<compile_context>
chip_gen: v7x
topology: tpu7x:2x2x1
jax: 0.10.0
libtpu: 0.0.40
codegen_flags: <defaults>
</compile_context>

<pallas_src>
import jax
import jax.numpy as jnp
from jax.experimental import pallas as pl
from jax.experimental.pallas import tpu as pltpu

# ---- logical (PyTorch) dims ----
D_IN, H1, H2, H3, H4, NUM_CLASSES = 784, 784, 320, 320, 196, 10
# ---- padded output dims (lane/MXU friendly); fc1's input dim stays at 784 ----
H1_PAD, H2_PAD, H3_PAD, H4_PAD, OUT_PAD = 896, 384, 384, 256, 128

_PAD_DIMS = [(D_IN, H1_PAD), (H1_PAD, H2_PAD), (H2_PAD, H3_PAD),
             (H3_PAD, H4_PAD), (H4_PAD, OUT_PAD)]


def _mlp5b_kernel(x_ref,
                  w1_ref, b1_ref, w2_ref, b2_ref, w3_ref, b3_ref,
                  w4_ref, b4_ref, w5_ref, b5_ref,
                  feat_ref, probs_ref):
    """Fused forward of one batch tile (eval mode: dropout is identity)."""

    def layer(h, w_ref, b_ref):
        y = jnp.dot(h, w_ref[...], preferred_element_type=jnp.float32) + b_ref[...]
        return jnp.maximum(y, 0.0)

    # bf16 activations into the MXU, f32 accumulation.
    h = layer(x_ref[...].astype(jnp.bfloat16), w1_ref, b1_ref).astype(jnp.bfloat16)
    h = layer(h, w2_ref, b2_ref).astype(jnp.bfloat16)
    h = layer(h, w3_ref, b3_ref).astype(jnp.bfloat16)
    h = layer(h, w4_ref, b4_ref).astype(jnp.bfloat16)

    # TODO(synk): F.dropout(training=True) would need pltpu.prng_seed/prng_random_bits
    # masking; this kernel implements eval-mode semantics (identity), i.e. inference.

    feat = layer(h, w5_ref, b5_ref)                       # relu(fc5), f32, (TB, OUT_PAD)
    feat_ref[...] = feat

    # Masked softmax over the 10 real classes (padded lanes excluded -> prob 0).
    col = jax.lax.broadcasted_iota(jnp.int32, feat.shape, 1)
    logits = jnp.where(col < NUM_CLASSES, feat, jnp.float32(-1e30))
    m = jnp.max(logits, axis=1, keepdims=True)
    e = jnp.exp(logits - m)
    denom = jnp.sum(e, axis=1, keepdims=True)
    # Exact f32 divide (approx reciprocal was not accurate enough for sum-to-1).
    probs_ref[...] = e / denom


def _pad2d(a, rows, cols, dtype):
    out = jnp.zeros((rows, cols), dtype)
    return out.at[:a.shape[0], :a.shape[1]].set(a.astype(dtype))


def prepare_params(params):
    """Pad torch-layout (in,out)/(1,out) params to lane-friendly dims; weights bf16."""
    # TODO(synk): optional fp8 (v7x) / int8 (v5e, v6e) quantization of fc1/fc2 weights
    # with per-output-channel scales would roughly halve the resident-weight DMA.
    prepared = []
    for (w, b), (rp, cp) in zip(params, _PAD_DIMS):
        prepared.append(_pad2d(w, rp, cp, jnp.bfloat16))   # weight (in[_pad], out_pad), bf16
        prepared.append(_pad2d(b, 1, cp, jnp.float32))     # bias   (1, out_pad), f32
    return prepared


def _batch_tile(B):
    """Batch tile: generation-aware for large B, sublane multiple for tiny B."""
    if B < 256:
        return max(8, ((B + 7) // 8) * 8)
    # v5e's slower MXU already amortizes the per-step overhead at 256 rows;
    # v6e/v7x benefit from 512-row tiles (fewer grid steps, weights stay resident).
    try:
        kind = jax.devices()[0].device_kind.lower()
        big = 256 if ("v5 lite" in kind or "v5e" in kind) else 512
    except Exception:
        big = 512
    return big if B >= big else 256


def mlp5b_forward(x_nchw, prepared):
    """x_nchw: (B, 1, 28, 28) float32. Returns (relu(fc5(x)), softmax probs), both (B, 10)."""
    B = x_nchw.shape[0]
    x = x_nchw.reshape(B, D_IN)                 # f32; cast to bf16 inside the kernel

    TB = _batch_tile(B)
    B_pad = ((B + TB - 1) // TB) * TB
    n_tiles = B_pad // TB
    if B_pad != B:                              # pad batch dim only (no column pad/copy)
        x = jnp.pad(x, ((0, B_pad - B), (0, 0)))

    out_spec = pl.BlockSpec((TB, OUT_PAD), lambda i: (i, 0))

    weight_bytes = sum(int(p.size) * p.dtype.itemsize for p in prepared)
    flops = 2 * B_pad * (784 * 784 + 784 * 320 + 320 * 320 + 320 * 196 + 196 * 10)
    bytes_accessed = weight_bytes + int(x.size) * 4 + 2 * B_pad * OUT_PAD * 4

    def run(single_buffer_weights):
        # x tile streams over the grid; weights/biases use a constant block index so
        # they are DMA'd once and stay resident in VMEM across grid steps.
        in_specs = [pl.BlockSpec((TB, D_IN), lambda i: (i, 0))]
        for p in prepared:
            if single_buffer_weights:
                in_specs.append(pl.BlockSpec(p.shape, lambda i: (0, 0),
                                             pipeline_mode=pl.Buffered(1)))
            else:
                in_specs.append(pl.BlockSpec(p.shape, lambda i: (0, 0)))
        return pl.pallas_call(
            _mlp5b_kernel,
            out_shape=(
                jax.ShapeDtypeStruct((B_pad, OUT_PAD), jnp.float32),
                jax.ShapeDtypeStruct((B_pad, OUT_PAD), jnp.float32),
            ),
            grid=(n_tiles,),
            in_specs=in_specs,
            out_specs=(out_spec, out_spec),
            compiler_params=pltpu.CompilerParams(
                # Only shard batch tiles across TensorCores when there is enough work;
                # otherwise each v7x core would DMA its own copy of the weights.
                dimension_semantics=("parallel",) if n_tiles >= 4 else ("arbitrary",),
                vmem_limit_bytes=32 << 20,   # real footprint ~8 MiB at TB=512
            ),
            cost_estimate=pl.CostEstimate(
                flops=flops,
                transcendentals=B_pad * OUT_PAD,
                bytes_accessed=bytes_accessed,
            ),
        )(x, *prepared)

    try:
        # Single-buffer the never-changing weight/bias blocks (~2.7 MiB VMEM saved).
        feat_pad, probs_pad = run(single_buffer_weights=True)
    except Exception:
        # pipeline_mode=pl.Buffered not supported on this JAX version/backend;
        # fall back to default (double-buffered) resident specs.
        feat_pad, probs_pad = run(single_buffer_weights=False)

    return feat_pad[:B, :NUM_CLASSES], probs_pad[:B, :NUM_CLASSES]


def init_params(key):
    """Deterministic init, torch nn.Linear default scale. Weights (in,out), biases (1,out)."""
    dims = [(D_IN, H1), (H1, H2), (H2, H3), (H3, H4), (H4, NUM_CLASSES)]
    params = []
    keys = jax.random.split(key, len(dims))
    for k, (d_in, d_out) in zip(keys, dims):
        kw, kb = jax.random.split(k)
        bound = 1.0 / jnp.sqrt(jnp.float32(d_in))
        w = jax.random.uniform(kw, (d_in, d_out), jnp.float32, -bound, bound)
        b = jax.random.uniform(kb, (1, d_out), jnp.float32, -bound, bound)
        params.append((w, b))
    return params


def mlp5b_reference(x_nchw, params):
    """Pure-JAX f32 reference (eval-mode dropout)."""
    x = x_nchw.reshape(x_nchw.shape[0], D_IN).astype(jnp.float32)
    (w1, b1), (w2, b2), (w3, b3), (w4, b4), (w5, b5) = params
    h = jax.nn.relu(x @ w1 + b1)
    h = jax.nn.relu(h @ w2 + b2)
    h = jax.nn.relu(h @ w3 + b3)
    h = jax.nn.relu(h @ w4 + b4)
    h = jax.nn.relu(h @ w5 + b5)
    return h, jax.nn.softmax(h, axis=1)


if __name__ == "__main__":
    key = jax.random.PRNGKey(0)
    k_params, k_x = jax.random.split(key)

    params = init_params(k_params)
    prepared = prepare_params(params)

    # MNIST-like input implied by the 784 view: (batch, 1, 28, 28)
    x = jax.random.normal(k_x, (2, 1, 28, 28), jnp.float32)

    feat, probs = mlp5b_forward(x, prepared)
    jax.block_until_ready((feat, probs))

    assert feat.shape == (2, NUM_CLASSES) and probs.shape == (2, NUM_CLASSES)
    assert bool(jnp.all(jnp.isfinite(feat))) and bool(jnp.all(jnp.isfinite(probs)))
    assert bool(jnp.allclose(jnp.sum(probs, axis=1), 1.0, atol=1e-3))

    # Loose check vs f32 reference (kernel uses bf16 weights/activations).
    feat_ref, probs_ref = mlp5b_reference(x, params)
    assert bool(jnp.max(jnp.abs(feat - feat_ref)) < 5e-2)
    assert bool(jnp.max(jnp.abs(probs - probs_ref)) < 5e-2)

    print("KERNEL_OK")
</pallas_src>

<mosaic_0001>
module attributes {stable_mosaic.version = 11 : i64} {
  func.func @_mlp5b_kernel(%arg0: i32, %arg1: memref<8x784xf32, #tpu.memory_space<vmem>>, %arg2: memref<784x896xbf16, #tpu.memory_space<vmem>>, %arg3: memref<1x896xf32, #tpu.memory_space<vmem>>, %arg4: memref<896x384xbf16, #tpu.memory_space<vmem>>, %arg5: memref<1x384xf32, #tpu.memory_space<vmem>>, %arg6: memref<384x384xbf16, #tpu.memory_space<vmem>>, %arg7: memref<1x384xf32, #tpu.memory_space<vmem>>, %arg8: memref<384x256xbf16, #tpu.memory_space<vmem>>, %arg9: memref<1x256xf32, #tpu.memory_space<vmem>>, %arg10: memref<256x128xbf16, #tpu.memory_space<vmem>>, %arg11: memref<1x128xf32, #tpu.memory_space<vmem>>, %arg12: memref<8x128xf32, #tpu.memory_space<vmem>>, %arg13: memref<8x128xf32, #tpu.memory_space<vmem>>) attributes {dimension_semantics = [#tpu.dimension_semantics<arbitrary>], iteration_bounds = array<i64: 1>, scalar_prefetch = 0 : i64, scratch_operands = 0 : i64, tpu.core_type = #tpu.core_type<tc>, window_params = [{transform_indices = @transform_0, window_bounds = array<i64: 8, 784>}, {pipeline_mode = #tpu.pipeline_mode<synchronous>, transform_indices = @transform_1, window_bounds = array<i64: 784, 896>}, {pipeline_mode = #tpu.pipeline_mode<synchronous>, transform_indices = @transform_2, window_bounds = array<i64: 1, 896>}, {pipeline_mode = #tpu.pipeline_mode<synchronous>, transform_indices = @transform_3, window_bounds = array<i64: 896, 384>}, {pipeline_mode = #tpu.pipeline_mode<synchronous>, transform_indices = @transform_4, window_bounds = array<i64: 1, 384>}, {pipeline_mode = #tpu.pipeline_mode<synchronous>, transform_indices = @transform_5, window_bounds = array<i64: 384, 384>}, {pipeline_mode = #tpu.pipeline_mode<synchronous>, transform_indices = @transform_6, window_bounds = array<i64: 1, 384>}, {pipeline_mode = #tpu.pipeline_mode<synchronous>, transform_indices = @transform_7, window_bounds = array<i64: 384, 256>}, {pipeline_mode = #tpu.pipeline_mode<synchronous>, transform_indices = @transform_8, window_bounds = array<i64: 1, 256>}, {pipeline_mode = #tpu.pipeline_mode<synchronous>, transform_indices = @transform_9, window_bounds = array<i64: 256, 128>}, {pipeline_mode = #tpu.pipeline_mode<synchronous>, transform_indices = @transform_10, window_bounds = array<i64: 1, 128>}, {transform_indices = @transform_11, window_bounds = array<i64: 8, 128>}, {transform_indices = @transform_12, window_bounds = array<i64: 8, 128>}]} {
    %c0 = arith.constant 0 : index
    %c0_0 = arith.constant 0 : index
    %0 = vector.load %arg1[%c0, %c0_0] : memref<8x784xf32, #tpu.memory_space<vmem>>, vector<8x784xf32>
    %1 = arith.truncf %0 : vector<8x784xf32> to vector<8x784xbf16>
    %c0_1 = arith.constant 0 : index
    %c0_2 = arith.constant 0 : index
    %2 = vector.load %arg2[%c0_1, %c0_2] : memref<784x896xbf16, #tpu.memory_space<vmem>>, vector<784x896xbf16>
    %cst = arith.constant dense<0.000000e+00> : vector<8x896xf32>
    %3 = tpu.matmul %1, %2, %cst {dimension_numbers = #tpu.dot_dimension_numbers<[1], [0], [0], [1], [0, 0, 1, 1], [], []>} : vector<8x784xbf16>, vector<784x896xbf16>, vector<8x896xf32> -> vector<8x896xf32>
    %c0_3 = arith.constant 0 : index
    %c0_4 = arith.constant 0 : index
    %4 = vector.load %arg3[%c0_3, %c0_4] : memref<1x896xf32, #tpu.memory_space<vmem>>, vector<1x896xf32>
    %5 = vector.broadcast %4 : vector<1x896xf32> to vector<8x896xf32>
    %6 = arith.addf %3, %5 : vector<8x896xf32>
    %cst_5 = arith.constant 0.000000e+00 : f32
    %7 = vector.broadcast %cst_5 : f32 to vector<8x896xf32>
    %8 = arith.maximumf %6, %7 : vector<8x896xf32>
    %9 = arith.truncf %8 : vector<8x896xf32> to vector<8x896xbf16>
    %c0_6 = arith.constant 0 : index
    %c0_7 = arith.constant 0 : index
    %10 = vector.load %arg4[%c0_6, %c0_7] : memref<896x384xbf16, #tpu.memory_space<vmem>>, vector<896x384xbf16>
    %cst_8 = arith.constant dense<0.000000e+00> : vector<8x384xf32>
    %11 = tpu.matmul %9, %10, %cst_8 {dimension_numbers = #tpu.dot_dimension_numbers<[1], [0], [0], [1], [0, 0, 1, 1], [], []>} : vector<8x896xbf16>, vector<896x384xbf16>, vector<8x384xf32> -> vector<8x384xf32>
    %c0_9 = arith.constant 0 : index
    %c0_10 = arith.constant 0 : index
    %12 = vector.load %arg5[%c0_9, %c0_10] : memref<1x384xf32, #tpu.memory_space<vmem>>, vector<1x384xf32>
    %13 = vector.broadcast %12 : vector<1x384xf32> to vector<8x384xf32>
    %14 = arith.addf %11, %13 : vector<8x384xf32>
    %cst_11 = arith.constant 0.000000e+00 : f32
    %15 = vector.broadcast %cst_11 : f32 to vector<8x384xf32>
    %16 = arith.maximumf %14, %15 : vector<8x384xf32>
    %17 = arith.truncf %16 : vector<8x384xf32> to vector<8x384xbf16>
    %c0_12 = arith.constant 0 : index
    %c0_13 = arith.constant 0 : index
    %18 = vector.load %arg6[%c0_12, %c0_13] : memref<384x384xbf16, #tpu.memory_space<vmem>>, vector<384x384xbf16>
    %cst_14 = arith.constant dense<0.000000e+00> : vector<8x384xf32>
    %19 = tpu.matmul %17, %18, %cst_14 {dimension_numbers = #tpu.dot_dimension_numbers<[1], [0], [0], [1], [0, 0, 1, 1], [], []>} : vector<8x384xbf16>, vector<384x384xbf16>, vector<8x384xf32> -> vector<8x384xf32>
    %c0_15 = arith.constant 0 : index
    %c0_16 = arith.constant 0 : index
    %20 = vector.load %arg7[%c0_15, %c0_16] : memref<1x384xf32, #tpu.memory_space<vmem>>, vector<1x384xf32>
    %21 = vector.broadcast %20 : vector<1x384xf32> to vector<8x384xf32>
    %22 = arith.addf %19, %21 : vector<8x384xf32>
    %cst_17 = arith.constant 0.000000e+00 : f32
    %23 = vector.broadcast %cst_17 : f32 to vector<8x384xf32>
    %24 = arith.maximumf %22, %23 : vector<8x384xf32>
    %25 = arith.truncf %24 : vector<8x384xf32> to vector<8x384xbf16>
    %c0_18 = arith.constant 0 : index
    %c0_19 = arith.constant 0 : index
    %26 = vector.load %arg8[%c0_18, %c0_19] : memref<384x256xbf16, #tpu.memory_space<vmem>>, vector<384x256xbf16>
    %cst_20 = arith.constant dense<0.000000e+00> : vector<8x256xf32>
    %27 = tpu.matmul %25, %26, %cst_20 {dimension_numbers = #tpu.dot_dimension_numbers<[1], [0], [0], [1], [0, 0, 1, 1], [], []>} : vector<8x384xbf16>, vector<384x256xbf16>, vector<8x256xf32> -> vector<8x256xf32>
    %c0_21 = arith.constant 0 : index
    %c0_22 = arith.constant 0 : index
    %28 = vector.load %arg9[%c0_21, %c0_22] : memref<1x256xf32, #tpu.memory_space<vmem>>, vector<1x256xf32>
    %29 = vector.broadcast %28 : vector<1x256xf32> to vector<8x256xf32>
    %30 = arith.addf %27, %29 : vector<8x256xf32>
    %cst_23 = arith.constant 0.000000e+00 : f32
    %31 = vector.broadcast %cst_23 : f32 to vector<8x256xf32>
    %32 = arith.maximumf %30, %31 : vector<8x256xf32>
    %33 = arith.truncf %32 : vector<8x256xf32> to vector<8x256xbf16>
    %c0_24 = arith.constant 0 : index
    %c0_25 = arith.constant 0 : index
    %34 = vector.load %arg10[%c0_24, %c0_25] : memref<256x128xbf16, #tpu.memory_space<vmem>>, vector<256x128xbf16>
    %cst_26 = arith.constant dense<0.000000e+00> : vector<8x128xf32>
    %35 = tpu.matmul %33, %34, %cst_26 {dimension_numbers = #tpu.dot_dimension_numbers<[1], [0], [0], [1], [0, 0, 1, 1], [], []>} : vector<8x256xbf16>, vector<256x128xbf16>, vector<8x128xf32> -> vector<8x128xf32>
    %c0_27 = arith.constant 0 : index
    %c0_28 = arith.constant 0 : index
    %36 = vector.load %arg11[%c0_27, %c0_28] : memref<1x128xf32, #tpu.memory_space<vmem>>, vector<1x128xf32>
    %37 = vector.broadcast %36 : vector<1x128xf32> to vector<8x128xf32>
    %38 = arith.addf %35, %37 : vector<8x128xf32>
    %cst_29 = arith.constant 0.000000e+00 : f32
    %39 = vector.broadcast %cst_29 : f32 to vector<8x128xf32>
    %40 = arith.maximumf %38, %39 : vector<8x128xf32>
    %c0_30 = arith.constant 0 : index
    %c0_31 = arith.constant 0 : index
    %41 = vector.load %arg12[%c0_30, %c0_31] : memref<8x128xf32, #tpu.memory_space<vmem>>, vector<8x128xf32>
    tpu.vector_store %arg12[%c0_30, %c0_31], %40 {strides = array<i32>} : memref<8x128xf32, #tpu.memory_space<vmem>>, vector<8x128xf32>,
    %42 = tpu.iota {dimensions = array<i32: 1>} : vector<8x128xi32>
    %c10_i32 = arith.constant 10 : i32
    %43 = vector.broadcast %c10_i32 : i32 to vector<8x128xi32>
    %44 = arith.cmpi slt, %42, %43 : vector<8x128xi32>
    %cst_32 = arith.constant -1.000000e+30 : f32
    %45 = vector.broadcast %cst_32 : f32 to vector<8x128xf32>
    %46 = arith.select %44, %40, %45 : vector<8x128xi1>, vector<8x128xf32>
    %cst_33 = arith.constant dense<0xFF800000> : vector<8xf32>
    %47 = vector.multi_reduction <maximumf>, %46, %cst_33 [1] : vector<8x128xf32> to vector<8xf32>
    %48 = vector.shape_cast %47 : vector<8xf32> to vector<8x1xf32>
    %49 = vector.broadcast %48 : vector<8x1xf32> to vector<8x128xf32>
    %50 = arith.subf %46, %49 : vector<8x128xf32>
    %51 = math.exp %50 : vector<8x128xf32>
    %cst_34 = arith.constant dense<0.000000e+00> : vector<8xf32>
    %52 = vector.multi_reduction <add>, %51, %cst_34 [1] : vector<8x128xf32> to vector<8xf32>
    %53 = vector.shape_cast %52 : vector<8xf32> to vector<8x1xf32>
    %54 = vector.broadcast %53 : vector<8x1xf32> to vector<8x128xf32>
    %55 = arith.divf %51, %54 : vector<8x128xf32>
    %c0_35 = arith.constant 0 : index
    %c0_36 = arith.constant 0 : index
    %56 = vector.load %arg13[%c0_35, %c0_36] : memref<8x128xf32, #tpu.memory_space<vmem>>, vector<8x128xf32>
    tpu.vector_store %arg13[%c0_35, %c0_36], %55 {strides = array<i32>} : memref<8x128xf32, #tpu.memory_space<vmem>>, vector<8x128xf32>,
    return
  }
  func.func @transform_0(%arg0: i32) -> (i32, i32) {
    %c0_i32 = arith.constant 0 : i32
    %c0_i32_0 = arith.constant 0 : i32
    return %arg0, %c0_i32 : i32, i32
  }
  func.func @transform_1(%arg0: i32) -> (i32, i32) {
    %c0_i32 = arith.constant 0 : i32
    %c0_i32_0 = arith.constant 0 : i32
    %c0_i32_1 = arith.constant 0 : i32
    return %c0_i32, %c0_i32_0 : i32, i32
  }
  func.func @transform_2(%arg0: i32) -> (i32, i32) {
    %c0_i32 = arith.constant 0 : i32
    %c0_i32_0 = arith.constant 0 : i32
    %c0_i32_1 = arith.constant 0 : i32
    return %c0_i32, %c0_i32_0 : i32, i32
  }
  func.func @transform_3(%arg0: i32) -> (i32, i32) {
    %c0_i32 = arith.constant 0 : i32
    %c0_i32_0 = arith.constant 0 : i32
    %c0_i32_1 = arith.constant 0 : i32
    return %c0_i32, %c0_i32_0 : i32, i32
  }
  func.func @transform_4(%arg0: i32) -> (i32, i32) {
    %c0_i32 = arith.constant 0 : i32
    %c0_i32_0 = arith.constant 0 : i32
    %c0_i32_1 = arith.constant 0 : i32
    return %c0_i32, %c0_i32_0 : i32, i32
  }
  func.func @transform_5(%arg0: i32) -> (i32, i32) {
    %c0_i32 = arith.constant 0 : i32
    %c0_i32_0 = arith.constant 0 : i32
    %c0_i32_1 = arith.constant 0 : i32
    return %c0_i32, %c0_i32_0 : i32, i32
  }
  func.func @transform_6(%arg0: i32) -> (i32, i32) {
    %c0_i32 = arith.constant 0 : i32
    %c0_i32_0 = arith.constant 0 : i32
    %c0_i32_1 = arith.constant 0 : i32
    return %c0_i32, %c0_i32_0 : i32, i32
  }
  func.func @transform_7(%arg0: i32) -> (i32, i32) {
    %c0_i32 = arith.constant 0 : i32
    %c0_i32_0 = arith.constant 0 : i32
    %c0_i32_1 = arith.constant 0 : i32
    return %c0_i32, %c0_i32_0 : i32, i32
  }
  func.func @transform_8(%arg0: i32) -> (i32, i32) {
    %c0_i32 = arith.constant 0 : i32
    %c0_i32_0 = arith.constant 0 : i32
    %c0_i32_1 = arith.constant 0 : i32
    return %c0_i32, %c0_i32_0 : i32, i32
  }
  func.func @transform_9(%arg0: i32) -> (i32, i32) {
    %c0_i32 = arith.constant 0 : i32
    %c0_i32_0 = arith.constant 0 : i32
    %c0_i32_1 = arith.constant 0 : i32
    return %c0_i32, %c0_i32_0 : i32, i32
  }
  func.func @transform_10(%arg0: i32) -> (i32, i32) {
    %c0_i32 = arith.constant 0 : i32
    %c0_i32_0 = arith.constant 0 : i32
    %c0_i32_1 = arith.constant 0 : i32
    return %c0_i32, %c0_i32_0 : i32, i32
  }
  func.func @transform_11(%arg0: i32) -> (i32, i32) {
    %c0_i32 = arith.constant 0 : i32
    %c0_i32_0 = arith.constant 0 : i32
    return %arg0, %c0_i32 : i32, i32
  }
  func.func @transform_12(%arg0: i32) -> (i32, i32) {
    %c0_i32 = arith.constant 0 : i32
    %c0_i32_0 = arith.constant 0 : i32
    return %arg0, %c0_i32 : i32, i32
  }
}

module attributes {stable_mosaic.version = 11 : i64} {
  func.func @_mlp5b_kernel(%arg0: i32, %arg1: memref<8x784xf32, #tpu.memory_space<vmem>>, %arg2: memref<784x896xbf16, #tpu.memory_space<vmem>>, %arg3: memref<1x896xf32, #tpu.memory_space<vmem>>, %arg4: memref<896x384xbf16, #tpu.memory_space<vmem>>, %arg5: memref<1x384xf32, #tpu.memory_space<vmem>>, %arg6: memref<384x384xbf16, #tpu.memory_space<vmem>>, %arg7: memref<1x384xf32, #tpu.memory_space<vmem>>, %arg8: memref<384x256xbf16, #tpu.memory_space<vmem>>, %arg9: memref<1x256xf32, #tpu.memory_space<vmem>>, %arg10: memref<256x128xbf16, #tpu.memory_space<vmem>>, %arg11: memref<1x128xf32, #tpu.memory_space<vmem>>, %arg12: memref<8x128xf32, #tpu.memory_space<vmem>>, %arg13: memref<8x128xf32, #tpu.memory_space<vmem>>) attributes {dimension_semantics = [#tpu.dimension_semantics<arbitrary>], iteration_bounds = array<i64: 1>, scalar_prefetch = 0 : i64, scratch_operands = 0 : i64, tpu.core_type = #tpu.core_type<tc>, window_params = [{transform_indices = @transform_0, window_bounds = array<i64: 8, 784>}, {pipeline_mode = #tpu.pipeline_mode<synchronous>, transform_indices = @transform_1, window_bounds = array<i64: 784, 896>}, {pipeline_mode = #tpu.pipeline_mode<synchronous>, transform_indices = @transform_2, window_bounds = array<i64: 1, 896>}, {pipeline_mode = #tpu.pipeline_mode<synchronous>, transform_indices = @transform_3, window_bounds = array<i64: 896, 384>}, {pipeline_mode = #tpu.pipeline_mode<synchronous>, transform_indices = @transform_4, window_bounds = array<i64: 1, 384>}, {pipeline_mode = #tpu.pipeline_mode<synchronous>, transform_indices = @transform_5, window_bounds = array<i64: 384, 384>}, {pipeline_mode = #tpu.pipeline_mode<synchronous>, transform_indices = @transform_6, window_bounds = array<i64: 1, 384>}, {pipeline_mode = #tpu.pipeline_mode<synchronous>, transform_indices = @transform_7, window_bounds = array<i64: 384, 256>}, {pipeline_mode = #tpu.pipeline_mode<synchronous>, transform_indices = @transform_8, window_bounds = array<i64: 1, 256>}, {pipeline_mode = #tpu.pipeline_mode<synchronous>, transform_indices = @transform_9, window_bounds = array<i64: 256, 128>}, {pipeline_mode = #tpu.pipeline_mode<synchronous>, transform_indices = @transform_10, window_bounds = array<i64: 1, 128>}, {transform_indices = @transform_11, window_bounds = array<i64: 8, 128>}, {transform_indices = @transform_12, window_bounds = array<i64: 8, 128>}]} {
    %c0 = arith.constant 0 : index
    %c0_0 = arith.constant 0 : index
    %0 = vector.load %arg1[%c0, %c0_0] : memref<8x784xf32, #tpu.memory_space<vmem>>, vector<8x784xf32>
    %1 = arith.truncf %0 : vector<8x784xf32> to vector<8x784xbf16>
    %c0_1 = arith.constant 0 : index
    %c0_2 = arith.constant 0 : index
    %2 = vector.load %arg2[%c0_1, %c0_2] : memref<784x896xbf16, #tpu.memory_space<vmem>>, vector<784x896xbf16>
    %cst = arith.constant dense<0.000000e+00> : vector<8x896xf32>
    %3 = tpu.matmul %1, %2, %cst {dimension_numbers = #tpu.dot_dimension_numbers<[1], [0], [0], [1], [0, 0, 1, 1], [], []>} : vector<8x784xbf16>, vector<784x896xbf16>, vector<8x896xf32> -> vector<8x896xf32>
    %c0_3 = arith.constant 0 : index
    %c0_4 = arith.constant 0 : index
    %4 = vector.load %arg3[%c0_3, %c0_4] : memref<1x896xf32, #tpu.memory_space<vmem>>, vector<1x896xf32>
    %5 = vector.broadcast %4 : vector<1x896xf32> to vector<8x896xf32>
    %6 = arith.addf %3, %5 : vector<8x896xf32>
    %cst_5 = arith.constant 0.000000e+00 : f32
    %7 = vector.broadcast %cst_5 : f32 to vector<8x896xf32>
    %8 = arith.maximumf %6, %7 : vector<8x896xf32>
    %9 = arith.truncf %8 : vector<8x896xf32> to vector<8x896xbf16>
    %c0_6 = arith.constant 0 : index
    %c0_7 = arith.constant 0 : index
    %10 = vector.load %arg4[%c0_6, %c0_7] : memref<896x384xbf16, #tpu.memory_space<vmem>>, vector<896x384xbf16>
    %cst_8 = arith.constant dense<0.000000e+00> : vector<8x384xf32>
    %11 = tpu.matmul %9, %10, %cst_8 {dimension_numbers = #tpu.dot_dimension_numbers<[1], [0], [0], [1], [0, 0, 1, 1], [], []>} : vector<8x896xbf16>, vector<896x384xbf16>, vector<8x384xf32> -> vector<8x384xf32>
    %c0_9 = arith.constant 0 : index
    %c0_10 = arith.constant 0 : index
    %12 = vector.load %arg5[%c0_9, %c0_10] : memref<1x384xf32, #tpu.memory_space<vmem>>, vector<1x384xf32>
    %13 = vector.broadcast %12 : vector<1x384xf32> to vector<8x384xf32>
    %14 = arith.addf %11, %13 : vector<8x384xf32>
    %cst_11 = arith.constant 0.000000e+00 : f32
    %15 = vector.broadcast %cst_11 : f32 to vector<8x384xf32>
    %16 = arith.maximumf %14, %15 : vector<8x384xf32>
    %17 = arith.truncf %16 : vector<8x384xf32> to vector<8x384xbf16>
    %c0_12 = arith.constant 0 : index
    %c0_13 = arith.constant 0 : index
    %18 = vector.load %arg6[%c0_12, %c0_13] : memref<384x384xbf16, #tpu.memory_space<vmem>>, vector<384x384xbf16>
    %cst_14 = arith.constant dense<0.000000e+00> : vector<8x384xf32>
    %19 = tpu.matmul %17, %18, %cst_14 {dimension_numbers = #tpu.dot_dimension_numbers<[1], [0], [0], [1], [0, 0, 1, 1], [], []>} : vector<8x384xbf16>, vector<384x384xbf16>, vector<8x384xf32> -> vector<8x384xf32>
    %c0_15 = arith.constant 0 : index
    %c0_16 = arith.constant 0 : index
    %20 = vector.load %arg7[%c0_15, %c0_16] : memref<1x384xf32, #tpu.memory_space<vmem>>, vector<1x384xf32>
    %21 = vector.broadcast %20 : vector<1x384xf32> to vector<8x384xf32>
    %22 = arith.addf %19, %21 : vector<8x384xf32>
    %cst_17 = arith.constant 0.000000e+00 : f32
    %23 = vector.broadcast %cst_17 : f32 to vector<8x384xf32>
    %24 = arith.maximumf %22, %23 : vector<8x384xf32>
    %25 = arith.truncf %24 : vector<8x384xf32> to vector<8x384xbf16>
    %c0_18 = arith.constant 0 : index
    %c0_19 = arith.constant 0 : index
    %26 = vector.load %arg8[%c0_18, %c0_19] : memref<384x256xbf16, #tpu.memory_space<vmem>>, vector<384x256xbf16>
    %cst_20 = arith.constant dense<0.000000e+00> : vector<8x256xf32>
    %27 = tpu.matmul %25, %26, %cst_20 {dimension_numbers = #tpu.dot_dimension_numbers<[1], [0], [0], [1], [0, 0, 1, 1], [], []>} : vector<8x384xbf16>, vector<384x256xbf16>, vector<8x256xf32> -> vector<8x256xf32>
    %c0_21 = arith.constant 0 : index
    %c0_22 = arith.constant 0 : index
    %28 = vector.load %arg9[%c0_21, %c0_22] : memref<1x256xf32, #tpu.memory_space<vmem>>, vector<1x256xf32>
    %29 = vector.broadcast %28 : vector<1x256xf32> to vector<8x256xf32>
    %30 = arith.addf %27, %29 : vector<8x256xf32>
    %cst_23 = arith.constant 0.000000e+00 : f32
    %31 = vector.broadcast %cst_23 : f32 to vector<8x256xf32>
    %32 = arith.maximumf %30, %31 : vector<8x256xf32>
    %33 = arith.truncf %32 : vector<8x256xf32> to vector<8x256xbf16>
    %c0_24 = arith.constant 0 : index
    %c0_25 = arith.constant 0 : index
    %34 = vector.load %arg10[%c0_24, %c0_25] : memref<256x128xbf16, #tpu.memory_space<vmem>>, vector<256x128xbf16>
    %cst_26 = arith.constant dense<0.000000e+00> : vector<8x128xf32>
    %35 = tpu.matmul %33, %34, %cst_26 {dimension_numbers = #tpu.dot_dimension_numbers<[1], [0], [0], [1], [0, 0, 1, 1], [], []>} : vector<8x256xbf16>, vector<256x128xbf16>, vector<8x128xf32> -> vector<8x128xf32>
    %c0_27 = arith.constant 0 : index
    %c0_28 = arith.constant 0 : index
    %36 = vector.load %arg11[%c0_27, %c0_28] : memref<1x128xf32, #tpu.memory_space<vmem>>, vector<1x128xf32>
    %37 = vector.broadcast %36 : vector<1x128xf32> to vector<8x128xf32>
    %38 = arith.addf %35, %37 : vector<8x128xf32>
    %cst_29 = arith.constant 0.000000e+00 : f32
    %39 = vector.broadcast %cst_29 : f32 to vector<8x128xf32>
    %40 = arith.maximumf %38, %39 : vector<8x128xf32>
    %c0_30 = arith.constant 0 : index
    %c0_31 = arith.constant 0 : index
    %41 = vector.load %arg12[%c0_30, %c0_31] : memref<8x128xf32, #tpu.memory_space<vmem>>, vector<8x128xf32>
    tpu.vector_store %arg12[%c0_30, %c0_31], %40 {strides = array<i32>} : memref<8x128xf32, #tpu.memory_space<vmem>>, vector<8x128xf32>,
    %42 = tpu.iota {dimensions = array<i32: 1>} : vector<8x128xi32>
    %c10_i32 = arith.constant 10 : i32
    %43 = vector.broadcast %c10_i32 : i32 to vector<8x128xi32>
    %44 = arith.cmpi slt, %42, %43 : vector<8x128xi32>
    %cst_32 = arith.constant -1.000000e+30 : f32
    %45 = vector.broadcast %cst_32 : f32 to vector<8x128xf32>
    %46 = arith.select %44, %40, %45 : vector<8x128xi1>, vector<8x128xf32>
    %cst_33 = arith.constant dense<0xFF800000> : vector<8xf32>
    %47 = vector.multi_reduction <maximumf>, %46, %cst_33 [1] : vector<8x128xf32> to vector<8xf32>
    %48 = vector.shape_cast %47 : vector<8xf32> to vector<8x1xf32>
    %49 = vector.broadcast %48 : vector<8x1xf32> to vector<8x128xf32>
    %50 = arith.subf %46, %49 : vector<8x128xf32>
    %51 = math.exp %50 : vector<8x128xf32>
    %cst_34 = arith.constant dense<0.000000e+00> : vector<8xf32>
    %52 = vector.multi_reduction <add>, %51, %cst_34 [1] : vector<8x128xf32> to vector<8xf32>
    %53 = vector.shape_cast %52 : vector<8xf32> to vector<8x1xf32>
    %54 = vector.broadcast %53 : vector<8x1xf32> to vector<8x128xf32>
    %55 = arith.divf %51, %54 : vector<8x128xf32>
    %c0_35 = arith.constant 0 : index
    %c0_36 = arith.constant 0 : index
    %56 = vector.load %arg13[%c0_35, %c0_36] : memref<8x128xf32, #tpu.memory_space<vmem>>, vector<8x128xf32>
    tpu.vector_store %arg13[%c0_35, %c0_36], %55 {strides = array<i32>} : memref<8x128xf32, #tpu.memory_space<vmem>>, vector<8x128xf32>,
    return
  }
  func.func @transform_0(%arg0: i32) -> (i32, i32) {
    %c0_i32 = arith.constant 0 : i32
    %c0_i32_0 = arith.constant 0 : i32
    return %arg0, %c0_i32 : i32, i32
  }
  func.func @transform_1(%arg0: i32) -> (i32, i32) {
    %c0_i32 = arith.constant 0 : i32
    %c0_i32_0 = arith.constant 0 : i32
    %c0_i32_1 = arith.constant 0 : i32
    return %c0_i32, %c0_i32_0 : i32, i32
  }
  func.func @transform_2(%arg0: i32) -> (i32, i32) {
    %c0_i32 = arith.constant 0 : i32
    %c0_i32_0 = arith.constant 0 : i32
    %c0_i32_1 = arith.constant 0 : i32
    return %c0_i32, %c0_i32_0 : i32, i32
  }
  func.func @transform_3(%arg0: i32) -> (i32, i32) {
    %c0_i32 = arith.constant 0 : i32
    %c0_i32_0 = arith.constant 0 : i32
    %c0_i32_1 = arith.constant 0 : i32
    return %c0_i32, %c0_i32_0 : i32, i32
  }
  func.func @transform_4(%arg0: i32) -> (i32, i32) {
    %c0_i32 = arith.constant 0 : i32
    %c0_i32_0 = arith.constant 0 : i32
    %c0_i32_1 = arith.constant 0 : i32
    return %c0_i32, %c0_i32_0 : i32, i32
  }
  func.func @transform_5(%arg0: i32) -> (i32, i32) {
    %c0_i32 = arith.constant 0 : i32
    %c0_i32_0 = arith.constant 0 : i32
    %c0_i32_1 = arith.constant 0 : i32
    return %c0_i32, %c0_i32_0 : i32, i32
  }
  func.func @transform_6(%arg0: i32) -> (i32, i32) {
    %c0_i32 = arith.constant 0 : i32
    %c0_i32_0 = arith.constant 0 : i32
    %c0_i32_1 = arith.constant 0 : i32
    return %c0_i32, %c0_i32_0 : i32, i32
  }
  func.func @transform_7(%arg0: i32) -> (i32, i32) {
    %c0_i32 = arith.constant 0 : i32
    %c0_i32_0 = arith.constant 0 : i32
    %c0_i32_1 = arith.constant 0 : i32
    return %c0_i32, %c0_i32_0 : i32, i32
  }
  func.func @transform_8(%arg0: i32) -> (i32, i32) {
    %c0_i32 = arith.constant 0 : i32
    %c0_i32_0 = arith.constant 0 : i32
    %c0_i32_1 = arith.constant 0 : i32
    return %c0_i32, %c0_i32_0 : i32, i32
  }
  func.func @transform_9(%arg0: i32) -> (i32, i32) {
    %c0_i32 = arith.constant 0 : i32
    %c0_i32_0 = arith.constant 0 : i32
    %c0_i32_1 = arith.constant 0 : i32
    return %c0_i32, %c0_i32_0 : i32, i32
  }
  func.func @transform_10(%arg0: i32) -> (i32, i32) {
    %c0_i32 = arith.constant 0 : i32
    %c0_i32_0 = arith.constant 0 : i32
    %c0_i32_1 = arith.constant 0 : i32
    return %c0_i32, %c0_i32_0 : i32, i32
  }
  func.func @transform_11(%arg0: i32) -> (i32, i32) {
    %c0_i32 = arith.constant 0 : i32
    %c0_i32_0 = arith.constant 0 : i32
    return %arg0, %c0_i32 : i32, i32
  }
  func.func @transform_12(%arg0: i32) -> (i32, i32) {
    %c0_i32 = arith.constant 0 : i32
    %c0_i32_0 = arith.constant 0 : i32
    return %arg0, %c0_i32 : i32, i32
  }
}

</mosaic_0001>

<llo_original>
// kernel: tpu_custom_call.1
$region0: #{tpu_custom_call.1}
  #allocation0 [shape = 'u32[]', space=smem, size = 0x4, offset = 0x4, fixed_abs, tag = 'smem constant byte address 0x4 - core index']
  #allocation1 [shape = 'u32[144,128]{1,0:T(1,128)}', space=vmem, size = 0x12000, scoped, tag = 'internal scratch']
  %s0 = inlined_call_operand.hbm [shape: f32[8,784], index: 0, kind: input, shape index: {}]
  %s1 = inlined_call_operand.hbm [shape: bf16[784,896], index: 1, kind: input, shape index: {}]
  %s2 = inlined_call_operand.hbm [shape: f32[1,896], index: 2, kind: input, shape index: {}]
  %s3 = inlined_call_operand.hbm [shape: bf16[896,384], index: 3, kind: input, shape index: {}]
  %s4 = inlined_call_operand.hbm [shape: f32[1,384], index: 4, kind: input, shape index: {}]
  %s5 = inlined_call_operand.hbm [shape: bf16[384,384], index: 5, kind: input, shape index: {}]
  %s6 = inlined_call_operand.hbm [shape: f32[1,384], index: 6, kind: input, shape index: {}]
  %s7 = inlined_call_operand.hbm [shape: bf16[384,256], index: 7, kind: input, shape index: {}]
  %s8 = inlined_call_operand.hbm [shape: f32[1,256], index: 8, kind: input, shape index: {}]
  %s9 = inlined_call_operand.hbm [shape: bf16[256,128], index: 9, kind: input, shape index: {}]
  %s10 = inlined_call_operand.hbm [shape: f32[1,128], index: 10, kind: input, shape index: {}]
  %s11 = inlined_call_operand.hbm [shape: f32[8,128], index: 11, kind: output, shape index: {0}]
  %s12 = inlined_call_operand.hbm [shape: f32[8,128], index: 12, kind: output, shape index: {1}]
  %13 = xla_tuple %s11, %s12
  %s14 = sld [smem:[#allocation0]]
  $region106: #{tpu_custom_call.1} parent=0
    _
  %s16 = ssub.s32 1, %s14
  %s17 = scalar_select 0, %s16, %s14
  $region1: #{tpu_custom_call.1} parent=0
    #allocation2 [shape = 'u8[28672]{0}', space=vmem, size = 0x7000, scoped, tag = 'input window, operand 0, single buffered']
    #allocation3 [shape = 's32[1]{0}', space=sflag, size = 0x4, scoped, tag = 'scoped memory for tpu_custom_call.1']
    #allocation4 [shape = 's32[1]{0}', space=sflag, size = 0x4, scoped, tag = 'scoped memory for tpu_custom_call.1']
    #allocation5 [shape = 'u8[1404928]{0}', space=vmem, size = 0x157000, scoped, tag = 'input window, operand 1, single buffered']
    #allocation6 [shape = 's32[1]{0}', space=sflag, size = 0x4, scoped, tag = 'scoped memory for tpu_custom_call.1']
    #allocation7 [shape = 'u8[3584]{0}', space=vmem, size = 0x1000, scoped, tag = 'input window, operand 2, single buffered']
    #allocation8 [shape = 'u8[688128]{0}', space=vmem, size = 0xa8000, scoped, tag = 'input window, operand 3, single buffered']
    #allocation9 [shape = 's32[1]{0}', space=sflag, size = 0x4, scoped, tag = 'scoped memory for tpu_custom_call.1']
    #allocation10 [shape = 'u8[1536]{0}', space=vmem, size = 0x800, scoped, tag = 'input window, operand 4, single buffered']
    #allocation11 [shape = 'u8[294912]{0}', space=vmem, size = 0x48000, scoped, tag = 'input window, operand 5, single buffered']
    #allocation12 [shape = 's32[1]{0}', space=sflag, size = 0x4, scoped, tag = 'scoped memory for tpu_custom_call.1']
    #allocation13 [shape = 'u8[1536]{0}', space=vmem, size = 0x800, scoped, tag = 'input window, operand 6, single buffered']
    #allocation14 [shape = 'u8[196608]{0}', space=vmem, size = 0x30000, scoped, tag = 'input window, operand 7, single buffered']
    #allocation15 [shape = 's32[1]{0}', space=sflag, size = 0x4, scoped, tag = 'scoped memory for tpu_custom_call.1']
    #allocation16 [shape = 'u8[1024]{0}', space=vmem, size = 0x400, scoped, tag = 'input window, operand 8, single buffered']
    #allocation17 [shape = 'u8[65536]{0}', space=vmem, size = 0x10000, scoped, tag = 'input window, operand 9, single buffered']
    #allocation18 [shape = 's32[1]{0}', space=sflag, size = 0x4, scoped, tag = 'scoped memory for tpu_custom_call.1']
    #allocation19 [shape = 'u8[512]{0}', space=vmem, size = 0x400, scoped, tag = 'input window, operand 10, single buffered']
    #allocation20 [shape = 'u8[4096]{0}', space=vmem, size = 0x1000, scoped, tag = 'output window, operand 0, single buffered']
    #allocation21 [shape = 'u8[4096]{0}', space=vmem, size = 0x1000, scoped, tag = 'output window, operand 1, single buffered']
    #allocation22 [shape = 's32[1]{0}', space=sflag, size = 0x4, scoped, tag = 'scoped memory for tpu_custom_call.1']
    %18 = vsyncpa [#allocation3], 0
    %19 = vsyncpa [#allocation6], 0
    %20 = vsyncpa [#allocation9], 0
    %21 = vsyncpa [#allocation12], 0
    %22 = vsyncpa [#allocation15], 0
    %23 = vsyncpa [#allocation18], 0
    %24 = vsyncpa [#allocation4], 0
    %25 = vsyncpa [#allocation22], 0
    // Predicated region
    $region2: #{tpu_custom_call.1} parent=1 // pred_check
      _
    $region3: #{tpu_custom_call.1} parent=1 // pred_check_branch
      %27 = sbr.rel (0) target = $region5
    $region4: #{tpu_custom_call.1} parent=1 // pred_region
      %s29 = ssub.s32 896, 896
      %30 = vsyncadd [#allocation3], %s29
      %s32 = sshll.u32 [#allocation2], 4
      %s33 = int_to_ptr.vmem [resolvable:$true] %s32
      %35 = dma.hbm_to_vmem [thread:$0]  %s0, 896, %s33, [#allocation3]
    $region5: #{tpu_custom_call.1} parent=1 // pred_fallthru
      _
    // Predicated region
    $region6: #{tpu_custom_call.1} parent=1 // pred_check
      _
    $region7: #{tpu_custom_call.1} parent=1 // pred_check_branch
      %37 = sbr.rel (0) target = $region9
    $region8: #{tpu_custom_call.1} parent=1 // pred_region
      %s39 = ssub.s32 43904, 43904
      %40 = vsyncadd [#allocation6], %s39
      %s41 = sshll.u32 [#allocation5], 4
      %s42 = int_to_ptr.vmem [resolvable:$true] %s41
      %47 = dma.hbm_to_vmem [thread:$0]  %s1, 43904, %s42, [#allocation6], 448, 448, 28
    $region9: #{tpu_custom_call.1} parent=1 // pred_fallthru
      _
    // Predicated region
    $region10: #{tpu_custom_call.1} parent=1 // pred_check
      _
    $region11: #{tpu_custom_call.1} parent=1 // pred_check_branch
      %49 = sbr.rel (0) target = $region13
    $region12: #{tpu_custom_call.1} parent=1 // pred_region
      %s51 = ssub.s32 112, 112
      %52 = vsyncadd [#allocation6], %s51
      %s54 = sshll.u32 [#allocation7], 4
      %s55 = int_to_ptr.vmem [resolvable:$true] %s54
      %57 = dma.hbm_to_vmem [thread:$0]  %s2, 112, %s55, [#allocation6]
    $region13: #{tpu_custom_call.1} parent=1 // pred_fallthru
      _
    // Predicated region
    $region14: #{tpu_custom_call.1} parent=1 // pred_check
      _
    $region15: #{tpu_custom_call.1} parent=1 // pred_check_branch
      %59 = sbr.rel (0) target = $region17
    $region16: #{tpu_custom_call.1} parent=1 // pred_region
      %s61 = ssub.s32 21504, 21504
      %62 = vsyncadd [#allocation9], %s61
      %s63 = sshll.u32 [#allocation8], 4
      %s64 = int_to_ptr.vmem [resolvable:$true] %s63
      %69 = dma.hbm_to_vmem [thread:$0]  %s3, 21504, %s64, [#allocation9], 192, 192, 12
    $region17: #{tpu_custom_call.1} parent=1 // pred_fallthru
      _
    // Predicated region
    $region18: #{tpu_custom_call.1} parent=1 // pred_check
      _
    $region19: #{tpu_custom_call.1} parent=1 // pred_check_branch
      %71 = sbr.rel (0) target = $region21
    $region20: #{tpu_custom_call.1} parent=1 // pred_region
      %s73 = ssub.s32 48, 48
      %74 = vsyncadd [#allocation9], %s73
      %s76 = sshll.u32 [#allocation10], 4
      %s77 = int_to_ptr.vmem [resolvable:$true] %s76
      %79 = dma.hbm_to_vmem [thread:$0]  %s4, 48, %s77, [#allocation9]
    $region21: #{tpu_custom_call.1} parent=1 // pred_fallthru
      _
    // Predicated region
    $region22: #{tpu_custom_call.1} parent=1 // pred_check
      _
    $region23: #{tpu_custom_call.1} parent=1 // pred_check_branch
      %81 = sbr.rel (0) target = $region25
    $region24: #{tpu_custom_call.1} parent=1 // pred_region
      %s83 = ssub.s32 9216, 9216
      %84 = vsyncadd [#allocation12], %s83
      %s85 = sshll.u32 [#allocation11], 4
      %s86 = int_to_ptr.vmem [resolvable:$true] %s85
      %91 = dma.hbm_to_vmem [thread:$0]  %s5, 9216, %s86, [#allocation12], 192, 192, 12
    $region25: #{tpu_custom_call.1} parent=1 // pred_fallthru
      _
    // Predicated region
    $region26: #{tpu_custom_call.1} parent=1 // pred_check
      _
    $region27: #{tpu_custom_call.1} parent=1 // pred_check_branch
      %93 = sbr.rel (0) target = $region29
    $region28: #{tpu_custom_call.1} parent=1 // pred_region
      %s95 = ssub.s32 48, 48
      %96 = vsyncadd [#allocation12], %s95
      %s98 = sshll.u32 [#allocation13], 4
      %s99 = int_to_ptr.vmem [resolvable:$true] %s98
      %101 = dma.hbm_to_vmem [thread:$0]  %s6, 48, %s99, [#allocation12]
    $region29: #{tpu_custom_call.1} parent=1 // pred_fallthru
      _
    // Predicated region
    $region30: #{tpu_custom_call.1} parent=1 // pred_check
      _
    $region31: #{tpu_custom_call.1} parent=1 // pred_check_branch
      %103 = sbr.rel (0) target = $region33
    $region32: #{tpu_custom_call.1} parent=1 // pred_region
      %s105 = ssub.s32 6144, 6144
      %106 = vsyncadd [#allocation15], %s105
      %s107 = sshll.u32 [#allocation14], 4
      %s108 = int_to_ptr.vmem [resolvable:$true] %s107
      %113 = dma.hbm_to_vmem [thread:$0]  %s7, 6144, %s108, [#allocation15], 128, 128, 8
    $region33: #{tpu_custom_call.1} parent=1 // pred_fallthru
      _
    // Predicated region
    $region34: #{tpu_custom_call.1} parent=1 // pred_check
      _
    $region35: #{tpu_custom_call.1} parent=1 // pred_check_branch
      %115 = sbr.rel (0) target = $region37
    $region36: #{tpu_custom_call.1} parent=1 // pred_region
      %s117 = ssub.s32 32, 32
      %118 = vsyncadd [#allocation15], %s117
      %s120 = sshll.u32 [#allocation16], 4
      %s121 = int_to_ptr.vmem [resolvable:$true] %s120
      %123 = dma.hbm_to_vmem [thread:$0]  %s8, 32, %s121, [#allocation15]
    $region37: #{tpu_custom_call.1} parent=1 // pred_fallthru
      _
    // Predicated region
    $region38: #{tpu_custom_call.1} parent=1 // pred_check
      _
    $region39: #{tpu_custom_call.1} parent=1 // pred_check_branch
      %125 = sbr.rel (0) target = $region41
    $region40: #{tpu_custom_call.1} parent=1 // pred_region
      %s127 = ssub.s32 2048, 2048
      %128 = vsyncadd [#allocation18], %s127
      %s129 = sshll.u32 [#allocation17], 4
      %s130 = int_to_ptr.vmem [resolvable:$true] %s129
      %135 = dma.hbm_to_vmem [thread:$0]  %s9, 2048, %s130, [#allocation18], 64, 64, 4
    $region41: #{tpu_custom_call.1} parent=1 // pred_fallthru
      _
    // Predicated region
    $region42: #{tpu_custom_call.1} parent=1 // pred_check
      _
    $region43: #{tpu_custom_call.1} parent=1 // pred_check_branch
      %137 = sbr.rel (0) target = $region45
    $region44: #{tpu_custom_call.1} parent=1 // pred_region
      %s139 = ssub.s32 16, 16
      %140 = vsyncadd [#allocation18], %s139
      %s142 = sshll.u32 [#allocation19], 4
      %s143 = int_to_ptr.vmem [resolvable:$true] %s142
      %145 = dma.hbm_to_vmem [thread:$0]  %s10, 16, %s143, [#allocation18]
    $region45: #{tpu_custom_call.1} parent=1 // pred_fallthru
      _
    // Predicated region
    $region46: #{tpu_custom_call.1} parent=1 // pred_check
      _
    $region47: #{tpu_custom_call.1} parent=1 // pred_check_branch
      %147 = sbr.rel (0) target = $region49
    $region48: #{tpu_custom_call.1} parent=1 // pred_region
      %148 = dma.done [#allocation3], 896
    $region49: #{tpu_custom_call.1} parent=1 // pred_fallthru
      _
    // Predicated region
    $region50: #{tpu_custom_call.1} parent=1 // pred_check
      _
    $region51: #{tpu_custom_call.1} parent=1 // pred_check_branch
      %150 = sbr.rel (0) target = $region53
    $region52: #{tpu_custom_call.1} parent=1 // pred_region
      %151 = dma.done [#allocation6], 43904
    $region53: #{tpu_custom_call.1} parent=1 // pred_fallthru
      _
    // Predicated region
    $region54: #{tpu_custom_call.1} parent=1 // pred_check
      _
    $region55: #{tpu_custom_call.1} parent=1 // pred_check_branch
      %153 = sbr.rel (0) target = $region57
    $region56: #{tpu_custom_call.1} parent=1 // pred_region
      %154 = dma.done [#allocation6], 112
    $region57: #{tpu_custom_call.1} parent=1 // pred_fallthru
      _
    // Predicated region
    $region58: #{tpu_custom_call.1} parent=1 // pred_check
      _
    $region59: #{tpu_custom_call.1} parent=1 // pred_check_branch
      %156 = sbr.rel (0) target = $region61
    $region60: #{tpu_custom_call.1} parent=1 // pred_region
      %157 = dma.done [#allocation9], 21504
    $region61: #{tpu_custom_call.1} parent=1 // pred_fallthru
      _
    // Predicated region
    $region62: #{tpu_custom_call.1} parent=1 // pred_check
      _
    $region63: #{tpu_custom_call.1} parent=1 // pred_check_branch
      %159 = sbr.rel (0) target = $region65
    $region64: #{tpu_custom_call.1} parent=1 // pred_region
      %160 = dma.done [#allocation9], 48
    $region65: #{tpu_custom_call.1} parent=1 // pred_fallthru
      _
    // Predicated region
    $region66: #{tpu_custom_call.1} parent=1 // pred_check
      _
    $region67: #{tpu_custom_call.1} parent=1 // pred_check_branch
      %162 = sbr.rel (0) target = $region69
    $region68: #{tpu_custom_call.1} parent=1 // pred_region
      %163 = dma.done [#allocation12], 9216
    $region69: #{tpu_custom_call.1} parent=1 // pred_fallthru
      _
    // Predicated region
    $region70: #{tpu_custom_call.1} parent=1 // pred_check
      _
    $region71: #{tpu_custom_call.1} parent=1 // pred_check_branch
      %165 = sbr.rel (0) target = $region73
    $region72: #{tpu_custom_call.1} parent=1 // pred_region
      %166 = dma.done [#allocation12], 48
    $region73: #{tpu_custom_call.1} parent=1 // pred_fallthru
      _
    // Predicated region
    $region74: #{tpu_custom_call.1} parent=1 // pred_check
      _
    $region75: #{tpu_custom_call.1} parent=1 // pred_check_branch
      %168 = sbr.rel (0) target = $region77
    $region76: #{tpu_custom_call.1} parent=1 // pred_region
      %169 = dma.done [#allocation15], 6144
    $region77: #{tpu_custom_call.1} parent=1 // pred_fallthru
      _
    // Predicated region
    $region78: #{tpu_custom_call.1} parent=1 // pred_check
      _
    $region79: #{tpu_custom_call.1} parent=1 // pred_check_branch
      %171 = sbr.rel (0) target = $region81
    $region80: #{tpu_custom_call.1} parent=1 // pred_region
      %172 = dma.done [#allocation15], 32
    $region81: #{tpu_custom_call.1} parent=1 // pred_fallthru
      _
    // Predicated region
    $region82: #{tpu_custom_call.1} parent=1 // pred_check
      _
    $region83: #{tpu_custom_call.1} parent=1 // pred_check_branch
      %174 = sbr.rel (0) target = $region85
    $region84: #{tpu_custom_call.1} parent=1 // pred_region
      %175 = dma.done [#allocation18], 2048
    $region85: #{tpu_custom_call.1} parent=1 // pred_fallthru
      _
    // Predicated region
    $region86: #{tpu_custom_call.1} parent=1 // pred_check
      _
    $region87: #{tpu_custom_call.1} parent=1 // pred_check_branch
      %177 = sbr.rel (0) target = $region89
    $region88: #{tpu_custom_call.1} parent=1 // pred_region
      %178 = dma.done [#allocation18], 16
    $region89: #{tpu_custom_call.1} parent=1 // pred_fallthru
      _
    %v180 = vld [vmem:[#allocation2] sm:$0xff]
    %v181 = vld [vmem:[#allocation2 + $0x8] sm:$0xff]
    %v182 = vld [vmem:[#allocation2 + $0x10] sm:$0xff]
    %v183 = vld [vmem:[#allocation2 + $0x18] sm:$0xff]
    %v184 = vld [vmem:[#allocation2 + $0x20] sm:$0xff]
    %v185 = vld [vmem:[#allocation2 + $0x28] sm:$0xff]
    %v186 = vld [vmem:[#allocation2 + $0x30] sm:$0xff]
    %v187 = vpack.c.bf16 %v180, %v180
    %v188 = vpack.c.bf16 %v181, %v181
    %v189 = vpack.c.bf16 %v182, %v182
    %v190 = vpack.c.bf16 %v183, %v183
    %v191 = vpack.c.bf16 %v184, %v184
    %v192 = vpack.c.bf16 %v185, %v185
    %v193 = vpack.c.bf16 %v186, %v186
    %v194 = vld [vmem:[#allocation5] sm:$0xff]
    %v195 = vld [vmem:[#allocation5 + $0x8] sm:$0xff]
    %v196 = vld [vmem:[#allocation5 + $0x10] sm:$0xff]
    %v197 = vld [vmem:[#allocation5 + $0x18] sm:$0xf]
    %v198 = vld [vmem:[#allocation5 + $0x1c] sm:$0xff]
    %v199 = vld [vmem:[#allocation5 + $0x24] sm:$0xff]
    %v200 = vld [vmem:[#allocation5 + $0x2c] sm:$0xff]
    %v201 = vld [vmem:[#allocation5 + $0x34] sm:$0xf]
    %v202 = vld [vmem:[#allocation5 + $0x38] sm:$0xff]
    %v203 = vld [vmem:[#allocation5 + $0x40] sm:$0xff]
    %v204 = vld [vmem:[#allocation5 + $0x48] sm:$0xff]
    %v205 = vld [vmem:[#allocation5 + $0x50] sm:$0xf]
    %v206 = vld [vmem:[#allocation5 + $0x54] sm:$0xff]
    %v207 = vld [vmem:[#allocation5 + $0x5c] sm:$0xff]
    %v208 = vld [vmem:[#allocation5 + $0x64] sm:$0xff]
    %v209 = vld [vmem:[#allocation5 + $0x6c] sm:$0xf]
    %v210 = vld [vmem:[#allocation5 + $0x70] sm:$0xff]
    %v211 = vld [vmem:[#allocation5 + $0x78] sm:$0xff]
    %v212 = vld [vmem:[#allocation5 + $0x80] sm:$0xff]
    %v213 = vld [vmem:[#allocation5 + $0x88] sm:$0xf]
    %v214 = vld [vmem:[#allocation5 + $0x8c] sm:$0xff]
    %v215 = vld [vmem:[#allocation5 + $0x94] sm:$0xff]
    %v216 = vld [vmem:[#allocation5 + $0x9c] sm:$0xff]
    %v217 = vld [vmem:[#allocation5 + $0xa4] sm:$0xf]
    %v218 = vld [vmem:[#allocation5 + $0xa8] sm:$0xff]
    %v219 = vld [vmem:[#allocation5 + $0xb0] sm:$0xff]
    %v220 = vld [vmem:[#allocation5 + $0xb8] sm:$0xff]
    %v221 = vld [vmem:[#allocation5 + $0xc0] sm:$0xf]
    %v222 = vld [vmem:[#allocation5 + $0xc4] sm:$0xff]
    %v223 = vld [vmem:[#allocation5 + $0xcc] sm:$0xff]
    %v224 = vld [vmem:[#allocation5 + $0xd4] sm:$0xff]
    %v225 = vld [vmem:[#allocation5 + $0xdc] sm:$0xf]
    %v226 = vld [vmem:[#allocation5 + $0xe0] sm:$0xff]
    %v227 = vld [vmem:[#allocation5 + $0xe8] sm:$0xff]
    %v228 = vld [vmem:[#allocation5 + $0xf0] sm:$0xff]
    %v229 = vld [vmem:[#allocation5 + $0xf8] sm:$0xf]
    %v230 = vld [vmem:[#allocation5 + $0xfc] sm:$0xff]
    %v231 = vld [vmem:[#allocation5 + $0x104] sm:$0xff]
    %v232 = vld [vmem:[#allocation5 + $0x10c] sm:$0xff]
    %v233 = vld [vmem:[#allocation5 + $0x114] sm:$0xf]
    %v234 = vld [vmem:[#allocation5 + $0x118] sm:$0xff]
    %v235 = vld [vmem:[#allocation5 + $0x120] sm:$0xff]
    %v236 = vld [vmem:[#allocation5 + $0x128] sm:$0xff]
    %v237 = vld [vmem:[#allocation5 + $0x130] sm:$0xf]
    %v238 = vld [vmem:[#allocation5 + $0x134] sm:$0xff]
    %v239 = vld [vmem:[#allocation5 + $0x13c] sm:$0xff]
    %v240 = vld [vmem:[#allocation5 + $0x144] sm:$0xff]
    %v241 = vld [vmem:[#allocation5 + $0x14c] sm:$0xf]
    %v242 = vld [vmem:[#allocation5 + $0x150] sm:$0xff]
    %v243 = vld [vmem:[#allocation5 + $0x158] sm:$0xff]
    %v244 = vld [vmem:[#allocation5 + $0x160] sm:$0xff]
    %v245 = vld [vmem:[#allocation5 + $0x168] sm:$0xf]
    %v246 = vld [vmem:[#allocation5 + $0x16c] sm:$0xff]
    %v247 = vld [vmem:[#allocation5 + $0x174] sm:$0xff]
    %v248 = vld [vmem:[#allocation5 + $0x17c] sm:$0xff]
    %v249 = vld [vmem:[#allocation5 + $0x184] sm:$0xf]
    %v250 = vld [vmem:[#allocation5 + $0x188] sm:$0xff]
    %v251 = vld [vmem:[#allocation5 + $0x190] sm:$0xff]
    %v252 = vld [vmem:[#allocation5 + $0x198] sm:$0xff]
    %v253 = vld [vmem:[#allocation5 + $0x1a0] sm:$0xf]
    %v254 = vld [vmem:[#allocation5 + $0x1a4] sm:$0xff]
    %v255 = vld [vmem:[#allocation5 + $0x1ac] sm:$0xff]
    %v256 = vld [vmem:[#allocation5 + $0x1b4] sm:$0xff]
    %v257 = vld [vmem:[#allocation5 + $0x1bc] sm:$0xf]
    %v258 = vld [vmem:[#allocation5 + $0x1c0] sm:$0xff]
    %v259 = vld [vmem:[#allocation5 + $0x1c8] sm:$0xff]
    %v260 = vld [vmem:[#allocation5 + $0x1d0] sm:$0xff]
    %v261 = vld [vmem:[#allocation5 + $0x1d8] sm:$0xf]
    %v262 = vld [vmem:[#allocation5 + $0x1dc] sm:$0xff]
    %v263 = vld [vmem:[#allocation5 + $0x1e4] sm:$0xff]
    %v264 = vld [vmem:[#allocation5 + $0x1ec] sm:$0xff]
    %v265 = vld [vmem:[#allocation5 + $0x1f4] sm:$0xf]
    %v266 = vld [vmem:[#allocation5 + $0x1f8] sm:$0xff]
    %v267 = vld [vmem:[#allocation5 + $0x200] sm:$0xff]
    %v268 = vld [vmem:[#allocation5 + $0x208] sm:$0xff]
    %v269 = vld [vmem:[#allocation5 + $0x210] sm:$0xf]
    %v270 = vld [vmem:[#allocation5 + $0x214] sm:$0xff]
    %v271 = vld [vmem:[#allocation5 + $0x21c] sm:$0xff]
    %v272 = vld [vmem:[#allocation5 + $0x224] sm:$0xff]
    %v273 = vld [vmem:[#allocation5 + $0x22c] sm:$0xf]
    %v274 = vld [vmem:[#allocation5 + $0x230] sm:$0xff]
    %v275 = vld [vmem:[#allocation5 + $0x238] sm:$0xff]
    %v276 = vld [vmem:[#allocation5 + $0x240] sm:$0xff]
    %v277 = vld [vmem:[#allocation5 + $0x248] sm:$0xf]
    %v278 = vld [vmem:[#allocation5 + $0x24c] sm:$0xff]
    %v279 = vld [vmem:[#allocation5 + $0x254] sm:$0xff]
    %v280 = vld [vmem:[#allocation5 + $0x25c] sm:$0xff]
    %v281 = vld [vmem:[#allocation5 + $0x264] sm:$0xf]
    %v282 = vld [vmem:[#allocation5 + $0x268] sm:$0xff]
    %v283 = vld [vmem:[#allocation5 + $0x270] sm:$0xff]
    %v284 = vld [vmem:[#allocation5 + $0x278] sm:$0xff]
    %v285 = vld [vmem:[#allocation5 + $0x280] sm:$0xf]
    %v286 = vld [vmem:[#allocation5 + $0x284] sm:$0xff]
    %v287 = vld [vmem:[#allocation5 + $0x28c] sm:$0xff]
    %v288 = vld [vmem:[#allocation5 + $0x294] sm:$0xff]
    %v289 = vld [vmem:[#allocation5 + $0x29c] sm:$0xf]
    %v290 = vld [vmem:[#allocation5 + $0x2a0] sm:$0xff]
    %v291 = vld [vmem:[#allocation5 + $0x2a8] sm:$0xff]
    %v292 = vld [vmem:[#allocation5 + $0x2b0] sm:$0xff]
    %v293 = vld [vmem:[#allocation5 + $0x2b8] sm:$0xf]
    %v294 = vld [vmem:[#allocation5 + $0x2bc] sm:$0xff]
    %v295 = vld [vmem:[#allocation5 + $0x2c4] sm:$0xff]
    %v296 = vld [vmem:[#allocation5 + $0x2cc] sm:$0xff]
    %v297 = vld [vmem:[#allocation5 + $0x2d4] sm:$0xf]
    %v298 = vld [vmem:[#allocation5 + $0x2d8] sm:$0xff]
    %v299 = vld [vmem:[#allocation5 + $0x2e0] sm:$0xff]
    %v300 = vld [vmem:[#allocation5 + $0x2e8] sm:$0xff]
    %v301 = vld [vmem:[#allocation5 + $0x2f0] sm:$0xf]
    %v302 = vld [vmem:[#allocation5 + $0x2f4] sm:$0xff]
    %v303 = vld [vmem:[#allocation5 + $0x2fc] sm:$0xff]
    %v304 = vld [vmem:[#allocation5 + $0x304] sm:$0xff]
    %v305 = vld [vmem:[#allocation5 + $0x30c] sm:$0xf]
    %v306 = vld [vmem:[#allocation5 + $0x310] sm:$0xff]
    %v307 = vld [vmem:[#allocation5 + $0x318] sm:$0xff]
    %v308 = vld [vmem:[#allocation5 + $0x320] sm:$0xff]
    %v309 = vld [vmem:[#allocation5 + $0x328] sm:$0xf]
    %v310 = vld [vmem:[#allocation5 + $0x32c] sm:$0xff]
    %v311 = vld [vmem:[#allocation5 + $0x334] sm:$0xff]
    %v312 = vld [vmem:[#allocation5 + $0x33c] sm:$0xff]
    %v313 = vld [vmem:[#allocation5 + $0x344] sm:$0xf]
    %v314 = vld [vmem:[#allocation5 + $0x348] sm:$0xff]
    %v315 = vld [vmem:[#allocation5 + $0x350] sm:$0xff]
    %v316 = vld [vmem:[#allocation5 + $0x358] sm:$0xff]
    %v317 = vld [vmem:[#allocation5 + $0x360] sm:$0xf]
    %v318 = vld [vmem:[#allocation5 + $0x364] sm:$0xff]
    %v319 = vld [vmem:[#allocation5 + $0x36c] sm:$0xff]
    %v320 = vld [vmem:[#allocation5 + $0x374] sm:$0xff]
    %v321 = vld [vmem:[#allocation5 + $0x37c] sm:$0xf]
    %v322 = vld [vmem:[#allocation5 + $0x380] sm:$0xff]
    %v323 = vld [vmem:[#allocation5 + $0x388] sm:$0xff]
    %v324 = vld [vmem:[#allocation5 + $0x390] sm:$0xff]
    %v325 = vld [vmem:[#allocation5 + $0x398] sm:$0xf]
    %v326 = vld [vmem:[#allocation5 + $0x39c] sm:$0xff]
    %v327 = vld [vmem:[#allocation5 + $0x3a4] sm:$0xff]
    %v328 = vld [vmem:[#allocation5 + $0x3ac] sm:$0xff]
    %v329 = vld [vmem:[#allocation5 + $0x3b4] sm:$0xf]
    %v330 = vld [vmem:[#allocation5 + $0x3b8] sm:$0xff]
    %v331 = vld [vmem:[#allocation5 + $0x3c0] sm:$0xff]
    %v332 = vld [vmem:[#allocation5 + $0x3c8] sm:$0xff]
    %v333 = vld [vmem:[#allocation5 + $0x3d0] sm:$0xf]
    %v334 = vld [vmem:[#allocation5 + $0x3d4] sm:$0xff]
    %v335 = vld [vmem:[#allocation5 + $0x3dc] sm:$0xff]
    %v336 = vld [vmem:[#allocation5 + $0x3e4] sm:$0xff]
    %v337 = vld [vmem:[#allocation5 + $0x3ec] sm:$0xf]
    %v338 = vld [vmem:[#allocation5 + $0x3f0] sm:$0xff]
    %v339 = vld [vmem:[#allocation5 + $0x3f8] sm:$0xff]
    %v340 = vld [vmem:[#allocation5 + $0x400] sm:$0xff]
    %v341 = vld [vmem:[#allocation5 + $0x408] sm:$0xf]
    %v342 = vld [vmem:[#allocation5 + $0x40c] sm:$0xff]
    %v343 = vld [vmem:[#allocation5 + $0x414] sm:$0xff]
    %v344 = vld [vmem:[#allocation5 + $0x41c] sm:$0xff]
    %v345 = vld [vmem:[#allocation5 + $0x424] sm:$0xf]
    %v346 = vld [vmem:[#allocation5 + $0x428] sm:$0xff]
    %v347 = vld [vmem:[#allocation5 + $0x430] sm:$0xff]
    %v348 = vld [vmem:[#allocation5 + $0x438] sm:$0xff]
    %v349 = vld [vmem:[#allocation5 + $0x440] sm:$0xf]
    %v350 = vld [vmem:[#allocation5 + $0x444] sm:$0xff]
    %v351 = vld [vmem:[#allocation5 + $0x44c] sm:$0xff]
    %v352 = vld [vmem:[#allocation5 + $0x454] sm:$0xff]
    %v353 = vld [vmem:[#allocation5 + $0x45c] sm:$0xf]
    %v354 = vld [vmem:[#allocation5 + $0x460] sm:$0xff]
    %v355 = vld [vmem:[#allocation5 + $0x468] sm:$0xff]
    %v356 = vld [vmem:[#allocation5 + $0x470] sm:$0xff]
    %v357 = vld [vmem:[#allocation5 + $0x478] sm:$0xf]
    %v358 = vld [vmem:[#allocation5 + $0x47c] sm:$0xff]
    %v359 = vld [vmem:[#allocation5 + $0x484] sm:$0xff]
    %v360 = vld [vmem:[#allocation5 + $0x48c] sm:$0xff]
    %v361 = vld [vmem:[#allocation5 + $0x494] sm:$0xf]
    %v362 = vld [vmem:[#allocation5 + $0x498] sm:$0xff]
    %v363 = vld [vmem:[#allocation5 + $0x4a0] sm:$0xff]
    %v364 = vld [vmem:[#allocation5 + $0x4a8] sm:$0xff]
    %v365 = vld [vmem:[#allocation5 + $0x4b0] sm:$0xf]
    %v366 = vld [vmem:[#allocation5 + $0x4b4] sm:$0xff]
    %v367 = vld [vmem:[#allocation5 + $0x4bc] sm:$0xff]
    %v368 = vld [vmem:[#allocation5 + $0x4c4] sm:$0xff]
    %v369 = vld [vmem:[#allocation5 + $0x4cc] sm:$0xf]
    %v370 = vld [vmem:[#allocation5 + $0x4d0] sm:$0xff]
    %v371 = vld [vmem:[#allocation5 + $0x4d8] sm:$0xff]
    %v372 = vld [vmem:[#allocation5 + $0x4e0] sm:$0xff]
    %v373 = vld [vmem:[#allocation5 + $0x4e8] sm:$0xf]
    %v374 = vld [vmem:[#allocation5 + $0x4ec] sm:$0xff]
    %v375 = vld [vmem:[#allocation5 + $0x4f4] sm:$0xff]
    %v376 = vld [vmem:[#allocation5 + $0x4fc] sm:$0xff]
    %v377 = vld [vmem:[#allocation5 + $0x504] sm:$0xf]
    %v378 = vld [vmem:[#allocation5 + $0x508] sm:$0xff]
    %v379 = vld [vmem:[#allocation5 + $0x510] sm:$0xff]
    %v380 = vld [vmem:[#allocation5 + $0x518] sm:$0xff]
    %v381 = vld [vmem:[#allocation5 + $0x520] sm:$0xf]
    %v382 = vld [vmem:[#allocation5 + $0x524] sm:$0xff]
    %v383 = vld [vmem:[#allocation5 + $0x52c] sm:$0xff]
    %v384 = vld [vmem:[#allocation5 + $0x534] sm:$0xff]
    %v385 = vld [vmem:[#allocation5 + $0x53c] sm:$0xf]
    %v386 = vld [vmem:[#allocation5 + $0x540] sm:$0xff]
    %v387 = vld [vmem:[#allocation5 + $0x548] sm:$0xff]
    %v388 = vld [vmem:[#allocation5 + $0x550] sm:$0xff]
    %v389 = vld [vmem:[#allocation5 + $0x558] sm:$0xf]
    %v390 = vld [vmem:[#allocation5 + $0x55c] sm:$0xff]
    %v391 = vld [vmem:[#allocation5 + $0x564] sm:$0xff]
    %v392 = vld [vmem:[#allocation5 + $0x56c] sm:$0xff]
    %v393 = vld [vmem:[#allocation5 + $0x574] sm:$0xf]
    %v394 = vld [vmem:[#allocation5 + $0x578] sm:$0xff]
    %v395 = vld [vmem:[#allocation5 + $0x580] sm:$0xff]
    %v396 = vld [vmem:[#allocation5 + $0x588] sm:$0xff]
    %v397 = vld [vmem:[#allocation5 + $0x590] sm:$0xf]
    %v398 = vld [vmem:[#allocation5 + $0x594] sm:$0xff]
    %v399 = vld [vmem:[#allocation5 + $0x59c] sm:$0xff]
    %v400 = vld [vmem:[#allocation5 + $0x5a4] sm:$0xff]
    %v401 = vld [vmem:[#allocation5 + $0x5ac] sm:$0xf]
    %v402 = vld [vmem:[#allocation5 + $0x5b0] sm:$0xff]
    %v403 = vld [vmem:[#allocation5 + $0x5b8] sm:$0xff]
    %v404 = vld [vmem:[#allocation5 + $0x5c0] sm:$0xff]
    %v405 = vld [vmem:[#allocation5 + $0x5c8] sm:$0xf]
    %v406 = vld [vmem:[#allocation5 + $0x5cc] sm:$0xff]
    %v407 = vld [vmem:[#allocation5 + $0x5d4] sm:$0xff]
    %v408 = vld [vmem:[#allocation5 + $0x5dc] sm:$0xff]
    %v409 = vld [vmem:[#allocation5 + $0x5e4] sm:$0xf]
    %v410 = vld [vmem:[#allocation5 + $0x5e8] sm:$0xff]
    %v411 = vld [vmem:[#allocation5 + $0x5f0] sm:$0xff]
    %v412 = vld [vmem:[#allocation5 + $0x5f8] sm:$0xff]
    %v413 = vld [vmem:[#allocation5 + $0x600] sm:$0xf]
    %v414 = vld [vmem:[#allocation5 + $0x604] sm:$0xff]
    %v415 = vld [vmem:[#allocation5 + $0x60c] sm:$0xff]
    %v416 = vld [vmem:[#allocation5 + $0x614] sm:$0xff]
    %v417 = vld [vmem:[#allocation5 + $0x61c] sm:$0xf]
    %v418 = vld [vmem:[#allocation5 + $0x620] sm:$0xff]
    %v419 = vld [vmem:[#allocation5 + $0x628] sm:$0xff]
    %v420 = vld [vmem:[#allocation5 + $0x630] sm:$0xff]
    %v421 = vld [vmem:[#allocation5 + $0x638] sm:$0xf]
    %v422 = vld [vmem:[#allocation5 + $0x63c] sm:$0xff]
    %v423 = vld [vmem:[#allocation5 + $0x644] sm:$0xff]
    %v424 = vld [vmem:[#allocation5 + $0x64c] sm:$0xff]
    %v425 = vld [vmem:[#allocation5 + $0x654] sm:$0xf]
    %v426 = vld [vmem:[#allocation5 + $0x658] sm:$0xff]
    %v427 = vld [vmem:[#allocation5 + $0x660] sm:$0xff]
    %v428 = vld [vmem:[#allocation5 + $0x668] sm:$0xff]
    %v429 = vld [vmem:[#allocation5 + $0x670] sm:$0xf]
    %v430 = vld [vmem:[#allocation5 + $0x674] sm:$0xff]
    %v431 = vld [vmem:[#allocation5 + $0x67c] sm:$0xff]
    %v432 = vld [vmem:[#allocation5 + $0x684] sm:$0xff]
    %v433 = vld [vmem:[#allocation5 + $0x68c] sm:$0xf]
    %v434 = vld [vmem:[#allocation5 + $0x690] sm:$0xff]
    %v435 = vld [vmem:[#allocation5 + $0x698] sm:$0xff]
    %v436 = vld [vmem:[#allocation5 + $0x6a0] sm:$0xff]
    %v437 = vld [vmem:[#allocation5 + $0x6a8] sm:$0xf]
    %v438 = vld [vmem:[#allocation5 + $0x6ac] sm:$0xff]
    %v439 = vld [vmem:[#allocation5 + $0x6b4] sm:$0xff]
    %v440 = vld [vmem:[#allocation5 + $0x6bc] sm:$0xff]
    %v441 = vld [vmem:[#allocation5 + $0x6c4] sm:$0xf]
    %v442 = vld [vmem:[#allocation5 + $0x6c8] sm:$0xff]
    %v443 = vld [vmem:[#allocation5 + $0x6d0] sm:$0xff]
    %v444 = vld [vmem:[#allocation5 + $0x6d8] sm:$0xff]
    %v445 = vld [vmem:[#allocation5 + $0x6e0] sm:$0xf]
    %v446 = vld [vmem:[#allocation5 + $0x6e4] sm:$0xff]
    %v447 = vld [vmem:[#allocation5 + $0x6ec] sm:$0xff]
    %v448 = vld [vmem:[#allocation5 + $0x6f4] sm:$0xff]
    %v449 = vld [vmem:[#allocation5 + $0x6fc] sm:$0xf]
    %v450 = vld [vmem:[#allocation5 + $0x700] sm:$0xff]
    %v451 = vld [vmem:[#allocation5 + $0x708] sm:$0xff]
    %v452 = vld [vmem:[#allocation5 + $0x710] sm:$0xff]
    %v453 = vld [vmem:[#allocation5 + $0x718] sm:$0xf]
    %v454 = vld [vmem:[#allocation5 + $0x71c] sm:$0xff]
    %v455 = vld [vmem:[#allocation5 + $0x724] sm:$0xff]
    %v456 = vld [vmem:[#allocation5 + $0x72c] sm:$0xff]
    %v457 = vld [vmem:[#allocation5 + $0x734] sm:$0xf]
    %v458 = vld [vmem:[#allocation5 + $0x738] sm:$0xff]
    %v459 = vld [vmem:[#allocation5 + $0x740] sm:$0xff]
    %v460 = vld [vmem:[#allocation5 + $0x748] sm:$0xff]
    %v461 = vld [vmem:[#allocation5 + $0x750] sm:$0xf]
    %v462 = vld [vmem:[#allocation5 + $0x754] sm:$0xff]
    %v463 = vld [vmem:[#allocation5 + $0x75c] sm:$0xff]
    %v464 = vld [vmem:[#allocation5 + $0x764] sm:$0xff]
    %v465 = vld [vmem:[#allocation5 + $0x76c] sm:$0xf]
    %v466 = vld [vmem:[#allocation5 + $0x770] sm:$0xff]
    %v467 = vld [vmem:[#allocation5 + $0x778] sm:$0xff]
    %v468 = vld [vmem:[#allocation5 + $0x780] sm:$0xff]
    %v469 = vld [vmem:[#allocation5 + $0x788] sm:$0xf]
    %v470 = vld [vmem:[#allocation5 + $0x78c] sm:$0xff]
    %v471 = vld [vmem:[#allocation5 + $0x794] sm:$0xff]
    %v472 = vld [vmem:[#allocation5 + $0x79c] sm:$0xff]
    %v473 = vld [vmem:[#allocation5 + $0x7a4] sm:$0xf]
    %v474 = vld [vmem:[#allocation5 + $0x7a8] sm:$0xff]
    %v475 = vld [vmem:[#allocation5 + $0x7b0] sm:$0xff]
    %v476 = vld [vmem:[#allocation5 + $0x7b8] sm:$0xff]
    %v477 = vld [vmem:[#allocation5 + $0x7c0] sm:$0xf]
    %v478 = vld [vmem:[#allocation5 + $0x7c4] sm:$0xff]
    %v479 = vld [vmem:[#allocation5 + $0x7cc] sm:$0xff]
    %v480 = vld [vmem:[#allocation5 + $0x7d4] sm:$0xff]
    %v481 = vld [vmem:[#allocation5 + $0x7dc] sm:$0xf]
    %v482 = vld [vmem:[#allocation5 + $0x7e0] sm:$0xff]
    %v483 = vld [vmem:[#allocation5 + $0x7e8] sm:$0xff]
    %v484 = vld [vmem:[#allocation5 + $0x7f0] sm:$0xff]
    %v485 = vld [vmem:[#allocation5 + $0x7f8] sm:$0xf]
    %v486 = vld [vmem:[#allocation5 + $0x7fc] sm:$0xff]
    %v487 = vld [vmem:[#allocation5 + $0x804] sm:$0xff]
    %v488 = vld [vmem:[#allocation5 + $0x80c] sm:$0xff]
    %v489 = vld [vmem:[#allocation5 + $0x814] sm:$0xf]
    %v490 = vld [vmem:[#allocation5 + $0x818] sm:$0xff]
    %v491 = vld [vmem:[#allocation5 + $0x820] sm:$0xff]
    %v492 = vld [vmem:[#allocation5 + $0x828] sm:$0xff]
    %v493 = vld [vmem:[#allocation5 + $0x830] sm:$0xf]
    %v494 = vld [vmem:[#allocation5 + $0x834] sm:$0xff]
    %v495 = vld [vmem:[#allocation5 + $0x83c] sm:$0xff]
    %v496 = vld [vmem:[#allocation5 + $0x844] sm:$0xff]
    %v497 = vld [vmem:[#allocation5 + $0x84c] sm:$0xf]
    %v498 = vld [vmem:[#allocation5 + $0x850] sm:$0xff]
    %v499 = vld [vmem:[#allocation5 + $0x858] sm:$0xff]
    %v500 = vld [vmem:[#allocation5 + $0x860] sm:$0xff]
    %v501 = vld [vmem:[#allocation5 + $0x868] sm:$0xf]
    %v502 = vld [vmem:[#allocation5 + $0x86c] sm:$0xff]
    %v503 = vld [vmem:[#allocation5 + $0x874] sm:$0xff]
    %v504 = vld [vmem:[#allocation5 + $0x87c] sm:$0xff]
    %v505 = vld [vmem:[#allocation5 + $0x884] sm:$0xf]
    %v506 = vld [vmem:[#allocation5 + $0x888] sm:$0xff]
    %v507 = vld [vmem:[#allocation5 + $0x890] sm:$0xff]
    %v508 = vld [vmem:[#allocation5 + $0x898] sm:$0xff]
    %v509 = vld [vmem:[#allocation5 + $0x8a0] sm:$0xf]
    %v510 = vld [vmem:[#allocation5 + $0x8a4] sm:$0xff]
    %v511 = vld [vmem:[#allocation5 + $0x8ac] sm:$0xff]
    %v512 = vld [vmem:[#allocation5 + $0x8b4] sm:$0xff]
    %v513 = vld [vmem:[#allocation5 + $0x8bc] sm:$0xf]
    %v514 = vld [vmem:[#allocation5 + $0x8c0] sm:$0xff]
    %v515 = vld [vmem:[#allocation5 + $0x8c8] sm:$0xff]
    %v516 = vld [vmem:[#allocation5 + $0x8d0] sm:$0xff]
    %v517 = vld [vmem:[#allocation5 + $0x8d8] sm:$0xf]
    %v518 = vld [vmem:[#allocation5 + $0x8dc] sm:$0xff]
    %v519 = vld [vmem:[#allocation5 + $0x8e4] sm:$0xff]
    %v520 = vld [vmem:[#allocation5 + $0x8ec] sm:$0xff]
    %v521 = vld [vmem:[#allocation5 + $0x8f4] sm:$0xf]
    %v522 = vld [vmem:[#allocation5 + $0x8f8] sm:$0xff]
    %v523 = vld [vmem:[#allocation5 + $0x900] sm:$0xff]
    %v524 = vld [vmem:[#allocation5 + $0x908] sm:$0xff]
    %v525 = vld [vmem:[#allocation5 + $0x910] sm:$0xf]
    %v526 = vld [vmem:[#allocation5 + $0x914] sm:$0xff]
    %v527 = vld [vmem:[#allocation5 + $0x91c] sm:$0xff]
    %v528 = vld [vmem:[#allocation5 + $0x924] sm:$0xff]
    %v529 = vld [vmem:[#allocation5 + $0x92c] sm:$0xf]
    %v530 = vld [vmem:[#allocation5 + $0x930] sm:$0xff]
    %v531 = vld [vmem:[#allocation5 + $0x938] sm:$0xff]
    %v532 = vld [vmem:[#allocation5 + $0x940] sm:$0xff]
    %v533 = vld [vmem:[#allocation5 + $0x948] sm:$0xf]
    %v534 = vld [vmem:[#allocation5 + $0x94c] sm:$0xff]
    %v535 = vld [vmem:[#allocation5 + $0x954] sm:$0xff]
    %v536 = vld [vmem:[#allocation5 + $0x95c] sm:$0xff]
    %v537 = vld [vmem:[#allocation5 + $0x964] sm:$0xf]
    %v538 = vld [vmem:[#allocation5 + $0x968] sm:$0xff]
    %v539 = vld [vmem:[#allocation5 + $0x970] sm:$0xff]
    %v540 = vld [vmem:[#allocation5 + $0x978] sm:$0xff]
    %v541 = vld [vmem:[#allocation5 + $0x980] sm:$0xf]
    %v542 = vld [vmem:[#allocation5 + $0x984] sm:$0xff]
    %v543 = vld [vmem:[#allocation5 + $0x98c] sm:$0xff]
    %v544 = vld [vmem:[#allocation5 + $0x994] sm:$0xff]
    %v545 = vld [vmem:[#allocation5 + $0x99c] sm:$0xf]
    %v546 = vld [vmem:[#allocation5 + $0x9a0] sm:$0xff]
    %v547 = vld [vmem:[#allocation5 + $0x9a8] sm:$0xff]
    %v548 = vld [vmem:[#allocation5 + $0x9b0] sm:$0xff]
    %v549 = vld [vmem:[#allocation5 + $0x9b8] sm:$0xf]
    %v550 = vld [vmem:[#allocation5 + $0x9bc] sm:$0xff]
    %v551 = vld [vmem:[#allocation5 + $0x9c4] sm:$0xff]
    %v552 = vld [vmem:[#allocation5 + $0x9cc] sm:$0xff]
    %v553 = vld [vmem:[#allocation5 + $0x9d4] sm:$0xf]
    %v554 = vld [vmem:[#allocation5 + $0x9d8] sm:$0xff]
    %v555 = vld [vmem:[#allocation5 + $0x9e0] sm:$0xff]
    %v556 = vld [vmem:[#allocation5 + $0x9e8] sm:$0xff]
    %v557 = vld [vmem:[#allocation5 + $0x9f0] sm:$0xf]
    %v558 = vld [vmem:[#allocation5 + $0x9f4] sm:$0xff]
    %v559 = vld [vmem:[#allocation5 + $0x9fc] sm:$0xff]
    %v560 = vld [vmem:[#allocation5 + $0xa04] sm:$0xff]
    %v561 = vld [vmem:[#allocation5 + $0xa0c] sm:$0xf]
    %v562 = vld [vmem:[#allocation5 + $0xa10] sm:$0xff]
    %v563 = vld [vmem:[#allocation5 + $0xa18] sm:$0xff]
    %v564 = vld [vmem:[#allocation5 + $0xa20] sm:$0xff]
    %v565 = vld [vmem:[#allocation5 + $0xa28] sm:$0xf]
    %v566 = vld [vmem:[#allocation5 + $0xa2c] sm:$0xff]
    %v567 = vld [vmem:[#allocation5 + $0xa34] sm:$0xff]
    %v568 = vld [vmem:[#allocation5 + $0xa3c] sm:$0xff]
    %v569 = vld [vmem:[#allocation5 + $0xa44] sm:$0xf]
    %v570 = vld [vmem:[#allocation5 + $0xa48] sm:$0xff]
    %v571 = vld [vmem:[#allocation5 + $0xa50] sm:$0xff]
    %v572 = vld [vmem:[#allocation5 + $0xa58] sm:$0xff]
    %v573 = vld [vmem:[#allocation5 + $0xa60] sm:$0xf]
    %v574 = vld [vmem:[#allocation5 + $0xa64] sm:$0xff]
    %v575 = vld [vmem:[#allocation5 + $0xa6c] sm:$0xff]
    %v576 = vld [vmem:[#allocation5 + $0xa74] sm:$0xff]
    %v577 = vld [vmem:[#allocation5 + $0xa7c] sm:$0xf]
    %v578 = vld [vmem:[#allocation5 + $0xa80] sm:$0xff]
    %v579 = vld [vmem:[#allocation5 + $0xa88] sm:$0xff]
    %v580 = vld [vmem:[#allocation5 + $0xa90] sm:$0xff]
    %v581 = vld [vmem:[#allocation5 + $0xa98] sm:$0xf]
    %v582 = vld [vmem:[#allocation5 + $0xa9c] sm:$0xff]
    %v583 = vld [vmem:[#allocation5 + $0xaa4] sm:$0xff]
    %v584 = vld [vmem:[#allocation5 + $0xaac] sm:$0xff]
    %v585 = vld [vmem:[#allocation5 + $0xab4] sm:$0xf]
    %v586 = vld [vmem:[#allocation7] sm:$0xff]
    %v588 = vlaneseq
    %v589 = vshrl.u32 %v588, 7
    %v590 = vsub.s32 0, %v589
    %v591 = vrot.slane %v586, %v590
    %v592 = vlaneseq
    %v593 = vshrl.u32 %v592, 7
    %v594 = vsub.s32 1, %v593
    %v595 = vrot.slane %v586, %v594
    %v596 = vlaneseq
    %v597 = vshrl.u32 %v596, 7
    %v598 = vsub.s32 2, %v597
    %v599 = vrot.slane %v586, %v598
    %v600 = vlaneseq
    %v601 = vshrl.u32 %v600, 7
    %v602 = vsub.s32 3, %v601
    %v603 = vrot.slane %v586, %v602
    %v604 = vlaneseq
    %v605 = vshrl.u32 %v604, 7
    %v606 = vsub.s32 4, %v605
    %v607 = vrot.slane %v586, %v606
    %v608 = vlaneseq
    %v609 = vshrl.u32 %v608, 7
    %v610 = vsub.s32 5, %v609
    %v611 = vrot.slane %v586, %v610
    %v612 = vlaneseq
    %v613 = vshrl.u32 %v612, 7
    %v614 = vsub.s32 6, %v613
    %v615 = vrot.slane %v586, %v614
    %v1015 = vunpack.c.l.b16 %v194
    %v1016 = vunpack.c.h.b16 %v194
    %v1017 = vunpack.c.l.b16 %v195
    %v1018 = vunpack.c.h.b16 %v195
    %v1019 = vunpack.c.l.b16 %v196
    %v1020 = vunpack.c.h.b16 %v196
    %v1021 = vunpack.c.l.b16 %v197
    %v1022 = vunpack.c.l.b16 %v198
    %v1023 = vunpack.c.h.b16 %v198
    %v1024 = vunpack.c.l.b16 %v199
    %v1025 = vunpack.c.h.b16 %v199
    %v1026 = vunpack.c.l.b16 %v200
    %v1027 = vunpack.c.h.b16 %v200
    %v1028 = vunpack.c.l.b16 %v201
    %v1029 = vunpack.c.l.b16 %v202
    %v1030 = vunpack.c.h.b16 %v202
    %v1031 = vunpack.c.l.b16 %v203
    %v1032 = vunpack.c.h.b16 %v203
    %v1033 = vunpack.c.l.b16 %v204
    %v1034 = vunpack.c.h.b16 %v204
    %v1035 = vunpack.c.l.b16 %v205
    %v1036 = vunpack.c.l.b16 %v206
    %v1037 = vunpack.c.h.b16 %v206
    %v1038 = vunpack.c.l.b16 %v207
    %v1039 = vunpack.c.h.b16 %v207
    %v1040 = vunpack.c.l.b16 %v208
    %v1041 = vunpack.c.h.b16 %v208
    %v1042 = vunpack.c.l.b16 %v209
    %v1043 = vunpack.c.l.b16 %v210
    %v1044 = vunpack.c.h.b16 %v210
    %v1045 = vunpack.c.l.b16 %v211
    %v1046 = vunpack.c.h.b16 %v211
    %v1047 = vunpack.c.l.b16 %v212
    %v1048 = vunpack.c.h.b16 %v212
    %v1049 = vunpack.c.l.b16 %v213
    %v1050 = vunpack.c.l.b16 %v214
    %v1051 = vunpack.c.h.b16 %v214
    %v1052 = vunpack.c.l.b16 %v215
    %v1053 = vunpack.c.h.b16 %v215
    %v1054 = vunpack.c.l.b16 %v216
    %v1055 = vunpack.c.h.b16 %v216
    %v1056 = vunpack.c.l.b16 %v217
    %v1057 = vunpack.c.l.b16 %v218
    %v1058 = vunpack.c.h.b16 %v218
    %v1059 = vunpack.c.l.b16 %v219
    %v1060 = vunpack.c.h.b16 %v219
    %v1061 = vunpack.c.l.b16 %v220
    %v1062 = vunpack.c.h.b16 %v220
    %v1063 = vunpack.c.l.b16 %v221
    %v1064 = vunpack.c.l.b16 %v222
    %v1065 = vunpack.c.h.b16 %v222
    %v1066 = vunpack.c.l.b16 %v223
    %v1067 = vunpack.c.h.b16 %v223
    %v1068 = vunpack.c.l.b16 %v224
    %v1069 = vunpack.c.h.b16 %v224
    %v1070 = vunpack.c.l.b16 %v225
    %v1071 = vunpack.c.l.b16 %v226
    %v1072 = vunpack.c.h.b16 %v226
    %v1073 = vunpack.c.l.b16 %v227
    %v1074 = vunpack.c.h.b16 %v227
    %v1075 = vunpack.c.l.b16 %v228
    %v1076 = vunpack.c.h.b16 %v228
    %v1077 = vunpack.c.l.b16 %v229
    %v1078 = vunpack.c.l.b16 %v230
    %v1079 = vunpack.c.h.b16 %v230
    %v1080 = vunpack.c.l.b16 %v231
    %v1081 = vunpack.c.h.b16 %v231
    %v1082 = vunpack.c.l.b16 %v232
    %v1083 = vunpack.c.h.b16 %v232
    %v1084 = vunpack.c.l.b16 %v233
    %v1085 = vunpack.c.l.b16 %v234
    %v1086 = vunpack.c.h.b16 %v234
    %v1087 = vunpack.c.l.b16 %v235
    %v1088 = vunpack.c.h.b16 %v235
    %v1089 = vunpack.c.l.b16 %v236
    %v1090 = vunpack.c.h.b16 %v236
    %v1091 = vunpack.c.l.b16 %v237
    %v1092 = vunpack.c.l.b16 %v238
    %v1093 = vunpack.c.h.b16 %v238
    %v1094 = vunpack.c.l.b16 %v239
    %v1095 = vunpack.c.h.b16 %v239
    %v1096 = vunpack.c.l.b16 %v240
    %v1097 = vunpack.c.h.b16 %v240
    %v1098 = vunpack.c.l.b16 %v241
    %v1099 = vunpack.c.l.b16 %v242
    %v1100 = vunpack.c.h.b16 %v242
    %v1101 = vunpack.c.l.b16 %v243
    %v1102 = vunpack.c.h.b16 %v243
    %v1103 = vunpack.c.l.b16 %v244
    %v1104 = vunpack.c.h.b16 %v244
    %v1105 = vunpack.c.l.b16 %v245
    %v1106 = vunpack.c.l.b16 %v246
    %v1107 = vunpack.c.h.b16 %v246
    %v1108 = vunpack.c.l.b16 %v247
    %v1109 = vunpack.c.h.b16 %v247
    %v1110 = vunpack.c.l.b16 %v248
    %v1111 = vunpack.c.h.b16 %v248
    %v1112 = vunpack.c.l.b16 %v249
    %v1113 = vunpack.c.l.b16 %v250
    %v1114 = vunpack.c.h.b16 %v250
    %v1115 = vunpack.c.l.b16 %v251
    %v1116 = vunpack.c.h.b16 %v251
    %v1117 = vunpack.c.l.b16 %v252
    %v1118 = vunpack.c.h.b16 %v252
    %v1119 = vunpack.c.l.b16 %v253
    %v1120 = vunpack.c.l.b16 %v254
    %v1121 = vunpack.c.h.b16 %v254
    %v1122 = vunpack.c.l.b16 %v255
    %v1123 = vunpack.c.h.b16 %v255
    %v1124 = vunpack.c.l.b16 %v256
    %v1125 = vunpack.c.h.b16 %v256
    %v1126 = vunpack.c.l.b16 %v257
    %v1127 = vunpack.c.l.b16 %v258
    %v1128 = vunpack.c.h.b16 %v258
    %v1129 = vunpack.c.l.b16 %v259
    %v1130 = vunpack.c.h.b16 %v259
    %v1131 = vunpack.c.l.b16 %v260
    %v1132 = vunpack.c.h.b16 %v260
    %v1133 = vunpack.c.l.b16 %v261
    %v1134 = vunpack.c.l.b16 %v262
    %v1135 = vunpack.c.h.b16 %v262
    %v1136 = vunpack.c.l.b16 %v263
    %v1137 = vunpack.c.h.b16 %v263
    %v1138 = vunpack.c.l.b16 %v264
    %v1139 = vunpack.c.h.b16 %v264
    %v1140 = vunpack.c.l.b16 %v265
    %v1141 = vunpack.c.l.b16 %v266
    %v1142 = vunpack.c.h.b16 %v266
    %v1143 = vunpack.c.l.b16 %v267
    %v1144 = vunpack.c.h.b16 %v267
    %v1145 = vunpack.c.l.b16 %v268
    %v1146 = vunpack.c.h.b16 %v268
    %v1147 = vunpack.c.l.b16 %v269
    %v1148 = vunpack.c.l.b16 %v270
    %v1149 = vunpack.c.h.b16 %v270
    %v1150 = vunpack.c.l.b16 %v271
    %v1151 = vunpack.c.h.b16 %v271
    %v1152 = vunpack.c.l.b16 %v272
    %v1153 = vunpack.c.h.b16 %v272
    %v1154 = vunpack.c.l.b16 %v273
    %v1155 = vunpack.c.l.b16 %v274
    %v1156 = vunpack.c.h.b16 %v274
    %v1157 = vunpack.c.l.b16 %v275
    %v1158 = vunpack.c.h.b16 %v275
    %v1159 = vunpack.c.l.b16 %v276
    %v1160 = vunpack.c.h.b16 %v276
    %v1161 = vunpack.c.l.b16 %v277
    %v1162 = vunpack.c.l.b16 %v278
    %v1163 = vunpack.c.h.b16 %v278
    %v1164 = vunpack.c.l.b16 %v279
    %v1165 = vunpack.c.h.b16 %v279
    %v1166 = vunpack.c.l.b16 %v280
    %v1167 = vunpack.c.h.b16 %v280
    %v1168 = vunpack.c.l.b16 %v281
    %v1169 = vunpack.c.l.b16 %v282
    %v1170 = vunpack.c.h.b16 %v282
    %v1171 = vunpack.c.l.b16 %v283
    %v1172 = vunpack.c.h.b16 %v283
    %v1173 = vunpack.c.l.b16 %v284
    %v1174 = vunpack.c.h.b16 %v284
    %v1175 = vunpack.c.l.b16 %v285
    %v1176 = vunpack.c.l.b16 %v286
    %v1177 = vunpack.c.h.b16 %v286
    %v1178 = vunpack.c.l.b16 %v287
    %v1179 = vunpack.c.h.b16 %v287
    %v1180 = vunpack.c.l.b16 %v288
    %v1181 = vunpack.c.h.b16 %v288
    %v1182 = vunpack.c.l.b16 %v289
    %v1183 = vunpack.c.l.b16 %v290
    %v1184 = vunpack.c.h.b16 %v290
    %v1185 = vunpack.c.l.b16 %v291
    %v1186 = vunpack.c.h.b16 %v291
    %v1187 = vunpack.c.l.b16 %v292
    %v1188 = vunpack.c.h.b16 %v292
    %v1189 = vunpack.c.l.b16 %v293
    %v1190 = vunpack.c.l.b16 %v294
    %v1191 = vunpack.c.h.b16 %v294
    %v1192 = vunpack.c.l.b16 %v295
    %v1193 = vunpack.c.h.b16 %v295
    %v1194 = vunpack.c.l.b16 %v296
    %v1195 = vunpack.c.h.b16 %v296
    %v1196 = vunpack.c.l.b16 %v297
    %v1197 = vunpack.c.l.b16 %v298
    %v1198 = vunpack.c.h.b16 %v298
    %v1199 = vunpack.c.l.b16 %v299
    %v1200 = vunpack.c.h.b16 %v299
    %v1201 = vunpack.c.l.b16 %v300
    %v1202 = vunpack.c.h.b16 %v300
    %v1203 = vunpack.c.l.b16 %v301
    %v1204 = vunpack.c.l.b16 %v302
    %v1205 = vunpack.c.h.b16 %v302
    %v1206 = vunpack.c.l.b16 %v303
    %v1207 = vunpack.c.h.b16 %v303
    %v1208 = vunpack.c.l.b16 %v304
    %v1209 = vunpack.c.h.b16 %v304
    %v1210 = vunpack.c.l.b16 %v305
    %v1211 = vunpack.c.l.b16 %v306
    %v1212 = vunpack.c.h.b16 %v306
    %v1213 = vunpack.c.l.b16 %v307
    %v1214 = vunpack.c.h.b16 %v307
    %v1215 = vunpack.c.l.b16 %v308
    %v1216 = vunpack.c.h.b16 %v308
    %v1217 = vunpack.c.l.b16 %v309
    %v1218 = vunpack.c.l.b16 %v310
    %v1219 = vunpack.c.h.b16 %v310
    %v1220 = vunpack.c.l.b16 %v311
    %v1221 = vunpack.c.h.b16 %v311
    %v1222 = vunpack.c.l.b16 %v312
    %v1223 = vunpack.c.h.b16 %v312
    %v1224 = vunpack.c.l.b16 %v313
    %v1225 = vunpack.c.l.b16 %v314
    %v1226 = vunpack.c.h.b16 %v314
    %v1227 = vunpack.c.l.b16 %v315
    %v1228 = vunpack.c.h.b16 %v315
    %v1229 = vunpack.c.l.b16 %v316
    %v1230 = vunpack.c.h.b16 %v316
    %v1231 = vunpack.c.l.b16 %v317
    %v1232 = vunpack.c.l.b16 %v318
    %v1233 = vunpack.c.h.b16 %v318
    %v1234 = vunpack.c.l.b16 %v319
    %v1235 = vunpack.c.h.b16 %v319
    %v1236 = vunpack.c.l.b16 %v320
    %v1237 = vunpack.c.h.b16 %v320
    %v1238 = vunpack.c.l.b16 %v321
    %v1239 = vunpack.c.l.b16 %v322
    %v1240 = vunpack.c.h.b16 %v322
    %v1241 = vunpack.c.l.b16 %v323
    %v1242 = vunpack.c.h.b16 %v323
    %v1243 = vunpack.c.l.b16 %v324
    %v1244 = vunpack.c.h.b16 %v324
    %v1245 = vunpack.c.l.b16 %v325
    %v1246 = vunpack.c.l.b16 %v326
    %v1247 = vunpack.c.h.b16 %v326
    %v1248 = vunpack.c.l.b16 %v327
    %v1249 = vunpack.c.h.b16 %v327
    %v1250 = vunpack.c.l.b16 %v328
    %v1251 = vunpack.c.h.b16 %v328
    %v1252 = vunpack.c.l.b16 %v329
    %v1253 = vunpack.c.l.b16 %v330
    %v1254 = vunpack.c.h.b16 %v330
    %v1255 = vunpack.c.l.b16 %v331
    %v1256 = vunpack.c.h.b16 %v331
    %v1257 = vunpack.c.l.b16 %v332
    %v1258 = vunpack.c.h.b16 %v332
    %v1259 = vunpack.c.l.b16 %v333
    %v1260 = vunpack.c.l.b16 %v334
    %v1261 = vunpack.c.h.b16 %v334
    %v1262 = vunpack.c.l.b16 %v335
    %v1263 = vunpack.c.h.b16 %v335
    %v1264 = vunpack.c.l.b16 %v336
    %v1265 = vunpack.c.h.b16 %v336
    %v1266 = vunpack.c.l.b16 %v337
    %v1267 = vunpack.c.l.b16 %v338
    %v1268 = vunpack.c.h.b16 %v338
    %v1269 = vunpack.c.l.b16 %v339
    %v1270 = vunpack.c.h.b16 %v339
    %v1271 = vunpack.c.l.b16 %v340
    %v1272 = vunpack.c.h.b16 %v340
    %v1273 = vunpack.c.l.b16 %v341
    %v1274 = vunpack.c.l.b16 %v342
    %v1275 = vunpack.c.h.b16 %v342
    %v1276 = vunpack.c.l.b16 %v343
    %v1277 = vunpack.c.h.b16 %v343
    %v1278 = vunpack.c.l.b16 %v344
    %v1279 = vunpack.c.h.b16 %v344
    %v1280 = vunpack.c.l.b16 %v345
    %v1281 = vunpack.c.l.b16 %v346
    %v1282 = vunpack.c.h.b16 %v346
    %v1283 = vunpack.c.l.b16 %v347
    %v1284 = vunpack.c.h.b16 %v347
    %v1285 = vunpack.c.l.b16 %v348
    %v1286 = vunpack.c.h.b16 %v348
    %v1287 = vunpack.c.l.b16 %v349
    %v1288 = vunpack.c.l.b16 %v350
    %v1289 = vunpack.c.h.b16 %v350
    %v1290 = vunpack.c.l.b16 %v351
    %v1291 = vunpack.c.h.b16 %v351
    %v1292 = vunpack.c.l.b16 %v352
    %v1293 = vunpack.c.h.b16 %v352
    %v1294 = vunpack.c.l.b16 %v353
    %v1295 = vunpack.c.l.b16 %v354
    %v1296 = vunpack.c.h.b16 %v354
    %v1297 = vunpack.c.l.b16 %v355
    %v1298 = vunpack.c.h.b16 %v355
    %v1299 = vunpack.c.l.b16 %v356
    %v1300 = vunpack.c.h.b16 %v356
    %v1301 = vunpack.c.l.b16 %v357
    %v1302 = vunpack.c.l.b16 %v358
    %v1303 = vunpack.c.h.b16 %v358
    %v1304 = vunpack.c.l.b16 %v359
    %v1305 = vunpack.c.h.b16 %v359
    %v1306 = vunpack.c.l.b16 %v360
    %v1307 = vunpack.c.h.b16 %v360
    %v1308 = vunpack.c.l.b16 %v361
    %v1309 = vunpack.c.l.b16 %v362
    %v1310 = vunpack.c.h.b16 %v362
    %v1311 = vunpack.c.l.b16 %v363
    %v1312 = vunpack.c.h.b16 %v363
    %v1313 = vunpack.c.l.b16 %v364
    %v1314 = vunpack.c.h.b16 %v364
    %v1315 = vunpack.c.l.b16 %v365
    %v1316 = vunpack.c.l.b16 %v366
    %v1317 = vunpack.c.h.b16 %v366
    %v1318 = vunpack.c.l.b16 %v367
    %v1319 = vunpack.c.h.b16 %v367
    %v1320 = vunpack.c.l.b16 %v368
    %v1321 = vunpack.c.h.b16 %v368
    %v1322 = vunpack.c.l.b16 %v369
    %v1323 = vunpack.c.l.b16 %v370
    %v1324 = vunpack.c.h.b16 %v370
    %v1325 = vunpack.c.l.b16 %v371
    %v1326 = vunpack.c.h.b16 %v371
    %v1327 = vunpack.c.l.b16 %v372
    %v1328 = vunpack.c.h.b16 %v372
    %v1329 = vunpack.c.l.b16 %v373
    %v1330 = vunpack.c.l.b16 %v374
    %v1331 = vunpack.c.h.b16 %v374
    %v1332 = vunpack.c.l.b16 %v375
    %v1333 = vunpack.c.h.b16 %v375
    %v1334 = vunpack.c.l.b16 %v376
    %v1335 = vunpack.c.h.b16 %v376
    %v1336 = vunpack.c.l.b16 %v377
    %v1337 = vunpack.c.l.b16 %v378
    %v1338 = vunpack.c.h.b16 %v378
    %v1339 = vunpack.c.l.b16 %v379
    %v1340 = vunpack.c.h.b16 %v379
    %v1341 = vunpack.c.l.b16 %v380
    %v1342 = vunpack.c.h.b16 %v380
    %v1343 = vunpack.c.l.b16 %v381
    %v1344 = vunpack.c.l.b16 %v382
    %v1345 = vunpack.c.h.b16 %v382
    %v1346 = vunpack.c.l.b16 %v383
    %v1347 = vunpack.c.h.b16 %v383
    %v1348 = vunpack.c.l.b16 %v384
    %v1349 = vunpack.c.h.b16 %v384
    %v1350 = vunpack.c.l.b16 %v385
    %v1351 = vunpack.c.l.b16 %v386
    %v1352 = vunpack.c.h.b16 %v386
    %v1353 = vunpack.c.l.b16 %v387
    %v1354 = vunpack.c.h.b16 %v387
    %v1355 = vunpack.c.l.b16 %v388
    %v1356 = vunpack.c.h.b16 %v388
    %v1357 = vunpack.c.l.b16 %v389
    %v1358 = vunpack.c.l.b16 %v390
    %v1359 = vunpack.c.h.b16 %v390
    %v1360 = vunpack.c.l.b16 %v391
    %v1361 = vunpack.c.h.b16 %v391
    %v1362 = vunpack.c.l.b16 %v392
    %v1363 = vunpack.c.h.b16 %v392
    %v1364 = vunpack.c.l.b16 %v393
    %v1365 = vunpack.c.l.b16 %v394
    %v1366 = vunpack.c.h.b16 %v394
    %v1367 = vunpack.c.l.b16 %v395
    %v1368 = vunpack.c.h.b16 %v395
    %v1369 = vunpack.c.l.b16 %v396
    %v1370 = vunpack.c.h.b16 %v396
    %v1371 = vunpack.c.l.b16 %v397
    %v1372 = vunpack.c.l.b16 %v398
    %v1373 = vunpack.c.h.b16 %v398
    %v1374 = vunpack.c.l.b16 %v399
    %v1375 = vunpack.c.h.b16 %v399
    %v1376 = vunpack.c.l.b16 %v400
    %v1377 = vunpack.c.h.b16 %v400
    %v1378 = vunpack.c.l.b16 %v401
    %v1379 = vunpack.c.l.b16 %v402
    %v1380 = vunpack.c.h.b16 %v402
    %v1381 = vunpack.c.l.b16 %v403
    %v1382 = vunpack.c.h.b16 %v403
    %v1383 = vunpack.c.l.b16 %v404
    %v1384 = vunpack.c.h.b16 %v404
    %v1385 = vunpack.c.l.b16 %v405
    %v1386 = vunpack.c.l.b16 %v406
    %v1387 = vunpack.c.h.b16 %v406
    %v1388 = vunpack.c.l.b16 %v407
    %v1389 = vunpack.c.h.b16 %v407
    %v1390 = vunpack.c.l.b16 %v408
    %v1391 = vunpack.c.h.b16 %v408
    %v1392 = vunpack.c.l.b16 %v409
    %v1393 = vunpack.c.l.b16 %v410
    %v1394 = vunpack.c.h.b16 %v410
    %v1395 = vunpack.c.l.b16 %v411
    %v1396 = vunpack.c.h.b16 %v411
    %v1397 = vunpack.c.l.b16 %v412
    %v1398 = vunpack.c.h.b16 %v412
    %v1399 = vunpack.c.l.b16 %v413
    %v1400 = vunpack.c.l.b16 %v414
    %v1401 = vunpack.c.h.b16 %v414
    %v1402 = vunpack.c.l.b16 %v415
    %v1403 = vunpack.c.h.b16 %v415
    %v1404 = vunpack.c.l.b16 %v416
    %v1405 = vunpack.c.h.b16 %v416
    %v1406 = vunpack.c.l.b16 %v417
    %v1407 = vunpack.c.l.b16 %v418
    %v1408 = vunpack.c.h.b16 %v418
    %v1409 = vunpack.c.l.b16 %v419
    %v1410 = vunpack.c.h.b16 %v419
    %v1411 = vunpack.c.l.b16 %v420
    %v1412 = vunpack.c.h.b16 %v420
    %v1413 = vunpack.c.l.b16 %v421
    %v1414 = vunpack.c.l.b16 %v422
    %v1415 = vunpack.c.h.b16 %v422
    %v1416 = vunpack.c.l.b16 %v423
    %v1417 = vunpack.c.h.b16 %v423
    %v1418 = vunpack.c.l.b16 %v424
    %v1419 = vunpack.c.h.b16 %v424
    %v1420 = vunpack.c.l.b16 %v425
    %v1421 = vunpack.c.l.b16 %v426
    %v1422 = vunpack.c.h.b16 %v426
    %v1423 = vunpack.c.l.b16 %v427
    %v1424 = vunpack.c.h.b16 %v427
    %v1425 = vunpack.c.l.b16 %v428
    %v1426 = vunpack.c.h.b16 %v428
    %v1427 = vunpack.c.l.b16 %v429
    %v1428 = vunpack.c.l.b16 %v430
    %v1429 = vunpack.c.h.b16 %v430
    %v1430 = vunpack.c.l.b16 %v431
    %v1431 = vunpack.c.h.b16 %v431
    %v1432 = vunpack.c.l.b16 %v432
    %v1433 = vunpack.c.h.b16 %v432
    %v1434 = vunpack.c.l.b16 %v433
    %v1435 = vunpack.c.l.b16 %v434
    %v1436 = vunpack.c.h.b16 %v434
    %v1437 = vunpack.c.l.b16 %v435
    %v1438 = vunpack.c.h.b16 %v435
    %v1439 = vunpack.c.l.b16 %v436
    %v1440 = vunpack.c.h.b16 %v436
    %v1441 = vunpack.c.l.b16 %v437
    %v1442 = vunpack.c.l.b16 %v438
    %v1443 = vunpack.c.h.b16 %v438
    %v1444 = vunpack.c.l.b16 %v439
    %v1445 = vunpack.c.h.b16 %v439
    %v1446 = vunpack.c.l.b16 %v440
    %v1447 = vunpack.c.h.b16 %v440
    %v1448 = vunpack.c.l.b16 %v441
    %v1449 = vunpack.c.l.b16 %v442
    %v1450 = vunpack.c.h.b16 %v442
    %v1451 = vunpack.c.l.b16 %v443
    %v1452 = vunpack.c.h.b16 %v443
    %v1453 = vunpack.c.l.b16 %v444
    %v1454 = vunpack.c.h.b16 %v444
    %v1455 = vunpack.c.l.b16 %v445
    %v1456 = vunpack.c.l.b16 %v446
    %v1457 = vunpack.c.h.b16 %v446
    %v1458 = vunpack.c.l.b16 %v447
    %v1459 = vunpack.c.h.b16 %v447
    %v1460 = vunpack.c.l.b16 %v448
    %v1461 = vunpack.c.h.b16 %v448
    %v1462 = vunpack.c.l.b16 %v449
    %v1463 = vunpack.c.l.b16 %v450
    %v1464 = vunpack.c.h.b16 %v450
    %v1465 = vunpack.c.l.b16 %v451
    %v1466 = vunpack.c.h.b16 %v451
    %v1467 = vunpack.c.l.b16 %v452
    %v1468 = vunpack.c.h.b16 %v452
    %v1469 = vunpack.c.l.b16 %v453
    %v1470 = vunpack.c.l.b16 %v454
    %v1471 = vunpack.c.h.b16 %v454
    %v1472 = vunpack.c.l.b16 %v455
    %v1473 = vunpack.c.h.b16 %v455
    %v1474 = vunpack.c.l.b16 %v456
    %v1475 = vunpack.c.h.b16 %v456
    %v1476 = vunpack.c.l.b16 %v457
    %v1477 = vunpack.c.l.b16 %v458
    %v1478 = vunpack.c.h.b16 %v458
    %v1479 = vunpack.c.l.b16 %v459
    %v1480 = vunpack.c.h.b16 %v459
    %v1481 = vunpack.c.l.b16 %v460
    %v1482 = vunpack.c.h.b16 %v460
    %v1483 = vunpack.c.l.b16 %v461
    %v1484 = vunpack.c.l.b16 %v462
    %v1485 = vunpack.c.h.b16 %v462
    %v1486 = vunpack.c.l.b16 %v463
    %v1487 = vunpack.c.h.b16 %v463
    %v1488 = vunpack.c.l.b16 %v464
    %v1489 = vunpack.c.h.b16 %v464
    %v1490 = vunpack.c.l.b16 %v465
    %v1491 = vunpack.c.l.b16 %v466
    %v1492 = vunpack.c.h.b16 %v466
    %v1493 = vunpack.c.l.b16 %v467
    %v1494 = vunpack.c.h.b16 %v467
    %v1495 = vunpack.c.l.b16 %v468
    %v1496 = vunpack.c.h.b16 %v468
    %v1497 = vunpack.c.l.b16 %v469
    %v1498 = vunpack.c.l.b16 %v470
    %v1499 = vunpack.c.h.b16 %v470
    %v1500 = vunpack.c.l.b16 %v471
    %v1501 = vunpack.c.h.b16 %v471
    %v1502 = vunpack.c.l.b16 %v472
    %v1503 = vunpack.c.h.b16 %v472
    %v1504 = vunpack.c.l.b16 %v473
    %v1505 = vunpack.c.l.b16 %v474
    %v1506 = vunpack.c.h.b16 %v474
    %v1507 = vunpack.c.l.b16 %v475
    %v1508 = vunpack.c.h.b16 %v475
    %v1509 = vunpack.c.l.b16 %v476
    %v1510 = vunpack.c.h.b16 %v476
    %v1511 = vunpack.c.l.b16 %v477
    %v1512 = vunpack.c.l.b16 %v478
    %v1513 = vunpack.c.h.b16 %v478
    %v1514 = vunpack.c.l.b16 %v479
    %v1515 = vunpack.c.h.b16 %v479
    %v1516 = vunpack.c.l.b16 %v480
    %v1517 = vunpack.c.h.b16 %v480
    %v1518 = vunpack.c.l.b16 %v481
    %v1519 = vunpack.c.l.b16 %v482
    %v1520 = vunpack.c.h.b16 %v482
    %v1521 = vunpack.c.l.b16 %v483
    %v1522 = vunpack.c.h.b16 %v483
    %v1523 = vunpack.c.l.b16 %v484
    %v1524 = vunpack.c.h.b16 %v484
    %v1525 = vunpack.c.l.b16 %v485
    %v1526 = vunpack.c.l.b16 %v486
    %v1527 = vunpack.c.h.b16 %v486
    %v1528 = vunpack.c.l.b16 %v487
    %v1529 = vunpack.c.h.b16 %v487
    %v1530 = vunpack.c.l.b16 %v488
    %v1531 = vunpack.c.h.b16 %v488
    %v1532 = vunpack.c.l.b16 %v489
    %v1533 = vunpack.c.l.b16 %v490
    %v1534 = vunpack.c.h.b16 %v490
    %v1535 = vunpack.c.l.b16 %v491
    %v1536 = vunpack.c.h.b16 %v491
    %v1537 = vunpack.c.l.b16 %v492
    %v1538 = vunpack.c.h.b16 %v492
    %v1539 = vunpack.c.l.b16 %v493
    %v1540 = vunpack.c.l.b16 %v494
    %v1541 = vunpack.c.h.b16 %v494
    %v1542 = vunpack.c.l.b16 %v495
    %v1543 = vunpack.c.h.b16 %v495
    %v1544 = vunpack.c.l.b16 %v496
    %v1545 = vunpack.c.h.b16 %v496
    %v1546 = vunpack.c.l.b16 %v497
    %v1547 = vunpack.c.l.b16 %v498
    %v1548 = vunpack.c.h.b16 %v498
    %v1549 = vunpack.c.l.b16 %v499
    %v1550 = vunpack.c.h.b16 %v499
    %v1551 = vunpack.c.l.b16 %v500
    %v1552 = vunpack.c.h.b16 %v500
    %v1553 = vunpack.c.l.b16 %v501
    %v1554 = vunpack.c.l.b16 %v502
    %v1555 = vunpack.c.h.b16 %v502
    %v1556 = vunpack.c.l.b16 %v503
    %v1557 = vunpack.c.h.b16 %v503
    %v1558 = vunpack.c.l.b16 %v504
    %v1559 = vunpack.c.h.b16 %v504
    %v1560 = vunpack.c.l.b16 %v505
    %v1561 = vunpack.c.l.b16 %v506
    %v1562 = vunpack.c.h.b16 %v506
    %v1563 = vunpack.c.l.b16 %v507
    %v1564 = vunpack.c.h.b16 %v507
    %v1565 = vunpack.c.l.b16 %v508
    %v1566 = vunpack.c.h.b16 %v508
    %v1567 = vunpack.c.l.b16 %v509
    %v1568 = vunpack.c.l.b16 %v510
    %v1569 = vunpack.c.h.b16 %v510
    %v1570 = vunpack.c.l.b16 %v511
    %v1571 = vunpack.c.h.b16 %v511
    %v1572 = vunpack.c.l.b16 %v512
    %v1573 = vunpack.c.h.b16 %v512
    %v1574 = vunpack.c.l.b16 %v513
    %v1575 = vunpack.c.l.b16 %v514
    %v1576 = vunpack.c.h.b16 %v514
    %v1577 = vunpack.c.l.b16 %v515
    %v1578 = vunpack.c.h.b16 %v515
    %v1579 = vunpack.c.l.b16 %v516
    %v1580 = vunpack.c.h.b16 %v516
    %v1581 = vunpack.c.l.b16 %v517
    %v1582 = vunpack.c.l.b16 %v518
    %v1583 = vunpack.c.h.b16 %v518
    %v1584 = vunpack.c.l.b16 %v519
    %v1585 = vunpack.c.h.b16 %v519
    %v1586 = vunpack.c.l.b16 %v520
    %v1587 = vunpack.c.h.b16 %v520
    %v1588 = vunpack.c.l.b16 %v521
    %v1589 = vunpack.c.l.b16 %v522
    %v1590 = vunpack.c.h.b16 %v522
    %v1591 = vunpack.c.l.b16 %v523
    %v1592 = vunpack.c.h.b16 %v523
    %v1593 = vunpack.c.l.b16 %v524
    %v1594 = vunpack.c.h.b16 %v524
    %v1595 = vunpack.c.l.b16 %v525
    %v1596 = vunpack.c.l.b16 %v526
    %v1597 = vunpack.c.h.b16 %v526
    %v1598 = vunpack.c.l.b16 %v527
    %v1599 = vunpack.c.h.b16 %v527
    %v1600 = vunpack.c.l.b16 %v528
    %v1601 = vunpack.c.h.b16 %v528
    %v1602 = vunpack.c.l.b16 %v529
    %v1603 = vunpack.c.l.b16 %v530
    %v1604 = vunpack.c.h.b16 %v530
    %v1605 = vunpack.c.l.b16 %v531
    %v1606 = vunpack.c.h.b16 %v531
    %v1607 = vunpack.c.l.b16 %v532
    %v1608 = vunpack.c.h.b16 %v532
    %v1609 = vunpack.c.l.b16 %v533
    %v1610 = vunpack.c.l.b16 %v534
    %v1611 = vunpack.c.h.b16 %v534
    %v1612 = vunpack.c.l.b16 %v535
    %v1613 = vunpack.c.h.b16 %v535
    %v1614 = vunpack.c.l.b16 %v536
    %v1615 = vunpack.c.h.b16 %v536
    %v1616 = vunpack.c.l.b16 %v537
    %v1617 = vunpack.c.l.b16 %v538
    %v1618 = vunpack.c.h.b16 %v538
    %v1619 = vunpack.c.l.b16 %v539
    %v1620 = vunpack.c.h.b16 %v539
    %v1621 = vunpack.c.l.b16 %v540
    %v1622 = vunpack.c.h.b16 %v540
    %v1623 = vunpack.c.l.b16 %v541
    %v1624 = vunpack.c.l.b16 %v542
    %v1625 = vunpack.c.h.b16 %v542
    %v1626 = vunpack.c.l.b16 %v543
    %v1627 = vunpack.c.h.b16 %v543
    %v1628 = vunpack.c.l.b16 %v544
    %v1629 = vunpack.c.h.b16 %v544
    %v1630 = vunpack.c.l.b16 %v545
    %v1631 = vunpack.c.l.b16 %v546
    %v1632 = vunpack.c.h.b16 %v546
    %v1633 = vunpack.c.l.b16 %v547
    %v1634 = vunpack.c.h.b16 %v547
    %v1635 = vunpack.c.l.b16 %v548
    %v1636 = vunpack.c.h.b16 %v548
    %v1637 = vunpack.c.l.b16 %v549
    %v1638 = vunpack.c.l.b16 %v550
    %v1639 = vunpack.c.h.b16 %v550
    %v1640 = vunpack.c.l.b16 %v551
    %v1641 = vunpack.c.h.b16 %v551
    %v1642 = vunpack.c.l.b16 %v552
    %v1643 = vunpack.c.h.b16 %v552
    %v1644 = vunpack.c.l.b16 %v553
    %v1645 = vunpack.c.l.b16 %v554
    %v1646 = vunpack.c.h.b16 %v554
    %v1647 = vunpack.c.l.b16 %v555
    %v1648 = vunpack.c.h.b16 %v555
    %v1649 = vunpack.c.l.b16 %v556
    %v1650 = vunpack.c.h.b16 %v556
    %v1651 = vunpack.c.l.b16 %v557
    %v1652 = vunpack.c.l.b16 %v558
    %v1653 = vunpack.c.h.b16 %v558
    %v1654 = vunpack.c.l.b16 %v559
    %v1655 = vunpack.c.h.b16 %v559
    %v1656 = vunpack.c.l.b16 %v560
    %v1657 = vunpack.c.h.b16 %v560
    %v1658 = vunpack.c.l.b16 %v561
    %v1659 = vunpack.c.l.b16 %v562
    %v1660 = vunpack.c.h.b16 %v562
    %v1661 = vunpack.c.l.b16 %v563
    %v1662 = vunpack.c.h.b16 %v563
    %v1663 = vunpack.c.l.b16 %v564
    %v1664 = vunpack.c.h.b16 %v564
    %v1665 = vunpack.c.l.b16 %v565
    %v1666 = vunpack.c.l.b16 %v566
    %v1667 = vunpack.c.h.b16 %v566
    %v1668 = vunpack.c.l.b16 %v567
    %v1669 = vunpack.c.h.b16 %v567
    %v1670 = vunpack.c.l.b16 %v568
    %v1671 = vunpack.c.h.b16 %v568
    %v1672 = vunpack.c.l.b16 %v569
    %v1673 = vunpack.c.l.b16 %v570
    %v1674 = vunpack.c.h.b16 %v570
    %v1675 = vunpack.c.l.b16 %v571
    %v1676 = vunpack.c.h.b16 %v571
    %v1677 = vunpack.c.l.b16 %v572
    %v1678 = vunpack.c.h.b16 %v572
    %v1679 = vunpack.c.l.b16 %v573
    %v1680 = vunpack.c.l.b16 %v574
    %v1681 = vunpack.c.h.b16 %v574
    %v1682 = vunpack.c.l.b16 %v575
    %v1683 = vunpack.c.h.b16 %v575
    %v1684 = vunpack.c.l.b16 %v576
    %v1685 = vunpack.c.h.b16 %v576
    %v1686 = vunpack.c.l.b16 %v577
    %v1687 = vunpack.c.l.b16 %v578
    %v1688 = vunpack.c.h.b16 %v578
    %v1689 = vunpack.c.l.b16 %v579
    %v1690 = vunpack.c.h.b16 %v579
    %v1691 = vunpack.c.l.b16 %v580
    %v1692 = vunpack.c.h.b16 %v580
    %v1693 = vunpack.c.l.b16 %v581
    %v1694 = vunpack.c.l.b16 %v582
    %v1695 = vunpack.c.h.b16 %v582
    %v1696 = vunpack.c.l.b16 %v583
    %v1697 = vunpack.c.h.b16 %v583
    %v1698 = vunpack.c.l.b16 %v584
    %v1699 = vunpack.c.h.b16 %v584
    %v1700 = vunpack.c.l.b16 %v585
    %v1701 = vpack.c.b16 %v1022, %v1015
    %v1702 = vpack.c.b16 %v1023, %v1016
    %v1703 = vpack.c.b16 %v1024, %v1017
    %v1704 = vpack.c.b16 %v1025, %v1018
    %v1705 = vpack.c.b16 %v1026, %v1019
    %v1706 = vpack.c.b16 %v1027, %v1020
    %v1707 = vpack.c.b16 %v1028, %v1021
    %v1708 = vpack.c.b16 %v1036, %v1029
    %v1709 = vpack.c.b16 %v1037, %v1030
    %v1710 = vpack.c.b16 %v1038, %v1031
    %v1711 = vpack.c.b16 %v1039, %v1032
    %v1712 = vpack.c.b16 %v1040, %v1033
    %v1713 = vpack.c.b16 %v1041, %v1034
    %v1714 = vpack.c.b16 %v1042, %v1035
    %v1715 = vpack.c.b16 %v1050, %v1043
    %v1716 = vpack.c.b16 %v1051, %v1044
    %v1717 = vpack.c.b16 %v1052, %v1045
    %v1718 = vpack.c.b16 %v1053, %v1046
    %v1719 = vpack.c.b16 %v1054, %v1047
    %v1720 = vpack.c.b16 %v1055, %v1048
    %v1721 = vpack.c.b16 %v1056, %v1049
    %v1722 = vpack.c.b16 %v1064, %v1057
    %v1723 = vpack.c.b16 %v1065, %v1058
    %v1724 = vpack.c.b16 %v1066, %v1059
    %v1725 = vpack.c.b16 %v1067, %v1060
    %v1726 = vpack.c.b16 %v1068, %v1061
    %v1727 = vpack.c.b16 %v1069, %v1062
    %v1728 = vpack.c.b16 %v1070, %v1063
    %v1729 = vpack.c.b16 %v1078, %v1071
    %v1730 = vpack.c.b16 %v1079, %v1072
    %v1731 = vpack.c.b16 %v1080, %v1073
    %v1732 = vpack.c.b16 %v1081, %v1074
    %v1733 = vpack.c.b16 %v1082, %v1075
    %v1734 = vpack.c.b16 %v1083, %v1076
    %v1735 = vpack.c.b16 %v1084, %v1077
    %v1736 = vpack.c.b16 %v1092, %v1085
    %v1737 = vpack.c.b16 %v1093, %v1086
    %v1738 = vpack.c.b16 %v1094, %v1087
    %v1739 = vpack.c.b16 %v1095, %v1088
    %v1740 = vpack.c.b16 %v1096, %v1089
    %v1741 = vpack.c.b16 %v1097, %v1090
    %v1742 = vpack.c.b16 %v1098, %v1091
    %v1743 = vpack.c.b16 %v1106, %v1099
    %v1744 = vpack.c.b16 %v1107, %v1100
    %v1745 = vpack.c.b16 %v1108, %v1101
    %v1746 = vpack.c.b16 %v1109, %v1102
    %v1747 = vpack.c.b16 %v1110, %v1103
    %v1748 = vpack.c.b16 %v1111, %v1104
    %v1749 = vpack.c.b16 %v1112, %v1105
    %v1750 = vpack.c.b16 %v1120, %v1113
    %v1751 = vpack.c.b16 %v1121, %v1114
    %v1752 = vpack.c.b16 %v1122, %v1115
    %v1753 = vpack.c.b16 %v1123, %v1116
    %v1754 = vpack.c.b16 %v1124, %v1117
    %v1755 = vpack.c.b16 %v1125, %v1118
    %v1756 = vpack.c.b16 %v1126, %v1119
    %v1757 = vpack.c.b16 %v1134, %v1127
    %v1758 = vpack.c.b16 %v1135, %v1128
    %v1759 = vpack.c.b16 %v1136, %v1129
    %v1760 = vpack.c.b16 %v1137, %v1130
    %v1761 = vpack.c.b16 %v1138, %v1131
    %v1762 = vpack.c.b16 %v1139, %v1132
    %v1763 = vpack.c.b16 %v1140, %v1133
    %v1764 = vpack.c.b16 %v1148, %v1141
    %v1765 = vpack.c.b16 %v1149, %v1142
    %v1766 = vpack.c.b16 %v1150, %v1143
    %v1767 = vpack.c.b16 %v1151, %v1144
    %v1768 = vpack.c.b16 %v1152, %v1145
    %v1769 = vpack.c.b16 %v1153, %v1146
    %v1770 = vpack.c.b16 %v1154, %v1147
    %v1771 = vpack.c.b16 %v1162, %v1155
    %v1772 = vpack.c.b16 %v1163, %v1156
    %v1773 = vpack.c.b16 %v1164, %v1157
    %v1774 = vpack.c.b16 %v1165, %v1158
    %v1775 = vpack.c.b16 %v1166, %v1159
    %v1776 = vpack.c.b16 %v1167, %v1160
    %v1777 = vpack.c.b16 %v1168, %v1161
    %v1778 = vpack.c.b16 %v1176, %v1169
    %v1779 = vpack.c.b16 %v1177, %v1170
    %v1780 = vpack.c.b16 %v1178, %v1171
    %v1781 = vpack.c.b16 %v1179, %v1172
    %v1782 = vpack.c.b16 %v1180, %v1173
    %v1783 = vpack.c.b16 %v1181, %v1174
    %v1784 = vpack.c.b16 %v1182, %v1175
    %v1785 = vpack.c.b16 %v1190, %v1183
    %v1786 = vpack.c.b16 %v1191, %v1184
    %v1787 = vpack.c.b16 %v1192, %v1185
    %v1788 = vpack.c.b16 %v1193, %v1186
    %v1789 = vpack.c.b16 %v1194, %v1187
    %v1790 = vpack.c.b16 %v1195, %v1188
    %v1791 = vpack.c.b16 %v1196, %v1189
    %v1792 = vpack.c.b16 %v1204, %v1197
    %v1793 = vpack.c.b16 %v1205, %v1198
    %v1794 = vpack.c.b16 %v1206, %v1199
    %v1795 = vpack.c.b16 %v1207, %v1200
    %v1796 = vpack.c.b16 %v1208, %v1201
    %v1797 = vpack.c.b16 %v1209, %v1202
    %v1798 = vpack.c.b16 %v1210, %v1203
    %v1799 = vpack.c.b16 %v1218, %v1211
    %v1800 = vpack.c.b16 %v1219, %v1212
    %v1801 = vpack.c.b16 %v1220, %v1213
    %v1802 = vpack.c.b16 %v1221, %v1214
    %v1803 = vpack.c.b16 %v1222, %v1215
    %v1804 = vpack.c.b16 %v1223, %v1216
    %v1805 = vpack.c.b16 %v1224, %v1217
    %v1806 = vpack.c.b16 %v1232, %v1225
    %v1807 = vpack.c.b16 %v1233, %v1226
    %v1808 = vpack.c.b16 %v1234, %v1227
    %v1809 = vpack.c.b16 %v1235, %v1228
    %v1810 = vpack.c.b16 %v1236, %v1229
    %v1811 = vpack.c.b16 %v1237, %v1230
    %v1812 = vpack.c.b16 %v1238, %v1231
    %v1813 = vpack.c.b16 %v1246, %v1239
    %v1814 = vpack.c.b16 %v1247, %v1240
    %v1815 = vpack.c.b16 %v1248, %v1241
    %v1816 = vpack.c.b16 %v1249, %v1242
    %v1817 = vpack.c.b16 %v1250, %v1243
    %v1818 = vpack.c.b16 %v1251, %v1244
    %v1819 = vpack.c.b16 %v1252, %v1245
    %v1820 = vpack.c.b16 %v1260, %v1253
    %v1821 = vpack.c.b16 %v1261, %v1254
    %v1822 = vpack.c.b16 %v1262, %v1255
    %v1823 = vpack.c.b16 %v1263, %v1256
    %v1824 = vpack.c.b16 %v1264, %v1257
    %v1825 = vpack.c.b16 %v1265, %v1258
    %v1826 = vpack.c.b16 %v1266, %v1259
    %v1827 = vpack.c.b16 %v1274, %v1267
    %v1828 = vpack.c.b16 %v1275, %v1268
    %v1829 = vpack.c.b16 %v1276, %v1269
    %v1830 = vpack.c.b16 %v1277, %v1270
    %v1831 = vpack.c.b16 %v1278, %v1271
    %v1832 = vpack.c.b16 %v1279, %v1272
    %v1833 = vpack.c.b16 %v1280, %v1273
    %v1834 = vpack.c.b16 %v1288, %v1281
    %v1835 = vpack.c.b16 %v1289, %v1282
    %v1836 = vpack.c.b16 %v1290, %v1283
    %v1837 = vpack.c.b16 %v1291, %v1284
    %v1838 = vpack.c.b16 %v1292, %v1285
    %v1839 = vpack.c.b16 %v1293, %v1286
    %v1840 = vpack.c.b16 %v1294, %v1287
    %v1841 = vpack.c.b16 %v1302, %v1295
    %v1842 = vpack.c.b16 %v1303, %v1296
    %v1843 = vpack.c.b16 %v1304, %v1297
    %v1844 = vpack.c.b16 %v1305, %v1298
    %v1845 = vpack.c.b16 %v1306, %v1299
    %v1846 = vpack.c.b16 %v1307, %v1300
    %v1847 = vpack.c.b16 %v1308, %v1301
    %v1848 = vpack.c.b16 %v1316, %v1309
    %v1849 = vpack.c.b16 %v1317, %v1310
    %v1850 = vpack.c.b16 %v1318, %v1311
    %v1851 = vpack.c.b16 %v1319, %v1312
    %v1852 = vpack.c.b16 %v1320, %v1313
    %v1853 = vpack.c.b16 %v1321, %v1314
    %v1854 = vpack.c.b16 %v1322, %v1315
    %v1855 = vpack.c.b16 %v1330, %v1323
    %v1856 = vpack.c.b16 %v1331, %v1324
    %v1857 = vpack.c.b16 %v1332, %v1325
    %v1858 = vpack.c.b16 %v1333, %v1326
    %v1859 = vpack.c.b16 %v1334, %v1327
    %v1860 = vpack.c.b16 %v1335, %v1328
    %v1861 = vpack.c.b16 %v1336, %v1329
    %v1862 = vpack.c.b16 %v1344, %v1337
    %v1863 = vpack.c.b16 %v1345, %v1338
    %v1864 = vpack.c.b16 %v1346, %v1339
    %v1865 = vpack.c.b16 %v1347, %v1340
    %v1866 = vpack.c.b16 %v1348, %v1341
    %v1867 = vpack.c.b16 %v1349, %v1342
    %v1868 = vpack.c.b16 %v1350, %v1343
    %v1869 = vpack.c.b16 %v1358, %v1351
    %v1870 = vpack.c.b16 %v1359, %v1352
    %v1871 = vpack.c.b16 %v1360, %v1353
    %v1872 = vpack.c.b16 %v1361, %v1354
    %v1873 = vpack.c.b16 %v1362, %v1355
    %v1874 = vpack.c.b16 %v1363, %v1356
    %v1875 = vpack.c.b16 %v1364, %v1357
    %v1876 = vpack.c.b16 %v1372, %v1365
    %v1877 = vpack.c.b16 %v1373, %v1366
    %v1878 = vpack.c.b16 %v1374, %v1367
    %v1879 = vpack.c.b16 %v1375, %v1368
    %v1880 = vpack.c.b16 %v1376, %v1369
    %v1881 = vpack.c.b16 %v1377, %v1370
    %v1882 = vpack.c.b16 %v1378, %v1371
    %v1883 = vpack.c.b16 %v1386, %v1379
    %v1884 = vpack.c.b16 %v1387, %v1380
    %v1885 = vpack.c.b16 %v1388, %v1381
    %v1886 = vpack.c.b16 %v1389, %v1382
    %v1887 = vpack.c.b16 %v1390, %v1383
    %v1888 = vpack.c.b16 %v1391, %v1384
    %v1889 = vpack.c.b16 %v1392, %v1385
    %v1890 = vpack.c.b16 %v1400, %v1393
    %v1891 = vpack.c.b16 %v1401, %v1394
    %v1892 = vpack.c.b16 %v1402, %v1395
    %v1893 = vpack.c.b16 %v1403, %v1396
    %v1894 = vpack.c.b16 %v1404, %v1397
    %v1895 = vpack.c.b16 %v1405, %v1398
    %v1896 = vpack.c.b16 %v1406, %v1399
    %v1897 = vpack.c.b16 %v1414, %v1407
    %v1898 = vpack.c.b16 %v1415, %v1408
    %v1899 = vpack.c.b16 %v1416, %v1409
    %v1900 = vpack.c.b16 %v1417, %v1410
    %v1901 = vpack.c.b16 %v1418, %v1411
    %v1902 = vpack.c.b16 %v1419, %v1412
    %v1903 = vpack.c.b16 %v1420, %v1413
    %v1904 = vpack.c.b16 %v1428, %v1421
    %v1905 = vpack.c.b16 %v1429, %v1422
    %v1906 = vpack.c.b16 %v1430, %v1423
    %v1907 = vpack.c.b16 %v1431, %v1424
    %v1908 = vpack.c.b16 %v1432, %v1425
    %v1909 = vpack.c.b16 %v1433, %v1426
    %v1910 = vpack.c.b16 %v1434, %v1427
    %v1911 = vpack.c.b16 %v1442, %v1435
    %v1912 = vpack.c.b16 %v1443, %v1436
    %v1913 = vpack.c.b16 %v1444, %v1437
    %v1914 = vpack.c.b16 %v1445, %v1438
    %v1915 = vpack.c.b16 %v1446, %v1439
    %v1916 = vpack.c.b16 %v1447, %v1440
    %v1917 = vpack.c.b16 %v1448, %v1441
    %v1918 = vpack.c.b16 %v1456, %v1449
    %v1919 = vpack.c.b16 %v1457, %v1450
    %v1920 = vpack.c.b16 %v1458, %v1451
    %v1921 = vpack.c.b16 %v1459, %v1452
    %v1922 = vpack.c.b16 %v1460, %v1453
    %v1923 = vpack.c.b16 %v1461, %v1454
    %v1924 = vpack.c.b16 %v1462, %v1455
    %v1925 = vpack.c.b16 %v1470, %v1463
    %v1926 = vpack.c.b16 %v1471, %v1464
    %v1927 = vpack.c.b16 %v1472, %v1465
    %v1928 = vpack.c.b16 %v1473, %v1466
    %v1929 = vpack.c.b16 %v1474, %v1467
    %v1930 = vpack.c.b16 %v1475, %v1468
    %v1931 = vpack.c.b16 %v1476, %v1469
    %v1932 = vpack.c.b16 %v1484, %v1477
    %v1933 = vpack.c.b16 %v1485, %v1478
    %v1934 = vpack.c.b16 %v1486, %v1479
    %v1935 = vpack.c.b16 %v1487, %v1480
    %v1936 = vpack.c.b16 %v1488, %v1481
    %v1937 = vpack.c.b16 %v1489, %v1482
    %v1938 = vpack.c.b16 %v1490, %v1483
    %v1939 = vpack.c.b16 %v1498, %v1491
    %v1940 = vpack.c.b16 %v1499, %v1492
    %v1941 = vpack.c.b16 %v1500, %v1493
    %v1942 = vpack.c.b16 %v1501, %v1494
    %v1943 = vpack.c.b16 %v1502, %v1495
    %v1944 = vpack.c.b16 %v1503, %v1496
    %v1945 = vpack.c.b16 %v1504, %v1497
    %v1946 = vpack.c.b16 %v1512, %v1505
    %v1947 = vpack.c.b16 %v1513, %v1506
    %v1948 = vpack.c.b16 %v1514, %v1507
    %v1949 = vpack.c.b16 %v1515, %v1508
    %v1950 = vpack.c.b16 %v1516, %v1509
    %v1951 = vpack.c.b16 %v1517, %v1510
    %v1952 = vpack.c.b16 %v1518, %v1511
    %v1953 = vpack.c.b16 %v1526, %v1519
    %v1954 = vpack.c.b16 %v1527, %v1520
    %v1955 = vpack.c.b16 %v1528, %v1521
    %v1956 = vpack.c.b16 %v1529, %v1522
    %v1957 = vpack.c.b16 %v1530, %v1523
    %v1958 = vpack.c.b16 %v1531, %v1524
    %v1959 = vpack.c.b16 %v1532, %v1525
    %v1960 = vpack.c.b16 %v1540, %v1533
    %v1961 = vpack.c.b16 %v1541, %v1534
    %v1962 = vpack.c.b16 %v1542, %v1535
    %v1963 = vpack.c.b16 %v1543, %v1536
    %v1964 = vpack.c.b16 %v1544, %v1537
    %v1965 = vpack.c.b16 %v1545, %v1538
    %v1966 = vpack.c.b16 %v1546, %v1539
    %v1967 = vpack.c.b16 %v1554, %v1547
    %v1968 = vpack.c.b16 %v1555, %v1548
    %v1969 = vpack.c.b16 %v1556, %v1549
    %v1970 = vpack.c.b16 %v1557, %v1550
    %v1971 = vpack.c.b16 %v1558, %v1551
    %v1972 = vpack.c.b16 %v1559, %v1552
    %v1973 = vpack.c.b16 %v1560, %v1553
    %v1974 = vpack.c.b16 %v1568, %v1561
    %v1975 = vpack.c.b16 %v1569, %v1562
    %v1976 = vpack.c.b16 %v1570, %v1563
    %v1977 = vpack.c.b16 %v1571, %v1564
    %v1978 = vpack.c.b16 %v1572, %v1565
    %v1979 = vpack.c.b16 %v1573, %v1566
    %v1980 = vpack.c.b16 %v1574, %v1567
    %v1981 = vpack.c.b16 %v1582, %v1575
    %v1982 = vpack.c.b16 %v1583, %v1576
    %v1983 = vpack.c.b16 %v1584, %v1577
    %v1984 = vpack.c.b16 %v1585, %v1578
    %v1985 = vpack.c.b16 %v1586, %v1579
    %v1986 = vpack.c.b16 %v1587, %v1580
    %v1987 = vpack.c.b16 %v1588, %v1581
    %v1988 = vpack.c.b16 %v1596, %v1589
    %v1989 = vpack.c.b16 %v1597, %v1590
    %v1990 = vpack.c.b16 %v1598, %v1591
    %v1991 = vpack.c.b16 %v1599, %v1592
    %v1992 = vpack.c.b16 %v1600, %v1593
    %v1993 = vpack.c.b16 %v1601, %v1594
    %v1994 = vpack.c.b16 %v1602, %v1595
    %v1995 = vpack.c.b16 %v1610, %v1603
    %v1996 = vpack.c.b16 %v1611, %v1604
    %v1997 = vpack.c.b16 %v1612, %v1605
    %v1998 = vpack.c.b16 %v1613, %v1606
    %v1999 = vpack.c.b16 %v1614, %v1607
    %v2000 = vpack.c.b16 %v1615, %v1608
    %v2001 = vpack.c.b16 %v1616, %v1609
    %v2002 = vpack.c.b16 %v1624, %v1617
    %v2003 = vpack.c.b16 %v1625, %v1618
    %v2004 = vpack.c.b16 %v1626, %v1619
    %v2005 = vpack.c.b16 %v1627, %v1620
    %v2006 = vpack.c.b16 %v1628, %v1621
    %v2007 = vpack.c.b16 %v1629, %v1622
    %v2008 = vpack.c.b16 %v1630, %v1623
    %v2009 = vpack.c.b16 %v1638, %v1631
    %v2010 = vpack.c.b16 %v1639, %v1632
    %v2011 = vpack.c.b16 %v1640, %v1633
    %v2012 = vpack.c.b16 %v1641, %v1634
    %v2013 = vpack.c.b16 %v1642, %v1635
    %v2014 = vpack.c.b16 %v1643, %v1636
    %v2015 = vpack.c.b16 %v1644, %v1637
    %v2016 = vpack.c.b16 %v1652, %v1645
    %v2017 = vpack.c.b16 %v1653, %v1646
    %v2018 = vpack.c.b16 %v1654, %v1647
    %v2019 = vpack.c.b16 %v1655, %v1648
    %v2020 = vpack.c.b16 %v1656, %v1649
    %v2021 = vpack.c.b16 %v1657, %v1650
    %v2022 = vpack.c.b16 %v1658, %v1651
    %v2023 = vpack.c.b16 %v1666, %v1659
    %v2024 = vpack.c.b16 %v1667, %v1660
    %v2025 = vpack.c.b16 %v1668, %v1661
    %v2026 = vpack.c.b16 %v1669, %v1662
    %v2027 = vpack.c.b16 %v1670, %v1663
    %v2028 = vpack.c.b16 %v1671, %v1664
    %v2029 = vpack.c.b16 %v1672, %v1665
    %v2030 = vpack.c.b16 %v1680, %v1673
    %v2031 = vpack.c.b16 %v1681, %v1674
    %v2032 = vpack.c.b16 %v1682, %v1675
    %v2033 = vpack.c.b16 %v1683, %v1676
    %v2034 = vpack.c.b16 %v1684, %v1677
    %v2035 = vpack.c.b16 %v1685, %v1678
    %v2036 = vpack.c.b16 %v1686, %v1679
    %v2037 = vpack.c.b16 %v1694, %v1687
    %v2038 = vpack.c.b16 %v1695, %v1688
    %v2039 = vpack.c.b16 %v1696, %v1689
    %v2040 = vpack.c.b16 %v1697, %v1690
    %v2041 = vpack.c.b16 %v1698, %v1691
    %v2042 = vpack.c.b16 %v1699, %v1692
    %v2043 = vpack.c.b16 %v1700, %v1693
    %vm2387 = vcmask 130048
    %v2389 = vsel %vm2387, %v193, 0
    %2391 = vmatprep.subr.bf16.mxu0 %v1702
    %2392 = vmatpush1.bf16.msra.mxu0 %v1701
    %2393 = vmatprep.subr.bf16.mxu0 %v1709
    %2394 = vmatpush1.bf16.msra.mxu0 %v1708
    %2395 = vmatprep.subr.bf16.mxu0 %v1716
    %2396 = vmatpush1.bf16.msra.mxu0 %v1715
    %2397 = vmatprep.subr.bf16.mxu0 %v1723
    %2398 = vmatpush1.bf16.msra.mxu0 %v1722
    %2399 = vmatprep.subr.bf16.mxu0 %v1730
    %2400 = vmatpush1.bf16.msra.mxu0 %v1729
    %2401 = vmatprep.subr.bf16.mxu0 %v1737
    %2402 = vmatpush1.bf16.msra.mxu0 %v1736
    %2403 = vmatprep.subr.bf16.mxu0 %v1744
    %2404 = vmatpush1.bf16.msra.mxu0 %v1743
    %2405 = vmatprep.subr.bf16.mxu0 %v1751
    %2406 = vmatpush1.bf16.msra.mxu0 %v1750
    %2407 = vmatprep.subr.bf16.mxu0 %v1758
    %2408 = vmatpush1.bf16.msra.mxu0 %v1757
    %2409 = vmatprep.subr.bf16.mxu0 %v1765
    %2410 = vmatpush1.bf16.msra.mxu0 %v1764
    %2411 = vmatprep.subr.bf16.mxu0 %v1772
    %2412 = vmatpush1.bf16.msra.mxu0 %v1771
    %2413 = vmatprep.subr.bf16.mxu0 %v1779
    %2414 = vmatpush1.bf16.msra.mxu0 %v1778
    %2415 = vmatprep.subr.bf16.mxu0 %v1786
    %2416 = vmatpush1.bf16.msra.mxu0 %v1785
    %2417 = vmatprep.subr.bf16.mxu0 %v1793
    %2418 = vmatpush1.bf16.msra.mxu0 %v1792
    %2419 = vmatprep.subr.bf16.mxu0 %v1800
    %2420 = vmatpush1.bf16.msra.mxu0 %v1799
    %2421 = vmatprep.subr.bf16.mxu0 %v1807
    %2422 = vmatpush1.bf16.msra.mxu0 %v1806
    %2423 = vmatprep.mubr.bf16.mxu0 %v188
    %2424 = vmatmul.mubr.bf16.gmra.mrb[0].mxu0 %v187
    %v2425 = vpop.f32.mrb[0].mxu0
    %v2426 = vadd.f32 %v591, %v2425
    %v2427 = vpop.f32.mrb[0].mxu0
    %v2428 = vadd.f32 %v595, %v2427
    %v2429 = vpop.f32.mrb[0].mxu0
    %v2430 = vpop.f32.mrb[0].mxu0
    %2431 = vdwg.mxu0
    %2432 = vmatprep.subr.bf16.mxu0 %v1814
    %2433 = vmatpush1.bf16.msra.mxu0 %v1813
    %2434 = vmatprep.subr.bf16.mxu0 %v1821
    %2435 = vmatpush1.bf16.msra.mxu0 %v1820
    %2436 = vmatprep.subr.bf16.mxu0 %v1828
    %2437 = vmatpush1.bf16.msra.mxu0 %v1827
    %2438 = vmatprep.subr.bf16.mxu0 %v1835
    %2439 = vmatpush1.bf16.msra.mxu0 %v1834
    %2440 = vmatprep.subr.bf16.mxu0 %v1842
    %2441 = vmatpush1.bf16.msra.mxu0 %v1841
    %2442 = vmatprep.subr.bf16.mxu0 %v1849
    %2443 = vmatpush1.bf16.msra.mxu0 %v1848
    %2444 = vmatprep.subr.bf16.mxu0 %v1856
    %2445 = vmatpush1.bf16.msra.mxu0 %v1855
    %2446 = vmatprep.subr.bf16.mxu0 %v1863
    %2447 = vmatpush1.bf16.msra.mxu0 %v1862
    %2448 = vmatprep.subr.bf16.mxu0 %v1870
    %2449 = vmatpush1.bf16.msra.mxu0 %v1869
    %2450 = vmatprep.subr.bf16.mxu0 %v1877
    %2451 = vmatpush1.bf16.msra.mxu0 %v1876
    %2452 = vmatprep.subr.bf16.mxu0 %v1884
    %2453 = vmatpush1.bf16.msra.mxu0 %v1883
    %2454 = vmatprep.subr.bf16.mxu0 %v1891
    %2455 = vmatpush1.bf16.msra.mxu0 %v1890
    %2456 = vmatprep.subr.bf16.mxu0 %v1898
    %2457 = vmatpush1.bf16.msra.mxu0 %v1897
    %2458 = vmatprep.subr.bf16.mxu0 %v1905
    %2459 = vmatpush1.bf16.msra.mxu0 %v1904
    %2460 = vmatprep.subr.bf16.mxu0 %v1912
    %2461 = vmatpush1.bf16.msra.mxu0 %v1911
    %2462 = vmatprep.subr.bf16.mxu0 %v1919
    %2463 = vmatpush1.bf16.msra.mxu0 %v1918
    %2464 = vmatprep.mubr.bf16.mxu0 %v190
    %2465 = vmatmul.mubr.bf16.gmra.mrb[0].mxu0 %v189
    %v2466 = vpop.f32.mrb[0].mxu0
    %v2467 = vadd.f32 %v2426, %v2466
    %v2468 = vpop.f32.mrb[0].mxu0
    %v2469 = vadd.f32 %v2428, %v2468
    %v2470 = vpop.f32.mrb[0].mxu0
    %v2471 = vpop.f32.mrb[0].mxu0
    %2472 = vdwg.mxu0
    %2473 = vmatprep.subr.bf16.mxu0 %v1926
    %2474 = vmatpush1.bf16.msra.mxu0 %v1925
    %2475 = vmatprep.subr.bf16.mxu0 %v1933
    %2476 = vmatpush1.bf16.msra.mxu0 %v1932
    %2477 = vmatprep.subr.bf16.mxu0 %v1940
    %2478 = vmatpush1.bf16.msra.mxu0 %v1939
    %2479 = vmatprep.subr.bf16.mxu0 %v1947
    %2480 = vmatpush1.bf16.msra.mxu0 %v1946
    %2481 = vmatprep.subr.bf16.mxu0 %v1954
    %2482 = vmatpush1.bf16.msra.mxu0 %v1953
    %2483 = vmatprep.subr.bf16.mxu0 %v1961
    %2484 = vmatpush1.bf16.msra.mxu0 %v1960
    %2485 = vmatprep.subr.bf16.mxu0 %v1968
    %2486 = vmatpush1.bf16.msra.mxu0 %v1967
    %2487 = vmatprep.subr.bf16.mxu0 %v1975
    %2488 = vmatpush1.bf16.msra.mxu0 %v1974
    %2489 = vmatprep.subr.bf16.mxu0 %v1982
    %2490 = vmatpush1.bf16.msra.mxu0 %v1981
    %2491 = vmatprep.subr.bf16.mxu0 %v1989
    %2492 = vmatpush1.bf16.msra.mxu0 %v1988
    %2493 = vmatprep.subr.bf16.mxu0 %v1996
    %2494 = vmatpush1.bf16.msra.mxu0 %v1995
    %2495 = vmatprep.subr.bf16.mxu0 %v2003
    %2496 = vmatpush1.bf16.msra.mxu0 %v2002
    %2497 = vmatprep.subr.bf16.mxu0 %v2010
    %2498 = vmatpush1.bf16.msra.mxu0 %v2009
    %2499 = vmatprep.subr.bf16.mxu0 %v2017
    %2500 = vmatpush1.bf16.msra.mxu0 %v2016
    %2501 = vmatprep.subr.bf16.mxu0 %v2024
    %2502 = vmatpush1.bf16.msra.mxu0 %v2023
    %2503 = vmatprep.subr.bf16.mxu0 %v2031
    %2504 = vmatpush1.bf16.msra.mxu0 %v2030
    %2505 = vmatprep.mubr.bf16.mxu0 %v192
    %2506 = vmatmul.mubr.bf16.gmra.mrb[0].mxu0 %v191
    %v2507 = vpop.f32.mrb[0].mxu0
    %v2508 = vadd.f32 %v2467, %v2507
    %v2509 = vpop.f32.mrb[0].mxu0
    %v2510 = vadd.f32 %v2469, %v2509
    %v2511 = vpop.f32.mrb[0].mxu0
    %v2512 = vpop.f32.mrb[0].mxu0
    %2513 = vdwg.mxu0
    %2514 = vmatprep.subr.bf16.mxu0 %v2038
    %2515 = vmatpush1.bf16.msra.mxu0 %v2037
    %2516 = vmatprep.subr.bf16.mxu0 0
    %2517 = vmatpush1.bf16.msra.mxu0 0
    %2518 = vmatprep.subr.bf16.mxu0 0
    %2519 = vmatpush1.bf16.msra.mxu0 0
    %2520 = vmatprep.subr.bf16.mxu0 0
    %2521 = vmatpush1.bf16.msra.mxu0 0
    %2522 = vmatprep.subr.bf16.mxu0 0
    %2523 = vmatpush1.bf16.msra.mxu0 0
    %2524 = vmatprep.subr.bf16.mxu0 0
    %2525 = vmatpush1.bf16.msra.mxu0 0
    %2526 = vmatprep.subr.bf16.mxu0 0
    %2527 = vmatpush1.bf16.msra.mxu0 0
    %2528 = vmatprep.subr.bf16.mxu0 0
    %2529 = vmatpush1.bf16.msra.mxu0 0
    %2530 = vmatprep.subr.bf16.mxu0 0
    %2531 = vmatpush1.bf16.msra.mxu0 0
    %2532 = vmatprep.subr.bf16.mxu0 0
    %2533 = vmatpush1.bf16.msra.mxu0 0
    %2534 = vmatprep.subr.bf16.mxu0 0
    %2535 = vmatpush1.bf16.msra.mxu0 0
    %2536 = vmatprep.subr.bf16.mxu0 0
    %2537 = vmatpush1.bf16.msra.mxu0 0
    %2538 = vmatprep.subr.bf16.mxu0 0
    %2539 = vmatpush1.bf16.msra.mxu0 0
    %2540 = vmatprep.subr.bf16.mxu0 0
    %2541 = vmatpush1.bf16.msra.mxu0 0
    %2542 = vmatprep.subr.bf16.mxu0 0
    %2543 = vmatpush1.bf16.msra.mxu0 0
    %2544 = vmatprep.subr.bf16.mxu0 0
    %2545 = vmatpush1.bf16.msra.mxu0 0
    %2546 = vmatprep.mubr.bf16.mxu0 0
    %2547 = vmatmul.mubr.bf16.gmra.mrb[0].mxu0 %v2389
    %v2548 = vpop.f32.mrb[0].mxu0
    %v2549 = vadd.f32 %v2508, %v2548
    %v2550 = vpop.f32.mrb[0].mxu0
    %v2551 = vadd.f32 %v2510, %v2550
    %v2552 = vpop.f32.mrb[0].mxu0
    %v2553 = vpop.f32.mrb[0].mxu0
    %2554 = vdwg.mxu0
    %2555 = vmatprep.subr.bf16.mxu0 %v1704
    %2556 = vmatpush1.bf16.msra.mxu0 %v1703
    %2557 = vmatprep.subr.bf16.mxu0 %v1711
    %2558 = vmatpush1.bf16.msra.mxu0 %v1710
    %2559 = vmatprep.subr.bf16.mxu0 %v1718
    %2560 = vmatpush1.bf16.msra.mxu0 %v1717
    %2561 = vmatprep.subr.bf16.mxu0 %v1725
    %2562 = vmatpush1.bf16.msra.mxu0 %v1724
    %2563 = vmatprep.subr.bf16.mxu0 %v1732
    %2564 = vmatpush1.bf16.msra.mxu0 %v1731
    %2565 = vmatprep.subr.bf16.mxu0 %v1739
    %2566 = vmatpush1.bf16.msra.mxu0 %v1738
    %2567 = vmatprep.subr.bf16.mxu0 %v1746
    %2568 = vmatpush1.bf16.msra.mxu0 %v1745
    %2569 = vmatprep.subr.bf16.mxu0 %v1753
    %2570 = vmatpush1.bf16.msra.mxu0 %v1752
    %2571 = vmatprep.subr.bf16.mxu0 %v1760
    %2572 = vmatpush1.bf16.msra.mxu0 %v1759
    %2573 = vmatprep.subr.bf16.mxu0 %v1767
    %2574 = vmatpush1.bf16.msra.mxu0 %v1766
    %2575 = vmatprep.subr.bf16.mxu0 %v1774
    %2576 = vmatpush1.bf16.msra.mxu0 %v1773
    %2577 = vmatprep.subr.bf16.mxu0 %v1781
    %2578 = vmatpush1.bf16.msra.mxu0 %v1780
    %2579 = vmatprep.subr.bf16.mxu0 %v1788
    %2580 = vmatpush1.bf16.msra.mxu0 %v1787
    %2581 = vmatprep.subr.bf16.mxu0 %v1795
    %2582 = vmatpush1.bf16.msra.mxu0 %v1794
    %2583 = vmatprep.subr.bf16.mxu0 %v1802
    %2584 = vmatpush1.bf16.msra.mxu0 %v1801
    %2585 = vmatprep.subr.bf16.mxu0 %v1809
    %2586 = vmatpush1.bf16.msra.mxu0 %v1808
    %2587 = vmatprep.mubr.bf16.mxu0 %v188
    %2588 = vmatmul.mubr.bf16.gmra.mrb[0].mxu0 %v187
    %v2589 = vpop.f32.mrb[0].mxu0
    %v2590 = vadd.f32 %v599, %v2589
    %v2591 = vpop.f32.mrb[0].mxu0
    %v2592 = vadd.f32 %v603, %v2591
    %v2593 = vpop.f32.mrb[0].mxu0
    %v2594 = vpop.f32.mrb[0].mxu0
    %2595 = vdwg.mxu0
    %2596 = vmatprep.subr.bf16.mxu0 %v1816
    %2597 = vmatpush1.bf16.msra.mxu0 %v1815
    %2598 = vmatprep.subr.bf16.mxu0 %v1823
    %2599 = vmatpush1.bf16.msra.mxu0 %v1822
    %2600 = vmatprep.subr.bf16.mxu0 %v1830
    %2601 = vmatpush1.bf16.msra.mxu0 %v1829
    %2602 = vmatprep.subr.bf16.mxu0 %v1837
    %2603 = vmatpush1.bf16.msra.mxu0 %v1836
    %2604 = vmatprep.subr.bf16.mxu0 %v1844
    %2605 = vmatpush1.bf16.msra.mxu0 %v1843
    %2606 = vmatprep.subr.bf16.mxu0 %v1851
    %2607 = vmatpush1.bf16.msra.mxu0 %v1850
    %2608 = vmatprep.subr.bf16.mxu0 %v1858
    %2609 = vmatpush1.bf16.msra.mxu0 %v1857
    %2610 = vmatprep.subr.bf16.mxu0 %v1865
    %2611 = vmatpush1.bf16.msra.mxu0 %v1864
    %2612 = vmatprep.subr.bf16.mxu0 %v1872
    %2613 = vmatpush1.bf16.msra.mxu0 %v1871
    %2614 = vmatprep.subr.bf16.mxu0 %v1879
    %2615 = vmatpush1.bf16.msra.mxu0 %v1878
    %2616 = vmatprep.subr.bf16.mxu0 %v1886
    %2617 = vmatpush1.bf16.msra.mxu0 %v1885
    %2618 = vmatprep.subr.bf16.mxu0 %v1893
    %2619 = vmatpush1.bf16.msra.mxu0 %v1892
    %2620 = vmatprep.subr.bf16.mxu0 %v1900
    %2621 = vmatpush1.bf16.msra.mxu0 %v1899
    %2622 = vmatprep.subr.bf16.mxu0 %v1907
    %2623 = vmatpush1.bf16.msra.mxu0 %v1906
    %2624 = vmatprep.subr.bf16.mxu0 %v1914
    %2625 = vmatpush1.bf16.msra.mxu0 %v1913
    %2626 = vmatprep.subr.bf16.mxu0 %v1921
    %2627 = vmatpush1.bf16.msra.mxu0 %v1920
    %2628 = vmatprep.mubr.bf16.mxu0 %v190
    %2629 = vmatmul.mubr.bf16.gmra.mrb[0].mxu0 %v189
    %v2630 = vpop.f32.mrb[0].mxu0
    %v2631 = vadd.f32 %v2590, %v2630
    %v2632 = vpop.f32.mrb[0].mxu0
    %v2633 = vadd.f32 %v2592, %v2632
    %v2634 = vpop.f32.mrb[0].mxu0
    %v2635 = vpop.f32.mrb[0].mxu0
    %2636 = vdwg.mxu0
    %2637 = vmatprep.subr.bf16.mxu0 %v1928
    %2638 = vmatpush1.bf16.msra.mxu0 %v1927
    %2639 = vmatprep.subr.bf16.mxu0 %v1935
    %2640 = vmatpush1.bf16.msra.mxu0 %v1934
    %2641 = vmatprep.subr.bf16.mxu0 %v1942
    %2642 = vmatpush1.bf16.msra.mxu0 %v1941
    %2643 = vmatprep.subr.bf16.mxu0 %v1949
    %2644 = vmatpush1.bf16.msra.mxu0 %v1948
    %2645 = vmatprep.subr.bf16.mxu0 %v1956
    %2646 = vmatpush1.bf16.msra.mxu0 %v1955
    %2647 = vmatprep.subr.bf16.mxu0 %v1963
    %2648 = vmatpush1.bf16.msra.mxu0 %v1962
    %2649 = vmatprep.subr.bf16.mxu0 %v1970
    %2650 = vmatpush1.bf16.msra.mxu0 %v1969
    %2651 = vmatprep.subr.bf16.mxu0 %v1977
    %2652 = vmatpush1.bf16.msra.mxu0 %v1976
    %2653 = vmatprep.subr.bf16.mxu0 %v1984
    %2654 = vmatpush1.bf16.msra.mxu0 %v1983
    %2655 = vmatprep.subr.bf16.mxu0 %v1991
    %2656 = vmatpush1.bf16.msra.mxu0 %v1990
    %2657 = vmatprep.subr.bf16.mxu0 %v1998
    %2658 = vmatpush1.bf16.msra.mxu0 %v1997
    %2659 = vmatprep.subr.bf16.mxu0 %v2005
    %2660 = vmatpush1.bf16.msra.mxu0 %v2004
    %2661 = vmatprep.subr.bf16.mxu0 %v2012
    %2662 = vmatpush1.bf16.msra.mxu0 %v2011
    %2663 = vmatprep.subr.bf16.mxu0 %v2019
    %2664 = vmatpush1.bf16.msra.mxu0 %v2018
    %2665 = vmatprep.subr.bf16.mxu0 %v2026
    %2666 = vmatpush1.bf16.msra.mxu0 %v2025
    %2667 = vmatprep.subr.bf16.mxu0 %v2033
    %2668 = vmatpush1.bf16.msra.mxu0 %v2032
    %2669 = vmatprep.mubr.bf16.mxu0 %v192
    %2670 = vmatmul.mubr.bf16.gmra.mrb[0].mxu0 %v191
    %v2671 = vpop.f32.mrb[0].mxu0
    %v2672 = vadd.f32 %v2631, %v2671
    %v2673 = vpop.f32.mrb[0].mxu0
    %v2674 = vadd.f32 %v2633, %v2673
    %v2675 = vpop.f32.mrb[0].mxu0
    %v2676 = vpop.f32.mrb[0].mxu0
    %2677 = vdwg.mxu0
    %2678 = vmatprep.subr.bf16.mxu0 %v2040
    %2679 = vmatpush1.bf16.msra.mxu0 %v2039
    %2680 = vmatprep.subr.bf16.mxu0 0
    %2681 = vmatpush1.bf16.msra.mxu0 0
    %2682 = vmatprep.subr.bf16.mxu0 0
    %2683 = vmatpush1.bf16.msra.mxu0 0
    %2684 = vmatprep.subr.bf16.mxu0 0
    %2685 = vmatpush1.bf16.msra.mxu0 0
    %2686 = vmatprep.subr.bf16.mxu0 0
    %2687 = vmatpush1.bf16.msra.mxu0 0
    %2688 = vmatprep.subr.bf16.mxu0 0
    %2689 = vmatpush1.bf16.msra.mxu0 0
    %2690 = vmatprep.subr.bf16.mxu0 0
    %2691 = vmatpush1.bf16.msra.mxu0 0
    %2692 = vmatprep.subr.bf16.mxu0 0
    %2693 = vmatpush1.bf16.msra.mxu0 0
    %2694 = vmatprep.subr.bf16.mxu0 0
    %2695 = vmatpush1.bf16.msra.mxu0 0
    %2696 = vmatprep.subr.bf16.mxu0 0
    %2697 = vmatpush1.bf16.msra.mxu0 0
    %2698 = vmatprep.subr.bf16.mxu0 0
    %2699 = vmatpush1.bf16.msra.mxu0 0
    %2700 = vmatprep.subr.bf16.mxu0 0
    %2701 = vmatpush1.bf16.msra.mxu0 0
    %2702 = vmatprep.subr.bf16.mxu0 0
    %2703 = vmatpush1.bf16.msra.mxu0 0
    %2704 = vmatprep.subr.bf16.mxu0 0
    %2705 = vmatpush1.bf16.msra.mxu0 0
    %2706 = vmatprep.subr.bf16.mxu0 0
    %2707 = vmatpush1.bf16.msra.mxu0 0
    %2708 = vmatprep.subr.bf16.mxu0 0
    %2709 = vmatpush1.bf16.msra.mxu0 0
    %2710 = vmatprep.mubr.bf16.mxu0 0
    %2711 = vmatmul.mubr.bf16.gmra.mrb[0].mxu0 %v2389
    %v2712 = vpop.f32.mrb[0].mxu0
    %v2713 = vadd.f32 %v2672, %v2712
    %v2714 = vpop.f32.mrb[0].mxu0
    %v2715 = vadd.f32 %v2674, %v2714
    %v2716 = vpop.f32.mrb[0].mxu0
    %v2717 = vpop.f32.mrb[0].mxu0
    %2718 = vdwg.mxu0
    %2719 = vmatprep.subr.bf16.mxu0 %v1706
    %2720 = vmatpush1.bf16.msra.mxu0 %v1705
    %2721 = vmatprep.subr.bf16.mxu0 %v1713
    %2722 = vmatpush1.bf16.msra.mxu0 %v1712
    %2723 = vmatprep.subr.bf16.mxu0 %v1720
    %2724 = vmatpush1.bf16.msra.mxu0 %v1719
    %2725 = vmatprep.subr.bf16.mxu0 %v1727
    %2726 = vmatpush1.bf16.msra.mxu0 %v1726
    %2727 = vmatprep.subr.bf16.mxu0 %v1734
    %2728 = vmatpush1.bf16.msra.mxu0 %v1733
    %2729 = vmatprep.subr.bf16.mxu0 %v1741
    %2730 = vmatpush1.bf16.msra.mxu0 %v1740
    %2731 = vmatprep.subr.bf16.mxu0 %v1748
    %2732 = vmatpush1.bf16.msra.mxu0 %v1747
    %2733 = vmatprep.subr.bf16.mxu0 %v1755
    %2734 = vmatpush1.bf16.msra.mxu0 %v1754
    %2735 = vmatprep.subr.bf16.mxu0 %v1762
    %2736 = vmatpush1.bf16.msra.mxu0 %v1761
    %2737 = vmatprep.subr.bf16.mxu0 %v1769
    %2738 = vmatpush1.bf16.msra.mxu0 %v1768
    %2739 = vmatprep.subr.bf16.mxu0 %v1776
    %2740 = vmatpush1.bf16.msra.mxu0 %v1775
    %2741 = vmatprep.subr.bf16.mxu0 %v1783
    %2742 = vmatpush1.bf16.msra.mxu0 %v1782
    %2743 = vmatprep.subr.bf16.mxu0 %v1790
    %2744 = vmatpush1.bf16.msra.mxu0 %v1789
    %2745 = vmatprep.subr.bf16.mxu0 %v1797
    %2746 = vmatpush1.bf16.msra.mxu0 %v1796
    %2747 = vmatprep.subr.bf16.mxu0 %v1804
    %2748 = vmatpush1.bf16.msra.mxu0 %v1803
    %2749 = vmatprep.subr.bf16.mxu0 %v1811
    %2750 = vmatpush1.bf16.msra.mxu0 %v1810
    %2751 = vmatprep.mubr.bf16.mxu0 %v188
    %2752 = vmatmul.mubr.bf16.gmra.mrb[0].mxu0 %v187
    %v2753 = vpop.f32.mrb[0].mxu0
    %v2754 = vadd.f32 %v607, %v2753
    %v2755 = vpop.f32.mrb[0].mxu0
    %v2756 = vadd.f32 %v611, %v2755
    %v2757 = vpop.f32.mrb[0].mxu0
    %v2758 = vpop.f32.mrb[0].mxu0
    %2759 = vdwg.mxu0
    %2760 = vmatprep.subr.bf16.mxu0 %v1818
    %2761 = vmatpush1.bf16.msra.mxu0 %v1817
    %2762 = vmatprep.subr.bf16.mxu0 %v1825
    %2763 = vmatpush1.bf16.msra.mxu0 %v1824
    %2764 = vmatprep.subr.bf16.mxu0 %v1832
    %2765 = vmatpush1.bf16.msra.mxu0 %v1831
    %2766 = vmatprep.subr.bf16.mxu0 %v1839
    %2767 = vmatpush1.bf16.msra.mxu0 %v1838
    %2768 = vmatprep.subr.bf16.mxu0 %v1846
    %2769 = vmatpush1.bf16.msra.mxu0 %v1845
    %2770 = vmatprep.subr.bf16.mxu0 %v1853
    %2771 = vmatpush1.bf16.msra.mxu0 %v1852
    %2772 = vmatprep.subr.bf16.mxu0 %v1860
    %2773 = vmatpush1.bf16.msra.mxu0 %v1859
    %2774 = vmatprep.subr.bf16.mxu0 %v1867
    %2775 = vmatpush1.bf16.msra.mxu0 %v1866
    %2776 = vmatprep.subr.bf16.mxu0 %v1874
    %2777 = vmatpush1.bf16.msra.mxu0 %v1873
    %2778 = vmatprep.subr.bf16.mxu0 %v1881
    %2779 = vmatpush1.bf16.msra.mxu0 %v1880
    %2780 = vmatprep.subr.bf16.mxu0 %v1888
    %2781 = vmatpush1.bf16.msra.mxu0 %v1887
    %2782 = vmatprep.subr.bf16.mxu0 %v1895
    %2783 = vmatpush1.bf16.msra.mxu0 %v1894
    %2784 = vmatprep.subr.bf16.mxu0 %v1902
    %2785 = vmatpush1.bf16.msra.mxu0 %v1901
    %2786 = vmatprep.subr.bf16.mxu0 %v1909
    %2787 = vmatpush1.bf16.msra.mxu0 %v1908
    %2788 = vmatprep.subr.bf16.mxu0 %v1916
    %2789 = vmatpush1.bf16.msra.mxu0 %v1915
    %2790 = vmatprep.subr.bf16.mxu0 %v1923
    %2791 = vmatpush1.bf16.msra.mxu0 %v1922
    %2792 = vmatprep.mubr.bf16.mxu0 %v190
    %2793 = vmatmul.mubr.bf16.gmra.mrb[0].mxu0 %v189
    %v2794 = vpop.f32.mrb[0].mxu0
    %v2795 = vadd.f32 %v2754, %v2794
    %v2796 = vpop.f32.mrb[0].mxu0
    %v2797 = vadd.f32 %v2756, %v2796
    %v2798 = vpop.f32.mrb[0].mxu0
    %v2799 = vpop.f32.mrb[0].mxu0
    %2800 = vdwg.mxu0
    %2801 = vmatprep.subr.bf16.mxu0 %v1930
    %2802 = vmatpush1.bf16.msra.mxu0 %v1929
    %2803 = vmatprep.subr.bf16.mxu0 %v1937
    %2804 = vmatpush1.bf16.msra.mxu0 %v1936
    %2805 = vmatprep.subr.bf16.mxu0 %v1944
    %2806 = vmatpush1.bf16.msra.mxu0 %v1943
    %2807 = vmatprep.subr.bf16.mxu0 %v1951
    %2808 = vmatpush1.bf16.msra.mxu0 %v1950
    %2809 = vmatprep.subr.bf16.mxu0 %v1958
    %2810 = vmatpush1.bf16.msra.mxu0 %v1957
    %2811 = vmatprep.subr.bf16.mxu0 %v1965
    %2812 = vmatpush1.bf16.msra.mxu0 %v1964
    %2813 = vmatprep.subr.bf16.mxu0 %v1972
    %2814 = vmatpush1.bf16.msra.mxu0 %v1971
    %2815 = vmatprep.subr.bf16.mxu0 %v1979
    %2816 = vmatpush1.bf16.msra.mxu0 %v1978
    %2817 = vmatprep.subr.bf16.mxu0 %v1986
    %2818 = vmatpush1.bf16.msra.mxu0 %v1985
    %2819 = vmatprep.subr.bf16.mxu0 %v1993
    %2820 = vmatpush1.bf16.msra.mxu0 %v1992
    %2821 = vmatprep.subr.bf16.mxu0 %v2000
    %2822 = vmatpush1.bf16.msra.mxu0 %v1999
    %2823 = vmatprep.subr.bf16.mxu0 %v2007
    %2824 = vmatpush1.bf16.msra.mxu0 %v2006
    %2825 = vmatprep.subr.bf16.mxu0 %v2014
    %2826 = vmatpush1.bf16.msra.mxu0 %v2013
    %2827 = vmatprep.subr.bf16.mxu0 %v2021
    %2828 = vmatpush1.bf16.msra.mxu0 %v2020
    %2829 = vmatprep.subr.bf16.mxu0 %v2028
    %2830 = vmatpush1.bf16.msra.mxu0 %v2027
    %2831 = vmatprep.subr.bf16.mxu0 %v2035
    %2832 = vmatpush1.bf16.msra.mxu0 %v2034
    %2833 = vmatprep.mubr.bf16.mxu0 %v192
    %2834 = vmatmul.mubr.bf16.gmra.mrb[0].mxu0 %v191
    %v2835 = vpop.f32.mrb[0].mxu0
    %v2836 = vadd.f32 %v2795, %v2835
    %v2837 = vpop.f32.mrb[0].mxu0
    %v2838 = vadd.f32 %v2797, %v2837
    %v2839 = vpop.f32.mrb[0].mxu0
    %v2840 = vpop.f32.mrb[0].mxu0
    %2841 = vdwg.mxu0
    %2842 = vmatprep.subr.bf16.mxu0 %v2042
    %2843 = vmatpush1.bf16.msra.mxu0 %v2041
    %2844 = vmatprep.subr.bf16.mxu0 0
    %2845 = vmatpush1.bf16.msra.mxu0 0
    %2846 = vmatprep.subr.bf16.mxu0 0
    %2847 = vmatpush1.bf16.msra.mxu0 0
    %2848 = vmatprep.subr.bf16.mxu0 0
    %2849 = vmatpush1.bf16.msra.mxu0 0
    %2850 = vmatprep.subr.bf16.mxu0 0
    %2851 = vmatpush1.bf16.msra.mxu0 0
    %2852 = vmatprep.subr.bf16.mxu0 0
    %2853 = vmatpush1.bf16.msra.mxu0 0
    %2854 = vmatprep.subr.bf16.mxu0 0
    %2855 = vmatpush1.bf16.msra.mxu0 0
    %2856 = vmatprep.subr.bf16.mxu0 0
    %2857 = vmatpush1.bf16.msra.mxu0 0
    %2858 = vmatprep.subr.bf16.mxu0 0
    %2859 = vmatpush1.bf16.msra.mxu0 0
    %2860 = vmatprep.subr.bf16.mxu0 0
    %2861 = vmatpush1.bf16.msra.mxu0 0
    %2862 = vmatprep.subr.bf16.mxu0 0
    %2863 = vmatpush1.bf16.msra.mxu0 0
    %2864 = vmatprep.subr.bf16.mxu0 0
    %2865 = vmatpush1.bf16.msra.mxu0 0
    %2866 = vmatprep.subr.bf16.mxu0 0
    %2867 = vmatpush1.bf16.msra.mxu0 0
    %2868 = vmatprep.subr.bf16.mxu0 0
    %2869 = vmatpush1.bf16.msra.mxu0 0
    %2870 = vmatprep.subr.bf16.mxu0 0
    %2871 = vmatpush1.bf16.msra.mxu0 0
    %2872 = vmatprep.subr.bf16.mxu0 0
    %2873 = vmatpush1.bf16.msra.mxu0 0
    %2874 = vmatprep.mubr.bf16.mxu0 0
    %2875 = vmatmul.mubr.bf16.gmra.mrb[0].mxu0 %v2389
    %v2876 = vpop.f32.mrb[0].mxu0
    %v2877 = vadd.f32 %v2836, %v2876
    %v2878 = vpop.f32.mrb[0].mxu0
    %v2879 = vadd.f32 %v2838, %v2878
    %v2880 = vpop.f32.mrb[0].mxu0
    %v2881 = vpop.f32.mrb[0].mxu0
    %2882 = vdwg.mxu0
    %2883 = vmatprep.subr.bf16.mxu0 0
    %2884 = vmatpush1.bf16.msra.mxu0 %v1707
    %2885 = vmatprep.subr.bf16.mxu0 0
    %2886 = vmatpush1.bf16.msra.mxu0 %v1714
    %2887 = vmatprep.subr.bf16.mxu0 0
    %2888 = vmatpush1.bf16.msra.mxu0 %v1721
    %2889 = vmatprep.subr.bf16.mxu0 0
    %2890 = vmatpush1.bf16.msra.mxu0 %v1728
    %2891 = vmatprep.subr.bf16.mxu0 0
    %2892 = vmatpush1.bf16.msra.mxu0 %v1735
    %2893 = vmatprep.subr.bf16.mxu0 0
    %2894 = vmatpush1.bf16.msra.mxu0 %v1742
    %2895 = vmatprep.subr.bf16.mxu0 0
    %2896 = vmatpush1.bf16.msra.mxu0 %v1749
    %2897 = vmatprep.subr.bf16.mxu0 0
    %2898 = vmatpush1.bf16.msra.mxu0 %v1756
    %2899 = vmatprep.subr.bf16.mxu0 0
    %2900 = vmatpush1.bf16.msra.mxu0 %v1763
    %2901 = vmatprep.subr.bf16.mxu0 0
    %2902 = vmatpush1.bf16.msra.mxu0 %v1770
    %2903 = vmatprep.subr.bf16.mxu0 0
    %2904 = vmatpush1.bf16.msra.mxu0 %v1777
    %2905 = vmatprep.subr.bf16.mxu0 0
    %2906 = vmatpush1.bf16.msra.mxu0 %v1784
    %2907 = vmatprep.subr.bf16.mxu0 0
    %2908 = vmatpush1.bf16.msra.mxu0 %v1791
    %2909 = vmatprep.subr.bf16.mxu0 0
    %2910 = vmatpush1.bf16.msra.mxu0 %v1798
    %2911 = vmatprep.subr.bf16.mxu0 0
    %2912 = vmatpush1.bf16.msra.mxu0 %v1805
    %2913 = vmatprep.subr.bf16.mxu0 0
    %2914 = vmatpush1.bf16.msra.mxu0 %v1812
    %2915 = vmatprep.mubr.bf16.mxu0 %v188
    %2916 = vmatmul.mubr.bf16.gmra.mrb[0].mxu0 %v187
    %v2917 = vpop.f32.mrb[0].mxu0
    %v2918 = vadd.f32 %v615, %v2917
    %v2919 = vpop.f32.mrb[0].mxu0
    %v2920 = vpop.f32.mrb[0].mxu0
    %v2921 = vpop.f32.mrb[0].mxu0
    %2922 = vdwg.mxu0
    %2923 = vmatprep.subr.bf16.mxu0 0
    %2924 = vmatpush1.bf16.msra.mxu0 %v1819
    %2925 = vmatprep.subr.bf16.mxu0 0
    %2926 = vmatpush1.bf16.msra.mxu0 %v1826
    %2927 = vmatprep.subr.bf16.mxu0 0
    %2928 = vmatpush1.bf16.msra.mxu0 %v1833
    %2929 = vmatprep.subr.bf16.mxu0 0
    %2930 = vmatpush1.bf16.msra.mxu0 %v1840
    %2931 = vmatprep.subr.bf16.mxu0 0
    %2932 = vmatpush1.bf16.msra.mxu0 %v1847
    %2933 = vmatprep.subr.bf16.mxu0 0
    %2934 = vmatpush1.bf16.msra.mxu0 %v1854
    %2935 = vmatprep.subr.bf16.mxu0 0
    %2936 = vmatpush1.bf16.msra.mxu0 %v1861
    %2937 = vmatprep.subr.bf16.mxu0 0
    %2938 = vmatpush1.bf16.msra.mxu0 %v1868
    %2939 = vmatprep.subr.bf16.mxu0 0
    %2940 = vmatpush1.bf16.msra.mxu0 %v1875
    %2941 = vmatprep.subr.bf16.mxu0 0
    %2942 = vmatpush1.bf16.msra.mxu0 %v1882
    %2943 = vmatprep.subr.bf16.mxu0 0
    %2944 = vmatpush1.bf16.msra.mxu0 %v1889
    %2945 = vmatprep.subr.bf16.mxu0 0
    %2946 = vmatpush1.bf16.msra.mxu0 %v1896
    %2947 = vmatprep.subr.bf16.mxu0 0
    %2948 = vmatpush1.bf16.msra.mxu0 %v1903
    %2949 = vmatprep.subr.bf16.mxu0 0
    %2950 = vmatpush1.bf16.msra.mxu0 %v1910
    %2951 = vmatprep.subr.bf16.mxu0 0
    %2952 = vmatpush1.bf16.msra.mxu0 %v1917
    %2953 = vmatprep.subr.bf16.mxu0 0
    %2954 = vmatpush1.bf16.msra.mxu0 %v1924
    %2955 = vmatprep.mubr.bf16.mxu0 %v190
    %2956 = vmatmul.mubr.bf16.gmra.mrb[0].mxu0 %v189
    %v2957 = vpop.f32.mrb[0].mxu0
    %v2958 = vadd.f32 %v2918, %v2957
    %v2959 = vpop.f32.mrb[0].mxu0
    %v2960 = vpop.f32.mrb[0].mxu0
    %v2961 = vpop.f32.mrb[0].mxu0
    %2962 = vdwg.mxu0
    %2963 = vmatprep.subr.bf16.mxu0 0
    %2964 = vmatpush1.bf16.msra.mxu0 %v1931
    %2965 = vmatprep.subr.bf16.mxu0 0
    %2966 = vmatpush1.bf16.msra.mxu0 %v1938
    %2967 = vmatprep.subr.bf16.mxu0 0
    %2968 = vmatpush1.bf16.msra.mxu0 %v1945
    %2969 = vmatprep.subr.bf16.mxu0 0
    %2970 = vmatpush1.bf16.msra.mxu0 %v1952
    %2971 = vmatprep.subr.bf16.mxu0 0
    %2972 = vmatpush1.bf16.msra.mxu0 %v1959
    %2973 = vmatprep.subr.bf16.mxu0 0
    %2974 = vmatpush1.bf16.msra.mxu0 %v1966
    %2975 = vmatprep.subr.bf16.mxu0 0
    %2976 = vmatpush1.bf16.msra.mxu0 %v1973
    %2977 = vmatprep.subr.bf16.mxu0 0
    %2978 = vmatpush1.bf16.msra.mxu0 %v1980
    %2979 = vmatprep.subr.bf16.mxu0 0
    %2980 = vmatpush1.bf16.msra.mxu0 %v1987
    %2981 = vmatprep.subr.bf16.mxu0 0
    %2982 = vmatpush1.bf16.msra.mxu0 %v1994
    %2983 = vmatprep.subr.bf16.mxu0 0
    %2984 = vmatpush1.bf16.msra.mxu0 %v2001
    %2985 = vmatprep.subr.bf16.mxu0 0
    %2986 = vmatpush1.bf16.msra.mxu0 %v2008
    %2987 = vmatprep.subr.bf16.mxu0 0
    %2988 = vmatpush1.bf16.msra.mxu0 %v2015
    %2989 = vmatprep.subr.bf16.mxu0 0
    %2990 = vmatpush1.bf16.msra.mxu0 %v2022
    %2991 = vmatprep.subr.bf16.mxu0 0
    %2992 = vmatpush1.bf16.msra.mxu0 %v2029
    %2993 = vmatprep.subr.bf16.mxu0 0
    %2994 = vmatpush1.bf16.msra.mxu0 %v2036
    %2995 = vmatprep.mubr.bf16.mxu0 %v192
    %2996 = vmatmul.mubr.bf16.gmra.mrb[0].mxu0 %v191
    %v2997 = vpop.f32.mrb[0].mxu0
    %v2998 = vadd.f32 %v2958, %v2997
    %v2999 = vpop.f32.mrb[0].mxu0
    %v3000 = vpop.f32.mrb[0].mxu0
    %v3001 = vpop.f32.mrb[0].mxu0
    %3002 = vdwg.mxu0
    %3003 = vmatprep.subr.bf16.mxu0 0
    %3004 = vmatpush1.bf16.msra.mxu0 %v2043
    %3005 = vmatprep.subr.bf16.mxu0 0
    %3006 = vmatpush1.bf16.msra.mxu0 0
    %3007 = vmatprep.subr.bf16.mxu0 0
    %3008 = vmatpush1.bf16.msra.mxu0 0
    %3009 = vmatprep.subr.bf16.mxu0 0
    %3010 = vmatpush1.bf16.msra.mxu0 0
    %3011 = vmatprep.subr.bf16.mxu0 0
    %3012 = vmatpush1.bf16.msra.mxu0 0
    %3013 = vmatprep.subr.bf16.mxu0 0
    %3014 = vmatpush1.bf16.msra.mxu0 0
    %3015 = vmatprep.subr.bf16.mxu0 0
    %3016 = vmatpush1.bf16.msra.mxu0 0
    %3017 = vmatprep.subr.bf16.mxu0 0
    %3018 = vmatpush1.bf16.msra.mxu0 0
    %3019 = vmatprep.subr.bf16.mxu0 0
    %3020 = vmatpush1.bf16.msra.mxu0 0
    %3021 = vmatprep.subr.bf16.mxu0 0
    %3022 = vmatpush1.bf16.msra.mxu0 0
    %3023 = vmatprep.subr.bf16.mxu0 0
    %3024 = vmatpush1.bf16.msra.mxu0 0
    %3025 = vmatprep.subr.bf16.mxu0 0
    %3026 = vmatpush1.bf16.msra.mxu0 0
    %3027 = vmatprep.subr.bf16.mxu0 0
    %3028 = vmatpush1.bf16.msra.mxu0 0
    %3029 = vmatprep.subr.bf16.mxu0 0
    %3030 = vmatpush1.bf16.msra.mxu0 0
    %3031 = vmatprep.subr.bf16.mxu0 0
    %3032 = vmatpush1.bf16.msra.mxu0 0
    %3033 = vmatprep.subr.bf16.mxu0 0
    %3034 = vmatpush1.bf16.msra.mxu0 0
    %3035 = vmatprep.mubr.bf16.mxu0 0
    %3036 = vmatmul.mubr.bf16.gmra.mrb[0].mxu0 %v2389
    %v3037 = vpop.f32.mrb[0].mxu0
    %v3038 = vadd.f32 %v2998, %v3037
    %v3039 = vpop.f32.mrb[0].mxu0
    %v3040 = vpop.f32.mrb[0].mxu0
    %v3041 = vpop.f32.mrb[0].mxu0
    %3042 = vdwg.mxu0
    %v3043 = vmax.f32 %v2549, 0.0
    %v3044 = vmax.f32 %v2551, 0.0
    %v3045 = vmax.f32 %v2713, 0.0
    %v3046 = vmax.f32 %v2715, 0.0
    %v3047 = vmax.f32 %v2877, 0.0
    %v3048 = vmax.f32 %v2879, 0.0
    %v3049 = vmax.f32 %v3038, 0.0
    %v3050 = vpack.c.bf16 %v3043, %v3043
    %v3051 = vpack.c.bf16 %v3044, %v3044
    %v3052 = vpack.c.bf16 %v3045, %v3045
    %v3053 = vpack.c.bf16 %v3046, %v3046
    %v3054 = vpack.c.bf16 %v3047, %v3047
    %v3055 = vpack.c.bf16 %v3048, %v3048
    %v3056 = vpack.c.bf16 %v3049, %v3049
    %v3057 = vld [vmem:[#allocation8] sm:$0xff]
    %v3058 = vld [vmem:[#allocation8 + $0x8] sm:$0xf]
    %v3059 = vld [vmem:[#allocation8 + $0xc] sm:$0xff]
    %v3060 = vld [vmem:[#allocation8 + $0x14] sm:$0xf]
    %v3061 = vld [vmem:[#allocation8 + $0x18] sm:$0xff]
    %v3062 = vld [vmem:[#allocation8 + $0x20] sm:$0xf]
    %v3063 = vld [vmem:[#allocation8 + $0x24] sm:$0xff]
    %v3064 = vld [vmem:[#allocation8 + $0x2c] sm:$0xf]
    %v3065 = vld [vmem:[#allocation8 + $0x30] sm:$0xff]
    %v3066 = vld [vmem:[#allocation8 + $0x38] sm:$0xf]
    %v3067 = vld [vmem:[#allocation8 + $0x3c] sm:$0xff]
    %v3068 = vld [vmem:[#allocation8 + $0x44] sm:$0xf]
    %v3069 = vld [vmem:[#allocation8 + $0x48] sm:$0xff]
    %v3070 = vld [vmem:[#allocation8 + $0x50] sm:$0xf]
    %v3071 = vld [vmem:[#allocation8 + $0x54] sm:$0xff]
    %v3072 = vld [vmem:[#allocation8 + $0x5c] sm:$0xf]
    %v3073 = vld [vmem:[#allocation8 + $0x60] sm:$0xff]
    %v3074 = vld [vmem:[#allocation8 + $0x68] sm:$0xf]
    %v3075 = vld [vmem:[#allocation8 + $0x6c] sm:$0xff]
    %v3076 = vld [vmem:[#allocation8 + $0x74] sm:$0xf]
    %v3077 = vld [vmem:[#allocation8 + $0x78] sm:$0xff]
    %v3078 = vld [vmem:[#allocation8 + $0x80] sm:$0xf]
    %v3079 = vld [vmem:[#allocation8 + $0x84] sm:$0xff]
    %v3080 = vld [vmem:[#allocation8 + $0x8c] sm:$0xf]
    %v3081 = vld [vmem:[#allocation8 + $0x90] sm:$0xff]
    %v3082 = vld [vmem:[#allocation8 + $0x98] sm:$0xf]
    %v3083 = vld [vmem:[#allocation8 + $0x9c] sm:$0xff]
    %v3084 = vld [vmem:[#allocation8 + $0xa4] sm:$0xf]
    %v3085 = vld [vmem:[#allocation8 + $0xa8] sm:$0xff]
    %v3086 = vld [vmem:[#allocation8 + $0xb0] sm:$0xf]
    %v3087 = vld [vmem:[#allocation8 + $0xb4] sm:$0xff]
    %v3088 = vld [vmem:[#allocation8 + $0xbc] sm:$0xf]
    %v3089 = vld [vmem:[#allocation8 + $0xc0] sm:$0xff]
    %v3090 = vld [vmem:[#allocation8 + $0xc8] sm:$0xf]
    %v3091 = vld [vmem:[#allocation8 + $0xcc] sm:$0xff]
    %v3092 = vld [vmem:[#allocation8 + $0xd4] sm:$0xf]
    %v3093 = vld [vmem:[#allocation8 + $0xd8] sm:$0xff]
    %v3094 = vld [vmem:[#allocation8 + $0xe0] sm:$0xf]
    %v3095 = vld [vmem:[#allocation8 + $0xe4] sm:$0xff]
    %v3096 = vld [vmem:[#allocation8 + $0xec] sm:$0xf]
    %v3097 = vld [vmem:[#allocation8 + $0xf0] sm:$0xff]
    %v3098 = vld [vmem:[#allocation8 + $0xf8] sm:$0xf]
    %v3099 = vld [vmem:[#allocation8 + $0xfc] sm:$0xff]
    %v3100 = vld [vmem:[#allocation8 + $0x104] sm:$0xf]
    %v3101 = vld [vmem:[#allocation8 + $0x108] sm:$0xff]
    %v3102 = vld [vmem:[#allocation8 + $0x110] sm:$0xf]
    %v3103 = vld [vmem:[#allocation8 + $0x114] sm:$0xff]
    %v3104 = vld [vmem:[#allocation8 + $0x11c] sm:$0xf]
    %v3105 = vld [vmem:[#allocation8 + $0x120] sm:$0xff]
    %v3106 = vld [vmem:[#allocation8 + $0x128] sm:$0xf]
    %v3107 = vld [vmem:[#allocation8 + $0x12c] sm:$0xff]
    %v3108 = vld [vmem:[#allocation8 + $0x134] sm:$0xf]
    %v3109 = vld [vmem:[#allocation8 + $0x138] sm:$0xff]
    %v3110 = vld [vmem:[#allocation8 + $0x140] sm:$0xf]
    %v3111 = vld [vmem:[#allocation8 + $0x144] sm:$0xff]
    %v3112 = vld [vmem:[#allocation8 + $0x14c] sm:$0xf]
    %v3113 = vld [vmem:[#allocation8 + $0x150] sm:$0xff]
    %v3114 = vld [vmem:[#allocation8 + $0x158] sm:$0xf]
    %v3115 = vld [vmem:[#allocation8 + $0x15c] sm:$0xff]
    %v3116 = vld [vmem:[#allocation8 + $0x164] sm:$0xf]
    %v3117 = vld [vmem:[#allocation8 + $0x168] sm:$0xff]
    %v3118 = vld [vmem:[#allocation8 + $0x170] sm:$0xf]
    %v3119 = vld [vmem:[#allocation8 + $0x174] sm:$0xff]
    %v3120 = vld [vmem:[#allocation8 + $0x17c] sm:$0xf]
    %v3121 = vld [vmem:[#allocation8 + $0x180] sm:$0xff]
    %v3122 = vld [vmem:[#allocation8 + $0x188] sm:$0xf]
    %v3123 = vld [vmem:[#allocation8 + $0x18c] sm:$0xff]
    %v3124 = vld [vmem:[#allocation8 + $0x194] sm:$0xf]
    %v3125 = vld [vmem:[#allocation8 + $0x198] sm:$0xff]
    %v3126 = vld [vmem:[#allocation8 + $0x1a0] sm:$0xf]
    %v3127 = vld [vmem:[#allocation8 + $0x1a4] sm:$0xff]
    %v3128 = vld [vmem:[#allocation8 + $0x1ac] sm:$0xf]
    %v3129 = vld [vmem:[#allocation8 + $0x1b0] sm:$0xff]
    %v3130 = vld [vmem:[#allocation8 + $0x1b8] sm:$0xf]
    %v3131 = vld [vmem:[#allocation8 + $0x1bc] sm:$0xff]
    %v3132 = vld [vmem:[#allocation8 + $0x1c4] sm:$0xf]
    %v3133 = vld [vmem:[#allocation8 + $0x1c8] sm:$0xff]
    %v3134 = vld [vmem:[#allocation8 + $0x1d0] sm:$0xf]
    %v3135 = vld [vmem:[#allocation8 + $0x1d4] sm:$0xff]
    %v3136 = vld [vmem:[#allocation8 + $0x1dc] sm:$0xf]
    %v3137 = vld [vmem:[#allocation8 + $0x1e0] sm:$0xff]
    %v3138 = vld [vmem:[#allocation8 + $0x1e8] sm:$0xf]
    %v3139 = vld [vmem:[#allocation8 + $0x1ec] sm:$0xff]
    %v3140 = vld [vmem:[#allocation8 + $0x1f4] sm:$0xf]
    %v3141 = vld [vmem:[#allocation8 + $0x1f8] sm:$0xff]
    %v3142 = vld [vmem:[#allocation8 + $0x200] sm:$0xf]
    %v3143 = vld [vmem:[#allocation8 + $0x204] sm:$0xff]
    %v3144 = vld [vmem:[#allocation8 + $0x20c] sm:$0xf]
    %v3145 = vld [vmem:[#allocation8 + $0x210] sm:$0xff]
    %v3146 = vld [vmem:[#allocation8 + $0x218] sm:$0xf]
    %v3147 = vld [vmem:[#allocation8 + $0x21c] sm:$0xff]
    %v3148 = vld [vmem:[#allocation8 + $0x224] sm:$0xf]
    %v3149 = vld [vmem:[#allocation8 + $0x228] sm:$0xff]
    %v3150 = vld [vmem:[#allocation8 + $0x230] sm:$0xf]
    %v3151 = vld [vmem:[#allocation8 + $0x234] sm:$0xff]
    %v3152 = vld [vmem:[#allocation8 + $0x23c] sm:$0xf]
    %v3153 = vld [vmem:[#allocation8 + $0x240] sm:$0xff]
    %v3154 = vld [vmem:[#allocation8 + $0x248] sm:$0xf]
    %v3155 = vld [vmem:[#allocation8 + $0x24c] sm:$0xff]
    %v3156 = vld [vmem:[#allocation8 + $0x254] sm:$0xf]
    %v3157 = vld [vmem:[#allocation8 + $0x258] sm:$0xff]
    %v3158 = vld [vmem:[#allocation8 + $0x260] sm:$0xf]
    %v3159 = vld [vmem:[#allocation8 + $0x264] sm:$0xff]
    %v3160 = vld [vmem:[#allocation8 + $0x26c] sm:$0xf]
    %v3161 = vld [vmem:[#allocation8 + $0x270] sm:$0xff]
    %v3162 = vld [vmem:[#allocation8 + $0x278] sm:$0xf]
    %v3163 = vld [vmem:[#allocation8 + $0x27c] sm:$0xff]
    %v3164 = vld [vmem:[#allocation8 + $0x284] sm:$0xf]
    %v3165 = vld [vmem:[#allocation8 + $0x288] sm:$0xff]
    %v3166 = vld [vmem:[#allocation8 + $0x290] sm:$0xf]
    %v3167 = vld [vmem:[#allocation8 + $0x294] sm:$0xff]
    %v3168 = vld [vmem:[#allocation8 + $0x29c] sm:$0xf]
    %v3169 = vld [vmem:[#allocation8 + $0x2a0] sm:$0xff]
    %v3170 = vld [vmem:[#allocation8 + $0x2a8] sm:$0xf]
    %v3171 = vld [vmem:[#allocation8 + $0x2ac] sm:$0xff]
    %v3172 = vld [vmem:[#allocation8 + $0x2b4] sm:$0xf]
    %v3173 = vld [vmem:[#allocation8 + $0x2b8] sm:$0xff]
    %v3174 = vld [vmem:[#allocation8 + $0x2c0] sm:$0xf]
    %v3175 = vld [vmem:[#allocation8 + $0x2c4] sm:$0xff]
    %v3176 = vld [vmem:[#allocation8 + $0x2cc] sm:$0xf]
    %v3177 = vld [vmem:[#allocation8 + $0x2d0] sm:$0xff]
    %v3178 = vld [vmem:[#allocation8 + $0x2d8] sm:$0xf]
    %v3179 = vld [vmem:[#allocation8 + $0x2dc] sm:$0xff]
    %v3180 = vld [vmem:[#allocation8 + $0x2e4] sm:$0xf]
    %v3181 = vld [vmem:[#allocation8 + $0x2e8] sm:$0xff]
    %v3182 = vld [vmem:[#allocation8 + $0x2f0] sm:$0xf]
    %v3183 = vld [vmem:[#allocation8 + $0x2f4] sm:$0xff]
    %v3184 = vld [vmem:[#allocation8 + $0x2fc] sm:$0xf]
    %v3185 = vld [vmem:[#allocation8 + $0x300] sm:$0xff]
    %v3186 = vld [vmem:[#allocation8 + $0x308] sm:$0xf]
    %v3187 = vld [vmem:[#allocation8 + $0x30c] sm:$0xff]
    %v3188 = vld [vmem:[#allocation8 + $0x314] sm:$0xf]
    %v3189 = vld [vmem:[#allocation8 + $0x318] sm:$0xff]
    %v3190 = vld [vmem:[#allocation8 + $0x320] sm:$0xf]
    %v3191 = vld [vmem:[#allocation8 + $0x324] sm:$0xff]
    %v3192 = vld [vmem:[#allocation8 + $0x32c] sm:$0xf]
    %v3193 = vld [vmem:[#allocation8 + $0x330] sm:$0xff]
    %v3194 = vld [vmem:[#allocation8 + $0x338] sm:$0xf]
    %v3195 = vld [vmem:[#allocation8 + $0x33c] sm:$0xff]
    %v3196 = vld [vmem:[#allocation8 + $0x344] sm:$0xf]
    %v3197 = vld [vmem:[#allocation8 + $0x348] sm:$0xff]
    %v3198 = vld [vmem:[#allocation8 + $0x350] sm:$0xf]
    %v3199 = vld [vmem:[#allocation8 + $0x354] sm:$0xff]
    %v3200 = vld [vmem:[#allocation8 + $0x35c] sm:$0xf]
    %v3201 = vld [vmem:[#allocation8 + $0x360] sm:$0xff]
    %v3202 = vld [vmem:[#allocation8 + $0x368] sm:$0xf]
    %v3203 = vld [vmem:[#allocation8 + $0x36c] sm:$0xff]
    %v3204 = vld [vmem:[#allocation8 + $0x374] sm:$0xf]
    %v3205 = vld [vmem:[#allocation8 + $0x378] sm:$0xff]
    %v3206 = vld [vmem:[#allocation8 + $0x380] sm:$0xf]
    %v3207 = vld [vmem:[#allocation8 + $0x384] sm:$0xff]
    %v3208 = vld [vmem:[#allocation8 + $0x38c] sm:$0xf]
    %v3209 = vld [vmem:[#allocation8 + $0x390] sm:$0xff]
    %v3210 = vld [vmem:[#allocation8 + $0x398] sm:$0xf]
    %v3211 = vld [vmem:[#allocation8 + $0x39c] sm:$0xff]
    %v3212 = vld [vmem:[#allocation8 + $0x3a4] sm:$0xf]
    %v3213 = vld [vmem:[#allocation8 + $0x3a8] sm:$0xff]
    %v3214 = vld [vmem:[#allocation8 + $0x3b0] sm:$0xf]
    %v3215 = vld [vmem:[#allocation8 + $0x3b4] sm:$0xff]
    %v3216 = vld [vmem:[#allocation8 + $0x3bc] sm:$0xf]
    %v3217 = vld [vmem:[#allocation8 + $0x3c0] sm:$0xff]
    %v3218 = vld [vmem:[#allocation8 + $0x3c8] sm:$0xf]
    %v3219 = vld [vmem:[#allocation8 + $0x3cc] sm:$0xff]
    %v3220 = vld [vmem:[#allocation8 + $0x3d4] sm:$0xf]
    %v3221 = vld [vmem:[#allocation8 + $0x3d8] sm:$0xff]
    %v3222 = vld [vmem:[#allocation8 + $0x3e0] sm:$0xf]
    %v3223 = vld [vmem:[#allocation8 + $0x3e4] sm:$0xff]
    %v3224 = vld [vmem:[#allocation8 + $0x3ec] sm:$0xf]
    %v3225 = vld [vmem:[#allocation8 + $0x3f0] sm:$0xff]
    %v3226 = vld [vmem:[#allocation8 + $0x3f8] sm:$0xf]
    %v3227 = vld [vmem:[#allocation8 + $0x3fc] sm:$0xff]
    %v3228 = vld [vmem:[#allocation8 + $0x404] sm:$0xf]
    %v3229 = vld [vmem:[#allocation8 + $0x408] sm:$0xff]
    %v3230 = vld [vmem:[#allocation8 + $0x410] sm:$0xf]
    %v3231 = vld [vmem:[#allocation8 + $0x414] sm:$0xff]
    %v3232 = vld [vmem:[#allocation8 + $0x41c] sm:$0xf]
    %v3233 = vld [vmem:[#allocation8 + $0x420] sm:$0xff]
    %v3234 = vld [vmem:[#allocation8 + $0x428] sm:$0xf]
    %v3235 = vld [vmem:[#allocation8 + $0x42c] sm:$0xff]
    %v3236 = vld [vmem:[#allocation8 + $0x434] sm:$0xf]
    %v3237 = vld [vmem:[#allocation8 + $0x438] sm:$0xff]
    %v3238 = vld [vmem:[#allocation8 + $0x440] sm:$0xf]
    %v3239 = vld [vmem:[#allocation8 + $0x444] sm:$0xff]
    %v3240 = vld [vmem:[#allocation8 + $0x44c] sm:$0xf]
    %v3241 = vld [vmem:[#allocation8 + $0x450] sm:$0xff]
    %v3242 = vld [vmem:[#allocation8 + $0x458] sm:$0xf]
    %v3243 = vld [vmem:[#allocation8 + $0x45c] sm:$0xff]
    %v3244 = vld [vmem:[#allocation8 + $0x464] sm:$0xf]
    %v3245 = vld [vmem:[#allocation8 + $0x468] sm:$0xff]
    %v3246 = vld [vmem:[#allocation8 + $0x470] sm:$0xf]
    %v3247 = vld [vmem:[#allocation8 + $0x474] sm:$0xff]
    %v3248 = vld [vmem:[#allocation8 + $0x47c] sm:$0xf]
    %v3249 = vld [vmem:[#allocation8 + $0x480] sm:$0xff]
    %v3250 = vld [vmem:[#allocation8 + $0x488] sm:$0xf]
    %v3251 = vld [vmem:[#allocation8 + $0x48c] sm:$0xff]
    %v3252 = vld [vmem:[#allocation8 + $0x494] sm:$0xf]
    %v3253 = vld [vmem:[#allocation8 + $0x498] sm:$0xff]
    %v3254 = vld [vmem:[#allocation8 + $0x4a0] sm:$0xf]
    %v3255 = vld [vmem:[#allocation8 + $0x4a4] sm:$0xff]
    %v3256 = vld [vmem:[#allocation8 + $0x4ac] sm:$0xf]
    %v3257 = vld [vmem:[#allocation8 + $0x4b0] sm:$0xff]
    %v3258 = vld [vmem:[#allocation8 + $0x4b8] sm:$0xf]
    %v3259 = vld [vmem:[#allocation8 + $0x4bc] sm:$0xff]
    %v3260 = vld [vmem:[#allocation8 + $0x4c4] sm:$0xf]
    %v3261 = vld [vmem:[#allocation8 + $0x4c8] sm:$0xff]
    %v3262 = vld [vmem:[#allocation8 + $0x4d0] sm:$0xf]
    %v3263 = vld [vmem:[#allocation8 + $0x4d4] sm:$0xff]
    %v3264 = vld [vmem:[#allocation8 + $0x4dc] sm:$0xf]
    %v3265 = vld [vmem:[#allocation8 + $0x4e0] sm:$0xff]
    %v3266 = vld [vmem:[#allocation8 + $0x4e8] sm:$0xf]
    %v3267 = vld [vmem:[#allocation8 + $0x4ec] sm:$0xff]
    %v3268 = vld [vmem:[#allocation8 + $0x4f4] sm:$0xf]
    %v3269 = vld [vmem:[#allocation8 + $0x4f8] sm:$0xff]
    %v3270 = vld [vmem:[#allocation8 + $0x500] sm:$0xf]
    %v3271 = vld [vmem:[#allocation8 + $0x504] sm:$0xff]
    %v3272 = vld [vmem:[#allocation8 + $0x50c] sm:$0xf]
    %v3273 = vld [vmem:[#allocation8 + $0x510] sm:$0xff]
    %v3274 = vld [vmem:[#allocation8 + $0x518] sm:$0xf]
    %v3275 = vld [vmem:[#allocation8 + $0x51c] sm:$0xff]
    %v3276 = vld [vmem:[#allocation8 + $0x524] sm:$0xf]
    %v3277 = vld [vmem:[#allocation8 + $0x528] sm:$0xff]
    %v3278 = vld [vmem:[#allocation8 + $0x530] sm:$0xf]
    %v3279 = vld [vmem:[#allocation8 + $0x534] sm:$0xff]
    %v3280 = vld [vmem:[#allocation8 + $0x53c] sm:$0xf]
    %v3281 = vld [vmem:[#allocation10] sm:$0x7]
    %v3283 = vlaneseq
    %v3284 = vshrl.u32 %v3283, 7
    %v3285 = vsub.s32 0, %v3284
    %v3286 = vrot.slane %v3281, %v3285
    %v3287 = vlaneseq
    %v3288 = vshrl.u32 %v3287, 7
    %v3289 = vsub.s32 1, %v3288
    %v3290 = vrot.slane %v3281, %v3289
    %v3291 = vlaneseq
    %v3292 = vshrl.u32 %v3291, 7
    %v3293 = vsub.s32 2, %v3292
    %v3294 = vrot.slane %v3281, %v3293
    %v3522 = vunpack.c.l.b16 %v3057
    %v3523 = vunpack.c.h.b16 %v3057
    %v3524 = vunpack.c.l.b16 %v3058
    %v3525 = vunpack.c.l.b16 %v3059
    %v3526 = vunpack.c.h.b16 %v3059
    %v3527 = vunpack.c.l.b16 %v3060
    %v3528 = vunpack.c.l.b16 %v3061
    %v3529 = vunpack.c.h.b16 %v3061
    %v3530 = vunpack.c.l.b16 %v3062
    %v3531 = vunpack.c.l.b16 %v3063
    %v3532 = vunpack.c.h.b16 %v3063
    %v3533 = vunpack.c.l.b16 %v3064
    %v3534 = vunpack.c.l.b16 %v3065
    %v3535 = vunpack.c.h.b16 %v3065
    %v3536 = vunpack.c.l.b16 %v3066
    %v3537 = vunpack.c.l.b16 %v3067
    %v3538 = vunpack.c.h.b16 %v3067
    %v3539 = vunpack.c.l.b16 %v3068
    %v3540 = vunpack.c.l.b16 %v3069
    %v3541 = vunpack.c.h.b16 %v3069
    %v3542 = vunpack.c.l.b16 %v3070
    %v3543 = vunpack.c.l.b16 %v3071
    %v3544 = vunpack.c.h.b16 %v3071
    %v3545 = vunpack.c.l.b16 %v3072
    %v3546 = vunpack.c.l.b16 %v3073
    %v3547 = vunpack.c.h.b16 %v3073
    %v3548 = vunpack.c.l.b16 %v3074
    %v3549 = vunpack.c.l.b16 %v3075
    %v3550 = vunpack.c.h.b16 %v3075
    %v3551 = vunpack.c.l.b16 %v3076
    %v3552 = vunpack.c.l.b16 %v3077
    %v3553 = vunpack.c.h.b16 %v3077
    %v3554 = vunpack.c.l.b16 %v3078
    %v3555 = vunpack.c.l.b16 %v3079
    %v3556 = vunpack.c.h.b16 %v3079
    %v3557 = vunpack.c.l.b16 %v3080
    %v3558 = vunpack.c.l.b16 %v3081
    %v3559 = vunpack.c.h.b16 %v3081
    %v3560 = vunpack.c.l.b16 %v3082
    %v3561 = vunpack.c.l.b16 %v3083
    %v3562 = vunpack.c.h.b16 %v3083
    %v3563 = vunpack.c.l.b16 %v3084
    %v3564 = vunpack.c.l.b16 %v3085
    %v3565 = vunpack.c.h.b16 %v3085
    %v3566 = vunpack.c.l.b16 %v3086
    %v3567 = vunpack.c.l.b16 %v3087
    %v3568 = vunpack.c.h.b16 %v3087
    %v3569 = vunpack.c.l.b16 %v3088
    %v3570 = vunpack.c.l.b16 %v3089
    %v3571 = vunpack.c.h.b16 %v3089
    %v3572 = vunpack.c.l.b16 %v3090
    %v3573 = vunpack.c.l.b16 %v3091
    %v3574 = vunpack.c.h.b16 %v3091
    %v3575 = vunpack.c.l.b16 %v3092
    %v3576 = vunpack.c.l.b16 %v3093
    %v3577 = vunpack.c.h.b16 %v3093
    %v3578 = vunpack.c.l.b16 %v3094
    %v3579 = vunpack.c.l.b16 %v3095
    %v3580 = vunpack.c.h.b16 %v3095
    %v3581 = vunpack.c.l.b16 %v3096
    %v3582 = vunpack.c.l.b16 %v3097
    %v3583 = vunpack.c.h.b16 %v3097
    %v3584 = vunpack.c.l.b16 %v3098
    %v3585 = vunpack.c.l.b16 %v3099
    %v3586 = vunpack.c.h.b16 %v3099
    %v3587 = vunpack.c.l.b16 %v3100
    %v3588 = vunpack.c.l.b16 %v3101
    %v3589 = vunpack.c.h.b16 %v3101
    %v3590 = vunpack.c.l.b16 %v3102
    %v3591 = vunpack.c.l.b16 %v3103
    %v3592 = vunpack.c.h.b16 %v3103
    %v3593 = vunpack.c.l.b16 %v3104
    %v3594 = vunpack.c.l.b16 %v3105
    %v3595 = vunpack.c.h.b16 %v3105
    %v3596 = vunpack.c.l.b16 %v3106
    %v3597 = vunpack.c.l.b16 %v3107
    %v3598 = vunpack.c.h.b16 %v3107
    %v3599 = vunpack.c.l.b16 %v3108
    %v3600 = vunpack.c.l.b16 %v3109
    %v3601 = vunpack.c.h.b16 %v3109
    %v3602 = vunpack.c.l.b16 %v3110
    %v3603 = vunpack.c.l.b16 %v3111
    %v3604 = vunpack.c.h.b16 %v3111
    %v3605 = vunpack.c.l.b16 %v3112
    %v3606 = vunpack.c.l.b16 %v3113
    %v3607 = vunpack.c.h.b16 %v3113
    %v3608 = vunpack.c.l.b16 %v3114
    %v3609 = vunpack.c.l.b16 %v3115
    %v3610 = vunpack.c.h.b16 %v3115
    %v3611 = vunpack.c.l.b16 %v3116
    %v3612 = vunpack.c.l.b16 %v3117
    %v3613 = vunpack.c.h.b16 %v3117
    %v3614 = vunpack.c.l.b16 %v3118
    %v3615 = vunpack.c.l.b16 %v3119
    %v3616 = vunpack.c.h.b16 %v3119
    %v3617 = vunpack.c.l.b16 %v3120
    %v3618 = vunpack.c.l.b16 %v3121
    %v3619 = vunpack.c.h.b16 %v3121
    %v3620 = vunpack.c.l.b16 %v3122
    %v3621 = vunpack.c.l.b16 %v3123
    %v3622 = vunpack.c.h.b16 %v3123
    %v3623 = vunpack.c.l.b16 %v3124
    %v3624 = vunpack.c.l.b16 %v3125
    %v3625 = vunpack.c.h.b16 %v3125
    %v3626 = vunpack.c.l.b16 %v3126
    %v3627 = vunpack.c.l.b16 %v3127
    %v3628 = vunpack.c.h.b16 %v3127
    %v3629 = vunpack.c.l.b16 %v3128
    %v3630 = vunpack.c.l.b16 %v3129
    %v3631 = vunpack.c.h.b16 %v3129
    %v3632 = vunpack.c.l.b16 %v3130
    %v3633 = vunpack.c.l.b16 %v3131
    %v3634 = vunpack.c.h.b16 %v3131
    %v3635 = vunpack.c.l.b16 %v3132
    %v3636 = vunpack.c.l.b16 %v3133
    %v3637 = vunpack.c.h.b16 %v3133
    %v3638 = vunpack.c.l.b16 %v3134
    %v3639 = vunpack.c.l.b16 %v3135
    %v3640 = vunpack.c.h.b16 %v3135
    %v3641 = vunpack.c.l.b16 %v3136
    %v3642 = vunpack.c.l.b16 %v3137
    %v3643 = vunpack.c.h.b16 %v3137
    %v3644 = vunpack.c.l.b16 %v3138
    %v3645 = vunpack.c.l.b16 %v3139
    %v3646 = vunpack.c.h.b16 %v3139
    %v3647 = vunpack.c.l.b16 %v3140
    %v3648 = vunpack.c.l.b16 %v3141
    %v3649 = vunpack.c.h.b16 %v3141
    %v3650 = vunpack.c.l.b16 %v3142
    %v3651 = vunpack.c.l.b16 %v3143
    %v3652 = vunpack.c.h.b16 %v3143
    %v3653 = vunpack.c.l.b16 %v3144
    %v3654 = vunpack.c.l.b16 %v3145
    %v3655 = vunpack.c.h.b16 %v3145
    %v3656 = vunpack.c.l.b16 %v3146
    %v3657 = vunpack.c.l.b16 %v3147
    %v3658 = vunpack.c.h.b16 %v3147
    %v3659 = vunpack.c.l.b16 %v3148
    %v3660 = vunpack.c.l.b16 %v3149
    %v3661 = vunpack.c.h.b16 %v3149
    %v3662 = vunpack.c.l.b16 %v3150
    %v3663 = vunpack.c.l.b16 %v3151
    %v3664 = vunpack.c.h.b16 %v3151
    %v3665 = vunpack.c.l.b16 %v3152
    %v3666 = vunpack.c.l.b16 %v3153
    %v3667 = vunpack.c.h.b16 %v3153
    %v3668 = vunpack.c.l.b16 %v3154
    %v3669 = vunpack.c.l.b16 %v3155
    %v3670 = vunpack.c.h.b16 %v3155
    %v3671 = vunpack.c.l.b16 %v3156
    %v3672 = vunpack.c.l.b16 %v3157
    %v3673 = vunpack.c.h.b16 %v3157
    %v3674 = vunpack.c.l.b16 %v3158
    %v3675 = vunpack.c.l.b16 %v3159
    %v3676 = vunpack.c.h.b16 %v3159
    %v3677 = vunpack.c.l.b16 %v3160
    %v3678 = vunpack.c.l.b16 %v3161
    %v3679 = vunpack.c.h.b16 %v3161
    %v3680 = vunpack.c.l.b16 %v3162
    %v3681 = vunpack.c.l.b16 %v3163
    %v3682 = vunpack.c.h.b16 %v3163
    %v3683 = vunpack.c.l.b16 %v3164
    %v3684 = vunpack.c.l.b16 %v3165
    %v3685 = vunpack.c.h.b16 %v3165
    %v3686 = vunpack.c.l.b16 %v3166
    %v3687 = vunpack.c.l.b16 %v3167
    %v3688 = vunpack.c.h.b16 %v3167
    %v3689 = vunpack.c.l.b16 %v3168
    %v3690 = vunpack.c.l.b16 %v3169
    %v3691 = vunpack.c.h.b16 %v3169
    %v3692 = vunpack.c.l.b16 %v3170
    %v3693 = vunpack.c.l.b16 %v3171
    %v3694 = vunpack.c.h.b16 %v3171
    %v3695 = vunpack.c.l.b16 %v3172
    %v3696 = vunpack.c.l.b16 %v3173
    %v3697 = vunpack.c.h.b16 %v3173
    %v3698 = vunpack.c.l.b16 %v3174
    %v3699 = vunpack.c.l.b16 %v3175
    %v3700 = vunpack.c.h.b16 %v3175
    %v3701 = vunpack.c.l.b16 %v3176
    %v3702 = vunpack.c.l.b16 %v3177
    %v3703 = vunpack.c.h.b16 %v3177
    %v3704 = vunpack.c.l.b16 %v3178
    %v3705 = vunpack.c.l.b16 %v3179
    %v3706 = vunpack.c.h.b16 %v3179
    %v3707 = vunpack.c.l.b16 %v3180
    %v3708 = vunpack.c.l.b16 %v3181
    %v3709 = vunpack.c.h.b16 %v3181
    %v3710 = vunpack.c.l.b16 %v3182
    %v3711 = vunpack.c.l.b16 %v3183
    %v3712 = vunpack.c.h.b16 %v3183
    %v3713 = vunpack.c.l.b16 %v3184
    %v3714 = vunpack.c.l.b16 %v3185
    %v3715 = vunpack.c.h.b16 %v3185
    %v3716 = vunpack.c.l.b16 %v3186
    %v3717 = vunpack.c.l.b16 %v3187
    %v3718 = vunpack.c.h.b16 %v3187
    %v3719 = vunpack.c.l.b16 %v3188
    %v3720 = vunpack.c.l.b16 %v3189
    %v3721 = vunpack.c.h.b16 %v3189
    %v3722 = vunpack.c.l.b16 %v3190
    %v3723 = vunpack.c.l.b16 %v3191
    %v3724 = vunpack.c.h.b16 %v3191
    %v3725 = vunpack.c.l.b16 %v3192
    %v3726 = vunpack.c.l.b16 %v3193
    %v3727 = vunpack.c.h.b16 %v3193
    %v3728 = vunpack.c.l.b16 %v3194
    %v3729 = vunpack.c.l.b16 %v3195
    %v3730 = vunpack.c.h.b16 %v3195
    %v3731 = vunpack.c.l.b16 %v3196
    %v3732 = vunpack.c.l.b16 %v3197
    %v3733 = vunpack.c.h.b16 %v3197
    %v3734 = vunpack.c.l.b16 %v3198
    %v3735 = vunpack.c.l.b16 %v3199
    %v3736 = vunpack.c.h.b16 %v3199
    %v3737 = vunpack.c.l.b16 %v3200
    %v3738 = vunpack.c.l.b16 %v3201
    %v3739 = vunpack.c.h.b16 %v3201
    %v3740 = vunpack.c.l.b16 %v3202
    %v3741 = vunpack.c.l.b16 %v3203
    %v3742 = vunpack.c.h.b16 %v3203
    %v3743 = vunpack.c.l.b16 %v3204
    %v3744 = vunpack.c.l.b16 %v3205
    %v3745 = vunpack.c.h.b16 %v3205
    %v3746 = vunpack.c.l.b16 %v3206
    %v3747 = vunpack.c.l.b16 %v3207
    %v3748 = vunpack.c.h.b16 %v3207
    %v3749 = vunpack.c.l.b16 %v3208
    %v3750 = vunpack.c.l.b16 %v3209
    %v3751 = vunpack.c.h.b16 %v3209
    %v3752 = vunpack.c.l.b16 %v3210
    %v3753 = vunpack.c.l.b16 %v3211
    %v3754 = vunpack.c.h.b16 %v3211
    %v3755 = vunpack.c.l.b16 %v3212
    %v3756 = vunpack.c.l.b16 %v3213
    %v3757 = vunpack.c.h.b16 %v3213
    %v3758 = vunpack.c.l.b16 %v3214
    %v3759 = vunpack.c.l.b16 %v3215
    %v3760 = vunpack.c.h.b16 %v3215
    %v3761 = vunpack.c.l.b16 %v3216
    %v3762 = vunpack.c.l.b16 %v3217
    %v3763 = vunpack.c.h.b16 %v3217
    %v3764 = vunpack.c.l.b16 %v3218
    %v3765 = vunpack.c.l.b16 %v3219
    %v3766 = vunpack.c.h.b16 %v3219
    %v3767 = vunpack.c.l.b16 %v3220
    %v3768 = vunpack.c.l.b16 %v3221
    %v3769 = vunpack.c.h.b16 %v3221
    %v3770 = vunpack.c.l.b16 %v3222
    %v3771 = vunpack.c.l.b16 %v3223
    %v3772 = vunpack.c.h.b16 %v3223
    %v3773 = vunpack.c.l.b16 %v3224
    %v3774 = vunpack.c.l.b16 %v3225
    %v3775 = vunpack.c.h.b16 %v3225
    %v3776 = vunpack.c.l.b16 %v3226
    %v3777 = vunpack.c.l.b16 %v3227
    %v3778 = vunpack.c.h.b16 %v3227
    %v3779 = vunpack.c.l.b16 %v3228
    %v3780 = vunpack.c.l.b16 %v3229
    %v3781 = vunpack.c.h.b16 %v3229
    %v3782 = vunpack.c.l.b16 %v3230
    %v3783 = vunpack.c.l.b16 %v3231
    %v3784 = vunpack.c.h.b16 %v3231
    %v3785 = vunpack.c.l.b16 %v3232
    %v3786 = vunpack.c.l.b16 %v3233
    %v3787 = vunpack.c.h.b16 %v3233
    %v3788 = vunpack.c.l.b16 %v3234
    %v3789 = vunpack.c.l.b16 %v3235
    %v3790 = vunpack.c.h.b16 %v3235
    %v3791 = vunpack.c.l.b16 %v3236
    %v3792 = vunpack.c.l.b16 %v3237
    %v3793 = vunpack.c.h.b16 %v3237
    %v3794 = vunpack.c.l.b16 %v3238
    %v3795 = vunpack.c.l.b16 %v3239
    %v3796 = vunpack.c.h.b16 %v3239
    %v3797 = vunpack.c.l.b16 %v3240
    %v3798 = vunpack.c.l.b16 %v3241
    %v3799 = vunpack.c.h.b16 %v3241
    %v3800 = vunpack.c.l.b16 %v3242
    %v3801 = vunpack.c.l.b16 %v3243
    %v3802 = vunpack.c.h.b16 %v3243
    %v3803 = vunpack.c.l.b16 %v3244
    %v3804 = vunpack.c.l.b16 %v3245
    %v3805 = vunpack.c.h.b16 %v3245
    %v3806 = vunpack.c.l.b16 %v3246
    %v3807 = vunpack.c.l.b16 %v3247
    %v3808 = vunpack.c.h.b16 %v3247
    %v3809 = vunpack.c.l.b16 %v3248
    %v3810 = vunpack.c.l.b16 %v3249
    %v3811 = vunpack.c.h.b16 %v3249
    %v3812 = vunpack.c.l.b16 %v3250
    %v3813 = vunpack.c.l.b16 %v3251
    %v3814 = vunpack.c.h.b16 %v3251
    %v3815 = vunpack.c.l.b16 %v3252
    %v3816 = vunpack.c.l.b16 %v3253
    %v3817 = vunpack.c.h.b16 %v3253
    %v3818 = vunpack.c.l.b16 %v3254
    %v3819 = vunpack.c.l.b16 %v3255
    %v3820 = vunpack.c.h.b16 %v3255
    %v3821 = vunpack.c.l.b16 %v3256
    %v3822 = vunpack.c.l.b16 %v3257
    %v3823 = vunpack.c.h.b16 %v3257
    %v3824 = vunpack.c.l.b16 %v3258
    %v3825 = vunpack.c.l.b16 %v3259
    %v3826 = vunpack.c.h.b16 %v3259
    %v3827 = vunpack.c.l.b16 %v3260
    %v3828 = vunpack.c.l.b16 %v3261
    %v3829 = vunpack.c.h.b16 %v3261
    %v3830 = vunpack.c.l.b16 %v3262
    %v3831 = vunpack.c.l.b16 %v3263
    %v3832 = vunpack.c.h.b16 %v3263
    %v3833 = vunpack.c.l.b16 %v3264
    %v3834 = vunpack.c.l.b16 %v3265
    %v3835 = vunpack.c.h.b16 %v3265
    %v3836 = vunpack.c.l.b16 %v3266
    %v3837 = vunpack.c.l.b16 %v3267
    %v3838 = vunpack.c.h.b16 %v3267
    %v3839 = vunpack.c.l.b16 %v3268
    %v3840 = vunpack.c.l.b16 %v3269
    %v3841 = vunpack.c.h.b16 %v3269
    %v3842 = vunpack.c.l.b16 %v3270
    %v3843 = vunpack.c.l.b16 %v3271
    %v3844 = vunpack.c.h.b16 %v3271
    %v3845 = vunpack.c.l.b16 %v3272
    %v3846 = vunpack.c.l.b16 %v3273
    %v3847 = vunpack.c.h.b16 %v3273
    %v3848 = vunpack.c.l.b16 %v3274
    %v3849 = vunpack.c.l.b16 %v3275
    %v3850 = vunpack.c.h.b16 %v3275
    %v3851 = vunpack.c.l.b16 %v3276
    %v3852 = vunpack.c.l.b16 %v3277
    %v3853 = vunpack.c.h.b16 %v3277
    %v3854 = vunpack.c.l.b16 %v3278
    %v3855 = vunpack.c.l.b16 %v3279
    %v3856 = vunpack.c.h.b16 %v3279
    %v3857 = vunpack.c.l.b16 %v3280
    %v3858 = vpack.c.b16 %v3525, %v3522
    %v3859 = vpack.c.b16 %v3526, %v3523
    %v3860 = vpack.c.b16 %v3527, %v3524
    %v3861 = vpack.c.b16 %v3531, %v3528
    %v3862 = vpack.c.b16 %v3532, %v3529
    %v3863 = vpack.c.b16 %v3533, %v3530
    %v3864 = vpack.c.b16 %v3537, %v3534
    %v3865 = vpack.c.b16 %v3538, %v3535
    %v3866 = vpack.c.b16 %v3539, %v3536
    %v3867 = vpack.c.b16 %v3543, %v3540
    %v3868 = vpack.c.b16 %v3544, %v3541
    %v3869 = vpack.c.b16 %v3545, %v3542
    %v3870 = vpack.c.b16 %v3549, %v3546
    %v3871 = vpack.c.b16 %v3550, %v3547
    %v3872 = vpack.c.b16 %v3551, %v3548
    %v3873 = vpack.c.b16 %v3555, %v3552
    %v3874 = vpack.c.b16 %v3556, %v3553
    %v3875 = vpack.c.b16 %v3557, %v3554
    %v3876 = vpack.c.b16 %v3561, %v3558
    %v3877 = vpack.c.b16 %v3562, %v3559
    %v3878 = vpack.c.b16 %v3563, %v3560
    %v3879 = vpack.c.b16 %v3567, %v3564
    %v3880 = vpack.c.b16 %v3568, %v3565
    %v3881 = vpack.c.b16 %v3569, %v3566
    %v3882 = vpack.c.b16 %v3573, %v3570
    %v3883 = vpack.c.b16 %v3574, %v3571
    %v3884 = vpack.c.b16 %v3575, %v3572
    %v3885 = vpack.c.b16 %v3579, %v3576
    %v3886 = vpack.c.b16 %v3580, %v3577
    %v3887 = vpack.c.b16 %v3581, %v3578
    %v3888 = vpack.c.b16 %v3585, %v3582
    %v3889 = vpack.c.b16 %v3586, %v3583
    %v3890 = vpack.c.b16 %v3587, %v3584
    %v3891 = vpack.c.b16 %v3591, %v3588
    %v3892 = vpack.c.b16 %v3592, %v3589
    %v3893 = vpack.c.b16 %v3593, %v3590
    %v3894 = vpack.c.b16 %v3597, %v3594
    %v3895 = vpack.c.b16 %v3598, %v3595
    %v3896 = vpack.c.b16 %v3599, %v3596
    %v3897 = vpack.c.b16 %v3603, %v3600
    %v3898 = vpack.c.b16 %v3604, %v3601
    %v3899 = vpack.c.b16 %v3605, %v3602
    %v3900 = vpack.c.b16 %v3609, %v3606
    %v3901 = vpack.c.b16 %v3610, %v3607
    %v3902 = vpack.c.b16 %v3611, %v3608
    %v3903 = vpack.c.b16 %v3615, %v3612
    %v3904 = vpack.c.b16 %v3616, %v3613
    %v3905 = vpack.c.b16 %v3617, %v3614
    %v3906 = vpack.c.b16 %v3621, %v3618
    %v3907 = vpack.c.b16 %v3622, %v3619
    %v3908 = vpack.c.b16 %v3623, %v3620
    %v3909 = vpack.c.b16 %v3627, %v3624
    %v3910 = vpack.c.b16 %v3628, %v3625
    %v3911 = vpack.c.b16 %v3629, %v3626
    %v3912 = vpack.c.b16 %v3633, %v3630
    %v3913 = vpack.c.b16 %v3634, %v3631
    %v3914 = vpack.c.b16 %v3635, %v3632
    %v3915 = vpack.c.b16 %v3639, %v3636
    %v3916 = vpack.c.b16 %v3640, %v3637
    %v3917 = vpack.c.b16 %v3641, %v3638
    %v3918 = vpack.c.b16 %v3645, %v3642
    %v3919 = vpack.c.b16 %v3646, %v3643
    %v3920 = vpack.c.b16 %v3647, %v3644
    %v3921 = vpack.c.b16 %v3651, %v3648
    %v3922 = vpack.c.b16 %v3652, %v3649
    %v3923 = vpack.c.b16 %v3653, %v3650
    %v3924 = vpack.c.b16 %v3657, %v3654
    %v3925 = vpack.c.b16 %v3658, %v3655
    %v3926 = vpack.c.b16 %v3659, %v3656
    %v3927 = vpack.c.b16 %v3663, %v3660
    %v3928 = vpack.c.b16 %v3664, %v3661
    %v3929 = vpack.c.b16 %v3665, %v3662
    %v3930 = vpack.c.b16 %v3669, %v3666
    %v3931 = vpack.c.b16 %v3670, %v3667
    %v3932 = vpack.c.b16 %v3671, %v3668
    %v3933 = vpack.c.b16 %v3675, %v3672
    %v3934 = vpack.c.b16 %v3676, %v3673
    %v3935 = vpack.c.b16 %v3677, %v3674
    %v3936 = vpack.c.b16 %v3681, %v3678
    %v3937 = vpack.c.b16 %v3682, %v3679
    %v3938 = vpack.c.b16 %v3683, %v3680
    %v3939 = vpack.c.b16 %v3687, %v3684
    %v3940 = vpack.c.b16 %v3688, %v3685
    %v3941 = vpack.c.b16 %v3689, %v3686
    %v3942 = vpack.c.b16 %v3693, %v3690
    %v3943 = vpack.c.b16 %v3694, %v3691
    %v3944 = vpack.c.b16 %v3695, %v3692
    %v3945 = vpack.c.b16 %v3699, %v3696
    %v3946 = vpack.c.b16 %v3700, %v3697
    %v3947 = vpack.c.b16 %v3701, %v3698
    %v3948 = vpack.c.b16 %v3705, %v3702
    %v3949 = vpack.c.b16 %v3706, %v3703
    %v3950 = vpack.c.b16 %v3707, %v3704
    %v3951 = vpack.c.b16 %v3711, %v3708
    %v3952 = vpack.c.b16 %v3712, %v3709
    %v3953 = vpack.c.b16 %v3713, %v3710
    %v3954 = vpack.c.b16 %v3717, %v3714
    %v3955 = vpack.c.b16 %v3718, %v3715
    %v3956 = vpack.c.b16 %v3719, %v3716
    %v3957 = vpack.c.b16 %v3723, %v3720
    %v3958 = vpack.c.b16 %v3724, %v3721
    %v3959 = vpack.c.b16 %v3725, %v3722
    %v3960 = vpack.c.b16 %v3729, %v3726
    %v3961 = vpack.c.b16 %v3730, %v3727
    %v3962 = vpack.c.b16 %v3731, %v3728
    %v3963 = vpack.c.b16 %v3735, %v3732
    %v3964 = vpack.c.b16 %v3736, %v3733
    %v3965 = vpack.c.b16 %v3737, %v3734
    %v3966 = vpack.c.b16 %v3741, %v3738
    %v3967 = vpack.c.b16 %v3742, %v3739
    %v3968 = vpack.c.b16 %v3743, %v3740
    %v3969 = vpack.c.b16 %v3747, %v3744
    %v3970 = vpack.c.b16 %v3748, %v3745
    %v3971 = vpack.c.b16 %v3749, %v3746
    %v3972 = vpack.c.b16 %v3753, %v3750
    %v3973 = vpack.c.b16 %v3754, %v3751
    %v3974 = vpack.c.b16 %v3755, %v3752
    %v3975 = vpack.c.b16 %v3759, %v3756
    %v3976 = vpack.c.b16 %v3760, %v3757
    %v3977 = vpack.c.b16 %v3761, %v3758
    %v3978 = vpack.c.b16 %v3765, %v3762
    %v3979 = vpack.c.b16 %v3766, %v3763
    %v3980 = vpack.c.b16 %v3767, %v3764
    %v3981 = vpack.c.b16 %v3771, %v3768
    %v3982 = vpack.c.b16 %v3772, %v3769
    %v3983 = vpack.c.b16 %v3773, %v3770
    %v3984 = vpack.c.b16 %v3777, %v3774
    %v3985 = vpack.c.b16 %v3778, %v3775
    %v3986 = vpack.c.b16 %v3779, %v3776
    %v3987 = vpack.c.b16 %v3783, %v3780
    %v3988 = vpack.c.b16 %v3784, %v3781
    %v3989 = vpack.c.b16 %v3785, %v3782
    %v3990 = vpack.c.b16 %v3789, %v3786
    %v3991 = vpack.c.b16 %v3790, %v3787
    %v3992 = vpack.c.b16 %v3791, %v3788
    %v3993 = vpack.c.b16 %v3795, %v3792
    %v3994 = vpack.c.b16 %v3796, %v3793
    %v3995 = vpack.c.b16 %v3797, %v3794
    %v3996 = vpack.c.b16 %v3801, %v3798
    %v3997 = vpack.c.b16 %v3802, %v3799
    %v3998 = vpack.c.b16 %v3803, %v3800
    %v3999 = vpack.c.b16 %v3807, %v3804
    %v4000 = vpack.c.b16 %v3808, %v3805
    %v4001 = vpack.c.b16 %v3809, %v3806
    %v4002 = vpack.c.b16 %v3813, %v3810
    %v4003 = vpack.c.b16 %v3814, %v3811
    %v4004 = vpack.c.b16 %v3815, %v3812
    %v4005 = vpack.c.b16 %v3819, %v3816
    %v4006 = vpack.c.b16 %v3820, %v3817
    %v4007 = vpack.c.b16 %v3821, %v3818
    %v4008 = vpack.c.b16 %v3825, %v3822
    %v4009 = vpack.c.b16 %v3826, %v3823
    %v4010 = vpack.c.b16 %v3827, %v3824
    %v4011 = vpack.c.b16 %v3831, %v3828
    %v4012 = vpack.c.b16 %v3832, %v3829
    %v4013 = vpack.c.b16 %v3833, %v3830
    %v4014 = vpack.c.b16 %v3837, %v3834
    %v4015 = vpack.c.b16 %v3838, %v3835
    %v4016 = vpack.c.b16 %v3839, %v3836
    %v4017 = vpack.c.b16 %v3843, %v3840
    %v4018 = vpack.c.b16 %v3844, %v3841
    %v4019 = vpack.c.b16 %v3845, %v3842
    %v4020 = vpack.c.b16 %v3849, %v3846
    %v4021 = vpack.c.b16 %v3850, %v3847
    %v4022 = vpack.c.b16 %v3851, %v3848
    %v4023 = vpack.c.b16 %v3855, %v3852
    %v4024 = vpack.c.b16 %v3856, %v3853
    %v4025 = vpack.c.b16 %v3857, %v3854
    %4194 = vmatprep.subr.bf16.mxu0 %v3859
    %4195 = vmatpush1.bf16.msra.mxu0 %v3858
    %4196 = vmatprep.subr.bf16.mxu0 %v3862
    %4197 = vmatpush1.bf16.msra.mxu0 %v3861
    %4198 = vmatprep.subr.bf16.mxu0 %v3865
    %4199 = vmatpush1.bf16.msra.mxu0 %v3864
    %4200 = vmatprep.subr.bf16.mxu0 %v3868
    %4201 = vmatpush1.bf16.msra.mxu0 %v3867
    %4202 = vmatprep.subr.bf16.mxu0 %v3871
    %4203 = vmatpush1.bf16.msra.mxu0 %v3870
    %4204 = vmatprep.subr.bf16.mxu0 %v3874
    %4205 = vmatpush1.bf16.msra.mxu0 %v3873
    %4206 = vmatprep.subr.bf16.mxu0 %v3877
    %4207 = vmatpush1.bf16.msra.mxu0 %v3876
    %4208 = vmatprep.subr.bf16.mxu0 %v3880
    %4209 = vmatpush1.bf16.msra.mxu0 %v3879
    %4210 = vmatprep.subr.bf16.mxu0 %v3883
    %4211 = vmatpush1.bf16.msra.mxu0 %v3882
    %4212 = vmatprep.subr.bf16.mxu0 %v3886
    %4213 = vmatpush1.bf16.msra.mxu0 %v3885
    %4214 = vmatprep.subr.bf16.mxu0 %v3889
    %4215 = vmatpush1.bf16.msra.mxu0 %v3888
    %4216 = vmatprep.subr.bf16.mxu0 %v3892
    %4217 = vmatpush1.bf16.msra.mxu0 %v3891
    %4218 = vmatprep.subr.bf16.mxu0 %v3895
    %4219 = vmatpush1.bf16.msra.mxu0 %v3894
    %4220 = vmatprep.subr.bf16.mxu0 %v3898
    %4221 = vmatpush1.bf16.msra.mxu0 %v3897
    %4222 = vmatprep.subr.bf16.mxu0 %v3901
    %4223 = vmatpush1.bf16.msra.mxu0 %v3900
    %4224 = vmatprep.subr.bf16.mxu0 %v3904
    %4225 = vmatpush1.bf16.msra.mxu0 %v3903
    %4226 = vmatprep.mubr.bf16.mxu0 %v3051
    %4227 = vmatmul.mubr.bf16.gmra.mrb[0].mxu0 %v3050
    %v4228 = vpop.f32.mrb[0].mxu0
    %v4229 = vadd.f32 %v3286, %v4228
    %v4230 = vpop.f32.mrb[0].mxu0
    %v4231 = vadd.f32 %v3290, %v4230
    %v4232 = vpop.f32.mrb[0].mxu0
    %v4233 = vpop.f32.mrb[0].mxu0
    %4234 = vdwg.mxu0
    %4235 = vmatprep.subr.bf16.mxu0 %v3907
    %4236 = vmatpush1.bf16.msra.mxu0 %v3906
    %4237 = vmatprep.subr.bf16.mxu0 %v3910
    %4238 = vmatpush1.bf16.msra.mxu0 %v3909
    %4239 = vmatprep.subr.bf16.mxu0 %v3913
    %4240 = vmatpush1.bf16.msra.mxu0 %v3912
    %4241 = vmatprep.subr.bf16.mxu0 %v3916
    %4242 = vmatpush1.bf16.msra.mxu0 %v3915
    %4243 = vmatprep.subr.bf16.mxu0 %v3919
    %4244 = vmatpush1.bf16.msra.mxu0 %v3918
    %4245 = vmatprep.subr.bf16.mxu0 %v3922
    %4246 = vmatpush1.bf16.msra.mxu0 %v3921
    %4247 = vmatprep.subr.bf16.mxu0 %v3925
    %4248 = vmatpush1.bf16.msra.mxu0 %v3924
    %4249 = vmatprep.subr.bf16.mxu0 %v3928
    %4250 = vmatpush1.bf16.msra.mxu0 %v3927
    %4251 = vmatprep.subr.bf16.mxu0 %v3931
    %4252 = vmatpush1.bf16.msra.mxu0 %v3930
    %4253 = vmatprep.subr.bf16.mxu0 %v3934
    %4254 = vmatpush1.bf16.msra.mxu0 %v3933
    %4255 = vmatprep.subr.bf16.mxu0 %v3937
    %4256 = vmatpush1.bf16.msra.mxu0 %v3936
    %4257 = vmatprep.subr.bf16.mxu0 %v3940
    %4258 = vmatpush1.bf16.msra.mxu0 %v3939
    %4259 = vmatprep.subr.bf16.mxu0 %v3943
    %4260 = vmatpush1.bf16.msra.mxu0 %v3942
    %4261 = vmatprep.subr.bf16.mxu0 %v3946
    %4262 = vmatpush1.bf16.msra.mxu0 %v3945
    %4263 = vmatprep.subr.bf16.mxu0 %v3949
    %4264 = vmatpush1.bf16.msra.mxu0 %v3948
    %4265 = vmatprep.subr.bf16.mxu0 %v3952
    %4266 = vmatpush1.bf16.msra.mxu0 %v3951
    %4267 = vmatprep.mubr.bf16.mxu0 %v3053
    %4268 = vmatmul.mubr.bf16.gmra.mrb[0].mxu0 %v3052
    %v4269 = vpop.f32.mrb[0].mxu0
    %v4270 = vadd.f32 %v4229, %v4269
    %v4271 = vpop.f32.mrb[0].mxu0
    %v4272 = vadd.f32 %v4231, %v4271
    %v4273 = vpop.f32.mrb[0].mxu0
    %v4274 = vpop.f32.mrb[0].mxu0
    %4275 = vdwg.mxu0
    %4276 = vmatprep.subr.bf16.mxu0 %v3955
    %4277 = vmatpush1.bf16.msra.mxu0 %v3954
    %4278 = vmatprep.subr.bf16.mxu0 %v3958
    %4279 = vmatpush1.bf16.msra.mxu0 %v3957
    %4280 = vmatprep.subr.bf16.mxu0 %v3961
    %4281 = vmatpush1.bf16.msra.mxu0 %v3960
    %4282 = vmatprep.subr.bf16.mxu0 %v3964
    %4283 = vmatpush1.bf16.msra.mxu0 %v3963
    %4284 = vmatprep.subr.bf16.mxu0 %v3967
    %4285 = vmatpush1.bf16.msra.mxu0 %v3966
    %4286 = vmatprep.subr.bf16.mxu0 %v3970
    %4287 = vmatpush1.bf16.msra.mxu0 %v3969
    %4288 = vmatprep.subr.bf16.mxu0 %v3973
    %4289 = vmatpush1.bf16.msra.mxu0 %v3972
    %4290 = vmatprep.subr.bf16.mxu0 %v3976
    %4291 = vmatpush1.bf16.msra.mxu0 %v3975
    %4292 = vmatprep.subr.bf16.mxu0 %v3979
    %4293 = vmatpush1.bf16.msra.mxu0 %v3978
    %4294 = vmatprep.subr.bf16.mxu0 %v3982
    %4295 = vmatpush1.bf16.msra.mxu0 %v3981
    %4296 = vmatprep.subr.bf16.mxu0 %v3985
    %4297 = vmatpush1.bf16.msra.mxu0 %v3984
    %4298 = vmatprep.subr.bf16.mxu0 %v3988
    %4299 = vmatpush1.bf16.msra.mxu0 %v3987
    %4300 = vmatprep.subr.bf16.mxu0 %v3991
    %4301 = vmatpush1.bf16.msra.mxu0 %v3990
    %4302 = vmatprep.subr.bf16.mxu0 %v3994
    %4303 = vmatpush1.bf16.msra.mxu0 %v3993
    %4304 = vmatprep.subr.bf16.mxu0 %v3997
    %4305 = vmatpush1.bf16.msra.mxu0 %v3996
    %4306 = vmatprep.subr.bf16.mxu0 %v4000
    %4307 = vmatpush1.bf16.msra.mxu0 %v3999
    %4308 = vmatprep.mubr.bf16.mxu0 %v3055
    %4309 = vmatmul.mubr.bf16.gmra.mrb[0].mxu0 %v3054
    %v4310 = vpop.f32.mrb[0].mxu0
    %v4311 = vadd.f32 %v4270, %v4310
    %v4312 = vpop.f32.mrb[0].mxu0
    %v4313 = vadd.f32 %v4272, %v4312
    %v4314 = vpop.f32.mrb[0].mxu0
    %v4315 = vpop.f32.mrb[0].mxu0
    %4316 = vdwg.mxu0
    %4317 = vmatprep.subr.bf16.mxu0 %v4003
    %4318 = vmatpush1.bf16.msra.mxu0 %v4002
    %4319 = vmatprep.subr.bf16.mxu0 %v4006
    %4320 = vmatpush1.bf16.msra.mxu0 %v4005
    %4321 = vmatprep.subr.bf16.mxu0 %v4009
    %4322 = vmatpush1.bf16.msra.mxu0 %v4008
    %4323 = vmatprep.subr.bf16.mxu0 %v4012
    %4324 = vmatpush1.bf16.msra.mxu0 %v4011
    %4325 = vmatprep.subr.bf16.mxu0 %v4015
    %4326 = vmatpush1.bf16.msra.mxu0 %v4014
    %4327 = vmatprep.subr.bf16.mxu0 %v4018
    %4328 = vmatpush1.bf16.msra.mxu0 %v4017
    %4329 = vmatprep.subr.bf16.mxu0 %v4021
    %4330 = vmatpush1.bf16.msra.mxu0 %v4020
    %4331 = vmatprep.subr.bf16.mxu0 %v4024
    %4332 = vmatpush1.bf16.msra.mxu0 %v4023
    %4333 = vmatprep.subr.bf16.mxu0 0
    %4334 = vmatpush1.bf16.msra.mxu0 0
    %4335 = vmatprep.subr.bf16.mxu0 0
    %4336 = vmatpush1.bf16.msra.mxu0 0
    %4337 = vmatprep.subr.bf16.mxu0 0
    %4338 = vmatpush1.bf16.msra.mxu0 0
    %4339 = vmatprep.subr.bf16.mxu0 0
    %4340 = vmatpush1.bf16.msra.mxu0 0
    %4341 = vmatprep.subr.bf16.mxu0 0
    %4342 = vmatpush1.bf16.msra.mxu0 0
    %4343 = vmatprep.subr.bf16.mxu0 0
    %4344 = vmatpush1.bf16.msra.mxu0 0
    %4345 = vmatprep.subr.bf16.mxu0 0
    %4346 = vmatpush1.bf16.msra.mxu0 0
    %4347 = vmatprep.subr.bf16.mxu0 0
    %4348 = vmatpush1.bf16.msra.mxu0 0
    %4349 = vmatprep.mubr.bf16.mxu0 0
    %4350 = vmatmul.mubr.bf16.gmra.mrb[0].mxu0 %v3056
    %v4351 = vpop.f32.mrb[0].mxu0
    %v4352 = vadd.f32 %v4311, %v4351
    %v4353 = vpop.f32.mrb[0].mxu0
    %v4354 = vadd.f32 %v4313, %v4353
    %v4355 = vpop.f32.mrb[0].mxu0
    %v4356 = vpop.f32.mrb[0].mxu0
    %4357 = vdwg.mxu0
    %4358 = vmatprep.subr.bf16.mxu0 0
    %4359 = vmatpush1.bf16.msra.mxu0 %v3860
    %4360 = vmatprep.subr.bf16.mxu0 0
    %4361 = vmatpush1.bf16.msra.mxu0 %v3863
    %4362 = vmatprep.subr.bf16.mxu0 0
    %4363 = vmatpush1.bf16.msra.mxu0 %v3866
    %4364 = vmatprep.subr.bf16.mxu0 0
    %4365 = vmatpush1.bf16.msra.mxu0 %v3869
    %4366 = vmatprep.subr.bf16.mxu0 0
    %4367 = vmatpush1.bf16.msra.mxu0 %v3872
    %4368 = vmatprep.subr.bf16.mxu0 0
    %4369 = vmatpush1.bf16.msra.mxu0 %v3875
    %4370 = vmatprep.subr.bf16.mxu0 0
    %4371 = vmatpush1.bf16.msra.mxu0 %v3878
    %4372 = vmatprep.subr.bf16.mxu0 0
    %4373 = vmatpush1.bf16.msra.mxu0 %v3881
    %4374 = vmatprep.subr.bf16.mxu0 0
    %4375 = vmatpush1.bf16.msra.mxu0 %v3884
    %4376 = vmatprep.subr.bf16.mxu0 0
    %4377 = vmatpush1.bf16.msra.mxu0 %v3887
    %4378 = vmatprep.subr.bf16.mxu0 0
    %4379 = vmatpush1.bf16.msra.mxu0 %v3890
    %4380 = vmatprep.subr.bf16.mxu0 0
    %4381 = vmatpush1.bf16.msra.mxu0 %v3893
    %4382 = vmatprep.subr.bf16.mxu0 0
    %4383 = vmatpush1.bf16.msra.mxu0 %v3896
    %4384 = vmatprep.subr.bf16.mxu0 0
    %4385 = vmatpush1.bf16.msra.mxu0 %v3899
    %4386 = vmatprep.subr.bf16.mxu0 0
    %4387 = vmatpush1.bf16.msra.mxu0 %v3902
    %4388 = vmatprep.subr.bf16.mxu0 0
    %4389 = vmatpush1.bf16.msra.mxu0 %v3905
    %4390 = vmatprep.mubr.bf16.mxu0 %v3051
    %4391 = vmatmul.mubr.bf16.gmra.mrb[0].mxu0 %v3050
    %v4392 = vpop.f32.mrb[0].mxu0
    %v4393 = vadd.f32 %v3294, %v4392
    %v4394 = vpop.f32.mrb[0].mxu0
    %v4395 = vpop.f32.mrb[0].mxu0
    %v4396 = vpop.f32.mrb[0].mxu0
    %4397 = vdwg.mxu0
    %4398 = vmatprep.subr.bf16.mxu0 0
    %4399 = vmatpush1.bf16.msra.mxu0 %v3908
    %4400 = vmatprep.subr.bf16.mxu0 0
    %4401 = vmatpush1.bf16.msra.mxu0 %v3911
    %4402 = vmatprep.subr.bf16.mxu0 0
    %4403 = vmatpush1.bf16.msra.mxu0 %v3914
    %4404 = vmatprep.subr.bf16.mxu0 0
    %4405 = vmatpush1.bf16.msra.mxu0 %v3917
    %4406 = vmatprep.subr.bf16.mxu0 0
    %4407 = vmatpush1.bf16.msra.mxu0 %v3920
    %4408 = vmatprep.subr.bf16.mxu0 0
    %4409 = vmatpush1.bf16.msra.mxu0 %v3923
    %4410 = vmatprep.subr.bf16.mxu0 0
    %4411 = vmatpush1.bf16.msra.mxu0 %v3926
    %4412 = vmatprep.subr.bf16.mxu0 0
    %4413 = vmatpush1.bf16.msra.mxu0 %v3929
    %4414 = vmatprep.subr.bf16.mxu0 0
    %4415 = vmatpush1.bf16.msra.mxu0 %v3932
    %4416 = vmatprep.subr.bf16.mxu0 0
    %4417 = vmatpush1.bf16.msra.mxu0 %v3935
    %4418 = vmatprep.subr.bf16.mxu0 0
    %4419 = vmatpush1.bf16.msra.mxu0 %v3938
    %4420 = vmatprep.subr.bf16.mxu0 0
    %4421 = vmatpush1.bf16.msra.mxu0 %v3941
    %4422 = vmatprep.subr.bf16.mxu0 0
    %4423 = vmatpush1.bf16.msra.mxu0 %v3944
    %4424 = vmatprep.subr.bf16.mxu0 0
    %4425 = vmatpush1.bf16.msra.mxu0 %v3947
    %4426 = vmatprep.subr.bf16.mxu0 0
    %4427 = vmatpush1.bf16.msra.mxu0 %v3950
    %4428 = vmatprep.subr.bf16.mxu0 0
    %4429 = vmatpush1.bf16.msra.mxu0 %v3953
    %4430 = vmatprep.mubr.bf16.mxu0 %v3053
    %4431 = vmatmul.mubr.bf16.gmra.mrb[0].mxu0 %v3052
    %v4432 = vpop.f32.mrb[0].mxu0
    %v4433 = vadd.f32 %v4393, %v4432
    %v4434 = vpop.f32.mrb[0].mxu0
    %v4435 = vpop.f32.mrb[0].mxu0
    %v4436 = vpop.f32.mrb[0].mxu0
    %4437 = vdwg.mxu0
    %4438 = vmatprep.subr.bf16.mxu0 0
    %4439 = vmatpush1.bf16.msra.mxu0 %v3956
    %4440 = vmatprep.subr.bf16.mxu0 0
    %4441 = vmatpush1.bf16.msra.mxu0 %v3959
    %4442 = vmatprep.subr.bf16.mxu0 0
    %4443 = vmatpush1.bf16.msra.mxu0 %v3962
    %4444 = vmatprep.subr.bf16.mxu0 0
    %4445 = vmatpush1.bf16.msra.mxu0 %v3965
    %4446 = vmatprep.subr.bf16.mxu0 0
    %4447 = vmatpush1.bf16.msra.mxu0 %v3968
    %4448 = vmatprep.subr.bf16.mxu0 0
    %4449 = vmatpush1.bf16.msra.mxu0 %v3971
    %4450 = vmatprep.subr.bf16.mxu0 0
    %4451 = vmatpush1.bf16.msra.mxu0 %v3974
    %4452 = vmatprep.subr.bf16.mxu0 0
    %4453 = vmatpush1.bf16.msra.mxu0 %v3977
    %4454 = vmatprep.subr.bf16.mxu0 0
    %4455 = vmatpush1.bf16.msra.mxu0 %v3980
    %4456 = vmatprep.subr.bf16.mxu0 0
    %4457 = vmatpush1.bf16.msra.mxu0 %v3983
    %4458 = vmatprep.subr.bf16.mxu0 0
    %4459 = vmatpush1.bf16.msra.mxu0 %v3986
    %4460 = vmatprep.subr.bf16.mxu0 0
    %4461 = vmatpush1.bf16.msra.mxu0 %v3989
    %4462 = vmatprep.subr.bf16.mxu0 0
    %4463 = vmatpush1.bf16.msra.mxu0 %v3992
    %4464 = vmatprep.subr.bf16.mxu0 0
    %4465 = vmatpush1.bf16.msra.mxu0 %v3995
    %4466 = vmatprep.subr.bf16.mxu0 0
    %4467 = vmatpush1.bf16.msra.mxu0 %v3998
    %4468 = vmatprep.subr.bf16.mxu0 0
    %4469 = vmatpush1.bf16.msra.mxu0 %v4001
    %4470 = vmatprep.mubr.bf16.mxu0 %v3055
    %4471 = vmatmul.mubr.bf16.gmra.mrb[0].mxu0 %v3054
    %v4472 = vpop.f32.mrb[0].mxu0
    %v4473 = vadd.f32 %v4433, %v4472
    %v4474 = vpop.f32.mrb[0].mxu0
    %v4475 = vpop.f32.mrb[0].mxu0
    %v4476 = vpop.f32.mrb[0].mxu0
    %4477 = vdwg.mxu0
    %4478 = vmatprep.subr.bf16.mxu0 0
    %4479 = vmatpush1.bf16.msra.mxu0 %v4004
    %4480 = vmatprep.subr.bf16.mxu0 0
    %4481 = vmatpush1.bf16.msra.mxu0 %v4007
    %4482 = vmatprep.subr.bf16.mxu0 0
    %4483 = vmatpush1.bf16.msra.mxu0 %v4010
    %4484 = vmatprep.subr.bf16.mxu0 0
    %4485 = vmatpush1.bf16.msra.mxu0 %v4013
    %4486 = vmatprep.subr.bf16.mxu0 0
    %4487 = vmatpush1.bf16.msra.mxu0 %v4016
    %4488 = vmatprep.subr.bf16.mxu0 0
    %4489 = vmatpush1.bf16.msra.mxu0 %v4019
    %4490 = vmatprep.subr.bf16.mxu0 0
    %4491 = vmatpush1.bf16.msra.mxu0 %v4022
    %4492 = vmatprep.subr.bf16.mxu0 0
    %4493 = vmatpush1.bf16.msra.mxu0 %v4025
    %4494 = vmatprep.subr.bf16.mxu0 0
    %4495 = vmatpush1.bf16.msra.mxu0 0
    %4496 = vmatprep.subr.bf16.mxu0 0
    %4497 = vmatpush1.bf16.msra.mxu0 0
    %4498 = vmatprep.subr.bf16.mxu0 0
    %4499 = vmatpush1.bf16.msra.mxu0 0
    %4500 = vmatprep.subr.bf16.mxu0 0
    %4501 = vmatpush1.bf16.msra.mxu0 0
    %4502 = vmatprep.subr.bf16.mxu0 0
    %4503 = vmatpush1.bf16.msra.mxu0 0
    %4504 = vmatprep.subr.bf16.mxu0 0
    %4505 = vmatpush1.bf16.msra.mxu0 0
    %4506 = vmatprep.subr.bf16.mxu0 0
    %4507 = vmatpush1.bf16.msra.mxu0 0
    %4508 = vmatprep.subr.bf16.mxu0 0
    %4509 = vmatpush1.bf16.msra.mxu0 0
    %4510 = vmatprep.mubr.bf16.mxu0 0
    %4511 = vmatmul.mubr.bf16.gmra.mrb[0].mxu0 %v3056
    %v4512 = vpop.f32.mrb[0].mxu0
    %v4513 = vadd.f32 %v4473, %v4512
    %v4514 = vpop.f32.mrb[0].mxu0
    %v4515 = vpop.f32.mrb[0].mxu0
    %v4516 = vpop.f32.mrb[0].mxu0
    %4517 = vdwg.mxu0
    %v4518 = vmax.f32 %v4352, 0.0
    %v4519 = vmax.f32 %v4354, 0.0
    %v4520 = vmax.f32 %v4513, 0.0
    %v4521 = vpack.c.bf16 %v4518, %v4518
    %v4522 = vpack.c.bf16 %v4519, %v4519
    %v4523 = vpack.c.bf16 %v4520, %v4520
    %v4524 = vld [vmem:[#allocation11] sm:$0xff]
    %v4525 = vld [vmem:[#allocation11 + $0x8] sm:$0xf]
    %v4526 = vld [vmem:[#allocation11 + $0xc] sm:$0xff]
    %v4527 = vld [vmem:[#allocation11 + $0x14] sm:$0xf]
    %v4528 = vld [vmem:[#allocation11 + $0x18] sm:$0xff]
    %v4529 = vld [vmem:[#allocation11 + $0x20] sm:$0xf]
    %v4530 = vld [vmem:[#allocation11 + $0x24] sm:$0xff]
    %v4531 = vld [vmem:[#allocation11 + $0x2c] sm:$0xf]
    %v4532 = vld [vmem:[#allocation11 + $0x30] sm:$0xff]
    %v4533 = vld [vmem:[#allocation11 + $0x38] sm:$0xf]
    %v4534 = vld [vmem:[#allocation11 + $0x3c] sm:$0xff]
    %v4535 = vld [vmem:[#allocation11 + $0x44] sm:$0xf]
    %v4536 = vld [vmem:[#allocation11 + $0x48] sm:$0xff]
    %v4537 = vld [vmem:[#allocation11 + $0x50] sm:$0xf]
    %v4538 = vld [vmem:[#allocation11 + $0x54] sm:$0xff]
    %v4539 = vld [vmem:[#allocation11 + $0x5c] sm:$0xf]
    %v4540 = vld [vmem:[#allocation11 + $0x60] sm:$0xff]
    %v4541 = vld [vmem:[#allocation11 + $0x68] sm:$0xf]
    %v4542 = vld [vmem:[#allocation11 + $0x6c] sm:$0xff]
    %v4543 = vld [vmem:[#allocation11 + $0x74] sm:$0xf]
    %v4544 = vld [vmem:[#allocation11 + $0x78] sm:$0xff]
    %v4545 = vld [vmem:[#allocation11 + $0x80] sm:$0xf]
    %v4546 = vld [vmem:[#allocation11 + $0x84] sm:$0xff]
    %v4547 = vld [vmem:[#allocation11 + $0x8c] sm:$0xf]
    %v4548 = vld [vmem:[#allocation11 + $0x90] sm:$0xff]
    %v4549 = vld [vmem:[#allocation11 + $0x98] sm:$0xf]
    %v4550 = vld [vmem:[#allocation11 + $0x9c] sm:$0xff]
    %v4551 = vld [vmem:[#allocation11 + $0xa4] sm:$0xf]
    %v4552 = vld [vmem:[#allocation11 + $0xa8] sm:$0xff]
    %v4553 = vld [vmem:[#allocation11 + $0xb0] sm:$0xf]
    %v4554 = vld [vmem:[#allocation11 + $0xb4] sm:$0xff]
    %v4555 = vld [vmem:[#allocation11 + $0xbc] sm:$0xf]
    %v4556 = vld [vmem:[#allocation11 + $0xc0] sm:$0xff]
    %v4557 = vld [vmem:[#allocation11 + $0xc8] sm:$0xf]
    %v4558 = vld [vmem:[#allocation11 + $0xcc] sm:$0xff]
    %v4559 = vld [vmem:[#allocation11 + $0xd4] sm:$0xf]
    %v4560 = vld [vmem:[#allocation11 + $0xd8] sm:$0xff]
    %v4561 = vld [vmem:[#allocation11 + $0xe0] sm:$0xf]
    %v4562 = vld [vmem:[#allocation11 + $0xe4] sm:$0xff]
    %v4563 = vld [vmem:[#allocation11 + $0xec] sm:$0xf]
    %v4564 = vld [vmem:[#allocation11 + $0xf0] sm:$0xff]
    %v4565 = vld [vmem:[#allocation11 + $0xf8] sm:$0xf]
    %v4566 = vld [vmem:[#allocation11 + $0xfc] sm:$0xff]
    %v4567 = vld [vmem:[#allocation11 + $0x104] sm:$0xf]
    %v4568 = vld [vmem:[#allocation11 + $0x108] sm:$0xff]
    %v4569 = vld [vmem:[#allocation11 + $0x110] sm:$0xf]
    %v4570 = vld [vmem:[#allocation11 + $0x114] sm:$0xff]
    %v4571 = vld [vmem:[#allocation11 + $0x11c] sm:$0xf]
    %v4572 = vld [vmem:[#allocation11 + $0x120] sm:$0xff]
    %v4573 = vld [vmem:[#allocation11 + $0x128] sm:$0xf]
    %v4574 = vld [vmem:[#allocation11 + $0x12c] sm:$0xff]
    %v4575 = vld [vmem:[#allocation11 + $0x134] sm:$0xf]
    %v4576 = vld [vmem:[#allocation11 + $0x138] sm:$0xff]
    %v4577 = vld [vmem:[#allocation11 + $0x140] sm:$0xf]
    %v4578 = vld [vmem:[#allocation11 + $0x144] sm:$0xff]
    %v4579 = vld [vmem:[#allocation11 + $0x14c] sm:$0xf]
    %v4580 = vld [vmem:[#allocation11 + $0x150] sm:$0xff]
    %v4581 = vld [vmem:[#allocation11 + $0x158] sm:$0xf]
    %v4582 = vld [vmem:[#allocation11 + $0x15c] sm:$0xff]
    %v4583 = vld [vmem:[#allocation11 + $0x164] sm:$0xf]
    %v4584 = vld [vmem:[#allocation11 + $0x168] sm:$0xff]
    %v4585 = vld [vmem:[#allocation11 + $0x170] sm:$0xf]
    %v4586 = vld [vmem:[#allocation11 + $0x174] sm:$0xff]
    %v4587 = vld [vmem:[#allocation11 + $0x17c] sm:$0xf]
    %v4588 = vld [vmem:[#allocation11 + $0x180] sm:$0xff]
    %v4589 = vld [vmem:[#allocation11 + $0x188] sm:$0xf]
    %v4590 = vld [vmem:[#allocation11 + $0x18c] sm:$0xff]
    %v4591 = vld [vmem:[#allocation11 + $0x194] sm:$0xf]
    %v4592 = vld [vmem:[#allocation11 + $0x198] sm:$0xff]
    %v4593 = vld [vmem:[#allocation11 + $0x1a0] sm:$0xf]
    %v4594 = vld [vmem:[#allocation11 + $0x1a4] sm:$0xff]
    %v4595 = vld [vmem:[#allocation11 + $0x1ac] sm:$0xf]
    %v4596 = vld [vmem:[#allocation11 + $0x1b0] sm:$0xff]
    %v4597 = vld [vmem:[#allocation11 + $0x1b8] sm:$0xf]
    %v4598 = vld [vmem:[#allocation11 + $0x1bc] sm:$0xff]
    %v4599 = vld [vmem:[#allocation11 + $0x1c4] sm:$0xf]
    %v4600 = vld [vmem:[#allocation11 + $0x1c8] sm:$0xff]
    %v4601 = vld [vmem:[#allocation11 + $0x1d0] sm:$0xf]
    %v4602 = vld [vmem:[#allocation11 + $0x1d4] sm:$0xff]
    %v4603 = vld [vmem:[#allocation11 + $0x1dc] sm:$0xf]
    %v4604 = vld [vmem:[#allocation11 + $0x1e0] sm:$0xff]
    %v4605 = vld [vmem:[#allocation11 + $0x1e8] sm:$0xf]
    %v4606 = vld [vmem:[#allocation11 + $0x1ec] sm:$0xff]
    %v4607 = vld [vmem:[#allocation11 + $0x1f4] sm:$0xf]
    %v4608 = vld [vmem:[#allocation11 + $0x1f8] sm:$0xff]
    %v4609 = vld [vmem:[#allocation11 + $0x200] sm:$0xf]
    %v4610 = vld [vmem:[#allocation11 + $0x204] sm:$0xff]
    %v4611 = vld [vmem:[#allocation11 + $0x20c] sm:$0xf]
    %v4612 = vld [vmem:[#allocation11 + $0x210] sm:$0xff]
    %v4613 = vld [vmem:[#allocation11 + $0x218] sm:$0xf]
    %v4614 = vld [vmem:[#allocation11 + $0x21c] sm:$0xff]
    %v4615 = vld [vmem:[#allocation11 + $0x224] sm:$0xf]
    %v4616 = vld [vmem:[#allocation11 + $0x228] sm:$0xff]
    %v4617 = vld [vmem:[#allocation11 + $0x230] sm:$0xf]
    %v4618 = vld [vmem:[#allocation11 + $0x234] sm:$0xff]
    %v4619 = vld [vmem:[#allocation11 + $0x23c] sm:$0xf]
    %v4620 = vld [vmem:[#allocation13] sm:$0x7]
    %v4622 = vlaneseq
    %v4623 = vshrl.u32 %v4622, 7
    %v4624 = vsub.s32 0, %v4623
    %v4625 = vrot.slane %v4620, %v4624
    %v4626 = vlaneseq
    %v4627 = vshrl.u32 %v4626, 7
    %v4628 = vsub.s32 1, %v4627
    %v4629 = vrot.slane %v4620, %v4628
    %v4630 = vlaneseq
    %v4631 = vshrl.u32 %v4630, 7
    %v4632 = vsub.s32 2, %v4631
    %v4633 = vrot.slane %v4620, %v4632
    %v4733 = vunpack.c.l.b16 %v4524
    %v4734 = vunpack.c.h.b16 %v4524
    %v4735 = vunpack.c.l.b16 %v4525
    %v4736 = vunpack.c.l.b16 %v4526
    %v4737 = vunpack.c.h.b16 %v4526
    %v4738 = vunpack.c.l.b16 %v4527
    %v4739 = vunpack.c.l.b16 %v4528
    %v4740 = vunpack.c.h.b16 %v4528
    %v4741 = vunpack.c.l.b16 %v4529
    %v4742 = vunpack.c.l.b16 %v4530
    %v4743 = vunpack.c.h.b16 %v4530
    %v4744 = vunpack.c.l.b16 %v4531
    %v4745 = vunpack.c.l.b16 %v4532
    %v4746 = vunpack.c.h.b16 %v4532
    %v4747 = vunpack.c.l.b16 %v4533
    %v4748 = vunpack.c.l.b16 %v4534
    %v4749 = vunpack.c.h.b16 %v4534
    %v4750 = vunpack.c.l.b16 %v4535
    %v4751 = vunpack.c.l.b16 %v4536
    %v4752 = vunpack.c.h.b16 %v4536
    %v4753 = vunpack.c.l.b16 %v4537
    %v4754 = vunpack.c.l.b16 %v4538
    %v4755 = vunpack.c.h.b16 %v4538
    %v4756 = vunpack.c.l.b16 %v4539
    %v4757 = vunpack.c.l.b16 %v4540
    %v4758 = vunpack.c.h.b16 %v4540
    %v4759 = vunpack.c.l.b16 %v4541
    %v4760 = vunpack.c.l.b16 %v4542
    %v4761 = vunpack.c.h.b16 %v4542
    %v4762 = vunpack.c.l.b16 %v4543
    %v4763 = vunpack.c.l.b16 %v4544
    %v4764 = vunpack.c.h.b16 %v4544
    %v4765 = vunpack.c.l.b16 %v4545
    %v4766 = vunpack.c.l.b16 %v4546
    %v4767 = vunpack.c.h.b16 %v4546
    %v4768 = vunpack.c.l.b16 %v4547
    %v4769 = vunpack.c.l.b16 %v4548
    %v4770 = vunpack.c.h.b16 %v4548
    %v4771 = vunpack.c.l.b16 %v4549
    %v4772 = vunpack.c.l.b16 %v4550
    %v4773 = vunpack.c.h.b16 %v4550
    %v4774 = vunpack.c.l.b16 %v4551
    %v4775 = vunpack.c.l.b16 %v4552
    %v4776 = vunpack.c.h.b16 %v4552
    %v4777 = vunpack.c.l.b16 %v4553
    %v4778 = vunpack.c.l.b16 %v4554
    %v4779 = vunpack.c.h.b16 %v4554
    %v4780 = vunpack.c.l.b16 %v4555
    %v4781 = vunpack.c.l.b16 %v4556
    %v4782 = vunpack.c.h.b16 %v4556
    %v4783 = vunpack.c.l.b16 %v4557
    %v4784 = vunpack.c.l.b16 %v4558
    %v4785 = vunpack.c.h.b16 %v4558
    %v4786 = vunpack.c.l.b16 %v4559
    %v4787 = vunpack.c.l.b16 %v4560
    %v4788 = vunpack.c.h.b16 %v4560
    %v4789 = vunpack.c.l.b16 %v4561
    %v4790 = vunpack.c.l.b16 %v4562
    %v4791 = vunpack.c.h.b16 %v4562
    %v4792 = vunpack.c.l.b16 %v4563
    %v4793 = vunpack.c.l.b16 %v4564
    %v4794 = vunpack.c.h.b16 %v4564
    %v4795 = vunpack.c.l.b16 %v4565
    %v4796 = vunpack.c.l.b16 %v4566
    %v4797 = vunpack.c.h.b16 %v4566
    %v4798 = vunpack.c.l.b16 %v4567
    %v4799 = vunpack.c.l.b16 %v4568
    %v4800 = vunpack.c.h.b16 %v4568
    %v4801 = vunpack.c.l.b16 %v4569
    %v4802 = vunpack.c.l.b16 %v4570
    %v4803 = vunpack.c.h.b16 %v4570
    %v4804 = vunpack.c.l.b16 %v4571
    %v4805 = vunpack.c.l.b16 %v4572
    %v4806 = vunpack.c.h.b16 %v4572
    %v4807 = vunpack.c.l.b16 %v4573
    %v4808 = vunpack.c.l.b16 %v4574
    %v4809 = vunpack.c.h.b16 %v4574
    %v4810 = vunpack.c.l.b16 %v4575
    %v4811 = vunpack.c.l.b16 %v4576
    %v4812 = vunpack.c.h.b16 %v4576
    %v4813 = vunpack.c.l.b16 %v4577
    %v4814 = vunpack.c.l.b16 %v4578
    %v4815 = vunpack.c.h.b16 %v4578
    %v4816 = vunpack.c.l.b16 %v4579
    %v4817 = vunpack.c.l.b16 %v4580
    %v4818 = vunpack.c.h.b16 %v4580
    %v4819 = vunpack.c.l.b16 %v4581
    %v4820 = vunpack.c.l.b16 %v4582
    %v4821 = vunpack.c.h.b16 %v4582
    %v4822 = vunpack.c.l.b16 %v4583
    %v4823 = vunpack.c.l.b16 %v4584
    %v4824 = vunpack.c.h.b16 %v4584
    %v4825 = vunpack.c.l.b16 %v4585
    %v4826 = vunpack.c.l.b16 %v4586
    %v4827 = vunpack.c.h.b16 %v4586
    %v4828 = vunpack.c.l.b16 %v4587
    %v4829 = vunpack.c.l.b16 %v4588
    %v4830 = vunpack.c.h.b16 %v4588
    %v4831 = vunpack.c.l.b16 %v4589
    %v4832 = vunpack.c.l.b16 %v4590
    %v4833 = vunpack.c.h.b16 %v4590
    %v4834 = vunpack.c.l.b16 %v4591
    %v4835 = vunpack.c.l.b16 %v4592
    %v4836 = vunpack.c.h.b16 %v4592
    %v4837 = vunpack.c.l.b16 %v4593
    %v4838 = vunpack.c.l.b16 %v4594
    %v4839 = vunpack.c.h.b16 %v4594
    %v4840 = vunpack.c.l.b16 %v4595
    %v4841 = vunpack.c.l.b16 %v4596
    %v4842 = vunpack.c.h.b16 %v4596
    %v4843 = vunpack.c.l.b16 %v4597
    %v4844 = vunpack.c.l.b16 %v4598
    %v4845 = vunpack.c.h.b16 %v4598
    %v4846 = vunpack.c.l.b16 %v4599
    %v4847 = vunpack.c.l.b16 %v4600
    %v4848 = vunpack.c.h.b16 %v4600
    %v4849 = vunpack.c.l.b16 %v4601
    %v4850 = vunpack.c.l.b16 %v4602
    %v4851 = vunpack.c.h.b16 %v4602
    %v4852 = vunpack.c.l.b16 %v4603
    %v4853 = vunpack.c.l.b16 %v4604
    %v4854 = vunpack.c.h.b16 %v4604
    %v4855 = vunpack.c.l.b16 %v4605
    %v4856 = vunpack.c.l.b16 %v4606
    %v4857 = vunpack.c.h.b16 %v4606
    %v4858 = vunpack.c.l.b16 %v4607
    %v4859 = vunpack.c.l.b16 %v4608
    %v4860 = vunpack.c.h.b16 %v4608
    %v4861 = vunpack.c.l.b16 %v4609
    %v4862 = vunpack.c.l.b16 %v4610
    %v4863 = vunpack.c.h.b16 %v4610
    %v4864 = vunpack.c.l.b16 %v4611
    %v4865 = vunpack.c.l.b16 %v4612
    %v4866 = vunpack.c.h.b16 %v4612
    %v4867 = vunpack.c.l.b16 %v4613
    %v4868 = vunpack.c.l.b16 %v4614
    %v4869 = vunpack.c.h.b16 %v4614
    %v4870 = vunpack.c.l.b16 %v4615
    %v4871 = vunpack.c.l.b16 %v4616
    %v4872 = vunpack.c.h.b16 %v4616
    %v4873 = vunpack.c.l.b16 %v4617
    %v4874 = vunpack.c.l.b16 %v4618
    %v4875 = vunpack.c.h.b16 %v4618
    %v4876 = vunpack.c.l.b16 %v4619
    %v4877 = vpack.c.b16 %v4736, %v4733
    %v4878 = vpack.c.b16 %v4737, %v4734
    %v4879 = vpack.c.b16 %v4738, %v4735
    %v4880 = vpack.c.b16 %v4742, %v4739
    %v4881 = vpack.c.b16 %v4743, %v4740
    %v4882 = vpack.c.b16 %v4744, %v4741
    %v4883 = vpack.c.b16 %v4748, %v4745
    %v4884 = vpack.c.b16 %v4749, %v4746
    %v4885 = vpack.c.b16 %v4750, %v4747
    %v4886 = vpack.c.b16 %v4754, %v4751
    %v4887 = vpack.c.b16 %v4755, %v4752
    %v4888 = vpack.c.b16 %v4756, %v4753
    %v4889 = vpack.c.b16 %v4760, %v4757
    %v4890 = vpack.c.b16 %v4761, %v4758
    %v4891 = vpack.c.b16 %v4762, %v4759
    %v4892 = vpack.c.b16 %v4766, %v4763
    %v4893 = vpack.c.b16 %v4767, %v4764
    %v4894 = vpack.c.b16 %v4768, %v4765
    %v4895 = vpack.c.b16 %v4772, %v4769
    %v4896 = vpack.c.b16 %v4773, %v4770
    %v4897 = vpack.c.b16 %v4774, %v4771
    %v4898 = vpack.c.b16 %v4778, %v4775
    %v4899 = vpack.c.b16 %v4779, %v4776
    %v4900 = vpack.c.b16 %v4780, %v4777
    %v4901 = vpack.c.b16 %v4784, %v4781
    %v4902 = vpack.c.b16 %v4785, %v4782
    %v4903 = vpack.c.b16 %v4786, %v4783
    %v4904 = vpack.c.b16 %v4790, %v4787
    %v4905 = vpack.c.b16 %v4791, %v4788
    %v4906 = vpack.c.b16 %v4792, %v4789
    %v4907 = vpack.c.b16 %v4796, %v4793
    %v4908 = vpack.c.b16 %v4797, %v4794
    %v4909 = vpack.c.b16 %v4798, %v4795
    %v4910 = vpack.c.b16 %v4802, %v4799
    %v4911 = vpack.c.b16 %v4803, %v4800
    %v4912 = vpack.c.b16 %v4804, %v4801
    %v4913 = vpack.c.b16 %v4808, %v4805
    %v4914 = vpack.c.b16 %v4809, %v4806
    %v4915 = vpack.c.b16 %v4810, %v4807
    %v4916 = vpack.c.b16 %v4814, %v4811
    %v4917 = vpack.c.b16 %v4815, %v4812
    %v4918 = vpack.c.b16 %v4816, %v4813
    %v4919 = vpack.c.b16 %v4820, %v4817
    %v4920 = vpack.c.b16 %v4821, %v4818
    %v4921 = vpack.c.b16 %v4822, %v4819
    %v4922 = vpack.c.b16 %v4826, %v4823
    %v4923 = vpack.c.b16 %v4827, %v4824
    %v4924 = vpack.c.b16 %v4828, %v4825
    %v4925 = vpack.c.b16 %v4832, %v4829
    %v4926 = vpack.c.b16 %v4833, %v4830
    %v4927 = vpack.c.b16 %v4834, %v4831
    %v4928 = vpack.c.b16 %v4838, %v4835
    %v4929 = vpack.c.b16 %v4839, %v4836
    %v4930 = vpack.c.b16 %v4840, %v4837
    %v4931 = vpack.c.b16 %v4844, %v4841
    %v4932 = vpack.c.b16 %v4845, %v4842
    %v4933 = vpack.c.b16 %v4846, %v4843
    %v4934 = vpack.c.b16 %v4850, %v4847
    %v4935 = vpack.c.b16 %v4851, %v4848
    %v4936 = vpack.c.b16 %v4852, %v4849
    %v4937 = vpack.c.b16 %v4856, %v4853
    %v4938 = vpack.c.b16 %v4857, %v4854
    %v4939 = vpack.c.b16 %v4858, %v4855
    %v4940 = vpack.c.b16 %v4862, %v4859
    %v4941 = vpack.c.b16 %v4863, %v4860
    %v4942 = vpack.c.b16 %v4864, %v4861
    %v4943 = vpack.c.b16 %v4868, %v4865
    %v4944 = vpack.c.b16 %v4869, %v4866
    %v4945 = vpack.c.b16 %v4870, %v4867
    %v4946 = vpack.c.b16 %v4874, %v4871
    %v4947 = vpack.c.b16 %v4875, %v4872
    %v4948 = vpack.c.b16 %v4876, %v4873
    %5021 = vmatprep.subr.bf16.mxu0 %v4878
    %5022 = vmatpush1.bf16.msra.mxu0 %v4877
    %5023 = vmatprep.subr.bf16.mxu0 %v4881
    %5024 = vmatpush1.bf16.msra.mxu0 %v4880
    %5025 = vmatprep.subr.bf16.mxu0 %v4884
    %5026 = vmatpush1.bf16.msra.mxu0 %v4883
    %5027 = vmatprep.subr.bf16.mxu0 %v4887
    %5028 = vmatpush1.bf16.msra.mxu0 %v4886
    %5029 = vmatprep.subr.bf16.mxu0 %v4890
    %5030 = vmatpush1.bf16.msra.mxu0 %v4889
    %5031 = vmatprep.subr.bf16.mxu0 %v4893
    %5032 = vmatpush1.bf16.msra.mxu0 %v4892
    %5033 = vmatprep.subr.bf16.mxu0 %v4896
    %5034 = vmatpush1.bf16.msra.mxu0 %v4895
    %5035 = vmatprep.subr.bf16.mxu0 %v4899
    %5036 = vmatpush1.bf16.msra.mxu0 %v4898
    %5037 = vmatprep.subr.bf16.mxu0 %v4902
    %5038 = vmatpush1.bf16.msra.mxu0 %v4901
    %5039 = vmatprep.subr.bf16.mxu0 %v4905
    %5040 = vmatpush1.bf16.msra.mxu0 %v4904
    %5041 = vmatprep.subr.bf16.mxu0 %v4908
    %5042 = vmatpush1.bf16.msra.mxu0 %v4907
    %5043 = vmatprep.subr.bf16.mxu0 %v4911
    %5044 = vmatpush1.bf16.msra.mxu0 %v4910
    %5045 = vmatprep.subr.bf16.mxu0 %v4914
    %5046 = vmatpush1.bf16.msra.mxu0 %v4913
    %5047 = vmatprep.subr.bf16.mxu0 %v4917
    %5048 = vmatpush1.bf16.msra.mxu0 %v4916
    %5049 = vmatprep.subr.bf16.mxu0 %v4920
    %5050 = vmatpush1.bf16.msra.mxu0 %v4919
    %5051 = vmatprep.subr.bf16.mxu0 %v4923
    %5052 = vmatpush1.bf16.msra.mxu0 %v4922
    %5053 = vmatprep.mubr.bf16.mxu0 %v4522
    %5054 = vmatmul.mubr.bf16.gmra.mrb[0].mxu0 %v4521
    %v5055 = vpop.f32.mrb[0].mxu0
    %v5056 = vadd.f32 %v4625, %v5055
    %v5057 = vpop.f32.mrb[0].mxu0
    %v5058 = vadd.f32 %v4629, %v5057
    %v5059 = vpop.f32.mrb[0].mxu0
    %v5060 = vpop.f32.mrb[0].mxu0
    %5061 = vdwg.mxu0
    %5062 = vmatprep.subr.bf16.mxu0 %v4926
    %5063 = vmatpush1.bf16.msra.mxu0 %v4925
    %5064 = vmatprep.subr.bf16.mxu0 %v4929
    %5065 = vmatpush1.bf16.msra.mxu0 %v4928
    %5066 = vmatprep.subr.bf16.mxu0 %v4932
    %5067 = vmatpush1.bf16.msra.mxu0 %v4931
    %5068 = vmatprep.subr.bf16.mxu0 %v4935
    %5069 = vmatpush1.bf16.msra.mxu0 %v4934
    %5070 = vmatprep.subr.bf16.mxu0 %v4938
    %5071 = vmatpush1.bf16.msra.mxu0 %v4937
    %5072 = vmatprep.subr.bf16.mxu0 %v4941
    %5073 = vmatpush1.bf16.msra.mxu0 %v4940
    %5074 = vmatprep.subr.bf16.mxu0 %v4944
    %5075 = vmatpush1.bf16.msra.mxu0 %v4943
    %5076 = vmatprep.subr.bf16.mxu0 %v4947
    %5077 = vmatpush1.bf16.msra.mxu0 %v4946
    %5078 = vmatprep.subr.bf16.mxu0 0
    %5079 = vmatpush1.bf16.msra.mxu0 0
    %5080 = vmatprep.subr.bf16.mxu0 0
    %5081 = vmatpush1.bf16.msra.mxu0 0
    %5082 = vmatprep.subr.bf16.mxu0 0
    %5083 = vmatpush1.bf16.msra.mxu0 0
    %5084 = vmatprep.subr.bf16.mxu0 0
    %5085 = vmatpush1.bf16.msra.mxu0 0
    %5086 = vmatprep.subr.bf16.mxu0 0
    %5087 = vmatpush1.bf16.msra.mxu0 0
    %5088 = vmatprep.subr.bf16.mxu0 0
    %5089 = vmatpush1.bf16.msra.mxu0 0
    %5090 = vmatprep.subr.bf16.mxu0 0
    %5091 = vmatpush1.bf16.msra.mxu0 0
    %5092 = vmatprep.subr.bf16.mxu0 0
    %5093 = vmatpush1.bf16.msra.mxu0 0
    %5094 = vmatprep.mubr.bf16.mxu0 0
    %5095 = vmatmul.mubr.bf16.gmra.mrb[0].mxu0 %v4523
    %v5096 = vpop.f32.mrb[0].mxu0
    %v5097 = vadd.f32 %v5056, %v5096
    %v5098 = vpop.f32.mrb[0].mxu0
    %v5099 = vadd.f32 %v5058, %v5098
    %v5100 = vpop.f32.mrb[0].mxu0
    %v5101 = vpop.f32.mrb[0].mxu0
    %5102 = vdwg.mxu0
    %5103 = vmatprep.subr.bf16.mxu0 0
    %5104 = vmatpush1.bf16.msra.mxu0 %v4879
    %5105 = vmatprep.subr.bf16.mxu0 0
    %5106 = vmatpush1.bf16.msra.mxu0 %v4882
    %5107 = vmatprep.subr.bf16.mxu0 0
    %5108 = vmatpush1.bf16.msra.mxu0 %v4885
    %5109 = vmatprep.subr.bf16.mxu0 0
    %5110 = vmatpush1.bf16.msra.mxu0 %v4888
    %5111 = vmatprep.subr.bf16.mxu0 0
    %5112 = vmatpush1.bf16.msra.mxu0 %v4891
    %5113 = vmatprep.subr.bf16.mxu0 0
    %5114 = vmatpush1.bf16.msra.mxu0 %v4894
    %5115 = vmatprep.subr.bf16.mxu0 0
    %5116 = vmatpush1.bf16.msra.mxu0 %v4897
    %5117 = vmatprep.subr.bf16.mxu0 0
    %5118 = vmatpush1.bf16.msra.mxu0 %v4900
    %5119 = vmatprep.subr.bf16.mxu0 0
    %5120 = vmatpush1.bf16.msra.mxu0 %v4903
    %5121 = vmatprep.subr.bf16.mxu0 0
    %5122 = vmatpush1.bf16.msra.mxu0 %v4906
    %5123 = vmatprep.subr.bf16.mxu0 0
    %5124 = vmatpush1.bf16.msra.mxu0 %v4909
    %5125 = vmatprep.subr.bf16.mxu0 0
    %5126 = vmatpush1.bf16.msra.mxu0 %v4912
    %5127 = vmatprep.subr.bf16.mxu0 0
    %5128 = vmatpush1.bf16.msra.mxu0 %v4915
    %5129 = vmatprep.subr.bf16.mxu0 0
    %5130 = vmatpush1.bf16.msra.mxu0 %v4918
    %5131 = vmatprep.subr.bf16.mxu0 0
    %5132 = vmatpush1.bf16.msra.mxu0 %v4921
    %5133 = vmatprep.subr.bf16.mxu0 0
    %5134 = vmatpush1.bf16.msra.mxu0 %v4924
    %5135 = vmatprep.mubr.bf16.mxu0 %v4522
    %5136 = vmatmul.mubr.bf16.gmra.mrb[0].mxu0 %v4521
    %v5137 = vpop.f32.mrb[0].mxu0
    %v5138 = vadd.f32 %v4633, %v5137
    %v5139 = vpop.f32.mrb[0].mxu0
    %v5140 = vpop.f32.mrb[0].mxu0
    %v5141 = vpop.f32.mrb[0].mxu0
    %5142 = vdwg.mxu0
    %5143 = vmatprep.subr.bf16.mxu0 0
    %5144 = vmatpush1.bf16.msra.mxu0 %v4927
    %5145 = vmatprep.subr.bf16.mxu0 0
    %5146 = vmatpush1.bf16.msra.mxu0 %v4930
    %5147 = vmatprep.subr.bf16.mxu0 0
    %5148 = vmatpush1.bf16.msra.mxu0 %v4933
    %5149 = vmatprep.subr.bf16.mxu0 0
    %5150 = vmatpush1.bf16.msra.mxu0 %v4936
    %5151 = vmatprep.subr.bf16.mxu0 0
    %5152 = vmatpush1.bf16.msra.mxu0 %v4939
    %5153 = vmatprep.subr.bf16.mxu0 0
    %5154 = vmatpush1.bf16.msra.mxu0 %v4942
    %5155 = vmatprep.subr.bf16.mxu0 0
    %5156 = vmatpush1.bf16.msra.mxu0 %v4945
    %5157 = vmatprep.subr.bf16.mxu0 0
    %5158 = vmatpush1.bf16.msra.mxu0 %v4948
    %5159 = vmatprep.subr.bf16.mxu0 0
    %5160 = vmatpush1.bf16.msra.mxu0 0
    %5161 = vmatprep.subr.bf16.mxu0 0
    %5162 = vmatpush1.bf16.msra.mxu0 0
    %5163 = vmatprep.subr.bf16.mxu0 0
    %5164 = vmatpush1.bf16.msra.mxu0 0
    %5165 = vmatprep.subr.bf16.mxu0 0
    %5166 = vmatpush1.bf16.msra.mxu0 0
    %5167 = vmatprep.subr.bf16.mxu0 0
    %5168 = vmatpush1.bf16.msra.mxu0 0
    %5169 = vmatprep.subr.bf16.mxu0 0
    %5170 = vmatpush1.bf16.msra.mxu0 0
    %5171 = vmatprep.subr.bf16.mxu0 0
    %5172 = vmatpush1.bf16.msra.mxu0 0
    %5173 = vmatprep.subr.bf16.mxu0 0
    %5174 = vmatpush1.bf16.msra.mxu0 0
    %5175 = vmatprep.mubr.bf16.mxu0 0
    %5176 = vmatmul.mubr.bf16.gmra.mrb[0].mxu0 %v4523
    %v5177 = vpop.f32.mrb[0].mxu0
    %v5178 = vadd.f32 %v5138, %v5177
    %v5179 = vpop.f32.mrb[0].mxu0
    %v5180 = vpop.f32.mrb[0].mxu0
    %v5181 = vpop.f32.mrb[0].mxu0
    %5182 = vdwg.mxu0
    %v5183 = vmax.f32 %v5097, 0.0
    %v5184 = vmax.f32 %v5099, 0.0
    %v5185 = vmax.f32 %v5178, 0.0
    %v5186 = vpack.c.bf16 %v5183, %v5183
    %v5187 = vpack.c.bf16 %v5184, %v5184
    %v5188 = vpack.c.bf16 %v5185, %v5185
    %v5189 = vld [vmem:[#allocation14] sm:$0xff]
    %v5190 = vld [vmem:[#allocation14 + $0x8] sm:$0xff]
    %v5191 = vld [vmem:[#allocation14 + $0x10] sm:$0xff]
    %v5192 = vld [vmem:[#allocation14 + $0x18] sm:$0xff]
    %v5193 = vld [vmem:[#allocation14 + $0x20] sm:$0xff]
    %v5194 = vld [vmem:[#allocation14 + $0x28] sm:$0xff]
    %v5195 = vld [vmem:[#allocation14 + $0x30] sm:$0xff]
    %v5196 = vld [vmem:[#allocation14 + $0x38] sm:$0xff]
    %v5197 = vld [vmem:[#allocation14 + $0x40] sm:$0xff]
    %v5198 = vld [vmem:[#allocation14 + $0x48] sm:$0xff]
    %v5199 = vld [vmem:[#allocation14 + $0x50] sm:$0xff]
    %v5200 = vld [vmem:[#allocation14 + $0x58] sm:$0xff]
    %v5201 = vld [vmem:[#allocation14 + $0x60] sm:$0xff]
    %v5202 = vld [vmem:[#allocation14 + $0x68] sm:$0xff]
    %v5203 = vld [vmem:[#allocation14 + $0x70] sm:$0xff]
    %v5204 = vld [vmem:[#allocation14 + $0x78] sm:$0xff]
    %v5205 = vld [vmem:[#allocation14 + $0x80] sm:$0xff]
    %v5206 = vld [vmem:[#allocation14 + $0x88] sm:$0xff]
    %v5207 = vld [vmem:[#allocation14 + $0x90] sm:$0xff]
    %v5208 = vld [vmem:[#allocation14 + $0x98] sm:$0xff]
    %v5209 = vld [vmem:[#allocation14 + $0xa0] sm:$0xff]
    %v5210 = vld [vmem:[#allocation14 + $0xa8] sm:$0xff]
    %v5211 = vld [vmem:[#allocation14 + $0xb0] sm:$0xff]
    %v5212 = vld [vmem:[#allocation14 + $0xb8] sm:$0xff]
    %v5213 = vld [vmem:[#allocation14 + $0xc0] sm:$0xff]
    %v5214 = vld [vmem:[#allocation14 + $0xc8] sm:$0xff]
    %v5215 = vld [vmem:[#allocation14 + $0xd0] sm:$0xff]
    %v5216 = vld [vmem:[#allocation14 + $0xd8] sm:$0xff]
    %v5217 = vld [vmem:[#allocation14 + $0xe0] sm:$0xff]
    %v5218 = vld [vmem:[#allocation14 + $0xe8] sm:$0xff]
    %v5219 = vld [vmem:[#allocation14 + $0xf0] sm:$0xff]
    %v5220 = vld [vmem:[#allocation14 + $0xf8] sm:$0xff]
    %v5221 = vld [vmem:[#allocation14 + $0x100] sm:$0xff]
    %v5222 = vld [vmem:[#allocation14 + $0x108] sm:$0xff]
    %v5223 = vld [vmem:[#allocation14 + $0x110] sm:$0xff]
    %v5224 = vld [vmem:[#allocation14 + $0x118] sm:$0xff]
    %v5225 = vld [vmem:[#allocation14 + $0x120] sm:$0xff]
    %v5226 = vld [vmem:[#allocation14 + $0x128] sm:$0xff]
    %v5227 = vld [vmem:[#allocation14 + $0x130] sm:$0xff]
    %v5228 = vld [vmem:[#allocation14 + $0x138] sm:$0xff]
    %v5229 = vld [vmem:[#allocation14 + $0x140] sm:$0xff]
    %v5230 = vld [vmem:[#allocation14 + $0x148] sm:$0xff]
    %v5231 = vld [vmem:[#allocation14 + $0x150] sm:$0xff]
    %v5232 = vld [vmem:[#allocation14 + $0x158] sm:$0xff]
    %v5233 = vld [vmem:[#allocation14 + $0x160] sm:$0xff]
    %v5234 = vld [vmem:[#allocation14 + $0x168] sm:$0xff]
    %v5235 = vld [vmem:[#allocation14 + $0x170] sm:$0xff]
    %v5236 = vld [vmem:[#allocation14 + $0x178] sm:$0xff]
    %v5237 = vld [vmem:[#allocation16] sm:$0x3]
    %v5239 = vlaneseq
    %v5240 = vshrl.u32 %v5239, 7
    %v5241 = vsub.s32 0, %v5240
    %v5242 = vrot.slane %v5237, %v5241
    %v5243 = vlaneseq
    %v5244 = vshrl.u32 %v5243, 7
    %v5245 = vsub.s32 1, %v5244
    %v5246 = vrot.slane %v5237, %v5245
    %v5297 = vunpack.c.l.b16 %v5189
    %v5298 = vunpack.c.h.b16 %v5189
    %v5299 = vunpack.c.l.b16 %v5190
    %v5300 = vunpack.c.h.b16 %v5190
    %v5301 = vunpack.c.l.b16 %v5191
    %v5302 = vunpack.c.h.b16 %v5191
    %v5303 = vunpack.c.l.b16 %v5192
    %v5304 = vunpack.c.h.b16 %v5192
    %v5305 = vunpack.c.l.b16 %v5193
    %v5306 = vunpack.c.h.b16 %v5193
    %v5307 = vunpack.c.l.b16 %v5194
    %v5308 = vunpack.c.h.b16 %v5194
    %v5309 = vunpack.c.l.b16 %v5195
    %v5310 = vunpack.c.h.b16 %v5195
    %v5311 = vunpack.c.l.b16 %v5196
    %v5312 = vunpack.c.h.b16 %v5196
    %v5313 = vunpack.c.l.b16 %v5197
    %v5314 = vunpack.c.h.b16 %v5197
    %v5315 = vunpack.c.l.b16 %v5198
    %v5316 = vunpack.c.h.b16 %v5198
    %v5317 = vunpack.c.l.b16 %v5199
    %v5318 = vunpack.c.h.b16 %v5199
    %v5319 = vunpack.c.l.b16 %v5200
    %v5320 = vunpack.c.h.b16 %v5200
    %v5321 = vunpack.c.l.b16 %v5201
    %v5322 = vunpack.c.h.b16 %v5201
    %v5323 = vunpack.c.l.b16 %v5202
    %v5324 = vunpack.c.h.b16 %v5202
    %v5325 = vunpack.c.l.b16 %v5203
    %v5326 = vunpack.c.h.b16 %v5203
    %v5327 = vunpack.c.l.b16 %v5204
    %v5328 = vunpack.c.h.b16 %v5204
    %v5329 = vunpack.c.l.b16 %v5205
    %v5330 = vunpack.c.h.b16 %v5205
    %v5331 = vunpack.c.l.b16 %v5206
    %v5332 = vunpack.c.h.b16 %v5206
    %v5333 = vunpack.c.l.b16 %v5207
    %v5334 = vunpack.c.h.b16 %v5207
    %v5335 = vunpack.c.l.b16 %v5208
    %v5336 = vunpack.c.h.b16 %v5208
    %v5337 = vunpack.c.l.b16 %v5209
    %v5338 = vunpack.c.h.b16 %v5209
    %v5339 = vunpack.c.l.b16 %v5210
    %v5340 = vunpack.c.h.b16 %v5210
    %v5341 = vunpack.c.l.b16 %v5211
    %v5342 = vunpack.c.h.b16 %v5211
    %v5343 = vunpack.c.l.b16 %v5212
    %v5344 = vunpack.c.h.b16 %v5212
    %v5345 = vunpack.c.l.b16 %v5213
    %v5346 = vunpack.c.h.b16 %v5213
    %v5347 = vunpack.c.l.b16 %v5214
    %v5348 = vunpack.c.h.b16 %v5214
    %v5349 = vunpack.c.l.b16 %v5215
    %v5350 = vunpack.c.h.b16 %v5215
    %v5351 = vunpack.c.l.b16 %v5216
    %v5352 = vunpack.c.h.b16 %v5216
    %v5353 = vunpack.c.l.b16 %v5217
    %v5354 = vunpack.c.h.b16 %v5217
    %v5355 = vunpack.c.l.b16 %v5218
    %v5356 = vunpack.c.h.b16 %v5218
    %v5357 = vunpack.c.l.b16 %v5219
    %v5358 = vunpack.c.h.b16 %v5219
    %v5359 = vunpack.c.l.b16 %v5220
    %v5360 = vunpack.c.h.b16 %v5220
    %v5361 = vunpack.c.l.b16 %v5221
    %v5362 = vunpack.c.h.b16 %v5221
    %v5363 = vunpack.c.l.b16 %v5222
    %v5364 = vunpack.c.h.b16 %v5222
    %v5365 = vunpack.c.l.b16 %v5223
    %v5366 = vunpack.c.h.b16 %v5223
    %v5367 = vunpack.c.l.b16 %v5224
    %v5368 = vunpack.c.h.b16 %v5224
    %v5369 = vunpack.c.l.b16 %v5225
    %v5370 = vunpack.c.h.b16 %v5225
    %v5371 = vunpack.c.l.b16 %v5226
    %v5372 = vunpack.c.h.b16 %v5226
    %v5373 = vunpack.c.l.b16 %v5227
    %v5374 = vunpack.c.h.b16 %v5227
    %v5375 = vunpack.c.l.b16 %v5228
    %v5376 = vunpack.c.h.b16 %v5228
    %v5377 = vunpack.c.l.b16 %v5229
    %v5378 = vunpack.c.h.b16 %v5229
    %v5379 = vunpack.c.l.b16 %v5230
    %v5380 = vunpack.c.h.b16 %v5230
    %v5381 = vunpack.c.l.b16 %v5231
    %v5382 = vunpack.c.h.b16 %v5231
    %v5383 = vunpack.c.l.b16 %v5232
    %v5384 = vunpack.c.h.b16 %v5232
    %v5385 = vunpack.c.l.b16 %v5233
    %v5386 = vunpack.c.h.b16 %v5233
    %v5387 = vunpack.c.l.b16 %v5234
    %v5388 = vunpack.c.h.b16 %v5234
    %v5389 = vunpack.c.l.b16 %v5235
    %v5390 = vunpack.c.h.b16 %v5235
    %v5391 = vunpack.c.l.b16 %v5236
    %v5392 = vunpack.c.h.b16 %v5236
    %v5393 = vpack.c.b16 %v5299, %v5297
    %v5394 = vpack.c.b16 %v5300, %v5298
    %v5395 = vpack.c.b16 %v5303, %v5301
    %v5396 = vpack.c.b16 %v5304, %v5302
    %v5397 = vpack.c.b16 %v5307, %v5305
    %v5398 = vpack.c.b16 %v5308, %v5306
    %v5399 = vpack.c.b16 %v5311, %v5309
    %v5400 = vpack.c.b16 %v5312, %v5310
    %v5401 = vpack.c.b16 %v5315, %v5313
    %v5402 = vpack.c.b16 %v5316, %v5314
    %v5403 = vpack.c.b16 %v5319, %v5317
    %v5404 = vpack.c.b16 %v5320, %v5318
    %v5405 = vpack.c.b16 %v5323, %v5321
    %v5406 = vpack.c.b16 %v5324, %v5322
    %v5407 = vpack.c.b16 %v5327, %v5325
    %v5408 = vpack.c.b16 %v5328, %v5326
    %v5409 = vpack.c.b16 %v5331, %v5329
    %v5410 = vpack.c.b16 %v5332, %v5330
    %v5411 = vpack.c.b16 %v5335, %v5333
    %v5412 = vpack.c.b16 %v5336, %v5334
    %v5413 = vpack.c.b16 %v5339, %v5337
    %v5414 = vpack.c.b16 %v5340, %v5338
    %v5415 = vpack.c.b16 %v5343, %v5341
    %v5416 = vpack.c.b16 %v5344, %v5342
    %v5417 = vpack.c.b16 %v5347, %v5345
    %v5418 = vpack.c.b16 %v5348, %v5346
    %v5419 = vpack.c.b16 %v5351, %v5349
    %v5420 = vpack.c.b16 %v5352, %v5350
    %v5421 = vpack.c.b16 %v5355, %v5353
    %v5422 = vpack.c.b16 %v5356, %v5354
    %v5423 = vpack.c.b16 %v5359, %v5357
    %v5424 = vpack.c.b16 %v5360, %v5358
    %v5425 = vpack.c.b16 %v5363, %v5361
    %v5426 = vpack.c.b16 %v5364, %v5362
    %v5427 = vpack.c.b16 %v5367, %v5365
    %v5428 = vpack.c.b16 %v5368, %v5366
    %v5429 = vpack.c.b16 %v5371, %v5369
    %v5430 = vpack.c.b16 %v5372, %v5370
    %v5431 = vpack.c.b16 %v5375, %v5373
    %v5432 = vpack.c.b16 %v5376, %v5374
    %v5433 = vpack.c.b16 %v5379, %v5377
    %v5434 = vpack.c.b16 %v5380, %v5378
    %v5435 = vpack.c.b16 %v5383, %v5381
    %v5436 = vpack.c.b16 %v5384, %v5382
    %v5437 = vpack.c.b16 %v5387, %v5385
    %v5438 = vpack.c.b16 %v5388, %v5386
    %v5439 = vpack.c.b16 %v5391, %v5389
    %v5440 = vpack.c.b16 %v5392, %v5390
    %5489 = vmatprep.subr.bf16.mxu0 %v5394
    %5490 = vmatpush1.bf16.msra.mxu0 %v5393
    %5491 = vmatprep.subr.bf16.mxu0 %v5396
    %5492 = vmatpush1.bf16.msra.mxu0 %v5395
    %5493 = vmatprep.subr.bf16.mxu0 %v5398
    %5494 = vmatpush1.bf16.msra.mxu0 %v5397
    %5495 = vmatprep.subr.bf16.mxu0 %v5400
    %5496 = vmatpush1.bf16.msra.mxu0 %v5399
    %5497 = vmatprep.subr.bf16.mxu0 %v5402
    %5498 = vmatpush1.bf16.msra.mxu0 %v5401
    %5499 = vmatprep.subr.bf16.mxu0 %v5404
    %5500 = vmatpush1.bf16.msra.mxu0 %v5403
    %5501 = vmatprep.subr.bf16.mxu0 %v5406
    %5502 = vmatpush1.bf16.msra.mxu0 %v5405
    %5503 = vmatprep.subr.bf16.mxu0 %v5408
    %5504 = vmatpush1.bf16.msra.mxu0 %v5407
    %5505 = vmatprep.subr.bf16.mxu0 %v5410
    %5506 = vmatpush1.bf16.msra.mxu0 %v5409
    %5507 = vmatprep.subr.bf16.mxu0 %v5412
    %5508 = vmatpush1.bf16.msra.mxu0 %v5411
    %5509 = vmatprep.subr.bf16.mxu0 %v5414
    %5510 = vmatpush1.bf16.msra.mxu0 %v5413
    %5511 = vmatprep.subr.bf16.mxu0 %v5416
    %5512 = vmatpush1.bf16.msra.mxu0 %v5415
    %5513 = vmatprep.subr.bf16.mxu0 %v5418
    %5514 = vmatpush1.bf16.msra.mxu0 %v5417
    %5515 = vmatprep.subr.bf16.mxu0 %v5420
    %5516 = vmatpush1.bf16.msra.mxu0 %v5419
    %5517 = vmatprep.subr.bf16.mxu0 %v5422
    %5518 = vmatpush1.bf16.msra.mxu0 %v5421
    %5519 = vmatprep.subr.bf16.mxu0 %v5424
    %5520 = vmatpush1.bf16.msra.mxu0 %v5423
    %5521 = vmatprep.mubr.bf16.mxu0 %v5187
    %5522 = vmatmul.mubr.bf16.gmra.mrb[0].mxu0 %v5186
    %v5523 = vpop.f32.mrb[0].mxu0
    %v5524 = vadd.f32 %v5242, %v5523
    %v5525 = vpop.f32.mrb[0].mxu0
    %v5526 = vadd.f32 %v5246, %v5525
    %v5527 = vpop.f32.mrb[0].mxu0
    %v5528 = vpop.f32.mrb[0].mxu0
    %5529 = vdwg.mxu0
    %5530 = vmatprep.subr.bf16.mxu0 %v5426
    %5531 = vmatpush1.bf16.msra.mxu0 %v5425
    %5532 = vmatprep.subr.bf16.mxu0 %v5428
    %5533 = vmatpush1.bf16.msra.mxu0 %v5427
    %5534 = vmatprep.subr.bf16.mxu0 %v5430
    %5535 = vmatpush1.bf16.msra.mxu0 %v5429
    %5536 = vmatprep.subr.bf16.mxu0 %v5432
    %5537 = vmatpush1.bf16.msra.mxu0 %v5431
    %5538 = vmatprep.subr.bf16.mxu0 %v5434
    %5539 = vmatpush1.bf16.msra.mxu0 %v5433
    %5540 = vmatprep.subr.bf16.mxu0 %v5436
    %5541 = vmatpush1.bf16.msra.mxu0 %v5435
    %5542 = vmatprep.subr.bf16.mxu0 %v5438
    %5543 = vmatpush1.bf16.msra.mxu0 %v5437
    %5544 = vmatprep.subr.bf16.mxu0 %v5440
    %5545 = vmatpush1.bf16.msra.mxu0 %v5439
    %5546 = vmatprep.subr.bf16.mxu0 0
    %5547 = vmatpush1.bf16.msra.mxu0 0
    %5548 = vmatprep.subr.bf16.mxu0 0
    %5549 = vmatpush1.bf16.msra.mxu0 0
    %5550 = vmatprep.subr.bf16.mxu0 0
    %5551 = vmatpush1.bf16.msra.mxu0 0
    %5552 = vmatprep.subr.bf16.mxu0 0
    %5553 = vmatpush1.bf16.msra.mxu0 0
    %5554 = vmatprep.subr.bf16.mxu0 0
    %5555 = vmatpush1.bf16.msra.mxu0 0
    %5556 = vmatprep.subr.bf16.mxu0 0
    %5557 = vmatpush1.bf16.msra.mxu0 0
    %5558 = vmatprep.subr.bf16.mxu0 0
    %5559 = vmatpush1.bf16.msra.mxu0 0
    %5560 = vmatprep.subr.bf16.mxu0 0
    %5561 = vmatpush1.bf16.msra.mxu0 0
    %5562 = vmatprep.mubr.bf16.mxu0 0
    %5563 = vmatmul.mubr.bf16.gmra.mrb[0].mxu0 %v5188
    %v5564 = vpop.f32.mrb[0].mxu0
    %v5565 = vadd.f32 %v5524, %v5564
    %v5566 = vpop.f32.mrb[0].mxu0
    %v5567 = vadd.f32 %v5526, %v5566
    %v5568 = vpop.f32.mrb[0].mxu0
    %v5569 = vpop.f32.mrb[0].mxu0
    %5570 = vdwg.mxu0
    %v5571 = vmax.f32 %v5565, 0.0
    %v5572 = vmax.f32 %v5567, 0.0
    %v5573 = vpack.c.bf16 %v5571, %v5571
    %v5574 = vpack.c.bf16 %v5572, %v5572
    %v5575 = vld [vmem:[#allocation17] sm:$0xf]
    %v5576 = vld [vmem:[#allocation17 + $0x4] sm:$0xf]
    %v5577 = vld [vmem:[#allocation17 + $0x8] sm:$0xf]
    %v5578 = vld [vmem:[#allocation17 + $0xc] sm:$0xf]
    %v5579 = vld [vmem:[#allocation17 + $0x10] sm:$0xf]
    %v5580 = vld [vmem:[#allocation17 + $0x14] sm:$0xf]
    %v5581 = vld [vmem:[#allocation17 + $0x18] sm:$0xf]
    %v5582 = vld [vmem:[#allocation17 + $0x1c] sm:$0xf]
    %v5583 = vld [vmem:[#allocation17 + $0x20] sm:$0xf]
    %v5584 = vld [vmem:[#allocation17 + $0x24] sm:$0xf]
    %v5585 = vld [vmem:[#allocation17 + $0x28] sm:$0xf]
    %v5586 = vld [vmem:[#allocation17 + $0x2c] sm:$0xf]
    %v5587 = vld [vmem:[#allocation17 + $0x30] sm:$0xf]
    %v5588 = vld [vmem:[#allocation17 + $0x34] sm:$0xf]
    %v5589 = vld [vmem:[#allocation17 + $0x38] sm:$0xf]
    %v5590 = vld [vmem:[#allocation17 + $0x3c] sm:$0xf]
    %v5591 = vld [vmem:[#allocation17 + $0x40] sm:$0xf]
    %v5592 = vld [vmem:[#allocation17 + $0x44] sm:$0xf]
    %v5593 = vld [vmem:[#allocation17 + $0x48] sm:$0xf]
    %v5594 = vld [vmem:[#allocation17 + $0x4c] sm:$0xf]
    %v5595 = vld [vmem:[#allocation17 + $0x50] sm:$0xf]
    %v5596 = vld [vmem:[#allocation17 + $0x54] sm:$0xf]
    %v5597 = vld [vmem:[#allocation17 + $0x58] sm:$0xf]
    %v5598 = vld [vmem:[#allocation17 + $0x5c] sm:$0xf]
    %v5599 = vld [vmem:[#allocation17 + $0x60] sm:$0xf]
    %v5600 = vld [vmem:[#allocation17 + $0x64] sm:$0xf]
    %v5601 = vld [vmem:[#allocation17 + $0x68] sm:$0xf]
    %v5602 = vld [vmem:[#allocation17 + $0x6c] sm:$0xf]
    %v5603 = vld [vmem:[#allocation17 + $0x70] sm:$0xf]
    %v5604 = vld [vmem:[#allocation17 + $0x74] sm:$0xf]
    %v5605 = vld [vmem:[#allocation17 + $0x78] sm:$0xf]
    %v5606 = vld [vmem:[#allocation17 + $0x7c] sm:$0xf]
    %v5607 = vld [vmem:[#allocation19] sm:$0x1]
    %v5609 = vlaneseq
    %v5610 = vshrl.u32 %v5609, 7
    %v5611 = vsub.s32 0, %v5610
    %v5612 = vrot.slane %v5607, %v5611
    %v5646 = vunpack.c.l.b16 %v5575
    %v5647 = vunpack.c.l.b16 %v5576
    %v5648 = vunpack.c.l.b16 %v5577
    %v5649 = vunpack.c.l.b16 %v5578
    %v5650 = vunpack.c.l.b16 %v5579
    %v5651 = vunpack.c.l.b16 %v5580
    %v5652 = vunpack.c.l.b16 %v5581
    %v5653 = vunpack.c.l.b16 %v5582
    %v5654 = vunpack.c.l.b16 %v5583
    %v5655 = vunpack.c.l.b16 %v5584
    %v5656 = vunpack.c.l.b16 %v5585
    %v5657 = vunpack.c.l.b16 %v5586
    %v5658 = vunpack.c.l.b16 %v5587
    %v5659 = vunpack.c.l.b16 %v5588
    %v5660 = vunpack.c.l.b16 %v5589
    %v5661 = vunpack.c.l.b16 %v5590
    %v5662 = vunpack.c.l.b16 %v5591
    %v5663 = vunpack.c.l.b16 %v5592
    %v5664 = vunpack.c.l.b16 %v5593
    %v5665 = vunpack.c.l.b16 %v5594
    %v5666 = vunpack.c.l.b16 %v5595
    %v5667 = vunpack.c.l.b16 %v5596
    %v5668 = vunpack.c.l.b16 %v5597
    %v5669 = vunpack.c.l.b16 %v5598
    %v5670 = vunpack.c.l.b16 %v5599
    %v5671 = vunpack.c.l.b16 %v5600
    %v5672 = vunpack.c.l.b16 %v5601
    %v5673 = vunpack.c.l.b16 %v5602
    %v5674 = vunpack.c.l.b16 %v5603
    %v5675 = vunpack.c.l.b16 %v5604
    %v5676 = vunpack.c.l.b16 %v5605
    %v5677 = vunpack.c.l.b16 %v5606
    %v5678 = vpack.c.b16 %v5647, %v5646
    %v5679 = vpack.c.b16 %v5649, %v5648
    %v5680 = vpack.c.b16 %v5651, %v5650
    %v5681 = vpack.c.b16 %v5653, %v5652
    %v5682 = vpack.c.b16 %v5655, %v5654
    %v5683 = vpack.c.b16 %v5657, %v5656
    %v5684 = vpack.c.b16 %v5659, %v5658
    %v5685 = vpack.c.b16 %v5661, %v5660
    %v5686 = vpack.c.b16 %v5663, %v5662
    %v5687 = vpack.c.b16 %v5665, %v5664
    %v5688 = vpack.c.b16 %v5667, %v5666
    %v5689 = vpack.c.b16 %v5669, %v5668
    %v5690 = vpack.c.b16 %v5671, %v5670
    %v5691 = vpack.c.b16 %v5673, %v5672
    %v5692 = vpack.c.b16 %v5675, %v5674
    %v5693 = vpack.c.b16 %v5677, %v5676
    %5710 = vmatprep.subr.bf16.mxu0 0
    %5711 = vmatpush1.bf16.msra.mxu0 %v5678
    %5712 = vmatprep.subr.bf16.mxu0 0
    %5713 = vmatpush1.bf16.msra.mxu0 %v5679
    %5714 = vmatprep.subr.bf16.mxu0 0
    %5715 = vmatpush1.bf16.msra.mxu0 %v5680
    %5716 = vmatprep.subr.bf16.mxu0 0
    %5717 = vmatpush1.bf16.msra.mxu0 %v5681
    %5718 = vmatprep.subr.bf16.mxu0 0
    %5719 = vmatpush1.bf16.msra.mxu0 %v5682
    %5720 = vmatprep.subr.bf16.mxu0 0
    %5721 = vmatpush1.bf16.msra.mxu0 %v5683
    %5722 = vmatprep.subr.bf16.mxu0 0
    %5723 = vmatpush1.bf16.msra.mxu0 %v5684
    %5724 = vmatprep.subr.bf16.mxu0 0
    %5725 = vmatpush1.bf16.msra.mxu0 %v5685
    %5726 = vmatprep.subr.bf16.mxu0 0
    %5727 = vmatpush1.bf16.msra.mxu0 %v5686
    %5728 = vmatprep.subr.bf16.mxu0 0
    %5729 = vmatpush1.bf16.msra.mxu0 %v5687
    %5730 = vmatprep.subr.bf16.mxu0 0
    %5731 = vmatpush1.bf16.msra.mxu0 %v5688
    %5732 = vmatprep.subr.bf16.mxu0 0
    %5733 = vmatpush1.bf16.msra.mxu0 %v5689
    %5734 = vmatprep.subr.bf16.mxu0 0
    %5735 = vmatpush1.bf16.msra.mxu0 %v5690
    %5736 = vmatprep.subr.bf16.mxu0 0
    %5737 = vmatpush1.bf16.msra.mxu0 %v5691
    %5738 = vmatprep.subr.bf16.mxu0 0
    %5739 = vmatpush1.bf16.msra.mxu0 %v5692
    %5740 = vmatprep.subr.bf16.mxu0 0
    %5741 = vmatpush1.bf16.msra.mxu0 %v5693
    %5742 = vmatprep.mubr.bf16.mxu0 %v5574
    %5743 = vmatmul.mubr.bf16.gmra.mrb[0].mxu0 %v5573
    %v5744 = vpop.f32.mrb[0].mxu0
    %v5745 = vadd.f32 %v5612, %v5744
    %v5746 = vpop.f32.mrb[0].mxu0
    %v5747 = vpop.f32.mrb[0].mxu0
    %v5748 = vpop.f32.mrb[0].mxu0
    %5749 = vdwg.mxu0
    %v5750 = vmax.f32 %v5745, 0.0
    %5751 = vst [vmem:[#allocation20] sm:$0xff] %v5750
    %v5752 = vlaneseq
    %v5753 = vand.u32 %v5752, 127
    %vm5754 = vcmp.lt.s32.totalorder %v5753, 10
    %v5755 = vsel %vm5754, %v5750, -1e+30
    %5756 = vmax.xlane.f32.xlu0 %v5755
    %v5757 = vpop.xlane.xlu0 %5756
    %v5758 = vsub.f32 %v5755, %v5757
    %v5759 = vmul.f32 %v5758, 1.442695
    %v5760 = vpow.pop %v5759
    %5761 = vadd.xlane.f32.xlu0 %v5760
    %v5762 = vpop.xlane.xlu0 %5761
    %v5763 = vrcp.pop %v5762
    %v5764 = vmul.f32 %v5760, %v5763
    %5765 = vst [vmem:[#allocation21] sm:$0xff] %v5764
    // Predicated region
    $region90: #{tpu_custom_call.1} parent=1 // pred_check
      _
    $region91: #{tpu_custom_call.1} parent=1 // pred_check_branch
      %5767 = sbr.rel (0) target = $region93
    $region92: #{tpu_custom_call.1} parent=1 // pred_region
      %s5769 = ssub.s32 128, 128
      %5770 = vsyncadd [#allocation4], %s5769
      %s5772 = sshll.u32 [#allocation20], 4
      %s5773 = int_to_ptr.vmem [resolvable:$true] %s5772
      %5775 = dma.vmem_to_hbm [thread:$0]  %s5773, 128, %s11, [#allocation4]
    $region93: #{tpu_custom_call.1} parent=1 // pred_fallthru
      _
    // Predicated region
    $region94: #{tpu_custom_call.1} parent=1 // pred_check
      _
    $region95: #{tpu_custom_call.1} parent=1 // pred_check_branch
      %5777 = sbr.rel (0) target = $region97
    $region96: #{tpu_custom_call.1} parent=1 // pred_region
      %s5779 = ssub.s32 128, 128
      %5780 = vsyncadd [#allocation22], %s5779
      %s5782 = sshll.u32 [#allocation21], 4
      %s5783 = int_to_ptr.vmem [resolvable:$true] %s5782
      %5785 = dma.vmem_to_hbm [thread:$0]  %s5783, 128, %s12, [#allocation22]
    $region97: #{tpu_custom_call.1} parent=1 // pred_fallthru
      _
    // Predicated region
    $region98: #{tpu_custom_call.1} parent=1 // pred_check
      _
    $region99: #{tpu_custom_call.1} parent=1 // pred_check_branch
      %5787 = sbr.rel (0) target = $region101
    $region100: #{tpu_custom_call.1} parent=1 // pred_region
      %5788 = dma.done [#allocation4], 128
    $region101: #{tpu_custom_call.1} parent=1 // pred_fallthru
      _
    // Predicated region
    $region102: #{tpu_custom_call.1} parent=1 // pred_check
      _
    $region103: #{tpu_custom_call.1} parent=1 // pred_check_branch
      %5790 = sbr.rel (0) target = $region105
    $region104: #{tpu_custom_call.1} parent=1 // pred_region
      %5791 = dma.done [#allocation22], 128
    $region105: #{tpu_custom_call.1} parent=1 // pred_fallthru
      _
    %5792 = vsyncpa [#allocation3], 1
    %5793 = vsyncpa [#allocation6], 1
    %5794 = vsyncpa [#allocation9], 1
    %5795 = vsyncpa [#allocation12], 1
    %5796 = vsyncpa [#allocation15], 1
    %5797 = vsyncpa [#allocation18], 1
    %5798 = vsyncpa [#allocation4], 1
    %5799 = vsyncpa [#allocation22], 1

// kernel: tpu_custom_call.1
$region0: #{tpu_custom_call.1}
  #allocation0 [shape = 'u32[]', space=smem, size = 0x4, offset = 0x4, fixed_abs, tag = 'smem constant byte address 0x4 - core index']
  #allocation1 [shape = 'u32[144,128]{1,0:T(1,128)}', space=vmem, size = 0x12000, scoped, tag = 'internal scratch']
  %s0 = inlined_call_operand.hbm [shape: f32[8,784], index: 0, kind: input, shape index: {}]
  %s1 = inlined_call_operand.hbm [shape: bf16[784,896], index: 1, kind: input, shape index: {}]
  %s2 = inlined_call_operand.hbm [shape: f32[1,896], index: 2, kind: input, shape index: {}]
  %s3 = inlined_call_operand.hbm [shape: bf16[896,384], index: 3, kind: input, shape index: {}]
  %s4 = inlined_call_operand.hbm [shape: f32[1,384], index: 4, kind: input, shape index: {}]
  %s5 = inlined_call_operand.hbm [shape: bf16[384,384], index: 5, kind: input, shape index: {}]
  %s6 = inlined_call_operand.hbm [shape: f32[1,384], index: 6, kind: input, shape index: {}]
  %s7 = inlined_call_operand.hbm [shape: bf16[384,256], index: 7, kind: input, shape index: {}]
  %s8 = inlined_call_operand.hbm [shape: f32[1,256], index: 8, kind: input, shape index: {}]
  %s9 = inlined_call_operand.hbm [shape: bf16[256,128], index: 9, kind: input, shape index: {}]
  %s10 = inlined_call_operand.hbm [shape: f32[1,128], index: 10, kind: input, shape index: {}]
  %s11 = inlined_call_operand.hbm [shape: f32[8,128], index: 11, kind: output, shape index: {0}]
  %s12 = inlined_call_operand.hbm [shape: f32[8,128], index: 12, kind: output, shape index: {1}]
  %13 = xla_tuple %s11, %s12
  %s14 = sld [smem:[#allocation0]]
  $region106: #{tpu_custom_call.1} parent=0
    _
  %s16 = ssub.s32 1, %s14
  %s17 = scalar_select 0, %s16, %s14
  $region1: #{tpu_custom_call.1} parent=0
    #allocation2 [shape = 'u8[28672]{0}', space=vmem, size = 0x7000, scoped, tag = 'input window, operand 0, single buffered']
    #allocation3 [shape = 's32[1]{0}', space=sflag, size = 0x4, scoped, tag = 'scoped memory for tpu_custom_call.1']
    #allocation4 [shape = 's32[1]{0}', space=sflag, size = 0x4, scoped, tag = 'scoped memory for tpu_custom_call.1']
    #allocation5 [shape = 'u8[1404928]{0}', space=vmem, size = 0x157000, scoped, tag = 'input window, operand 1, single buffered']
    #allocation6 [shape = 's32[1]{0}', space=sflag, size = 0x4, scoped, tag = 'scoped memory for tpu_custom_call.1']
    #allocation7 [shape = 'u8[3584]{0}', space=vmem, size = 0x1000, scoped, tag = 'input window, operand 2, single buffered']
    #allocation8 [shape = 'u8[688128]{0}', space=vmem, size = 0xa8000, scoped, tag = 'input window, operand 3, single buffered']
    #allocation9 [shape = 's32[1]{0}', space=sflag, size = 0x4, scoped, tag = 'scoped memory for tpu_custom_call.1']
    #allocation10 [shape = 'u8[1536]{0}', space=vmem, size = 0x800, scoped, tag = 'input window, operand 4, single buffered']
    #allocation11 [shape = 'u8[294912]{0}', space=vmem, size = 0x48000, scoped, tag = 'input window, operand 5, single buffered']
    #allocation12 [shape = 's32[1]{0}', space=sflag, size = 0x4, scoped, tag = 'scoped memory for tpu_custom_call.1']
    #allocation13 [shape = 'u8[1536]{0}', space=vmem, size = 0x800, scoped, tag = 'input window, operand 6, single buffered']
    #allocation14 [shape = 'u8[196608]{0}', space=vmem, size = 0x30000, scoped, tag = 'input window, operand 7, single buffered']
    #allocation15 [shape = 's32[1]{0}', space=sflag, size = 0x4, scoped, tag = 'scoped memory for tpu_custom_call.1']
    #allocation16 [shape = 'u8[1024]{0}', space=vmem, size = 0x400, scoped, tag = 'input window, operand 8, single buffered']
    #allocation17 [shape = 'u8[65536]{0}', space=vmem, size = 0x10000, scoped, tag = 'input window, operand 9, single buffered']
    #allocation18 [shape = 's32[1]{0}', space=sflag, size = 0x4, scoped, tag = 'scoped memory for tpu_custom_call.1']
    #allocation19 [shape = 'u8[512]{0}', space=vmem, size = 0x400, scoped, tag = 'input window, operand 10, single buffered']
    #allocation20 [shape = 'u8[4096]{0}', space=vmem, size = 0x1000, scoped, tag = 'output window, operand 0, single buffered']
    #allocation21 [shape = 'u8[4096]{0}', space=vmem, size = 0x1000, scoped, tag = 'output window, operand 1, single buffered']
    #allocation22 [shape = 's32[1]{0}', space=sflag, size = 0x4, scoped, tag = 'scoped memory for tpu_custom_call.1']
    %18 = vsyncpa [#allocation3], 0
    %19 = vsyncpa [#allocation6], 0
    %20 = vsyncpa [#allocation9], 0
    %21 = vsyncpa [#allocation12], 0
    %22 = vsyncpa [#allocation15], 0
    %23 = vsyncpa [#allocation18], 0
    %24 = vsyncpa [#allocation4], 0
    %25 = vsyncpa [#allocation22], 0
    // Predicated region
    $region2: #{tpu_custom_call.1} parent=1 // pred_check
      _
    $region3: #{tpu_custom_call.1} parent=1 // pred_check_branch
      %27 = sbr.rel (0) target = $region5
    $region4: #{tpu_custom_call.1} parent=1 // pred_region
      %s29 = ssub.s32 896, 896
      %30 = vsyncadd [#allocation3], %s29
      %s32 = sshll.u32 [#allocation2], 4
      %s33 = int_to_ptr.vmem [resolvable:$true] %s32
      %35 = dma.hbm_to_vmem [thread:$0]  %s0, 896, %s33, [#allocation3]
    $region5: #{tpu_custom_call.1} parent=1 // pred_fallthru
      _
    // Predicated region
    $region6: #{tpu_custom_call.1} parent=1 // pred_check
      _
    $region7: #{tpu_custom_call.1} parent=1 // pred_check_branch
      %37 = sbr.rel (0) target = $region9
    $region8: #{tpu_custom_call.1} parent=1 // pred_region
      %s39 = ssub.s32 43904, 43904
      %40 = vsyncadd [#allocation6], %s39
      %s41 = sshll.u32 [#allocation5], 4
      %s42 = int_to_ptr.vmem [resolvable:$true] %s41
      %47 = dma.hbm_to_vmem [thread:$0]  %s1, 43904, %s42, [#allocation6], 448, 448, 28
    $region9: #{tpu_custom_call.1} parent=1 // pred_fallthru
      _
    // Predicated region
    $region10: #{tpu_custom_call.1} parent=1 // pred_check
      _
    $region11: #{tpu_custom_call.1} parent=1 // pred_check_branch
      %49 = sbr.rel (0) target = $region13
    $region12: #{tpu_custom_call.1} parent=1 // pred_region
      %s51 = ssub.s32 112, 112
      %52 = vsyncadd [#allocation6], %s51
      %s54 = sshll.u32 [#allocation7], 4
      %s55 = int_to_ptr.vmem [resolvable:$true] %s54
      %57 = dma.hbm_to_vmem [thread:$0]  %s2, 112, %s55, [#allocation6]
    $region13: #{tpu_custom_call.1} parent=1 // pred_fallthru
      _
    // Predicated region
    $region14: #{tpu_custom_call.1} parent=1 // pred_check
      _
    $region15: #{tpu_custom_call.1} parent=1 // pred_check_branch
      %59 = sbr.rel (0) target = $region17
    $region16: #{tpu_custom_call.1} parent=1 // pred_region
      %s61 = ssub.s32 21504, 21504
      %62 = vsyncadd [#allocation9], %s61
      %s63 = sshll.u32 [#allocation8], 4
      %s64 = int_to_ptr.vmem [resolvable:$true] %s63
      %69 = dma.hbm_to_vmem [thread:$0]  %s3, 21504, %s64, [#allocation9], 192, 192, 12
    $region17: #{tpu_custom_call.1} parent=1 // pred_fallthru
      _
    // Predicated region
    $region18: #{tpu_custom_call.1} parent=1 // pred_check
      _
    $region19: #{tpu_custom_call.1} parent=1 // pred_check_branch
      %71 = sbr.rel (0) target = $region21
    $region20: #{tpu_custom_call.1} parent=1 // pred_region
      %s73 = ssub.s32 48, 48
      %74 = vsyncadd [#allocation9], %s73
      %s76 = sshll.u32 [#allocation10], 4
      %s77 = int_to_ptr.vmem [resolvable:$true] %s76
      %79 = dma.hbm_to_vmem [thread:$0]  %s4, 48, %s77, [#allocation9]
    $region21: #{tpu_custom_call.1} parent=1 // pred_fallthru
      _
    // Predicated region
    $region22: #{tpu_custom_call.1} parent=1 // pred_check
      _
    $region23: #{tpu_custom_call.1} parent=1 // pred_check_branch
      %81 = sbr.rel (0) target = $region25
    $region24: #{tpu_custom_call.1} parent=1 // pred_region
      %s83 = ssub.s32 9216, 9216
      %84 = vsyncadd [#allocation12], %s83
      %s85 = sshll.u32 [#allocation11], 4
      %s86 = int_to_ptr.vmem [resolvable:$true] %s85
      %91 = dma.hbm_to_vmem [thread:$0]  %s5, 9216, %s86, [#allocation12], 192, 192, 12
    $region25: #{tpu_custom_call.1} parent=1 // pred_fallthru
      _
    // Predicated region
    $region26: #{tpu_custom_call.1} parent=1 // pred_check
      _
    $region27: #{tpu_custom_call.1} parent=1 // pred_check_branch
      %93 = sbr.rel (0) target = $region29
    $region28: #{tpu_custom_call.1} parent=1 // pred_region
      %s95 = ssub.s32 48, 48
      %96 = vsyncadd [#allocation12], %s95
      %s98 = sshll.u32 [#allocation13], 4
      %s99 = int_to_ptr.vmem [resolvable:$true] %s98
      %101 = dma.hbm_to_vmem [thread:$0]  %s6, 48, %s99, [#allocation12]
    $region29: #{tpu_custom_call.1} parent=1 // pred_fallthru
      _
    // Predicated region
    $region30: #{tpu_custom_call.1} parent=1 // pred_check
      _
    $region31: #{tpu_custom_call.1} parent=1 // pred_check_branch
      %103 = sbr.rel (0) target = $region33
    $region32: #{tpu_custom_call.1} parent=1 // pred_region
      %s105 = ssub.s32 6144, 6144
      %106 = vsyncadd [#allocation15], %s105
      %s107 = sshll.u32 [#allocation14], 4
      %s108 = int_to_ptr.vmem [resolvable:$true] %s107
      %113 = dma.hbm_to_vmem [thread:$0]  %s7, 6144, %s108, [#allocation15], 128, 128, 8
    $region33: #{tpu_custom_call.1} parent=1 // pred_fallthru
      _
    // Predicated region
    $region34: #{tpu_custom_call.1} parent=1 // pred_check
      _
    $region35: #{tpu_custom_call.1} parent=1 // pred_check_branch
      %115 = sbr.rel (0) target = $region37
    $region36: #{tpu_custom_call.1} parent=1 // pred_region
      %s117 = ssub.s32 32, 32
      %118 = vsyncadd [#allocation15], %s117
      %s120 = sshll.u32 [#allocation16], 4
      %s121 = int_to_ptr.vmem [resolvable:$true] %s120
      %123 = dma.hbm_to_vmem [thread:$0]  %s8, 32, %s121, [#allocation15]
    $region37: #{tpu_custom_call.1} parent=1 // pred_fallthru
      _
    // Predicated region
    $region38: #{tpu_custom_call.1} parent=1 // pred_check
      _
    $region39: #{tpu_custom_call.1} parent=1 // pred_check_branch
      %125 = sbr.rel (0) target = $region41
    $region40: #{tpu_custom_call.1} parent=1 // pred_region
      %s127 = ssub.s32 2048, 2048
      %128 = vsyncadd [#allocation18], %s127
      %s129 = sshll.u32 [#allocation17], 4
      %s130 = int_to_ptr.vmem [resolvable:$true] %s129
      %135 = dma.hbm_to_vmem [thread:$0]  %s9, 2048, %s130, [#allocation18], 64, 64, 4
    $region41: #{tpu_custom_call.1} parent=1 // pred_fallthru
      _
    // Predicated region
    $region42: #{tpu_custom_call.1} parent=1 // pred_check
      _
    $region43: #{tpu_custom_call.1} parent=1 // pred_check_branch
      %137 = sbr.rel (0) target = $region45
    $region44: #{tpu_custom_call.1} parent=1 // pred_region
      %s139 = ssub.s32 16, 16
      %140 = vsyncadd [#allocation18], %s139
      %s142 = sshll.u32 [#allocation19], 4
      %s143 = int_to_ptr.vmem [resolvable:$true] %s142
      %145 = dma.hbm_to_vmem [thread:$0]  %s10, 16, %s143, [#allocation18]
    $region45: #{tpu_custom_call.1} parent=1 // pred_fallthru
      _
    // Predicated region
    $region46: #{tpu_custom_call.1} parent=1 // pred_check
      _
    $region47: #{tpu_custom_call.1} parent=1 // pred_check_branch
      %147 = sbr.rel (0) target = $region49
    $region48: #{tpu_custom_call.1} parent=1 // pred_region
      %148 = dma.done [#allocation3], 896
    $region49: #{tpu_custom_call.1} parent=1 // pred_fallthru
      _
    // Predicated region
    $region50: #{tpu_custom_call.1} parent=1 // pred_check
      _
    $region51: #{tpu_custom_call.1} parent=1 // pred_check_branch
      %150 = sbr.rel (0) target = $region53
    $region52: #{tpu_custom_call.1} parent=1 // pred_region
      %151 = dma.done [#allocation6], 43904
    $region53: #{tpu_custom_call.1} parent=1 // pred_fallthru
      _
    // Predicated region
    $region54: #{tpu_custom_call.1} parent=1 // pred_check
      _
    $region55: #{tpu_custom_call.1} parent=1 // pred_check_branch
      %153 = sbr.rel (0) target = $region57
    $region56: #{tpu_custom_call.1} parent=1 // pred_region
      %154 = dma.done [#allocation6], 112
    $region57: #{tpu_custom_call.1} parent=1 // pred_fallthru
      _
    // Predicated region
    $region58: #{tpu_custom_call.1} parent=1 // pred_check
      _
    $region59: #{tpu_custom_call.1} parent=1 // pred_check_branch
      %156 = sbr.rel (0) target = $region61
    $region60: #{tpu_custom_call.1} parent=1 // pred_region
      %157 = dma.done [#allocation9], 21504
    $region61: #{tpu_custom_call.1} parent=1 // pred_fallthru
      _
    // Predicated region
    $region62: #{tpu_custom_call.1} parent=1 // pred_check
      _
    $region63: #{tpu_custom_call.1} parent=1 // pred_check_branch
      %159 = sbr.rel (0) target = $region65
    $region64: #{tpu_custom_call.1} parent=1 // pred_region
      %160 = dma.done [#allocation9], 48
    $region65: #{tpu_custom_call.1} parent=1 // pred_fallthru
      _
    // Predicated region
    $region66: #{tpu_custom_call.1} parent=1 // pred_check
      _
    $region67: #{tpu_custom_call.1} parent=1 // pred_check_branch
      %162 = sbr.rel (0) target = $region69
    $region68: #{tpu_custom_call.1} parent=1 // pred_region
      %163 = dma.done [#allocation12], 9216
    $region69: #{tpu_custom_call.1} parent=1 // pred_fallthru
      _
    // Predicated region
    $region70: #{tpu_custom_call.1} parent=1 // pred_check
      _
    $region71: #{tpu_custom_call.1} parent=1 // pred_check_branch
      %165 = sbr.rel (0) target = $region73
    $region72: #{tpu_custom_call.1} parent=1 // pred_region
      %166 = dma.done [#allocation12], 48
    $region73: #{tpu_custom_call.1} parent=1 // pred_fallthru
      _
    // Predicated region
    $region74: #{tpu_custom_call.1} parent=1 // pred_check
      _
    $region75: #{tpu_custom_call.1} parent=1 // pred_check_branch
      %168 = sbr.rel (0) target = $region77
    $region76: #{tpu_custom_call.1} parent=1 // pred_region
      %169 = dma.done [#allocation15], 6144
    $region77: #{tpu_custom_call.1} parent=1 // pred_fallthru
      _
    // Predicated region
    $region78: #{tpu_custom_call.1} parent=1 // pred_check
      _
    $region79: #{tpu_custom_call.1} parent=1 // pred_check_branch
      %171 = sbr.rel (0) target = $region81
    $region80: #{tpu_custom_call.1} parent=1 // pred_region
      %172 = dma.done [#allocation15], 32
    $region81: #{tpu_custom_call.1} parent=1 // pred_fallthru
      _
    // Predicated region
    $region82: #{tpu_custom_call.1} parent=1 // pred_check
      _
    $region83: #{tpu_custom_call.1} parent=1 // pred_check_branch
      %174 = sbr.rel (0) target = $region85
    $region84: #{tpu_custom_call.1} parent=1 // pred_region
      %175 = dma.done [#allocation18], 2048
    $region85: #{tpu_custom_call.1} parent=1 // pred_fallthru
      _
    // Predicated region
    $region86: #{tpu_custom_call.1} parent=1 // pred_check
      _
    $region87: #{tpu_custom_call.1} parent=1 // pred_check_branch
      %177 = sbr.rel (0) target = $region89
    $region88: #{tpu_custom_call.1} parent=1 // pred_region
      %178 = dma.done [#allocation18], 16
    $region89: #{tpu_custom_call.1} parent=1 // pred_fallthru
      _
    %v180 = vld [vmem:[#allocation2] sm:$0xff]
    %v181 = vld [vmem:[#allocation2 + $0x8] sm:$0xff]
    %v182 = vld [vmem:[#allocation2 + $0x10] sm:$0xff]
    %v183 = vld [vmem:[#allocation2 + $0x18] sm:$0xff]
    %v184 = vld [vmem:[#allocation2 + $0x20] sm:$0xff]
    %v185 = vld [vmem:[#allocation2 + $0x28] sm:$0xff]
    %v186 = vld [vmem:[#allocation2 + $0x30] sm:$0xff]
    %v187 = vpack.c.bf16 %v180, %v180
    %v188 = vpack.c.bf16 %v181, %v181
    %v189 = vpack.c.bf16 %v182, %v182
    %v190 = vpack.c.bf16 %v183, %v183
    %v191 = vpack.c.bf16 %v184, %v184
    %v192 = vpack.c.bf16 %v185, %v185
    %v193 = vpack.c.bf16 %v186, %v186
    %v194 = vld [vmem:[#allocation5] sm:$0xff]
    %v195 = vld [vmem:[#allocation5 + $0x8] sm:$0xff]
    %v196 = vld [vmem:[#allocation5 + $0x10] sm:$0xff]
    %v197 = vld [vmem:[#allocation5 + $0x18] sm:$0xf]
    %v198 = vld [vmem:[#allocation5 + $0x1c] sm:$0xff]
    %v199 = vld [vmem:[#allocation5 + $0x24] sm:$0xff]
    %v200 = vld [vmem:[#allocation5 + $0x2c] sm:$0xff]
    %v201 = vld [vmem:[#allocation5 + $0x34] sm:$0xf]
    %v202 = vld [vmem:[#allocation5 + $0x38] sm:$0xff]
    %v203 = vld [vmem:[#allocation5 + $0x40] sm:$0xff]
    %v204 = vld [vmem:[#allocation5 + $0x48] sm:$0xff]
    %v205 = vld [vmem:[#allocation5 + $0x50] sm:$0xf]
    %v206 = vld [vmem:[#allocation5 + $0x54] sm:$0xff]
    %v207 = vld [vmem:[#allocation5 + $0x5c] sm:$0xff]
    %v208 = vld [vmem:[#allocation5 + $0x64] sm:$0xff]
    %v209 = vld [vmem:[#allocation5 + $0x6c] sm:$0xf]
    %v210 = vld [vmem:[#allocation5 + $0x70] sm:$0xff]
    %v211 = vld [vmem:[#allocation5 + $0x78] sm:$0xff]
    %v212 = vld [vmem:[#allocation5 + $0x80] sm:$0xff]
    %v213 = vld [vmem:[#allocation5 + $0x88] sm:$0xf]
    %v214 = vld [vmem:[#allocation5 + $0x8c] sm:$0xff]
    %v215 = vld [vmem:[#allocation5 + $0x94] sm:$0xff]
    %v216 = vld [vmem:[#allocation5 + $0x9c] sm:$0xff]
    %v217 = vld [vmem:[#allocation5 + $0xa4] sm:$0xf]
    %v218 = vld [vmem:[#allocation5 + $0xa8] sm:$0xff]
    %v219 = vld [vmem:[#allocation5 + $0xb0] sm:$0xff]
    %v220 = vld [vmem:[#allocation5 + $0xb8] sm:$0xff]
    %v221 = vld [vmem:[#allocation5 + $0xc0] sm:$0xf]
    %v222 = vld [vmem:[#allocation5 + $0xc4] sm:$0xff]
    %v223 = vld [vmem:[#allocation5 + $0xcc] sm:$0xff]
    %v224 = vld [vmem:[#allocation5 + $0xd4] sm:$0xff]
    %v225 = vld [vmem:[#allocation5 + $0xdc] sm:$0xf]
    %v226 = vld [vmem:[#allocation5 + $0xe0] sm:$0xff]
    %v227 = vld [vmem:[#allocation5 + $0xe8] sm:$0xff]
    %v228 = vld [vmem:[#allocation5 + $0xf0] sm:$0xff]
    %v229 = vld [vmem:[#allocation5 + $0xf8] sm:$0xf]
    %v230 = vld [vmem:[#allocation5 + $0xfc] sm:$0xff]
    %v231 = vld [vmem:[#allocation5 + $0x104] sm:$0xff]
    %v232 = vld [vmem:[#allocation5 + $0x10c] sm:$0xff]
    %v233 = vld [vmem:[#allocation5 + $0x114] sm:$0xf]
    %v234 = vld [vmem:[#allocation5 + $0x118] sm:$0xff]
    %v235 = vld [vmem:[#allocation5 + $0x120] sm:$0xff]
    %v236 = vld [vmem:[#allocation5 + $0x128] sm:$0xff]
    %v237 = vld [vmem:[#allocation5 + $0x130] sm:$0xf]
    %v238 = vld [vmem:[#allocation5 + $0x134] sm:$0xff]
    %v239 = vld [vmem:[#allocation5 + $0x13c] sm:$0xff]
    %v240 = vld [vmem:[#allocation5 + $0x144] sm:$0xff]
    %v241 = vld [vmem:[#allocation5 + $0x14c] sm:$0xf]
    %v242 = vld [vmem:[#allocation5 + $0x150] sm:$0xff]
    %v243 = vld [vmem:[#allocation5 + $0x158] sm:$0xff]
    %v244 = vld [vmem:[#allocation5 + $0x160] sm:$0xff]
    %v245 = vld [vmem:[#allocation5 + $0x168] sm:$0xf]
    %v246 = vld [vmem:[#allocation5 + $0x16c] sm:$0xff]
    %v247 = vld [vmem:[#allocation5 + $0x174] sm:$0xff]
    %v248 = vld [vmem:[#allocation5 + $0x17c] sm:$0xff]
    %v249 = vld [vmem:[#allocation5 + $0x184] sm:$0xf]
    %v250 = vld [vmem:[#allocation5 + $0x188] sm:$0xff]
    %v251 = vld [vmem:[#allocation5 + $0x190] sm:$0xff]
    %v252 = vld [vmem:[#allocation5 + $0x198] sm:$0xff]
    %v253 = vld [vmem:[#allocation5 + $0x1a0] sm:$0xf]
    %v254 = vld [vmem:[#allocation5 + $0x1a4] sm:$0xff]
    %v255 = vld [vmem:[#allocation5 + $0x1ac] sm:$0xff]
    %v256 = vld [vmem:[#allocation5 + $0x1b4] sm:$0xff]
    %v257 = vld [vmem:[#allocation5 + $0x1bc] sm:$0xf]
    %v258 = vld [vmem:[#allocation5 + $0x1c0] sm:$0xff]
    %v259 = vld [vmem:[#allocation5 + $0x1c8] sm:$0xff]
    %v260 = vld [vmem:[#allocation5 + $0x1d0] sm:$0xff]
    %v261 = vld [vmem:[#allocation5 + $0x1d8] sm:$0xf]
    %v262 = vld [vmem:[#allocation5 + $0x1dc] sm:$0xff]
    %v263 = vld [vmem:[#allocation5 + $0x1e4] sm:$0xff]
    %v264 = vld [vmem:[#allocation5 + $0x1ec] sm:$0xff]
    %v265 = vld [vmem:[#allocation5 + $0x1f4] sm:$0xf]
    %v266 = vld [vmem:[#allocation5 + $0x1f8] sm:$0xff]
    %v267 = vld [vmem:[#allocation5 + $0x200] sm:$0xff]
    %v268 = vld [vmem:[#allocation5 + $0x208] sm:$0xff]
    %v269 = vld [vmem:[#allocation5 + $0x210] sm:$0xf]
    %v270 = vld [vmem:[#allocation5 + $0x214] sm:$0xff]
    %v271 = vld [vmem:[#allocation5 + $0x21c] sm:$0xff]
    %v272 = vld [vmem:[#allocation5 + $0x224] sm:$0xff]
    %v273 = vld [vmem:[#allocation5 + $0x22c] sm:$0xf]
    %v274 = vld [vmem:[#allocation5 + $0x230] sm:$0xff]
    %v275 = vld [vmem:[#allocation5 + $0x238] sm:$0xff]
    %v276 = vld [vmem:[#allocation5 + $0x240] sm:$0xff]
    %v277 = vld [vmem:[#allocation5 + $0x248] sm:$0xf]
    %v278 = vld [vmem:[#allocation5 + $0x24c] sm:$0xff]
    %v279 = vld [vmem:[#allocation5 + $0x254] sm:$0xff]
    %v280 = vld [vmem:[#allocation5 + $0x25c] sm:$0xff]
    %v281 = vld [vmem:[#allocation5 + $0x264] sm:$0xf]
    %v282 = vld [vmem:[#allocation5 + $0x268] sm:$0xff]
    %v283 = vld [vmem:[#allocation5 + $0x270] sm:$0xff]
    %v284 = vld [vmem:[#allocation5 + $0x278] sm:$0xff]
    %v285 = vld [vmem:[#allocation5 + $0x280] sm:$0xf]
    %v286 = vld [vmem:[#allocation5 + $0x284] sm:$0xff]
    %v287 = vld [vmem:[#allocation5 + $0x28c] sm:$0xff]
    %v288 = vld [vmem:[#allocation5 + $0x294] sm:$0xff]
    %v289 = vld [vmem:[#allocation5 + $0x29c] sm:$0xf]
    %v290 = vld [vmem:[#allocation5 + $0x2a0] sm:$0xff]
    %v291 = vld [vmem:[#allocation5 + $0x2a8] sm:$0xff]
    %v292 = vld [vmem:[#allocation5 + $0x2b0] sm:$0xff]
    %v293 = vld [vmem:[#allocation5 + $0x2b8] sm:$0xf]
    %v294 = vld [vmem:[#allocation5 + $0x2bc] sm:$0xff]
    %v295 = vld [vmem:[#allocation5 + $0x2c4] sm:$0xff]
    %v296 = vld [vmem:[#allocation5 + $0x2cc] sm:$0xff]
    %v297 = vld [vmem:[#allocation5 + $0x2d4] sm:$0xf]
    %v298 = vld [vmem:[#allocation5 + $0x2d8] sm:$0xff]
    %v299 = vld [vmem:[#allocation5 + $0x2e0] sm:$0xff]
    %v300 = vld [vmem:[#allocation5 + $0x2e8] sm:$0xff]
    %v301 = vld [vmem:[#allocation5 + $0x2f0] sm:$0xf]
    %v302 = vld [vmem:[#allocation5 + $0x2f4] sm:$0xff]
    %v303 = vld [vmem:[#allocation5 + $0x2fc] sm:$0xff]
    %v304 = vld [vmem:[#allocation5 + $0x304] sm:$0xff]
    %v305 = vld [vmem:[#allocation5 + $0x30c] sm:$0xf]
    %v306 = vld [vmem:[#allocation5 + $0x310] sm:$0xff]
    %v307 = vld [vmem:[#allocation5 + $0x318] sm:$0xff]
    %v308 = vld [vmem:[#allocation5 + $0x320] sm:$0xff]
    %v309 = vld [vmem:[#allocation5 + $0x328] sm:$0xf]
    %v310 = vld [vmem:[#allocation5 + $0x32c] sm:$0xff]
    %v311 = vld [vmem:[#allocation5 + $0x334] sm:$0xff]
    %v312 = vld [vmem:[#allocation5 + $0x33c] sm:$0xff]
    %v313 = vld [vmem:[#allocation5 + $0x344] sm:$0xf]
    %v314 = vld [vmem:[#allocation5 + $0x348] sm:$0xff]
    %v315 = vld [vmem:[#allocation5 + $0x350] sm:$0xff]
    %v316 = vld [vmem:[#allocation5 + $0x358] sm:$0xff]
    %v317 = vld [vmem:[#allocation5 + $0x360] sm:$0xf]
    %v318 = vld [vmem:[#allocation5 + $0x364] sm:$0xff]
    %v319 = vld [vmem:[#allocation5 + $0x36c] sm:$0xff]
    %v320 = vld [vmem:[#allocation5 + $0x374] sm:$0xff]
    %v321 = vld [vmem:[#allocation5 + $0x37c] sm:$0xf]
    %v322 = vld [vmem:[#allocation5 + $0x380] sm:$0xff]
    %v323 = vld [vmem:[#allocation5 + $0x388] sm:$0xff]
    %v324 = vld [vmem:[#allocation5 + $0x390] sm:$0xff]
    %v325 = vld [vmem:[#allocation5 + $0x398] sm:$0xf]
    %v326 = vld [vmem:[#allocation5 + $0x39c] sm:$0xff]
    %v327 = vld [vmem:[#allocation5 + $0x3a4] sm:$0xff]
    %v328 = vld [vmem:[#allocation5 + $0x3ac] sm:$0xff]
    %v329 = vld [vmem:[#allocation5 + $0x3b4] sm:$0xf]
    %v330 = vld [vmem:[#allocation5 + $0x3b8] sm:$0xff]
    %v331 = vld [vmem:[#allocation5 + $0x3c0] sm:$0xff]
    %v332 = vld [vmem:[#allocation5 + $0x3c8] sm:$0xff]
    %v333 = vld [vmem:[#allocation5 + $0x3d0] sm:$0xf]
    %v334 = vld [vmem:[#allocation5 + $0x3d4] sm:$0xff]
    %v335 = vld [vmem:[#allocation5 + $0x3dc] sm:$0xff]
    %v336 = vld [vmem:[#allocation5 + $0x3e4] sm:$0xff]
    %v337 = vld [vmem:[#allocation5 + $0x3ec] sm:$0xf]
    %v338 = vld [vmem:[#allocation5 + $0x3f0] sm:$0xff]
    %v339 = vld [vmem:[#allocation5 + $0x3f8] sm:$0xff]
    %v340 = vld [vmem:[#allocation5 + $0x400] sm:$0xff]
    %v341 = vld [vmem:[#allocation5 + $0x408] sm:$0xf]
    %v342 = vld [vmem:[#allocation5 + $0x40c] sm:$0xff]
    %v343 = vld [vmem:[#allocation5 + $0x414] sm:$0xff]
    %v344 = vld [vmem:[#allocation5 + $0x41c] sm:$0xff]
    %v345 = vld [vmem:[#allocation5 + $0x424] sm:$0xf]
    %v346 = vld [vmem:[#allocation5 + $0x428] sm:$0xff]
    %v347 = vld [vmem:[#allocation5 + $0x430] sm:$0xff]
    %v348 = vld [vmem:[#allocation5 + $0x438] sm:$0xff]
    %v349 = vld [vmem:[#allocation5 + $0x440] sm:$0xf]
    %v350 = vld [vmem:[#allocation5 + $0x444] sm:$0xff]
    %v351 = vld [vmem:[#allocation5 + $0x44c] sm:$0xff]
    %v352 = vld [vmem:[#allocation5 + $0x454] sm:$0xff]
    %v353 = vld [vmem:[#allocation5 + $0x45c] sm:$0xf]
    %v354 = vld [vmem:[#allocation5 + $0x460] sm:$0xff]
    %v355 = vld [vmem:[#allocation5 + $0x468] sm:$0xff]
    %v356 = vld [vmem:[#allocation5 + $0x470] sm:$0xff]
    %v357 = vld [vmem:[#allocation5 + $0x478] sm:$0xf]
    %v358 = vld [vmem:[#allocation5 + $0x47c] sm:$0xff]
    %v359 = vld [vmem:[#allocation5 + $0x484] sm:$0xff]
    %v360 = vld [vmem:[#allocation5 + $0x48c] sm:$0xff]
    %v361 = vld [vmem:[#allocation5 + $0x494] sm:$0xf]
    %v362 = vld [vmem:[#allocation5 + $0x498] sm:$0xff]
    %v363 = vld [vmem:[#allocation5 + $0x4a0] sm:$0xff]
    %v364 = vld [vmem:[#allocation5 + $0x4a8] sm:$0xff]
    %v365 = vld [vmem:[#allocation5 + $0x4b0] sm:$0xf]
    %v366 = vld [vmem:[#allocation5 + $0x4b4] sm:$0xff]
    %v367 = vld [vmem:[#allocation5 + $0x4bc] sm:$0xff]
    %v368 = vld [vmem:[#allocation5 + $0x4c4] sm:$0xff]
    %v369 = vld [vmem:[#allocation5 + $0x4cc] sm:$0xf]
    %v370 = vld [vmem:[#allocation5 + $0x4d0] sm:$0xff]
    %v371 = vld [vmem:[#allocation5 + $0x4d8] sm:$0xff]
    %v372 = vld [vmem:[#allocation5 + $0x4e0] sm:$0xff]
    %v373 = vld [vmem:[#allocation5 + $0x4e8] sm:$0xf]
    %v374 = vld [vmem:[#allocation5 + $0x4ec] sm:$0xff]
    %v375 = vld [vmem:[#allocation5 + $0x4f4] sm:$0xff]
    %v376 = vld [vmem:[#allocation5 + $0x4fc] sm:$0xff]
    %v377 = vld [vmem:[#allocation5 + $0x504] sm:$0xf]
    %v378 = vld [vmem:[#allocation5 + $0x508] sm:$0xff]
    %v379 = vld [vmem:[#allocation5 + $0x510] sm:$0xff]
    %v380 = vld [vmem:[#allocation5 + $0x518] sm:$0xff]
    %v381 = vld [vmem:[#allocation5 + $0x520] sm:$0xf]
    %v382 = vld [vmem:[#allocation5 + $0x524] sm:$0xff]
    %v383 = vld [vmem:[#allocation5 + $0x52c] sm:$0xff]
    %v384 = vld [vmem:[#allocation5 + $0x534] sm:$0xff]
    %v385 = vld [vmem:[#allocation5 + $0x53c] sm:$0xf]
    %v386 = vld [vmem:[#allocation5 + $0x540] sm:$0xff]
    %v387 = vld [vmem:[#allocation5 + $0x548] sm:$0xff]
    %v388 = vld [vmem:[#allocation5 + $0x550] sm:$0xff]
    %v389 = vld [vmem:[#allocation5 + $0x558] sm:$0xf]
    %v390 = vld [vmem:[#allocation5 + $0x55c] sm:$0xff]
    %v391 = vld [vmem:[#allocation5 + $0x564] sm:$0xff]
    %v392 = vld [vmem:[#allocation5 + $0x56c] sm:$0xff]
    %v393 = vld [vmem:[#allocation5 + $0x574] sm:$0xf]
    %v394 = vld [vmem:[#allocation5 + $0x578] sm:$0xff]
    %v395 = vld [vmem:[#allocation5 + $0x580] sm:$0xff]
    %v396 = vld [vmem:[#allocation5 + $0x588] sm:$0xff]
    %v397 = vld [vmem:[#allocation5 + $0x590] sm:$0xf]
    %v398 = vld [vmem:[#allocation5 + $0x594] sm:$0xff]
    %v399 = vld [vmem:[#allocation5 + $0x59c] sm:$0xff]
    %v400 = vld [vmem:[#allocation5 + $0x5a4] sm:$0xff]
    %v401 = vld [vmem:[#allocation5 + $0x5ac] sm:$0xf]
    %v402 = vld [vmem:[#allocation5 + $0x5b0] sm:$0xff]
    %v403 = vld [vmem:[#allocation5 + $0x5b8] sm:$0xff]
    %v404 = vld [vmem:[#allocation5 + $0x5c0] sm:$0xff]
    %v405 = vld [vmem:[#allocation5 + $0x5c8] sm:$0xf]
    %v406 = vld [vmem:[#allocation5 + $0x5cc] sm:$0xff]
    %v407 = vld [vmem:[#allocation5 + $0x5d4] sm:$0xff]
    %v408 = vld [vmem:[#allocation5 + $0x5dc] sm:$0xff]
    %v409 = vld [vmem:[#allocation5 + $0x5e4] sm:$0xf]
    %v410 = vld [vmem:[#allocation5 + $0x5e8] sm:$0xff]
    %v411 = vld [vmem:[#allocation5 + $0x5f0] sm:$0xff]
    %v412 = vld [vmem:[#allocation5 + $0x5f8] sm:$0xff]
    %v413 = vld [vmem:[#allocation5 + $0x600] sm:$0xf]
    %v414 = vld [vmem:[#allocation5 + $0x604] sm:$0xff]
    %v415 = vld [vmem:[#allocation5 + $0x60c] sm:$0xff]
    %v416 = vld [vmem:[#allocation5 + $0x614] sm:$0xff]
    %v417 = vld [vmem:[#allocation5 + $0x61c] sm:$0xf]
    %v418 = vld [vmem:[#allocation5 + $0x620] sm:$0xff]
    %v419 = vld [vmem:[#allocation5 + $0x628] sm:$0xff]
    %v420 = vld [vmem:[#allocation5 + $0x630] sm:$0xff]
    %v421 = vld [vmem:[#allocation5 + $0x638] sm:$0xf]
    %v422 = vld [vmem:[#allocation5 + $0x63c] sm:$0xff]
    %v423 = vld [vmem:[#allocation5 + $0x644] sm:$0xff]
    %v424 = vld [vmem:[#allocation5 + $0x64c] sm:$0xff]
    %v425 = vld [vmem:[#allocation5 + $0x654] sm:$0xf]
    %v426 = vld [vmem:[#allocation5 + $0x658] sm:$0xff]
    %v427 = vld [vmem:[#allocation5 + $0x660] sm:$0xff]
    %v428 = vld [vmem:[#allocation5 + $0x668] sm:$0xff]
    %v429 = vld [vmem:[#allocation5 + $0x670] sm:$0xf]
    %v430 = vld [vmem:[#allocation5 + $0x674] sm:$0xff]
    %v431 = vld [vmem:[#allocation5 + $0x67c] sm:$0xff]
    %v432 = vld [vmem:[#allocation5 + $0x684] sm:$0xff]
    %v433 = vld [vmem:[#allocation5 + $0x68c] sm:$0xf]
    %v434 = vld [vmem:[#allocation5 + $0x690] sm:$0xff]
    %v435 = vld [vmem:[#allocation5 + $0x698] sm:$0xff]
    %v436 = vld [vmem:[#allocation5 + $0x6a0] sm:$0xff]
    %v437 = vld [vmem:[#allocation5 + $0x6a8] sm:$0xf]
    %v438 = vld [vmem:[#allocation5 + $0x6ac] sm:$0xff]
    %v439 = vld [vmem:[#allocation5 + $0x6b4] sm:$0xff]
    %v440 = vld [vmem:[#allocation5 + $0x6bc] sm:$0xff]
    %v441 = vld [vmem:[#allocation5 + $0x6c4] sm:$0xf]
    %v442 = vld [vmem:[#allocation5 + $0x6c8] sm:$0xff]
    %v443 = vld [vmem:[#allocation5 + $0x6d0] sm:$0xff]
    %v444 = vld [vmem:[#allocation5 + $0x6d8] sm:$0xff]
    %v445 = vld [vmem:[#allocation5 + $0x6e0] sm:$0xf]
    %v446 = vld [vmem:[#allocation5 + $0x6e4] sm:$0xff]
    %v447 = vld [vmem:[#allocation5 + $0x6ec] sm:$0xff]
    %v448 = vld [vmem:[#allocation5 + $0x6f4] sm:$0xff]
    %v449 = vld [vmem:[#allocation5 + $0x6fc] sm:$0xf]
    %v450 = vld [vmem:[#allocation5 + $0x700] sm:$0xff]
    %v451 = vld [vmem:[#allocation5 + $0x708] sm:$0xff]
    %v452 = vld [vmem:[#allocation5 + $0x710] sm:$0xff]
    %v453 = vld [vmem:[#allocation5 + $0x718] sm:$0xf]
    %v454 = vld [vmem:[#allocation5 + $0x71c] sm:$0xff]
    %v455 = vld [vmem:[#allocation5 + $0x724] sm:$0xff]
    %v456 = vld [vmem:[#allocation5 + $0x72c] sm:$0xff]
    %v457 = vld [vmem:[#allocation5 + $0x734] sm:$0xf]
    %v458 = vld [vmem:[#allocation5 + $0x738] sm:$0xff]
    %v459 = vld [vmem:[#allocation5 + $0x740] sm:$0xff]
    %v460 = vld [vmem:[#allocation5 + $0x748] sm:$0xff]
    %v461 = vld [vmem:[#allocation5 + $0x750] sm:$0xf]
    %v462 = vld [vmem:[#allocation5 + $0x754] sm:$0xff]
    %v463 = vld [vmem:[#allocation5 + $0x75c] sm:$0xff]
    %v464 = vld [vmem:[#allocation5 + $0x764] sm:$0xff]
    %v465 = vld [vmem:[#allocation5 + $0x76c] sm:$0xf]
    %v466 = vld [vmem:[#allocation5 + $0x770] sm:$0xff]
    %v467 = vld [vmem:[#allocation5 + $0x778] sm:$0xff]
    %v468 = vld [vmem:[#allocation5 + $0x780] sm:$0xff]
    %v469 = vld [vmem:[#allocation5 + $0x788] sm:$0xf]
    %v470 = vld [vmem:[#allocation5 + $0x78c] sm:$0xff]
    %v471 = vld [vmem:[#allocation5 + $0x794] sm:$0xff]
    %v472 = vld [vmem:[#allocation5 + $0x79c] sm:$0xff]
    %v473 = vld [vmem:[#allocation5 + $0x7a4] sm:$0xf]
    %v474 = vld [vmem:[#allocation5 + $0x7a8] sm:$0xff]
    %v475 = vld [vmem:[#allocation5 + $0x7b0] sm:$0xff]
    %v476 = vld [vmem:[#allocation5 + $0x7b8] sm:$0xff]
    %v477 = vld [vmem:[#allocation5 + $0x7c0] sm:$0xf]
    %v478 = vld [vmem:[#allocation5 + $0x7c4] sm:$0xff]
    %v479 = vld [vmem:[#allocation5 + $0x7cc] sm:$0xff]
    %v480 = vld [vmem:[#allocation5 + $0x7d4] sm:$0xff]
    %v481 = vld [vmem:[#allocation5 + $0x7dc] sm:$0xf]
    %v482 = vld [vmem:[#allocation5 + $0x7e0] sm:$0xff]
    %v483 = vld [vmem:[#allocation5 + $0x7e8] sm:$0xff]
    %v484 = vld [vmem:[#allocation5 + $0x7f0] sm:$0xff]
    %v485 = vld [vmem:[#allocation5 + $0x7f8] sm:$0xf]
    %v486 = vld [vmem:[#allocation5 + $0x7fc] sm:$0xff]
    %v487 = vld [vmem:[#allocation5 + $0x804] sm:$0xff]
    %v488 = vld [vmem:[#allocation5 + $0x80c] sm:$0xff]
    %v489 = vld [vmem:[#allocation5 + $0x814] sm:$0xf]
    %v490 = vld [vmem:[#allocation5 + $0x818] sm:$0xff]
    %v491 = vld [vmem:[#allocation5 + $0x820] sm:$0xff]
    %v492 = vld [vmem:[#allocation5 + $0x828] sm:$0xff]
    %v493 = vld [vmem:[#allocation5 + $0x830] sm:$0xf]
    %v494 = vld [vmem:[#allocation5 + $0x834] sm:$0xff]
    %v495 = vld [vmem:[#allocation5 + $0x83c] sm:$0xff]
    %v496 = vld [vmem:[#allocation5 + $0x844] sm:$0xff]
    %v497 = vld [vmem:[#allocation5 + $0x84c] sm:$0xf]
    %v498 = vld [vmem:[#allocation5 + $0x850] sm:$0xff]
    %v499 = vld [vmem:[#allocation5 + $0x858] sm:$0xff]
    %v500 = vld [vmem:[#allocation5 + $0x860] sm:$0xff]
    %v501 = vld [vmem:[#allocation5 + $0x868] sm:$0xf]
    %v502 = vld [vmem:[#allocation5 + $0x86c] sm:$0xff]
    %v503 = vld [vmem:[#allocation5 + $0x874] sm:$0xff]
    %v504 = vld [vmem:[#allocation5 + $0x87c] sm:$0xff]
    %v505 = vld [vmem:[#allocation5 + $0x884] sm:$0xf]
    %v506 = vld [vmem:[#allocation5 + $0x888] sm:$0xff]
    %v507 = vld [vmem:[#allocation5 + $0x890] sm:$0xff]
    %v508 = vld [vmem:[#allocation5 + $0x898] sm:$0xff]
    %v509 = vld [vmem:[#allocation5 + $0x8a0] sm:$0xf]
    %v510 = vld [vmem:[#allocation5 + $0x8a4] sm:$0xff]
    %v511 = vld [vmem:[#allocation5 + $0x8ac] sm:$0xff]
    %v512 = vld [vmem:[#allocation5 + $0x8b4] sm:$0xff]
    %v513 = vld [vmem:[#allocation5 + $0x8bc] sm:$0xf]
    %v514 = vld [vmem:[#allocation5 + $0x8c0] sm:$0xff]
    %v515 = vld [vmem:[#allocation5 + $0x8c8] sm:$0xff]
    %v516 = vld [vmem:[#allocation5 + $0x8d0] sm:$0xff]
    %v517 = vld [vmem:[#allocation5 + $0x8d8] sm:$0xf]
    %v518 = vld [vmem:[#allocation5 + $0x8dc] sm:$0xff]
    %v519 = vld [vmem:[#allocation5 + $0x8e4] sm:$0xff]
    %v520 = vld [vmem:[#allocation5 + $0x8ec] sm:$0xff]
    %v521 = vld [vmem:[#allocation5 + $0x8f4] sm:$0xf]
    %v522 = vld [vmem:[#allocation5 + $0x8f8] sm:$0xff]
    %v523 = vld [vmem:[#allocation5 + $0x900] sm:$0xff]
    %v524 = vld [vmem:[#allocation5 + $0x908] sm:$0xff]
    %v525 = vld [vmem:[#allocation5 + $0x910] sm:$0xf]
    %v526 = vld [vmem:[#allocation5 + $0x914] sm:$0xff]
    %v527 = vld [vmem:[#allocation5 + $0x91c] sm:$0xff]
    %v528 = vld [vmem:[#allocation5 + $0x924] sm:$0xff]
    %v529 = vld [vmem:[#allocation5 + $0x92c] sm:$0xf]
    %v530 = vld [vmem:[#allocation5 + $0x930] sm:$0xff]
    %v531 = vld [vmem:[#allocation5 + $0x938] sm:$0xff]
    %v532 = vld [vmem:[#allocation5 + $0x940] sm:$0xff]
    %v533 = vld [vmem:[#allocation5 + $0x948] sm:$0xf]
    %v534 = vld [vmem:[#allocation5 + $0x94c] sm:$0xff]
    %v535 = vld [vmem:[#allocation5 + $0x954] sm:$0xff]
    %v536 = vld [vmem:[#allocation5 + $0x95c] sm:$0xff]
    %v537 = vld [vmem:[#allocation5 + $0x964] sm:$0xf]
    %v538 = vld [vmem:[#allocation5 + $0x968] sm:$0xff]
    %v539 = vld [vmem:[#allocation5 + $0x970] sm:$0xff]
    %v540 = vld [vmem:[#allocation5 + $0x978] sm:$0xff]
    %v541 = vld [vmem:[#allocation5 + $0x980] sm:$0xf]
    %v542 = vld [vmem:[#allocation5 + $0x984] sm:$0xff]
    %v543 = vld [vmem:[#allocation5 + $0x98c] sm:$0xff]
    %v544 = vld [vmem:[#allocation5 + $0x994] sm:$0xff]
    %v545 = vld [vmem:[#allocation5 + $0x99c] sm:$0xf]
    %v546 = vld [vmem:[#allocation5 + $0x9a0] sm:$0xff]
    %v547 = vld [vmem:[#allocation5 + $0x9a8] sm:$0xff]
    %v548 = vld [vmem:[#allocation5 + $0x9b0] sm:$0xff]
    %v549 = vld [vmem:[#allocation5 + $0x9b8] sm:$0xf]
    %v550 = vld [vmem:[#allocation5 + $0x9bc] sm:$0xff]
    %v551 = vld [vmem:[#allocation5 + $0x9c4] sm:$0xff]
    %v552 = vld [vmem:[#allocation5 + $0x9cc] sm:$0xff]
    %v553 = vld [vmem:[#allocation5 + $0x9d4] sm:$0xf]
    %v554 = vld [vmem:[#allocation5 + $0x9d8] sm:$0xff]
    %v555 = vld [vmem:[#allocation5 + $0x9e0] sm:$0xff]
    %v556 = vld [vmem:[#allocation5 + $0x9e8] sm:$0xff]
    %v557 = vld [vmem:[#allocation5 + $0x9f0] sm:$0xf]
    %v558 = vld [vmem:[#allocation5 + $0x9f4] sm:$0xff]
    %v559 = vld [vmem:[#allocation5 + $0x9fc] sm:$0xff]
    %v560 = vld [vmem:[#allocation5 + $0xa04] sm:$0xff]
    %v561 = vld [vmem:[#allocation5 + $0xa0c] sm:$0xf]
    %v562 = vld [vmem:[#allocation5 + $0xa10] sm:$0xff]
    %v563 = vld [vmem:[#allocation5 + $0xa18] sm:$0xff]
    %v564 = vld [vmem:[#allocation5 + $0xa20] sm:$0xff]
    %v565 = vld [vmem:[#allocation5 + $0xa28] sm:$0xf]
    %v566 = vld [vmem:[#allocation5 + $0xa2c] sm:$0xff]
    %v567 = vld [vmem:[#allocation5 + $0xa34] sm:$0xff]
    %v568 = vld [vmem:[#allocation5 + $0xa3c] sm:$0xff]
    %v569 = vld [vmem:[#allocation5 + $0xa44] sm:$0xf]
    %v570 = vld [vmem:[#allocation5 + $0xa48] sm:$0xff]
    %v571 = vld [vmem:[#allocation5 + $0xa50] sm:$0xff]
    %v572 = vld [vmem:[#allocation5 + $0xa58] sm:$0xff]
    %v573 = vld [vmem:[#allocation5 + $0xa60] sm:$0xf]
    %v574 = vld [vmem:[#allocation5 + $0xa64] sm:$0xff]
    %v575 = vld [vmem:[#allocation5 + $0xa6c] sm:$0xff]
    %v576 = vld [vmem:[#allocation5 + $0xa74] sm:$0xff]
    %v577 = vld [vmem:[#allocation5 + $0xa7c] sm:$0xf]
    %v578 = vld [vmem:[#allocation5 + $0xa80] sm:$0xff]
    %v579 = vld [vmem:[#allocation5 + $0xa88] sm:$0xff]
    %v580 = vld [vmem:[#allocation5 + $0xa90] sm:$0xff]
    %v581 = vld [vmem:[#allocation5 + $0xa98] sm:$0xf]
    %v582 = vld [vmem:[#allocation5 + $0xa9c] sm:$0xff]
    %v583 = vld [vmem:[#allocation5 + $0xaa4] sm:$0xff]
    %v584 = vld [vmem:[#allocation5 + $0xaac] sm:$0xff]
    %v585 = vld [vmem:[#allocation5 + $0xab4] sm:$0xf]
    %v586 = vld [vmem:[#allocation7] sm:$0xff]
    %v588 = vlaneseq
    %v589 = vshrl.u32 %v588, 7
    %v590 = vsub.s32 0, %v589
    %v591 = vrot.slane %v586, %v590
    %v592 = vlaneseq
    %v593 = vshrl.u32 %v592, 7
    %v594 = vsub.s32 1, %v593
    %v595 = vrot.slane %v586, %v594
    %v596 = vlaneseq
    %v597 = vshrl.u32 %v596, 7
    %v598 = vsub.s32 2, %v597
    %v599 = vrot.slane %v586, %v598
    %v600 = vlaneseq
    %v601 = vshrl.u32 %v600, 7
    %v602 = vsub.s32 3, %v601
    %v603 = vrot.slane %v586, %v602
    %v604 = vlaneseq
    %v605 = vshrl.u32 %v604, 7
    %v606 = vsub.s32 4, %v605
    %v607 = vrot.slane %v586, %v606
    %v608 = vlaneseq
    %v609 = vshrl.u32 %v608, 7
    %v610 = vsub.s32 5, %v609
    %v611 = vrot.slane %v586, %v610
    %v612 = vlaneseq
    %v613 = vshrl.u32 %v612, 7
    %v614 = vsub.s32 6, %v613
    %v615 = vrot.slane %v586, %v614
    %v1015 = vunpack.c.l.b16 %v194
    %v1016 = vunpack.c.h.b16 %v194
    %v1017 = vunpack.c.l.b16 %v195
    %v1018 = vunpack.c.h.b16 %v195
    %v1019 = vunpack.c.l.b16 %v196
    %v1020 = vunpack.c.h.b16 %v196
    %v1021 = vunpack.c.l.b16 %v197
    %v1022 = vunpack.c.l.b16 %v198
    %v1023 = vunpack.c.h.b16 %v198
    %v1024 = vunpack.c.l.b16 %v199
    %v1025 = vunpack.c.h.b16 %v199
    %v1026 = vunpack.c.l.b16 %v200
    %v1027 = vunpack.c.h.b16 %v200
    %v1028 = vunpack.c.l.b16 %v201
    %v1029 = vunpack.c.l.b16 %v202
    %v1030 = vunpack.c.h.b16 %v202
    %v1031 = vunpack.c.l.b16 %v203
    %v1032 = vunpack.c.h.b16 %v203
    %v1033 = vunpack.c.l.b16 %v204
    %v1034 = vunpack.c.h.b16 %v204
    %v1035 = vunpack.c.l.b16 %v205
    %v1036 = vunpack.c.l.b16 %v206
    %v1037 = vunpack.c.h.b16 %v206
    %v1038 = vunpack.c.l.b16 %v207
    %v1039 = vunpack.c.h.b16 %v207
    %v1040 = vunpack.c.l.b16 %v208
    %v1041 = vunpack.c.h.b16 %v208
    %v1042 = vunpack.c.l.b16 %v209
    %v1043 = vunpack.c.l.b16 %v210
    %v1044 = vunpack.c.h.b16 %v210
    %v1045 = vunpack.c.l.b16 %v211
    %v1046 = vunpack.c.h.b16 %v211
    %v1047 = vunpack.c.l.b16 %v212
    %v1048 = vunpack.c.h.b16 %v212
    %v1049 = vunpack.c.l.b16 %v213
    %v1050 = vunpack.c.l.b16 %v214
    %v1051 = vunpack.c.h.b16 %v214
    %v1052 = vunpack.c.l.b16 %v215
    %v1053 = vunpack.c.h.b16 %v215
    %v1054 = vunpack.c.l.b16 %v216
    %v1055 = vunpack.c.h.b16 %v216
    %v1056 = vunpack.c.l.b16 %v217
    %v1057 = vunpack.c.l.b16 %v218
    %v1058 = vunpack.c.h.b16 %v218
    %v1059 = vunpack.c.l.b16 %v219
    %v1060 = vunpack.c.h.b16 %v219
    %v1061 = vunpack.c.l.b16 %v220
    %v1062 = vunpack.c.h.b16 %v220
    %v1063 = vunpack.c.l.b16 %v221
    %v1064 = vunpack.c.l.b16 %v222
    %v1065 = vunpack.c.h.b16 %v222
    %v1066 = vunpack.c.l.b16 %v223
    %v1067 = vunpack.c.h.b16 %v223
    %v1068 = vunpack.c.l.b16 %v224
    %v1069 = vunpack.c.h.b16 %v224
    %v1070 = vunpack.c.l.b16 %v225
    %v1071 = vunpack.c.l.b16 %v226
    %v1072 = vunpack.c.h.b16 %v226
    %v1073 = vunpack.c.l.b16 %v227
    %v1074 = vunpack.c.h.b16 %v227
    %v1075 = vunpack.c.l.b16 %v228
    %v1076 = vunpack.c.h.b16 %v228
    %v1077 = vunpack.c.l.b16 %v229
    %v1078 = vunpack.c.l.b16 %v230
    %v1079 = vunpack.c.h.b16 %v230
    %v1080 = vunpack.c.l.b16 %v231
    %v1081 = vunpack.c.h.b16 %v231
    %v1082 = vunpack.c.l.b16 %v232
    %v1083 = vunpack.c.h.b16 %v232
    %v1084 = vunpack.c.l.b16 %v233
    %v1085 = vunpack.c.l.b16 %v234
    %v1086 = vunpack.c.h.b16 %v234
    %v1087 = vunpack.c.l.b16 %v235
    %v1088 = vunpack.c.h.b16 %v235
    %v1089 = vunpack.c.l.b16 %v236
    %v1090 = vunpack.c.h.b16 %v236
    %v1091 = vunpack.c.l.b16 %v237
    %v1092 = vunpack.c.l.b16 %v238
    %v1093 = vunpack.c.h.b16 %v238
    %v1094 = vunpack.c.l.b16 %v239
    %v1095 = vunpack.c.h.b16 %v239
    %v1096 = vunpack.c.l.b16 %v240
    %v1097 = vunpack.c.h.b16 %v240
    %v1098 = vunpack.c.l.b16 %v241
    %v1099 = vunpack.c.l.b16 %v242
    %v1100 = vunpack.c.h.b16 %v242
    %v1101 = vunpack.c.l.b16 %v243
    %v1102 = vunpack.c.h.b16 %v243
    %v1103 = vunpack.c.l.b16 %v244
    %v1104 = vunpack.c.h.b16 %v244
    %v1105 = vunpack.c.l.b16 %v245
    %v1106 = vunpack.c.l.b16 %v246
    %v1107 = vunpack.c.h.b16 %v246
    %v1108 = vunpack.c.l.b16 %v247
    %v1109 = vunpack.c.h.b16 %v247
    %v1110 = vunpack.c.l.b16 %v248
    %v1111 = vunpack.c.h.b16 %v248
    %v1112 = vunpack.c.l.b16 %v249
    %v1113 = vunpack.c.l.b16 %v250
    %v1114 = vunpack.c.h.b16 %v250
    %v1115 = vunpack.c.l.b16 %v251
    %v1116 = vunpack.c.h.b16 %v251
    %v1117 = vunpack.c.l.b16 %v252
    %v1118 = vunpack.c.h.b16 %v252
    %v1119 = vunpack.c.l.b16 %v253
    %v1120 = vunpack.c.l.b16 %v254
    %v1121 = vunpack.c.h.b16 %v254
    %v1122 = vunpack.c.l.b16 %v255
    %v1123 = vunpack.c.h.b16 %v255
    %v1124 = vunpack.c.l.b16 %v256
    %v1125 = vunpack.c.h.b16 %v256
    %v1126 = vunpack.c.l.b16 %v257
    %v1127 = vunpack.c.l.b16 %v258
    %v1128 = vunpack.c.h.b16 %v258
    %v1129 = vunpack.c.l.b16 %v259
    %v1130 = vunpack.c.h.b16 %v259
    %v1131 = vunpack.c.l.b16 %v260
    %v1132 = vunpack.c.h.b16 %v260
    %v1133 = vunpack.c.l.b16 %v261
    %v1134 = vunpack.c.l.b16 %v262
    %v1135 = vunpack.c.h.b16 %v262
    %v1136 = vunpack.c.l.b16 %v263
    %v1137 = vunpack.c.h.b16 %v263
    %v1138 = vunpack.c.l.b16 %v264
    %v1139 = vunpack.c.h.b16 %v264
    %v1140 = vunpack.c.l.b16 %v265
    %v1141 = vunpack.c.l.b16 %v266
    %v1142 = vunpack.c.h.b16 %v266
    %v1143 = vunpack.c.l.b16 %v267
    %v1144 = vunpack.c.h.b16 %v267
    %v1145 = vunpack.c.l.b16 %v268
    %v1146 = vunpack.c.h.b16 %v268
    %v1147 = vunpack.c.l.b16 %v269
    %v1148 = vunpack.c.l.b16 %v270
    %v1149 = vunpack.c.h.b16 %v270
    %v1150 = vunpack.c.l.b16 %v271
    %v1151 = vunpack.c.h.b16 %v271
    %v1152 = vunpack.c.l.b16 %v272
    %v1153 = vunpack.c.h.b16 %v272
    %v1154 = vunpack.c.l.b16 %v273
    %v1155 = vunpack.c.l.b16 %v274
    %v1156 = vunpack.c.h.b16 %v274
    %v1157 = vunpack.c.l.b16 %v275
    %v1158 = vunpack.c.h.b16 %v275
    %v1159 = vunpack.c.l.b16 %v276
    %v1160 = vunpack.c.h.b16 %v276
    %v1161 = vunpack.c.l.b16 %v277
    %v1162 = vunpack.c.l.b16 %v278
    %v1163 = vunpack.c.h.b16 %v278
    %v1164 = vunpack.c.l.b16 %v279
    %v1165 = vunpack.c.h.b16 %v279
    %v1166 = vunpack.c.l.b16 %v280
    %v1167 = vunpack.c.h.b16 %v280
    %v1168 = vunpack.c.l.b16 %v281
    %v1169 = vunpack.c.l.b16 %v282
    %v1170 = vunpack.c.h.b16 %v282
    %v1171 = vunpack.c.l.b16 %v283
    %v1172 = vunpack.c.h.b16 %v283
    %v1173 = vunpack.c.l.b16 %v284
    %v1174 = vunpack.c.h.b16 %v284
    %v1175 = vunpack.c.l.b16 %v285
    %v1176 = vunpack.c.l.b16 %v286
    %v1177 = vunpack.c.h.b16 %v286
    %v1178 = vunpack.c.l.b16 %v287
    %v1179 = vunpack.c.h.b16 %v287
    %v1180 = vunpack.c.l.b16 %v288
    %v1181 = vunpack.c.h.b16 %v288
    %v1182 = vunpack.c.l.b16 %v289
    %v1183 = vunpack.c.l.b16 %v290
    %v1184 = vunpack.c.h.b16 %v290
    %v1185 = vunpack.c.l.b16 %v291
    %v1186 = vunpack.c.h.b16 %v291
    %v1187 = vunpack.c.l.b16 %v292
    %v1188 = vunpack.c.h.b16 %v292
    %v1189 = vunpack.c.l.b16 %v293
    %v1190 = vunpack.c.l.b16 %v294
    %v1191 = vunpack.c.h.b16 %v294
    %v1192 = vunpack.c.l.b16 %v295
    %v1193 = vunpack.c.h.b16 %v295
    %v1194 = vunpack.c.l.b16 %v296
    %v1195 = vunpack.c.h.b16 %v296
    %v1196 = vunpack.c.l.b16 %v297
    %v1197 = vunpack.c.l.b16 %v298
    %v1198 = vunpack.c.h.b16 %v298
    %v1199 = vunpack.c.l.b16 %v299
    %v1200 = vunpack.c.h.b16 %v299
    %v1201 = vunpack.c.l.b16 %v300
    %v1202 = vunpack.c.h.b16 %v300
    %v1203 = vunpack.c.l.b16 %v301
    %v1204 = vunpack.c.l.b16 %v302
    %v1205 = vunpack.c.h.b16 %v302
    %v1206 = vunpack.c.l.b16 %v303
    %v1207 = vunpack.c.h.b16 %v303
    %v1208 = vunpack.c.l.b16 %v304
    %v1209 = vunpack.c.h.b16 %v304
    %v1210 = vunpack.c.l.b16 %v305
    %v1211 = vunpack.c.l.b16 %v306
    %v1212 = vunpack.c.h.b16 %v306
    %v1213 = vunpack.c.l.b16 %v307
    %v1214 = vunpack.c.h.b16 %v307
    %v1215 = vunpack.c.l.b16 %v308
    %v1216 = vunpack.c.h.b16 %v308
    %v1217 = vunpack.c.l.b16 %v309
    %v1218 = vunpack.c.l.b16 %v310
    %v1219 = vunpack.c.h.b16 %v310
    %v1220 = vunpack.c.l.b16 %v311
    %v1221 = vunpack.c.h.b16 %v311
    %v1222 = vunpack.c.l.b16 %v312
    %v1223 = vunpack.c.h.b16 %v312
    %v1224 = vunpack.c.l.b16 %v313
    %v1225 = vunpack.c.l.b16 %v314
    %v1226 = vunpack.c.h.b16 %v314
    %v1227 = vunpack.c.l.b16 %v315
    %v1228 = vunpack.c.h.b16 %v315
    %v1229 = vunpack.c.l.b16 %v316
    %v1230 = vunpack.c.h.b16 %v316
    %v1231 = vunpack.c.l.b16 %v317
    %v1232 = vunpack.c.l.b16 %v318
    %v1233 = vunpack.c.h.b16 %v318
    %v1234 = vunpack.c.l.b16 %v319
    %v1235 = vunpack.c.h.b16 %v319
    %v1236 = vunpack.c.l.b16 %v320
    %v1237 = vunpack.c.h.b16 %v320
    %v1238 = vunpack.c.l.b16 %v321
    %v1239 = vunpack.c.l.b16 %v322
    %v1240 = vunpack.c.h.b16 %v322
    %v1241 = vunpack.c.l.b16 %v323
    %v1242 = vunpack.c.h.b16 %v323
    %v1243 = vunpack.c.l.b16 %v324
    %v1244 = vunpack.c.h.b16 %v324
    %v1245 = vunpack.c.l.b16 %v325
    %v1246 = vunpack.c.l.b16 %v326
    %v1247 = vunpack.c.h.b16 %v326
    %v1248 = vunpack.c.l.b16 %v327
    %v1249 = vunpack.c.h.b16 %v327
    %v1250 = vunpack.c.l.b16 %v328
    %v1251 = vunpack.c.h.b16 %v328
    %v1252 = vunpack.c.l.b16 %v329
    %v1253 = vunpack.c.l.b16 %v330
    %v1254 = vunpack.c.h.b16 %v330
    %v1255 = vunpack.c.l.b16 %v331
    %v1256 = vunpack.c.h.b16 %v331
    %v1257 = vunpack.c.l.b16 %v332
    %v1258 = vunpack.c.h.b16 %v332
    %v1259 = vunpack.c.l.b16 %v333
    %v1260 = vunpack.c.l.b16 %v334
    %v1261 = vunpack.c.h.b16 %v334
    %v1262 = vunpack.c.l.b16 %v335
    %v1263 = vunpack.c.h.b16 %v335
    %v1264 = vunpack.c.l.b16 %v336
    %v1265 = vunpack.c.h.b16 %v336
    %v1266 = vunpack.c.l.b16 %v337
    %v1267 = vunpack.c.l.b16 %v338
    %v1268 = vunpack.c.h.b16 %v338
    %v1269 = vunpack.c.l.b16 %v339
    %v1270 = vunpack.c.h.b16 %v339
    %v1271 = vunpack.c.l.b16 %v340
    %v1272 = vunpack.c.h.b16 %v340
    %v1273 = vunpack.c.l.b16 %v341
    %v1274 = vunpack.c.l.b16 %v342
    %v1275 = vunpack.c.h.b16 %v342
    %v1276 = vunpack.c.l.b16 %v343
    %v1277 = vunpack.c.h.b16 %v343
    %v1278 = vunpack.c.l.b16 %v344
    %v1279 = vunpack.c.h.b16 %v344
    %v1280 = vunpack.c.l.b16 %v345
    %v1281 = vunpack.c.l.b16 %v346
    %v1282 = vunpack.c.h.b16 %v346
    %v1283 = vunpack.c.l.b16 %v347
    %v1284 = vunpack.c.h.b16 %v347
    %v1285 = vunpack.c.l.b16 %v348
    %v1286 = vunpack.c.h.b16 %v348
    %v1287 = vunpack.c.l.b16 %v349
    %v1288 = vunpack.c.l.b16 %v350
    %v1289 = vunpack.c.h.b16 %v350
    %v1290 = vunpack.c.l.b16 %v351
    %v1291 = vunpack.c.h.b16 %v351
    %v1292 = vunpack.c.l.b16 %v352
    %v1293 = vunpack.c.h.b16 %v352
    %v1294 = vunpack.c.l.b16 %v353
    %v1295 = vunpack.c.l.b16 %v354
    %v1296 = vunpack.c.h.b16 %v354
    %v1297 = vunpack.c.l.b16 %v355
    %v1298 = vunpack.c.h.b16 %v355
    %v1299 = vunpack.c.l.b16 %v356
    %v1300 = vunpack.c.h.b16 %v356
    %v1301 = vunpack.c.l.b16 %v357
    %v1302 = vunpack.c.l.b16 %v358
    %v1303 = vunpack.c.h.b16 %v358
    %v1304 = vunpack.c.l.b16 %v359
    %v1305 = vunpack.c.h.b16 %v359
    %v1306 = vunpack.c.l.b16 %v360
    %v1307 = vunpack.c.h.b16 %v360
    %v1308 = vunpack.c.l.b16 %v361
    %v1309 = vunpack.c.l.b16 %v362
    %v1310 = vunpack.c.h.b16 %v362
    %v1311 = vunpack.c.l.b16 %v363
    %v1312 = vunpack.c.h.b16 %v363
    %v1313 = vunpack.c.l.b16 %v364
    %v1314 = vunpack.c.h.b16 %v364
    %v1315 = vunpack.c.l.b16 %v365
    %v1316 = vunpack.c.l.b16 %v366
    %v1317 = vunpack.c.h.b16 %v366
    %v1318 = vunpack.c.l.b16 %v367
    %v1319 = vunpack.c.h.b16 %v367
    %v1320 = vunpack.c.l.b16 %v368
    %v1321 = vunpack.c.h.b16 %v368
    %v1322 = vunpack.c.l.b16 %v369
    %v1323 = vunpack.c.l.b16 %v370
    %v1324 = vunpack.c.h.b16 %v370
    %v1325 = vunpack.c.l.b16 %v371
    %v1326 = vunpack.c.h.b16 %v371
    %v1327 = vunpack.c.l.b16 %v372
    %v1328 = vunpack.c.h.b16 %v372
    %v1329 = vunpack.c.l.b16 %v373
    %v1330 = vunpack.c.l.b16 %v374
    %v1331 = vunpack.c.h.b16 %v374
    %v1332 = vunpack.c.l.b16 %v375
    %v1333 = vunpack.c.h.b16 %v375
    %v1334 = vunpack.c.l.b16 %v376
    %v1335 = vunpack.c.h.b16 %v376
    %v1336 = vunpack.c.l.b16 %v377
    %v1337 = vunpack.c.l.b16 %v378
    %v1338 = vunpack.c.h.b16 %v378
    %v1339 = vunpack.c.l.b16 %v379
    %v1340 = vunpack.c.h.b16 %v379
    %v1341 = vunpack.c.l.b16 %v380
    %v1342 = vunpack.c.h.b16 %v380
    %v1343 = vunpack.c.l.b16 %v381
    %v1344 = vunpack.c.l.b16 %v382
    %v1345 = vunpack.c.h.b16 %v382
    %v1346 = vunpack.c.l.b16 %v383
    %v1347 = vunpack.c.h.b16 %v383
    %v1348 = vunpack.c.l.b16 %v384
    %v1349 = vunpack.c.h.b16 %v384
    %v1350 = vunpack.c.l.b16 %v385
    %v1351 = vunpack.c.l.b16 %v386
    %v1352 = vunpack.c.h.b16 %v386
    %v1353 = vunpack.c.l.b16 %v387
    %v1354 = vunpack.c.h.b16 %v387
    %v1355 = vunpack.c.l.b16 %v388
    %v1356 = vunpack.c.h.b16 %v388
    %v1357 = vunpack.c.l.b16 %v389
    %v1358 = vunpack.c.l.b16 %v390
    %v1359 = vunpack.c.h.b16 %v390
    %v1360 = vunpack.c.l.b16 %v391
    %v1361 = vunpack.c.h.b16 %v391
    %v1362 = vunpack.c.l.b16 %v392
    %v1363 = vunpack.c.h.b16 %v392
    %v1364 = vunpack.c.l.b16 %v393
    %v1365 = vunpack.c.l.b16 %v394
    %v1366 = vunpack.c.h.b16 %v394
    %v1367 = vunpack.c.l.b16 %v395
    %v1368 = vunpack.c.h.b16 %v395
    %v1369 = vunpack.c.l.b16 %v396
    %v1370 = vunpack.c.h.b16 %v396
    %v1371 = vunpack.c.l.b16 %v397
    %v1372 = vunpack.c.l.b16 %v398
    %v1373 = vunpack.c.h.b16 %v398
    %v1374 = vunpack.c.l.b16 %v399
    %v1375 = vunpack.c.h.b16 %v399
    %v1376 = vunpack.c.l.b16 %v400
    %v1377 = vunpack.c.h.b16 %v400
    %v1378 = vunpack.c.l.b16 %v401
    %v1379 = vunpack.c.l.b16 %v402
    %v1380 = vunpack.c.h.b16 %v402
    %v1381 = vunpack.c.l.b16 %v403
    %v1382 = vunpack.c.h.b16 %v403
    %v1383 = vunpack.c.l.b16 %v404
    %v1384 = vunpack.c.h.b16 %v404
    %v1385 = vunpack.c.l.b16 %v405
    %v1386 = vunpack.c.l.b16 %v406
    %v1387 = vunpack.c.h.b16 %v406
    %v1388 = vunpack.c.l.b16 %v407
    %v1389 = vunpack.c.h.b16 %v407
    %v1390 = vunpack.c.l.b16 %v408
    %v1391 = vunpack.c.h.b16 %v408
    %v1392 = vunpack.c.l.b16 %v409
    %v1393 = vunpack.c.l.b16 %v410
    %v1394 = vunpack.c.h.b16 %v410
    %v1395 = vunpack.c.l.b16 %v411
    %v1396 = vunpack.c.h.b16 %v411
    %v1397 = vunpack.c.l.b16 %v412
    %v1398 = vunpack.c.h.b16 %v412
    %v1399 = vunpack.c.l.b16 %v413
    %v1400 = vunpack.c.l.b16 %v414
    %v1401 = vunpack.c.h.b16 %v414
    %v1402 = vunpack.c.l.b16 %v415
    %v1403 = vunpack.c.h.b16 %v415
    %v1404 = vunpack.c.l.b16 %v416
    %v1405 = vunpack.c.h.b16 %v416
    %v1406 = vunpack.c.l.b16 %v417
    %v1407 = vunpack.c.l.b16 %v418
    %v1408 = vunpack.c.h.b16 %v418
    %v1409 = vunpack.c.l.b16 %v419
    %v1410 = vunpack.c.h.b16 %v419
    %v1411 = vunpack.c.l.b16 %v420
    %v1412 = vunpack.c.h.b16 %v420
    %v1413 = vunpack.c.l.b16 %v421
    %v1414 = vunpack.c.l.b16 %v422
    %v1415 = vunpack.c.h.b16 %v422
    %v1416 = vunpack.c.l.b16 %v423
    %v1417 = vunpack.c.h.b16 %v423
    %v1418 = vunpack.c.l.b16 %v424
    %v1419 = vunpack.c.h.b16 %v424
    %v1420 = vunpack.c.l.b16 %v425
    %v1421 = vunpack.c.l.b16 %v426
    %v1422 = vunpack.c.h.b16 %v426
    %v1423 = vunpack.c.l.b16 %v427
    %v1424 = vunpack.c.h.b16 %v427
    %v1425 = vunpack.c.l.b16 %v428
    %v1426 = vunpack.c.h.b16 %v428
    %v1427 = vunpack.c.l.b16 %v429
    %v1428 = vunpack.c.l.b16 %v430
    %v1429 = vunpack.c.h.b16 %v430
    %v1430 = vunpack.c.l.b16 %v431
    %v1431 = vunpack.c.h.b16 %v431
    %v1432 = vunpack.c.l.b16 %v432
    %v1433 = vunpack.c.h.b16 %v432
    %v1434 = vunpack.c.l.b16 %v433
    %v1435 = vunpack.c.l.b16 %v434
    %v1436 = vunpack.c.h.b16 %v434
    %v1437 = vunpack.c.l.b16 %v435
    %v1438 = vunpack.c.h.b16 %v435
    %v1439 = vunpack.c.l.b16 %v436
    %v1440 = vunpack.c.h.b16 %v436
    %v1441 = vunpack.c.l.b16 %v437
    %v1442 = vunpack.c.l.b16 %v438
    %v1443 = vunpack.c.h.b16 %v438
    %v1444 = vunpack.c.l.b16 %v439
    %v1445 = vunpack.c.h.b16 %v439
    %v1446 = vunpack.c.l.b16 %v440
    %v1447 = vunpack.c.h.b16 %v440
    %v1448 = vunpack.c.l.b16 %v441
    %v1449 = vunpack.c.l.b16 %v442
    %v1450 = vunpack.c.h.b16 %v442
    %v1451 = vunpack.c.l.b16 %v443
    %v1452 = vunpack.c.h.b16 %v443
    %v1453 = vunpack.c.l.b16 %v444
    %v1454 = vunpack.c.h.b16 %v444
    %v1455 = vunpack.c.l.b16 %v445
    %v1456 = vunpack.c.l.b16 %v446
    %v1457 = vunpack.c.h.b16 %v446
    %v1458 = vunpack.c.l.b16 %v447
    %v1459 = vunpack.c.h.b16 %v447
    %v1460 = vunpack.c.l.b16 %v448
    %v1461 = vunpack.c.h.b16 %v448
    %v1462 = vunpack.c.l.b16 %v449
    %v1463 = vunpack.c.l.b16 %v450
    %v1464 = vunpack.c.h.b16 %v450
    %v1465 = vunpack.c.l.b16 %v451
    %v1466 = vunpack.c.h.b16 %v451
    %v1467 = vunpack.c.l.b16 %v452
    %v1468 = vunpack.c.h.b16 %v452
    %v1469 = vunpack.c.l.b16 %v453
    %v1470 = vunpack.c.l.b16 %v454
    %v1471 = vunpack.c.h.b16 %v454
    %v1472 = vunpack.c.l.b16 %v455
    %v1473 = vunpack.c.h.b16 %v455
    %v1474 = vunpack.c.l.b16 %v456
    %v1475 = vunpack.c.h.b16 %v456
    %v1476 = vunpack.c.l.b16 %v457
    %v1477 = vunpack.c.l.b16 %v458
    %v1478 = vunpack.c.h.b16 %v458
    %v1479 = vunpack.c.l.b16 %v459
    %v1480 = vunpack.c.h.b16 %v459
    %v1481 = vunpack.c.l.b16 %v460
    %v1482 = vunpack.c.h.b16 %v460
    %v1483 = vunpack.c.l.b16 %v461
    %v1484 = vunpack.c.l.b16 %v462
    %v1485 = vunpack.c.h.b16 %v462
    %v1486 = vunpack.c.l.b16 %v463
    %v1487 = vunpack.c.h.b16 %v463
    %v1488 = vunpack.c.l.b16 %v464
    %v1489 = vunpack.c.h.b16 %v464
    %v1490 = vunpack.c.l.b16 %v465
    %v1491 = vunpack.c.l.b16 %v466
    %v1492 = vunpack.c.h.b16 %v466
    %v1493 = vunpack.c.l.b16 %v467
    %v1494 = vunpack.c.h.b16 %v467
    %v1495 = vunpack.c.l.b16 %v468
    %v1496 = vunpack.c.h.b16 %v468
    %v1497 = vunpack.c.l.b16 %v469
    %v1498 = vunpack.c.l.b16 %v470
    %v1499 = vunpack.c.h.b16 %v470
    %v1500 = vunpack.c.l.b16 %v471
    %v1501 = vunpack.c.h.b16 %v471
    %v1502 = vunpack.c.l.b16 %v472
    %v1503 = vunpack.c.h.b16 %v472
    %v1504 = vunpack.c.l.b16 %v473
    %v1505 = vunpack.c.l.b16 %v474
    %v1506 = vunpack.c.h.b16 %v474
    %v1507 = vunpack.c.l.b16 %v475
    %v1508 = vunpack.c.h.b16 %v475
    %v1509 = vunpack.c.l.b16 %v476
    %v1510 = vunpack.c.h.b16 %v476
    %v1511 = vunpack.c.l.b16 %v477
    %v1512 = vunpack.c.l.b16 %v478
    %v1513 = vunpack.c.h.b16 %v478
    %v1514 = vunpack.c.l.b16 %v479
    %v1515 = vunpack.c.h.b16 %v479
    %v1516 = vunpack.c.l.b16 %v480
    %v1517 = vunpack.c.h.b16 %v480
    %v1518 = vunpack.c.l.b16 %v481
    %v1519 = vunpack.c.l.b16 %v482
    %v1520 = vunpack.c.h.b16 %v482
    %v1521 = vunpack.c.l.b16 %v483
    %v1522 = vunpack.c.h.b16 %v483
    %v1523 = vunpack.c.l.b16 %v484
    %v1524 = vunpack.c.h.b16 %v484
    %v1525 = vunpack.c.l.b16 %v485
    %v1526 = vunpack.c.l.b16 %v486
    %v1527 = vunpack.c.h.b16 %v486
    %v1528 = vunpack.c.l.b16 %v487
    %v1529 = vunpack.c.h.b16 %v487
    %v1530 = vunpack.c.l.b16 %v488
    %v1531 = vunpack.c.h.b16 %v488
    %v1532 = vunpack.c.l.b16 %v489
    %v1533 = vunpack.c.l.b16 %v490
    %v1534 = vunpack.c.h.b16 %v490
    %v1535 = vunpack.c.l.b16 %v491
    %v1536 = vunpack.c.h.b16 %v491
    %v1537 = vunpack.c.l.b16 %v492
    %v1538 = vunpack.c.h.b16 %v492
    %v1539 = vunpack.c.l.b16 %v493
    %v1540 = vunpack.c.l.b16 %v494
    %v1541 = vunpack.c.h.b16 %v494
    %v1542 = vunpack.c.l.b16 %v495
    %v1543 = vunpack.c.h.b16 %v495
    %v1544 = vunpack.c.l.b16 %v496
    %v1545 = vunpack.c.h.b16 %v496
    %v1546 = vunpack.c.l.b16 %v497
    %v1547 = vunpack.c.l.b16 %v498
    %v1548 = vunpack.c.h.b16 %v498
    %v1549 = vunpack.c.l.b16 %v499
    %v1550 = vunpack.c.h.b16 %v499
    %v1551 = vunpack.c.l.b16 %v500
    %v1552 = vunpack.c.h.b16 %v500
    %v1553 = vunpack.c.l.b16 %v501
    %v1554 = vunpack.c.l.b16 %v502
    %v1555 = vunpack.c.h.b16 %v502
    %v1556 = vunpack.c.l.b16 %v503
    %v1557 = vunpack.c.h.b16 %v503
    %v1558 = vunpack.c.l.b16 %v504
    %v1559 = vunpack.c.h.b16 %v504
    %v1560 = vunpack.c.l.b16 %v505
    %v1561 = vunpack.c.l.b16 %v506
    %v1562 = vunpack.c.h.b16 %v506
    %v1563 = vunpack.c.l.b16 %v507
    %v1564 = vunpack.c.h.b16 %v507
    %v1565 = vunpack.c.l.b16 %v508
    %v1566 = vunpack.c.h.b16 %v508
    %v1567 = vunpack.c.l.b16 %v509
    %v1568 = vunpack.c.l.b16 %v510
    %v1569 = vunpack.c.h.b16 %v510
    %v1570 = vunpack.c.l.b16 %v511
    %v1571 = vunpack.c.h.b16 %v511
    %v1572 = vunpack.c.l.b16 %v512
    %v1573 = vunpack.c.h.b16 %v512
    %v1574 = vunpack.c.l.b16 %v513
    %v1575 = vunpack.c.l.b16 %v514
    %v1576 = vunpack.c.h.b16 %v514
    %v1577 = vunpack.c.l.b16 %v515
    %v1578 = vunpack.c.h.b16 %v515
    %v1579 = vunpack.c.l.b16 %v516
    %v1580 = vunpack.c.h.b16 %v516
    %v1581 = vunpack.c.l.b16 %v517
    %v1582 = vunpack.c.l.b16 %v518
    %v1583 = vunpack.c.h.b16 %v518
    %v1584 = vunpack.c.l.b16 %v519
    %v1585 = vunpack.c.h.b16 %v519
    %v1586 = vunpack.c.l.b16 %v520
    %v1587 = vunpack.c.h.b16 %v520
    %v1588 = vunpack.c.l.b16 %v521
    %v1589 = vunpack.c.l.b16 %v522
    %v1590 = vunpack.c.h.b16 %v522
    %v1591 = vunpack.c.l.b16 %v523
    %v1592 = vunpack.c.h.b16 %v523
    %v1593 = vunpack.c.l.b16 %v524
    %v1594 = vunpack.c.h.b16 %v524
    %v1595 = vunpack.c.l.b16 %v525
    %v1596 = vunpack.c.l.b16 %v526
    %v1597 = vunpack.c.h.b16 %v526
    %v1598 = vunpack.c.l.b16 %v527
    %v1599 = vunpack.c.h.b16 %v527
    %v1600 = vunpack.c.l.b16 %v528
    %v1601 = vunpack.c.h.b16 %v528
    %v1602 = vunpack.c.l.b16 %v529
    %v1603 = vunpack.c.l.b16 %v530
    %v1604 = vunpack.c.h.b16 %v530
    %v1605 = vunpack.c.l.b16 %v531
    %v1606 = vunpack.c.h.b16 %v531
    %v1607 = vunpack.c.l.b16 %v532
    %v1608 = vunpack.c.h.b16 %v532
    %v1609 = vunpack.c.l.b16 %v533
    %v1610 = vunpack.c.l.b16 %v534
    %v1611 = vunpack.c.h.b16 %v534
    %v1612 = vunpack.c.l.b16 %v535
    %v1613 = vunpack.c.h.b16 %v535
    %v1614 = vunpack.c.l.b16 %v536
    %v1615 = vunpack.c.h.b16 %v536
    %v1616 = vunpack.c.l.b16 %v537
    %v1617 = vunpack.c.l.b16 %v538
    %v1618 = vunpack.c.h.b16 %v538
    %v1619 = vunpack.c.l.b16 %v539
    %v1620 = vunpack.c.h.b16 %v539
    %v1621 = vunpack.c.l.b16 %v540
    %v1622 = vunpack.c.h.b16 %v540
    %v1623 = vunpack.c.l.b16 %v541
    %v1624 = vunpack.c.l.b16 %v542
    %v1625 = vunpack.c.h.b16 %v542
    %v1626 = vunpack.c.l.b16 %v543
    %v1627 = vunpack.c.h.b16 %v543
    %v1628 = vunpack.c.l.b16 %v544
    %v1629 = vunpack.c.h.b16 %v544
    %v1630 = vunpack.c.l.b16 %v545
    %v1631 = vunpack.c.l.b16 %v546
    %v1632 = vunpack.c.h.b16 %v546
    %v1633 = vunpack.c.l.b16 %v547
    %v1634 = vunpack.c.h.b16 %v547
    %v1635 = vunpack.c.l.b16 %v548
    %v1636 = vunpack.c.h.b16 %v548
    %v1637 = vunpack.c.l.b16 %v549
    %v1638 = vunpack.c.l.b16 %v550
    %v1639 = vunpack.c.h.b16 %v550
    %v1640 = vunpack.c.l.b16 %v551
    %v1641 = vunpack.c.h.b16 %v551
    %v1642 = vunpack.c.l.b16 %v552
    %v1643 = vunpack.c.h.b16 %v552
    %v1644 = vunpack.c.l.b16 %v553
    %v1645 = vunpack.c.l.b16 %v554
    %v1646 = vunpack.c.h.b16 %v554
    %v1647 = vunpack.c.l.b16 %v555
    %v1648 = vunpack.c.h.b16 %v555
    %v1649 = vunpack.c.l.b16 %v556
    %v1650 = vunpack.c.h.b16 %v556
    %v1651 = vunpack.c.l.b16 %v557
    %v1652 = vunpack.c.l.b16 %v558
    %v1653 = vunpack.c.h.b16 %v558
    %v1654 = vunpack.c.l.b16 %v559
    %v1655 = vunpack.c.h.b16 %v559
    %v1656 = vunpack.c.l.b16 %v560
    %v1657 = vunpack.c.h.b16 %v560
    %v1658 = vunpack.c.l.b16 %v561
    %v1659 = vunpack.c.l.b16 %v562
    %v1660 = vunpack.c.h.b16 %v562
    %v1661 = vunpack.c.l.b16 %v563
    %v1662 = vunpack.c.h.b16 %v563
    %v1663 = vunpack.c.l.b16 %v564
    %v1664 = vunpack.c.h.b16 %v564
    %v1665 = vunpack.c.l.b16 %v565
    %v1666 = vunpack.c.l.b16 %v566
    %v1667 = vunpack.c.h.b16 %v566
    %v1668 = vunpack.c.l.b16 %v567
    %v1669 = vunpack.c.h.b16 %v567
    %v1670 = vunpack.c.l.b16 %v568
    %v1671 = vunpack.c.h.b16 %v568
    %v1672 = vunpack.c.l.b16 %v569
    %v1673 = vunpack.c.l.b16 %v570
    %v1674 = vunpack.c.h.b16 %v570
    %v1675 = vunpack.c.l.b16 %v571
    %v1676 = vunpack.c.h.b16 %v571
    %v1677 = vunpack.c.l.b16 %v572
    %v1678 = vunpack.c.h.b16 %v572
    %v1679 = vunpack.c.l.b16 %v573
    %v1680 = vunpack.c.l.b16 %v574
    %v1681 = vunpack.c.h.b16 %v574
    %v1682 = vunpack.c.l.b16 %v575
    %v1683 = vunpack.c.h.b16 %v575
    %v1684 = vunpack.c.l.b16 %v576
    %v1685 = vunpack.c.h.b16 %v576
    %v1686 = vunpack.c.l.b16 %v577
    %v1687 = vunpack.c.l.b16 %v578
    %v1688 = vunpack.c.h.b16 %v578
    %v1689 = vunpack.c.l.b16 %v579
    %v1690 = vunpack.c.h.b16 %v579
    %v1691 = vunpack.c.l.b16 %v580
    %v1692 = vunpack.c.h.b16 %v580
    %v1693 = vunpack.c.l.b16 %v581
    %v1694 = vunpack.c.l.b16 %v582
    %v1695 = vunpack.c.h.b16 %v582
    %v1696 = vunpack.c.l.b16 %v583
    %v1697 = vunpack.c.h.b16 %v583
    %v1698 = vunpack.c.l.b16 %v584
    %v1699 = vunpack.c.h.b16 %v584
    %v1700 = vunpack.c.l.b16 %v585
    %v1701 = vpack.c.b16 %v1022, %v1015
    %v1702 = vpack.c.b16 %v1023, %v1016
    %v1703 = vpack.c.b16 %v1024, %v1017
    %v1704 = vpack.c.b16 %v1025, %v1018
    %v1705 = vpack.c.b16 %v1026, %v1019
    %v1706 = vpack.c.b16 %v1027, %v1020
    %v1707 = vpack.c.b16 %v1028, %v1021
    %v1708 = vpack.c.b16 %v1036, %v1029
    %v1709 = vpack.c.b16 %v1037, %v1030
    %v1710 = vpack.c.b16 %v1038, %v1031
    %v1711 = vpack.c.b16 %v1039, %v1032
    %v1712 = vpack.c.b16 %v1040, %v1033
    %v1713 = vpack.c.b16 %v1041, %v1034
    %v1714 = vpack.c.b16 %v1042, %v1035
    %v1715 = vpack.c.b16 %v1050, %v1043
    %v1716 = vpack.c.b16 %v1051, %v1044
    %v1717 = vpack.c.b16 %v1052, %v1045
    %v1718 = vpack.c.b16 %v1053, %v1046
    %v1719 = vpack.c.b16 %v1054, %v1047
    %v1720 = vpack.c.b16 %v1055, %v1048
    %v1721 = vpack.c.b16 %v1056, %v1049
    %v1722 = vpack.c.b16 %v1064, %v1057
    %v1723 = vpack.c.b16 %v1065, %v1058
    %v1724 = vpack.c.b16 %v1066, %v1059
    %v1725 = vpack.c.b16 %v1067, %v1060
    %v1726 = vpack.c.b16 %v1068, %v1061
    %v1727 = vpack.c.b16 %v1069, %v1062
    %v1728 = vpack.c.b16 %v1070, %v1063
    %v1729 = vpack.c.b16 %v1078, %v1071
    %v1730 = vpack.c.b16 %v1079, %v1072
    %v1731 = vpack.c.b16 %v1080, %v1073
    %v1732 = vpack.c.b16 %v1081, %v1074
    %v1733 = vpack.c.b16 %v1082, %v1075
    %v1734 = vpack.c.b16 %v1083, %v1076
    %v1735 = vpack.c.b16 %v1084, %v1077
    %v1736 = vpack.c.b16 %v1092, %v1085
    %v1737 = vpack.c.b16 %v1093, %v1086
    %v1738 = vpack.c.b16 %v1094, %v1087
    %v1739 = vpack.c.b16 %v1095, %v1088
    %v1740 = vpack.c.b16 %v1096, %v1089
    %v1741 = vpack.c.b16 %v1097, %v1090
    %v1742 = vpack.c.b16 %v1098, %v1091
    %v1743 = vpack.c.b16 %v1106, %v1099
    %v1744 = vpack.c.b16 %v1107, %v1100
    %v1745 = vpack.c.b16 %v1108, %v1101
    %v1746 = vpack.c.b16 %v1109, %v1102
    %v1747 = vpack.c.b16 %v1110, %v1103
    %v1748 = vpack.c.b16 %v1111, %v1104
    %v1749 = vpack.c.b16 %v1112, %v1105
    %v1750 = vpack.c.b16 %v1120, %v1113
    %v1751 = vpack.c.b16 %v1121, %v1114
    %v1752 = vpack.c.b16 %v1122, %v1115
    %v1753 = vpack.c.b16 %v1123, %v1116
    %v1754 = vpack.c.b16 %v1124, %v1117
    %v1755 = vpack.c.b16 %v1125, %v1118
    %v1756 = vpack.c.b16 %v1126, %v1119
    %v1757 = vpack.c.b16 %v1134, %v1127
    %v1758 = vpack.c.b16 %v1135, %v1128
    %v1759 = vpack.c.b16 %v1136, %v1129
    %v1760 = vpack.c.b16 %v1137, %v1130
    %v1761 = vpack.c.b16 %v1138, %v1131
    %v1762 = vpack.c.b16 %v1139, %v1132
    %v1763 = vpack.c.b16 %v1140, %v1133
    %v1764 = vpack.c.b16 %v1148, %v1141
    %v1765 = vpack.c.b16 %v1149, %v1142
    %v1766 = vpack.c.b16 %v1150, %v1143
    %v1767 = vpack.c.b16 %v1151, %v1144
    %v1768 = vpack.c.b16 %v1152, %v1145
    %v1769 = vpack.c.b16 %v1153, %v1146
    %v1770 = vpack.c.b16 %v1154, %v1147
    %v1771 = vpack.c.b16 %v1162, %v1155
    %v1772 = vpack.c.b16 %v1163, %v1156
    %v1773 = vpack.c.b16 %v1164, %v1157
    %v1774 = vpack.c.b16 %v1165, %v1158
    %v1775 = vpack.c.b16 %v1166, %v1159
    %v1776 = vpack.c.b16 %v1167, %v1160
    %v1777 = vpack.c.b16 %v1168, %v1161
    %v1778 = vpack.c.b16 %v1176, %v1169
    %v1779 = vpack.c.b16 %v1177, %v1170
    %v1780 = vpack.c.b16 %v1178, %v1171
    %v1781 = vpack.c.b16 %v1179, %v1172
    %v1782 = vpack.c.b16 %v1180, %v1173
    %v1783 = vpack.c.b16 %v1181, %v1174
    %v1784 = vpack.c.b16 %v1182, %v1175
    %v1785 = vpack.c.b16 %v1190, %v1183
    %v1786 = vpack.c.b16 %v1191, %v1184
    %v1787 = vpack.c.b16 %v1192, %v1185
    %v1788 = vpack.c.b16 %v1193, %v1186
    %v1789 = vpack.c.b16 %v1194, %v1187
    %v1790 = vpack.c.b16 %v1195, %v1188
    %v1791 = vpack.c.b16 %v1196, %v1189
    %v1792 = vpack.c.b16 %v1204, %v1197
    %v1793 = vpack.c.b16 %v1205, %v1198
    %v1794 = vpack.c.b16 %v1206, %v1199
    %v1795 = vpack.c.b16 %v1207, %v1200
    %v1796 = vpack.c.b16 %v1208, %v1201
    %v1797 = vpack.c.b16 %v1209, %v1202
    %v1798 = vpack.c.b16 %v1210, %v1203
    %v1799 = vpack.c.b16 %v1218, %v1211
    %v1800 = vpack.c.b16 %v1219, %v1212
    %v1801 = vpack.c.b16 %v1220, %v1213
    %v1802 = vpack.c.b16 %v1221, %v1214
    %v1803 = vpack.c.b16 %v1222, %v1215
    %v1804 = vpack.c.b16 %v1223, %v1216
    %v1805 = vpack.c.b16 %v1224, %v1217
    %v1806 = vpack.c.b16 %v1232, %v1225
    %v1807 = vpack.c.b16 %v1233, %v1226
    %v1808 = vpack.c.b16 %v1234, %v1227
    %v1809 = vpack.c.b16 %v1235, %v1228
    %v1810 = vpack.c.b16 %v1236, %v1229
    %v1811 = vpack.c.b16 %v1237, %v1230
    %v1812 = vpack.c.b16 %v1238, %v1231
    %v1813 = vpack.c.b16 %v1246, %v1239
    %v1814 = vpack.c.b16 %v1247, %v1240
    %v1815 = vpack.c.b16 %v1248, %v1241
    %v1816 = vpack.c.b16 %v1249, %v1242
    %v1817 = vpack.c.b16 %v1250, %v1243
    %v1818 = vpack.c.b16 %v1251, %v1244
    %v1819 = vpack.c.b16 %v1252, %v1245
    %v1820 = vpack.c.b16 %v1260, %v1253
    %v1821 = vpack.c.b16 %v1261, %v1254
    %v1822 = vpack.c.b16 %v1262, %v1255
    %v1823 = vpack.c.b16 %v1263, %v1256
    %v1824 = vpack.c.b16 %v1264, %v1257
    %v1825 = vpack.c.b16 %v1265, %v1258
    %v1826 = vpack.c.b16 %v1266, %v1259
    %v1827 = vpack.c.b16 %v1274, %v1267
    %v1828 = vpack.c.b16 %v1275, %v1268
    %v1829 = vpack.c.b16 %v1276, %v1269
    %v1830 = vpack.c.b16 %v1277, %v1270
    %v1831 = vpack.c.b16 %v1278, %v1271
    %v1832 = vpack.c.b16 %v1279, %v1272
    %v1833 = vpack.c.b16 %v1280, %v1273
    %v1834 = vpack.c.b16 %v1288, %v1281
    %v1835 = vpack.c.b16 %v1289, %v1282
    %v1836 = vpack.c.b16 %v1290, %v1283
    %v1837 = vpack.c.b16 %v1291, %v1284
    %v1838 = vpack.c.b16 %v1292, %v1285
    %v1839 = vpack.c.b16 %v1293, %v1286
    %v1840 = vpack.c.b16 %v1294, %v1287
    %v1841 = vpack.c.b16 %v1302, %v1295
    %v1842 = vpack.c.b16 %v1303, %v1296
    %v1843 = vpack.c.b16 %v1304, %v1297
    %v1844 = vpack.c.b16 %v1305, %v1298
    %v1845 = vpack.c.b16 %v1306, %v1299
    %v1846 = vpack.c.b16 %v1307, %v1300
    %v1847 = vpack.c.b16 %v1308, %v1301
    %v1848 = vpack.c.b16 %v1316, %v1309
    %v1849 = vpack.c.b16 %v1317, %v1310
    %v1850 = vpack.c.b16 %v1318, %v1311
    %v1851 = vpack.c.b16 %v1319, %v1312
    %v1852 = vpack.c.b16 %v1320, %v1313
    %v1853 = vpack.c.b16 %v1321, %v1314
    %v1854 = vpack.c.b16 %v1322, %v1315
    %v1855 = vpack.c.b16 %v1330, %v1323
    %v1856 = vpack.c.b16 %v1331, %v1324
    %v1857 = vpack.c.b16 %v1332, %v1325
    %v1858 = vpack.c.b16 %v1333, %v1326
    %v1859 = vpack.c.b16 %v1334, %v1327
    %v1860 = vpack.c.b16 %v1335, %v1328
    %v1861 = vpack.c.b16 %v1336, %v1329
    %v1862 = vpack.c.b16 %v1344, %v1337
    %v1863 = vpack.c.b16 %v1345, %v1338
    %v1864 = vpack.c.b16 %v1346, %v1339
    %v1865 = vpack.c.b16 %v1347, %v1340
    %v1866 = vpack.c.b16 %v1348, %v1341
    %v1867 = vpack.c.b16 %v1349, %v1342
    %v1868 = vpack.c.b16 %v1350, %v1343
    %v1869 = vpack.c.b16 %v1358, %v1351
    %v1870 = vpack.c.b16 %v1359, %v1352
    %v1871 = vpack.c.b16 %v1360, %v1353
    %v1872 = vpack.c.b16 %v1361, %v1354
    %v1873 = vpack.c.b16 %v1362, %v1355
    %v1874 = vpack.c.b16 %v1363, %v1356
    %v1875 = vpack.c.b16 %v1364, %v1357
    %v1876 = vpack.c.b16 %v1372, %v1365
    %v1877 = vpack.c.b16 %v1373, %v1366
    %v1878 = vpack.c.b16 %v1374, %v1367
    %v1879 = vpack.c.b16 %v1375, %v1368
    %v1880 = vpack.c.b16 %v1376, %v1369
    %v1881 = vpack.c.b16 %v1377, %v1370
    %v1882 = vpack.c.b16 %v1378, %v1371
    %v1883 = vpack.c.b16 %v1386, %v1379
    %v1884 = vpack.c.b16 %v1387, %v1380
    %v1885 = vpack.c.b16 %v1388, %v1381
    %v1886 = vpack.c.b16 %v1389, %v1382
    %v1887 = vpack.c.b16 %v1390, %v1383
    %v1888 = vpack.c.b16 %v1391, %v1384
    %v1889 = vpack.c.b16 %v1392, %v1385
    %v1890 = vpack.c.b16 %v1400, %v1393
    %v1891 = vpack.c.b16 %v1401, %v1394
    %v1892 = vpack.c.b16 %v1402, %v1395
    %v1893 = vpack.c.b16 %v1403, %v1396
    %v1894 = vpack.c.b16 %v1404, %v1397
    %v1895 = vpack.c.b16 %v1405, %v1398
    %v1896 = vpack.c.b16 %v1406, %v1399
    %v1897 = vpack.c.b16 %v1414, %v1407
    %v1898 = vpack.c.b16 %v1415, %v1408
    %v1899 = vpack.c.b16 %v1416, %v1409
    %v1900 = vpack.c.b16 %v1417, %v1410
    %v1901 = vpack.c.b16 %v1418, %v1411
    %v1902 = vpack.c.b16 %v1419, %v1412
    %v1903 = vpack.c.b16 %v1420, %v1413
    %v1904 = vpack.c.b16 %v1428, %v1421
    %v1905 = vpack.c.b16 %v1429, %v1422
    %v1906 = vpack.c.b16 %v1430, %v1423
    %v1907 = vpack.c.b16 %v1431, %v1424
    %v1908 = vpack.c.b16 %v1432, %v1425
    %v1909 = vpack.c.b16 %v1433, %v1426
    %v1910 = vpack.c.b16 %v1434, %v1427
    %v1911 = vpack.c.b16 %v1442, %v1435
    %v1912 = vpack.c.b16 %v1443, %v1436
    %v1913 = vpack.c.b16 %v1444, %v1437
    %v1914 = vpack.c.b16 %v1445, %v1438
    %v1915 = vpack.c.b16 %v1446, %v1439
    %v1916 = vpack.c.b16 %v1447, %v1440
    %v1917 = vpack.c.b16 %v1448, %v1441
    %v1918 = vpack.c.b16 %v1456, %v1449
    %v1919 = vpack.c.b16 %v1457, %v1450
    %v1920 = vpack.c.b16 %v1458, %v1451
    %v1921 = vpack.c.b16 %v1459, %v1452
    %v1922 = vpack.c.b16 %v1460, %v1453
    %v1923 = vpack.c.b16 %v1461, %v1454
    %v1924 = vpack.c.b16 %v1462, %v1455
    %v1925 = vpack.c.b16 %v1470, %v1463
    %v1926 = vpack.c.b16 %v1471, %v1464
    %v1927 = vpack.c.b16 %v1472, %v1465
    %v1928 = vpack.c.b16 %v1473, %v1466
    %v1929 = vpack.c.b16 %v1474, %v1467
    %v1930 = vpack.c.b16 %v1475, %v1468
    %v1931 = vpack.c.b16 %v1476, %v1469
    %v1932 = vpack.c.b16 %v1484, %v1477
    %v1933 = vpack.c.b16 %v1485, %v1478
    %v1934 = vpack.c.b16 %v1486, %v1479
    %v1935 = vpack.c.b16 %v1487, %v1480
    %v1936 = vpack.c.b16 %v1488, %v1481
    %v1937 = vpack.c.b16 %v1489, %v1482
    %v1938 = vpack.c.b16 %v1490, %v1483
    %v1939 = vpack.c.b16 %v1498, %v1491
    %v1940 = vpack.c.b16 %v1499, %v1492
    %v1941 = vpack.c.b16 %v1500, %v1493
    %v1942 = vpack.c.b16 %v1501, %v1494
    %v1943 = vpack.c.b16 %v1502, %v1495
    %v1944 = vpack.c.b16 %v1503, %v1496
    %v1945 = vpack.c.b16 %v1504, %v1497
    %v1946 = vpack.c.b16 %v1512, %v1505
    %v1947 = vpack.c.b16 %v1513, %v1506
    %v1948 = vpack.c.b16 %v1514, %v1507
    %v1949 = vpack.c.b16 %v1515, %v1508
    %v1950 = vpack.c.b16 %v1516, %v1509
    %v1951 = vpack.c.b16 %v1517, %v1510
    %v1952 = vpack.c.b16 %v1518, %v1511
    %v1953 = vpack.c.b16 %v1526, %v1519
    %v1954 = vpack.c.b16 %v1527, %v1520
    %v1955 = vpack.c.b16 %v1528, %v1521
    %v1956 = vpack.c.b16 %v1529, %v1522
    %v1957 = vpack.c.b16 %v1530, %v1523
    %v1958 = vpack.c.b16 %v1531, %v1524
    %v1959 = vpack.c.b16 %v1532, %v1525
    %v1960 = vpack.c.b16 %v1540, %v1533
    %v1961 = vpack.c.b16 %v1541, %v1534
    %v1962 = vpack.c.b16 %v1542, %v1535
    %v1963 = vpack.c.b16 %v1543, %v1536
    %v1964 = vpack.c.b16 %v1544, %v1537
    %v1965 = vpack.c.b16 %v1545, %v1538
    %v1966 = vpack.c.b16 %v1546, %v1539
    %v1967 = vpack.c.b16 %v1554, %v1547
    %v1968 = vpack.c.b16 %v1555, %v1548
    %v1969 = vpack.c.b16 %v1556, %v1549
    %v1970 = vpack.c.b16 %v1557, %v1550
    %v1971 = vpack.c.b16 %v1558, %v1551
    %v1972 = vpack.c.b16 %v1559, %v1552
    %v1973 = vpack.c.b16 %v1560, %v1553
    %v1974 = vpack.c.b16 %v1568, %v1561
    %v1975 = vpack.c.b16 %v1569, %v1562
    %v1976 = vpack.c.b16 %v1570, %v1563
    %v1977 = vpack.c.b16 %v1571, %v1564
    %v1978 = vpack.c.b16 %v1572, %v1565
    %v1979 = vpack.c.b16 %v1573, %v1566
    %v1980 = vpack.c.b16 %v1574, %v1567
    %v1981 = vpack.c.b16 %v1582, %v1575
    %v1982 = vpack.c.b16 %v1583, %v1576
    %v1983 = vpack.c.b16 %v1584, %v1577
    %v1984 = vpack.c.b16 %v1585, %v1578
    %v1985 = vpack.c.b16 %v1586, %v1579
    %v1986 = vpack.c.b16 %v1587, %v1580
    %v1987 = vpack.c.b16 %v1588, %v1581
    %v1988 = vpack.c.b16 %v1596, %v1589
    %v1989 = vpack.c.b16 %v1597, %v1590
    %v1990 = vpack.c.b16 %v1598, %v1591
    %v1991 = vpack.c.b16 %v1599, %v1592
    %v1992 = vpack.c.b16 %v1600, %v1593
    %v1993 = vpack.c.b16 %v1601, %v1594
    %v1994 = vpack.c.b16 %v1602, %v1595
    %v1995 = vpack.c.b16 %v1610, %v1603
    %v1996 = vpack.c.b16 %v1611, %v1604
    %v1997 = vpack.c.b16 %v1612, %v1605
    %v1998 = vpack.c.b16 %v1613, %v1606
    %v1999 = vpack.c.b16 %v1614, %v1607
    %v2000 = vpack.c.b16 %v1615, %v1608
    %v2001 = vpack.c.b16 %v1616, %v1609
    %v2002 = vpack.c.b16 %v1624, %v1617
    %v2003 = vpack.c.b16 %v1625, %v1618
    %v2004 = vpack.c.b16 %v1626, %v1619
    %v2005 = vpack.c.b16 %v1627, %v1620
    %v2006 = vpack.c.b16 %v1628, %v1621
    %v2007 = vpack.c.b16 %v1629, %v1622
    %v2008 = vpack.c.b16 %v1630, %v1623
    %v2009 = vpack.c.b16 %v1638, %v1631
    %v2010 = vpack.c.b16 %v1639, %v1632
    %v2011 = vpack.c.b16 %v1640, %v1633
    %v2012 = vpack.c.b16 %v1641, %v1634
    %v2013 = vpack.c.b16 %v1642, %v1635
    %v2014 = vpack.c.b16 %v1643, %v1636
    %v2015 = vpack.c.b16 %v1644, %v1637
    %v2016 = vpack.c.b16 %v1652, %v1645
    %v2017 = vpack.c.b16 %v1653, %v1646
    %v2018 = vpack.c.b16 %v1654, %v1647
    %v2019 = vpack.c.b16 %v1655, %v1648
    %v2020 = vpack.c.b16 %v1656, %v1649
    %v2021 = vpack.c.b16 %v1657, %v1650
    %v2022 = vpack.c.b16 %v1658, %v1651
    %v2023 = vpack.c.b16 %v1666, %v1659
    %v2024 = vpack.c.b16 %v1667, %v1660
    %v2025 = vpack.c.b16 %v1668, %v1661
    %v2026 = vpack.c.b16 %v1669, %v1662
    %v2027 = vpack.c.b16 %v1670, %v1663
    %v2028 = vpack.c.b16 %v1671, %v1664
    %v2029 = vpack.c.b16 %v1672, %v1665
    %v2030 = vpack.c.b16 %v1680, %v1673
    %v2031 = vpack.c.b16 %v1681, %v1674
    %v2032 = vpack.c.b16 %v1682, %v1675
    %v2033 = vpack.c.b16 %v1683, %v1676
    %v2034 = vpack.c.b16 %v1684, %v1677
    %v2035 = vpack.c.b16 %v1685, %v1678
    %v2036 = vpack.c.b16 %v1686, %v1679
    %v2037 = vpack.c.b16 %v1694, %v1687
    %v2038 = vpack.c.b16 %v1695, %v1688
    %v2039 = vpack.c.b16 %v1696, %v1689
    %v2040 = vpack.c.b16 %v1697, %v1690
    %v2041 = vpack.c.b16 %v1698, %v1691
    %v2042 = vpack.c.b16 %v1699, %v1692
    %v2043 = vpack.c.b16 %v1700, %v1693
    %vm2387 = vcmask 130048
    %v2389 = vsel %vm2387, %v193, 0
    %2391 = vmatprep.subr.bf16.mxu0 %v1702
    %2392 = vmatpush1.bf16.msra.mxu0 %v1701
    %2393 = vmatprep.subr.bf16.mxu0 %v1709
    %2394 = vmatpush1.bf16.msra.mxu0 %v1708
    %2395 = vmatprep.subr.bf16.mxu0 %v1716
    %2396 = vmatpush1.bf16.msra.mxu0 %v1715
    %2397 = vmatprep.subr.bf16.mxu0 %v1723
    %2398 = vmatpush1.bf16.msra.mxu0 %v1722
    %2399 = vmatprep.subr.bf16.mxu0 %v1730
    %2400 = vmatpush1.bf16.msra.mxu0 %v1729
    %2401 = vmatprep.subr.bf16.mxu0 %v1737
    %2402 = vmatpush1.bf16.msra.mxu0 %v1736
    %2403 = vmatprep.subr.bf16.mxu0 %v1744
    %2404 = vmatpush1.bf16.msra.mxu0 %v1743
    %2405 = vmatprep.subr.bf16.mxu0 %v1751
    %2406 = vmatpush1.bf16.msra.mxu0 %v1750
    %2407 = vmatprep.subr.bf16.mxu0 %v1758
    %2408 = vmatpush1.bf16.msra.mxu0 %v1757
    %2409 = vmatprep.subr.bf16.mxu0 %v1765
    %2410 = vmatpush1.bf16.msra.mxu0 %v1764
    %2411 = vmatprep.subr.bf16.mxu0 %v1772
    %2412 = vmatpush1.bf16.msra.mxu0 %v1771
    %2413 = vmatprep.subr.bf16.mxu0 %v1779
    %2414 = vmatpush1.bf16.msra.mxu0 %v1778
    %2415 = vmatprep.subr.bf16.mxu0 %v1786
    %2416 = vmatpush1.bf16.msra.mxu0 %v1785
    %2417 = vmatprep.subr.bf16.mxu0 %v1793
    %2418 = vmatpush1.bf16.msra.mxu0 %v1792
    %2419 = vmatprep.subr.bf16.mxu0 %v1800
    %2420 = vmatpush1.bf16.msra.mxu0 %v1799
    %2421 = vmatprep.subr.bf16.mxu0 %v1807
    %2422 = vmatpush1.bf16.msra.mxu0 %v1806
    %2423 = vmatprep.mubr.bf16.mxu0 %v188
    %2424 = vmatmul.mubr.bf16.gmra.mrb[0].mxu0 %v187
    %v2425 = vpop.f32.mrb[0].mxu0
    %v2426 = vadd.f32 %v591, %v2425
    %v2427 = vpop.f32.mrb[0].mxu0
    %v2428 = vadd.f32 %v595, %v2427
    %v2429 = vpop.f32.mrb[0].mxu0
    %v2430 = vpop.f32.mrb[0].mxu0
    %2431 = vdwg.mxu0
    %2432 = vmatprep.subr.bf16.mxu0 %v1814
    %2433 = vmatpush1.bf16.msra.mxu0 %v1813
    %2434 = vmatprep.subr.bf16.mxu0 %v1821
    %2435 = vmatpush1.bf16.msra.mxu0 %v1820
    %2436 = vmatprep.subr.bf16.mxu0 %v1828
    %2437 = vmatpush1.bf16.msra.mxu0 %v1827
    %2438 = vmatprep.subr.bf16.mxu0 %v1835
    %2439 = vmatpush1.bf16.msra.mxu0 %v1834
    %2440 = vmatprep.subr.bf16.mxu0 %v1842
    %2441 = vmatpush1.bf16.msra.mxu0 %v1841
    %2442 = vmatprep.subr.bf16.mxu0 %v1849
    %2443 = vmatpush1.bf16.msra.mxu0 %v1848
    %2444 = vmatprep.subr.bf16.mxu0 %v1856
    %2445 = vmatpush1.bf16.msra.mxu0 %v1855
    %2446 = vmatprep.subr.bf16.mxu0 %v1863
    %2447 = vmatpush1.bf16.msra.mxu0 %v1862
    %2448 = vmatprep.subr.bf16.mxu0 %v1870
    %2449 = vmatpush1.bf16.msra.mxu0 %v1869
    %2450 = vmatprep.subr.bf16.mxu0 %v1877
    %2451 = vmatpush1.bf16.msra.mxu0 %v1876
    %2452 = vmatprep.subr.bf16.mxu0 %v1884
    %2453 = vmatpush1.bf16.msra.mxu0 %v1883
    %2454 = vmatprep.subr.bf16.mxu0 %v1891
    %2455 = vmatpush1.bf16.msra.mxu0 %v1890
    %2456 = vmatprep.subr.bf16.mxu0 %v1898
    %2457 = vmatpush1.bf16.msra.mxu0 %v1897
    %2458 = vmatprep.subr.bf16.mxu0 %v1905
    %2459 = vmatpush1.bf16.msra.mxu0 %v1904
    %2460 = vmatprep.subr.bf16.mxu0 %v1912
    %2461 = vmatpush1.bf16.msra.mxu0 %v1911
    %2462 = vmatprep.subr.bf16.mxu0 %v1919
    %2463 = vmatpush1.bf16.msra.mxu0 %v1918
    %2464 = vmatprep.mubr.bf16.mxu0 %v190
    %2465 = vmatmul.mubr.bf16.gmra.mrb[0].mxu0 %v189
    %v2466 = vpop.f32.mrb[0].mxu0
    %v2467 = vadd.f32 %v2426, %v2466
    %v2468 = vpop.f32.mrb[0].mxu0
    %v2469 = vadd.f32 %v2428, %v2468
    %v2470 = vpop.f32.mrb[0].mxu0
    %v2471 = vpop.f32.mrb[0].mxu0
    %2472 = vdwg.mxu0
    %2473 = vmatprep.subr.bf16.mxu0 %v1926
    %2474 = vmatpush1.bf16.msra.mxu0 %v1925
    %2475 = vmatprep.subr.bf16.mxu0 %v1933
    %2476 = vmatpush1.bf16.msra.mxu0 %v1932
    %2477 = vmatprep.subr.bf16.mxu0 %v1940
    %2478 = vmatpush1.bf16.msra.mxu0 %v1939
    %2479 = vmatprep.subr.bf16.mxu0 %v1947
    %2480 = vmatpush1.bf16.msra.mxu0 %v1946
    %2481 = vmatprep.subr.bf16.mxu0 %v1954
    %2482 = vmatpush1.bf16.msra.mxu0 %v1953
    %2483 = vmatprep.subr.bf16.mxu0 %v1961
    %2484 = vmatpush1.bf16.msra.mxu0 %v1960
    %2485 = vmatprep.subr.bf16.mxu0 %v1968
    %2486 = vmatpush1.bf16.msra.mxu0 %v1967
    %2487 = vmatprep.subr.bf16.mxu0 %v1975
    %2488 = vmatpush1.bf16.msra.mxu0 %v1974
    %2489 = vmatprep.subr.bf16.mxu0 %v1982
    %2490 = vmatpush1.bf16.msra.mxu0 %v1981
    %2491 = vmatprep.subr.bf16.mxu0 %v1989
    %2492 = vmatpush1.bf16.msra.mxu0 %v1988
    %2493 = vmatprep.subr.bf16.mxu0 %v1996
    %2494 = vmatpush1.bf16.msra.mxu0 %v1995
    %2495 = vmatprep.subr.bf16.mxu0 %v2003
    %2496 = vmatpush1.bf16.msra.mxu0 %v2002
    %2497 = vmatprep.subr.bf16.mxu0 %v2010
    %2498 = vmatpush1.bf16.msra.mxu0 %v2009
    %2499 = vmatprep.subr.bf16.mxu0 %v2017
    %2500 = vmatpush1.bf16.msra.mxu0 %v2016
    %2501 = vmatprep.subr.bf16.mxu0 %v2024
    %2502 = vmatpush1.bf16.msra.mxu0 %v2023
    %2503 = vmatprep.subr.bf16.mxu0 %v2031
    %2504 = vmatpush1.bf16.msra.mxu0 %v2030
    %2505 = vmatprep.mubr.bf16.mxu0 %v192
    %2506 = vmatmul.mubr.bf16.gmra.mrb[0].mxu0 %v191
    %v2507 = vpop.f32.mrb[0].mxu0
    %v2508 = vadd.f32 %v2467, %v2507
    %v2509 = vpop.f32.mrb[0].mxu0
    %v2510 = vadd.f32 %v2469, %v2509
    %v2511 = vpop.f32.mrb[0].mxu0
    %v2512 = vpop.f32.mrb[0].mxu0
    %2513 = vdwg.mxu0
    %2514 = vmatprep.subr.bf16.mxu0 %v2038
    %2515 = vmatpush1.bf16.msra.mxu0 %v2037
    %2516 = vmatprep.subr.bf16.mxu0 0
    %2517 = vmatpush1.bf16.msra.mxu0 0
    %2518 = vmatprep.subr.bf16.mxu0 0
    %2519 = vmatpush1.bf16.msra.mxu0 0
    %2520 = vmatprep.subr.bf16.mxu0 0
    %2521 = vmatpush1.bf16.msra.mxu0 0
    %2522 = vmatprep.subr.bf16.mxu0 0
    %2523 = vmatpush1.bf16.msra.mxu0 0
    %2524 = vmatprep.subr.bf16.mxu0 0
    %2525 = vmatpush1.bf16.msra.mxu0 0
    %2526 = vmatprep.subr.bf16.mxu0 0
    %2527 = vmatpush1.bf16.msra.mxu0 0
    %2528 = vmatprep.subr.bf16.mxu0 0
    %2529 = vmatpush1.bf16.msra.mxu0 0
    %2530 = vmatprep.subr.bf16.mxu0 0
    %2531 = vmatpush1.bf16.msra.mxu0 0
    %2532 = vmatprep.subr.bf16.mxu0 0
    %2533 = vmatpush1.bf16.msra.mxu0 0
    %2534 = vmatprep.subr.bf16.mxu0 0
    %2535 = vmatpush1.bf16.msra.mxu0 0
    %2536 = vmatprep.subr.bf16.mxu0 0
    %2537 = vmatpush1.bf16.msra.mxu0 0
    %2538 = vmatprep.subr.bf16.mxu0 0
    %2539 = vmatpush1.bf16.msra.mxu0 0
    %2540 = vmatprep.subr.bf16.mxu0 0
    %2541 = vmatpush1.bf16.msra.mxu0 0
    %2542 = vmatprep.subr.bf16.mxu0 0
    %2543 = vmatpush1.bf16.msra.mxu0 0
    %2544 = vmatprep.subr.bf16.mxu0 0
    %2545 = vmatpush1.bf16.msra.mxu0 0
    %2546 = vmatprep.mubr.bf16.mxu0 0
    %2547 = vmatmul.mubr.bf16.gmra.mrb[0].mxu0 %v2389
    %v2548 = vpop.f32.mrb[0].mxu0
    %v2549 = vadd.f32 %v2508, %v2548
    %v2550 = vpop.f32.mrb[0].mxu0
    %v2551 = vadd.f32 %v2510, %v2550
    %v2552 = vpop.f32.mrb[0].mxu0
    %v2553 = vpop.f32.mrb[0].mxu0
    %2554 = vdwg.mxu0
    %2555 = vmatprep.subr.bf16.mxu0 %v1704
    %2556 = vmatpush1.bf16.msra.mxu0 %v1703
    %2557 = vmatprep.subr.bf16.mxu0 %v1711
    %2558 = vmatpush1.bf16.msra.mxu0 %v1710
    %2559 = vmatprep.subr.bf16.mxu0 %v1718
    %2560 = vmatpush1.bf16.msra.mxu0 %v1717
    %2561 = vmatprep.subr.bf16.mxu0 %v1725
    %2562 = vmatpush1.bf16.msra.mxu0 %v1724
    %2563 = vmatprep.subr.bf16.mxu0 %v1732
    %2564 = vmatpush1.bf16.msra.mxu0 %v1731
    %2565 = vmatprep.subr.bf16.mxu0 %v1739
    %2566 = vmatpush1.bf16.msra.mxu0 %v1738
    %2567 = vmatprep.subr.bf16.mxu0 %v1746
    %2568 = vmatpush1.bf16.msra.mxu0 %v1745
    %2569 = vmatprep.subr.bf16.mxu0 %v1753
    %2570 = vmatpush1.bf16.msra.mxu0 %v1752
    %2571 = vmatprep.subr.bf16.mxu0 %v1760
    %2572 = vmatpush1.bf16.msra.mxu0 %v1759
    %2573 = vmatprep.subr.bf16.mxu0 %v1767
    %2574 = vmatpush1.bf16.msra.mxu0 %v1766
    %2575 = vmatprep.subr.bf16.mxu0 %v1774
    %2576 = vmatpush1.bf16.msra.mxu0 %v1773
    %2577 = vmatprep.subr.bf16.mxu0 %v1781
    %2578 = vmatpush1.bf16.msra.mxu0 %v1780
    %2579 = vmatprep.subr.bf16.mxu0 %v1788
    %2580 = vmatpush1.bf16.msra.mxu0 %v1787
    %2581 = vmatprep.subr.bf16.mxu0 %v1795
    %2582 = vmatpush1.bf16.msra.mxu0 %v1794
    %2583 = vmatprep.subr.bf16.mxu0 %v1802
    %2584 = vmatpush1.bf16.msra.mxu0 %v1801
    %2585 = vmatprep.subr.bf16.mxu0 %v1809
    %2586 = vmatpush1.bf16.msra.mxu0 %v1808
    %2587 = vmatprep.mubr.bf16.mxu0 %v188
    %2588 = vmatmul.mubr.bf16.gmra.mrb[0].mxu0 %v187
    %v2589 = vpop.f32.mrb[0].mxu0
    %v2590 = vadd.f32 %v599, %v2589
    %v2591 = vpop.f32.mrb[0].mxu0
    %v2592 = vadd.f32 %v603, %v2591
    %v2593 = vpop.f32.mrb[0].mxu0
    %v2594 = vpop.f32.mrb[0].mxu0
    %2595 = vdwg.mxu0
    %2596 = vmatprep.subr.bf16.mxu0 %v1816
    %2597 = vmatpush1.bf16.msra.mxu0 %v1815
    %2598 = vmatprep.subr.bf16.mxu0 %v1823
    %2599 = vmatpush1.bf16.msra.mxu0 %v1822
    %2600 = vmatprep.subr.bf16.mxu0 %v1830
    %2601 = vmatpush1.bf16.msra.mxu0 %v1829
    %2602 = vmatprep.subr.bf16.mxu0 %v1837
    %2603 = vmatpush1.bf16.msra.mxu0 %v1836
    %2604 = vmatprep.subr.bf16.mxu0 %v1844
    %2605 = vmatpush1.bf16.msra.mxu0 %v1843
    %2606 = vmatprep.subr.bf16.mxu0 %v1851
    %2607 = vmatpush1.bf16.msra.mxu0 %v1850
    %2608 = vmatprep.subr.bf16.mxu0 %v1858
    %2609 = vmatpush1.bf16.msra.mxu0 %v1857
    %2610 = vmatprep.subr.bf16.mxu0 %v1865
    %2611 = vmatpush1.bf16.msra.mxu0 %v1864
    %2612 = vmatprep.subr.bf16.mxu0 %v1872
    %2613 = vmatpush1.bf16.msra.mxu0 %v1871
    %2614 = vmatprep.subr.bf16.mxu0 %v1879
    %2615 = vmatpush1.bf16.msra.mxu0 %v1878
    %2616 = vmatprep.subr.bf16.mxu0 %v1886
    %2617 = vmatpush1.bf16.msra.mxu0 %v1885
    %2618 = vmatprep.subr.bf16.mxu0 %v1893
    %2619 = vmatpush1.bf16.msra.mxu0 %v1892
    %2620 = vmatprep.subr.bf16.mxu0 %v1900
    %2621 = vmatpush1.bf16.msra.mxu0 %v1899
    %2622 = vmatprep.subr.bf16.mxu0 %v1907
    %2623 = vmatpush1.bf16.msra.mxu0 %v1906
    %2624 = vmatprep.subr.bf16.mxu0 %v1914
    %2625 = vmatpush1.bf16.msra.mxu0 %v1913
    %2626 = vmatprep.subr.bf16.mxu0 %v1921
    %2627 = vmatpush1.bf16.msra.mxu0 %v1920
    %2628 = vmatprep.mubr.bf16.mxu0 %v190
    %2629 = vmatmul.mubr.bf16.gmra.mrb[0].mxu0 %v189
    %v2630 = vpop.f32.mrb[0].mxu0
    %v2631 = vadd.f32 %v2590, %v2630
    %v2632 = vpop.f32.mrb[0].mxu0
    %v2633 = vadd.f32 %v2592, %v2632
    %v2634 = vpop.f32.mrb[0].mxu0
    %v2635 = vpop.f32.mrb[0].mxu0
    %2636 = vdwg.mxu0
    %2637 = vmatprep.subr.bf16.mxu0 %v1928
    %2638 = vmatpush1.bf16.msra.mxu0 %v1927
    %2639 = vmatprep.subr.bf16.mxu0 %v1935
    %2640 = vmatpush1.bf16.msra.mxu0 %v1934
    %2641 = vmatprep.subr.bf16.mxu0 %v1942
    %2642 = vmatpush1.bf16.msra.mxu0 %v1941
    %2643 = vmatprep.subr.bf16.mxu0 %v1949
    %2644 = vmatpush1.bf16.msra.mxu0 %v1948
    %2645 = vmatprep.subr.bf16.mxu0 %v1956
    %2646 = vmatpush1.bf16.msra.mxu0 %v1955
    %2647 = vmatprep.subr.bf16.mxu0 %v1963
    %2648 = vmatpush1.bf16.msra.mxu0 %v1962
    %2649 = vmatprep.subr.bf16.mxu0 %v1970
    %2650 = vmatpush1.bf16.msra.mxu0 %v1969
    %2651 = vmatprep.subr.bf16.mxu0 %v1977
    %2652 = vmatpush1.bf16.msra.mxu0 %v1976
    %2653 = vmatprep.subr.bf16.mxu0 %v1984
    %2654 = vmatpush1.bf16.msra.mxu0 %v1983
    %2655 = vmatprep.subr.bf16.mxu0 %v1991
    %2656 = vmatpush1.bf16.msra.mxu0 %v1990
    %2657 = vmatprep.subr.bf16.mxu0 %v1998
    %2658 = vmatpush1.bf16.msra.mxu0 %v1997
    %2659 = vmatprep.subr.bf16.mxu0 %v2005
    %2660 = vmatpush1.bf16.msra.mxu0 %v2004
    %2661 = vmatprep.subr.bf16.mxu0 %v2012
    %2662 = vmatpush1.bf16.msra.mxu0 %v2011
    %2663 = vmatprep.subr.bf16.mxu0 %v2019
    %2664 = vmatpush1.bf16.msra.mxu0 %v2018
    %2665 = vmatprep.subr.bf16.mxu0 %v2026
    %2666 = vmatpush1.bf16.msra.mxu0 %v2025
    %2667 = vmatprep.subr.bf16.mxu0 %v2033
    %2668 = vmatpush1.bf16.msra.mxu0 %v2032
    %2669 = vmatprep.mubr.bf16.mxu0 %v192
    %2670 = vmatmul.mubr.bf16.gmra.mrb[0].mxu0 %v191
    %v2671 = vpop.f32.mrb[0].mxu0
    %v2672 = vadd.f32 %v2631, %v2671
    %v2673 = vpop.f32.mrb[0].mxu0
    %v2674 = vadd.f32 %v2633, %v2673
    %v2675 = vpop.f32.mrb[0].mxu0
    %v2676 = vpop.f32.mrb[0].mxu0
    %2677 = vdwg.mxu0
    %2678 = vmatprep.subr.bf16.mxu0 %v2040
    %2679 = vmatpush1.bf16.msra.mxu0 %v2039
    %2680 = vmatprep.subr.bf16.mxu0 0
    %2681 = vmatpush1.bf16.msra.mxu0 0
    %2682 = vmatprep.subr.bf16.mxu0 0
    %2683 = vmatpush1.bf16.msra.mxu0 0
    %2684 = vmatprep.subr.bf16.mxu0 0
    %2685 = vmatpush1.bf16.msra.mxu0 0
    %2686 = vmatprep.subr.bf16.mxu0 0
    %2687 = vmatpush1.bf16.msra.mxu0 0
    %2688 = vmatprep.subr.bf16.mxu0 0
    %2689 = vmatpush1.bf16.msra.mxu0 0
    %2690 = vmatprep.subr.bf16.mxu0 0
    %2691 = vmatpush1.bf16.msra.mxu0 0
    %2692 = vmatprep.subr.bf16.mxu0 0
    %2693 = vmatpush1.bf16.msra.mxu0 0
    %2694 = vmatprep.subr.bf16.mxu0 0
    %2695 = vmatpush1.bf16.msra.mxu0 0
    %2696 = vmatprep.subr.bf16.mxu0 0
    %2697 = vmatpush1.bf16.msra.mxu0 0
    %2698 = vmatprep.subr.bf16.mxu0 0
    %2699 = vmatpush1.bf16.msra.mxu0 0
    %2700 = vmatprep.subr.bf16.mxu0 0
    %2701 = vmatpush1.bf16.msra.mxu0 0
    %2702 = vmatprep.subr.bf16.mxu0 0
    %2703 = vmatpush1.bf16.msra.mxu0 0
    %2704 = vmatprep.subr.bf16.mxu0 0
    %2705 = vmatpush1.bf16.msra.mxu0 0
    %2706 = vmatprep.subr.bf16.mxu0 0
    %2707 = vmatpush1.bf16.msra.mxu0 0
    %2708 = vmatprep.subr.bf16.mxu0 0
    %2709 = vmatpush1.bf16.msra.mxu0 0
    %2710 = vmatprep.mubr.bf16.mxu0 0
    %2711 = vmatmul.mubr.bf16.gmra.mrb[0].mxu0 %v2389
    %v2712 = vpop.f32.mrb[0].mxu0
    %v2713 = vadd.f32 %v2672, %v2712
    %v2714 = vpop.f32.mrb[0].mxu0
    %v2715 = vadd.f32 %v2674, %v2714
    %v2716 = vpop.f32.mrb[0].mxu0
    %v2717 = vpop.f32.mrb[0].mxu0
    %2718 = vdwg.mxu0
    %2719 = vmatprep.subr.bf16.mxu0 %v1706
    %2720 = vmatpush1.bf16.msra.mxu0 %v1705
    %2721 = vmatprep.subr.bf16.mxu0 %v1713
    %2722 = vmatpush1.bf16.msra.mxu0 %v1712
    %2723 = vmatprep.subr.bf16.mxu0 %v1720
    %2724 = vmatpush1.bf16.msra.mxu0 %v1719
    %2725 = vmatprep.subr.bf16.mxu0 %v1727
    %2726 = vmatpush1.bf16.msra.mxu0 %v1726
    %2727 = vmatprep.subr.bf16.mxu0 %v1734
    %2728 = vmatpush1.bf16.msra.mxu0 %v1733
    %2729 = vmatprep.subr.bf16.mxu0 %v1741
    %2730 = vmatpush1.bf16.msra.mxu0 %v1740
    %2731 = vmatprep.subr.bf16.mxu0 %v1748
    %2732 = vmatpush1.bf16.msra.mxu0 %v1747
    %2733 = vmatprep.subr.bf16.mxu0 %v1755
    %2734 = vmatpush1.bf16.msra.mxu0 %v1754
    %2735 = vmatprep.subr.bf16.mxu0 %v1762
    %2736 = vmatpush1.bf16.msra.mxu0 %v1761
    %2737 = vmatprep.subr.bf16.mxu0 %v1769
    %2738 = vmatpush1.bf16.msra.mxu0 %v1768
    %2739 = vmatprep.subr.bf16.mxu0 %v1776
    %2740 = vmatpush1.bf16.msra.mxu0 %v1775
    %2741 = vmatprep.subr.bf16.mxu0 %v1783
    %2742 = vmatpush1.bf16.msra.mxu0 %v1782
    %2743 = vmatprep.subr.bf16.mxu0 %v1790
    %2744 = vmatpush1.bf16.msra.mxu0 %v1789
    %2745 = vmatprep.subr.bf16.mxu0 %v1797
    %2746 = vmatpush1.bf16.msra.mxu0 %v1796
    %2747 = vmatprep.subr.bf16.mxu0 %v1804
    %2748 = vmatpush1.bf16.msra.mxu0 %v1803
    %2749 = vmatprep.subr.bf16.mxu0 %v1811
    %2750 = vmatpush1.bf16.msra.mxu0 %v1810
    %2751 = vmatprep.mubr.bf16.mxu0 %v188
    %2752 = vmatmul.mubr.bf16.gmra.mrb[0].mxu0 %v187
    %v2753 = vpop.f32.mrb[0].mxu0
    %v2754 = vadd.f32 %v607, %v2753
    %v2755 = vpop.f32.mrb[0].mxu0
    %v2756 = vadd.f32 %v611, %v2755
    %v2757 = vpop.f32.mrb[0].mxu0
    %v2758 = vpop.f32.mrb[0].mxu0
    %2759 = vdwg.mxu0
    %2760 = vmatprep.subr.bf16.mxu0 %v1818
    %2761 = vmatpush1.bf16.msra.mxu0 %v1817
    %2762 = vmatprep.subr.bf16.mxu0 %v1825
    %2763 = vmatpush1.bf16.msra.mxu0 %v1824
    %2764 = vmatprep.subr.bf16.mxu0 %v1832
    %2765 = vmatpush1.bf16.msra.mxu0 %v1831
    %2766 = vmatprep.subr.bf16.mxu0 %v1839
    %2767 = vmatpush1.bf16.msra.mxu0 %v1838
    %2768 = vmatprep.subr.bf16.mxu0 %v1846
    %2769 = vmatpush1.bf16.msra.mxu0 %v1845
    %2770 = vmatprep.subr.bf16.mxu0 %v1853
    %2771 = vmatpush1.bf16.msra.mxu0 %v1852
    %2772 = vmatprep.subr.bf16.mxu0 %v1860
    %2773 = vmatpush1.bf16.msra.mxu0 %v1859
    %2774 = vmatprep.subr.bf16.mxu0 %v1867
    %2775 = vmatpush1.bf16.msra.mxu0 %v1866
    %2776 = vmatprep.subr.bf16.mxu0 %v1874
    %2777 = vmatpush1.bf16.msra.mxu0 %v1873
    %2778 = vmatprep.subr.bf16.mxu0 %v1881
    %2779 = vmatpush1.bf16.msra.mxu0 %v1880
    %2780 = vmatprep.subr.bf16.mxu0 %v1888
    %2781 = vmatpush1.bf16.msra.mxu0 %v1887
    %2782 = vmatprep.subr.bf16.mxu0 %v1895
    %2783 = vmatpush1.bf16.msra.mxu0 %v1894
    %2784 = vmatprep.subr.bf16.mxu0 %v1902
    %2785 = vmatpush1.bf16.msra.mxu0 %v1901
    %2786 = vmatprep.subr.bf16.mxu0 %v1909
    %2787 = vmatpush1.bf16.msra.mxu0 %v1908
    %2788 = vmatprep.subr.bf16.mxu0 %v1916
    %2789 = vmatpush1.bf16.msra.mxu0 %v1915
    %2790 = vmatprep.subr.bf16.mxu0 %v1923
    %2791 = vmatpush1.bf16.msra.mxu0 %v1922
    %2792 = vmatprep.mubr.bf16.mxu0 %v190
    %2793 = vmatmul.mubr.bf16.gmra.mrb[0].mxu0 %v189
    %v2794 = vpop.f32.mrb[0].mxu0
    %v2795 = vadd.f32 %v2754, %v2794
    %v2796 = vpop.f32.mrb[0].mxu0
    %v2797 = vadd.f32 %v2756, %v2796
    %v2798 = vpop.f32.mrb[0].mxu0
    %v2799 = vpop.f32.mrb[0].mxu0
    %2800 = vdwg.mxu0
    %2801 = vmatprep.subr.bf16.mxu0 %v1930
    %2802 = vmatpush1.bf16.msra.mxu0 %v1929
    %2803 = vmatprep.subr.bf16.mxu0 %v1937
    %2804 = vmatpush1.bf16.msra.mxu0 %v1936
    %2805 = vmatprep.subr.bf16.mxu0 %v1944
    %2806 = vmatpush1.bf16.msra.mxu0 %v1943
    %2807 = vmatprep.subr.bf16.mxu0 %v1951
    %2808 = vmatpush1.bf16.msra.mxu0 %v1950
    %2809 = vmatprep.subr.bf16.mxu0 %v1958
    %2810 = vmatpush1.bf16.msra.mxu0 %v1957
    %2811 = vmatprep.subr.bf16.mxu0 %v1965
    %2812 = vmatpush1.bf16.msra.mxu0 %v1964
    %2813 = vmatprep.subr.bf16.mxu0 %v1972
    %2814 = vmatpush1.bf16.msra.mxu0 %v1971
    %2815 = vmatprep.subr.bf16.mxu0 %v1979
    %2816 = vmatpush1.bf16.msra.mxu0 %v1978
    %2817 = vmatprep.subr.bf16.mxu0 %v1986
    %2818 = vmatpush1.bf16.msra.mxu0 %v1985
    %2819 = vmatprep.subr.bf16.mxu0 %v1993
    %2820 = vmatpush1.bf16.msra.mxu0 %v1992
    %2821 = vmatprep.subr.bf16.mxu0 %v2000
    %2822 = vmatpush1.bf16.msra.mxu0 %v1999
    %2823 = vmatprep.subr.bf16.mxu0 %v2007
    %2824 = vmatpush1.bf16.msra.mxu0 %v2006
    %2825 = vmatprep.subr.bf16.mxu0 %v2014
    %2826 = vmatpush1.bf16.msra.mxu0 %v2013
    %2827 = vmatprep.subr.bf16.mxu0 %v2021
    %2828 = vmatpush1.bf16.msra.mxu0 %v2020
    %2829 = vmatprep.subr.bf16.mxu0 %v2028
    %2830 = vmatpush1.bf16.msra.mxu0 %v2027
    %2831 = vmatprep.subr.bf16.mxu0 %v2035
    %2832 = vmatpush1.bf16.msra.mxu0 %v2034
    %2833 = vmatprep.mubr.bf16.mxu0 %v192
    %2834 = vmatmul.mubr.bf16.gmra.mrb[0].mxu0 %v191
    %v2835 = vpop.f32.mrb[0].mxu0
    %v2836 = vadd.f32 %v2795, %v2835
    %v2837 = vpop.f32.mrb[0].mxu0
    %v2838 = vadd.f32 %v2797, %v2837
    %v2839 = vpop.f32.mrb[0].mxu0
    %v2840 = vpop.f32.mrb[0].mxu0
    %2841 = vdwg.mxu0
    %2842 = vmatprep.subr.bf16.mxu0 %v2042
    %2843 = vmatpush1.bf16.msra.mxu0 %v2041
    %2844 = vmatprep.subr.bf16.mxu0 0
    %2845 = vmatpush1.bf16.msra.mxu0 0
    %2846 = vmatprep.subr.bf16.mxu0 0
    %2847 = vmatpush1.bf16.msra.mxu0 0
    %2848 = vmatprep.subr.bf16.mxu0 0
    %2849 = vmatpush1.bf16.msra.mxu0 0
    %2850 = vmatprep.subr.bf16.mxu0 0
    %2851 = vmatpush1.bf16.msra.mxu0 0
    %2852 = vmatprep.subr.bf16.mxu0 0
    %2853 = vmatpush1.bf16.msra.mxu0 0
    %2854 = vmatprep.subr.bf16.mxu0 0
    %2855 = vmatpush1.bf16.msra.mxu0 0
    %2856 = vmatprep.subr.bf16.mxu0 0
    %2857 = vmatpush1.bf16.msra.mxu0 0
    %2858 = vmatprep.subr.bf16.mxu0 0
    %2859 = vmatpush1.bf16.msra.mxu0 0
    %2860 = vmatprep.subr.bf16.mxu0 0
    %2861 = vmatpush1.bf16.msra.mxu0 0
    %2862 = vmatprep.subr.bf16.mxu0 0
    %2863 = vmatpush1.bf16.msra.mxu0 0
    %2864 = vmatprep.subr.bf16.mxu0 0
    %2865 = vmatpush1.bf16.msra.mxu0 0
    %2866 = vmatprep.subr.bf16.mxu0 0
    %2867 = vmatpush1.bf16.msra.mxu0 0
    %2868 = vmatprep.subr.bf16.mxu0 0
    %2869 = vmatpush1.bf16.msra.mxu0 0
    %2870 = vmatprep.subr.bf16.mxu0 0
    %2871 = vmatpush1.bf16.msra.mxu0 0
    %2872 = vmatprep.subr.bf16.mxu0 0
    %2873 = vmatpush1.bf16.msra.mxu0 0
    %2874 = vmatprep.mubr.bf16.mxu0 0
    %2875 = vmatmul.mubr.bf16.gmra.mrb[0].mxu0 %v2389
    %v2876 = vpop.f32.mrb[0].mxu0
    %v2877 = vadd.f32 %v2836, %v2876
    %v2878 = vpop.f32.mrb[0].mxu0
    %v2879 = vadd.f32 %v2838, %v2878
    %v2880 = vpop.f32.mrb[0].mxu0
    %v2881 = vpop.f32.mrb[0].mxu0
    %2882 = vdwg.mxu0
    %2883 = vmatprep.subr.bf16.mxu0 0
    %2884 = vmatpush1.bf16.msra.mxu0 %v1707
    %2885 = vmatprep.subr.bf16.mxu0 0
    %2886 = vmatpush1.bf16.msra.mxu0 %v1714
    %2887 = vmatprep.subr.bf16.mxu0 0
    %2888 = vmatpush1.bf16.msra.mxu0 %v1721
    %2889 = vmatprep.subr.bf16.mxu0 0
    %2890 = vmatpush1.bf16.msra.mxu0 %v1728
    %2891 = vmatprep.subr.bf16.mxu0 0
    %2892 = vmatpush1.bf16.msra.mxu0 %v1735
    %2893 = vmatprep.subr.bf16.mxu0 0
    %2894 = vmatpush1.bf16.msra.mxu0 %v1742
    %2895 = vmatprep.subr.bf16.mxu0 0
    %2896 = vmatpush1.bf16.msra.mxu0 %v1749
    %2897 = vmatprep.subr.bf16.mxu0 0
    %2898 = vmatpush1.bf16.msra.mxu0 %v1756
    %2899 = vmatprep.subr.bf16.mxu0 0
    %2900 = vmatpush1.bf16.msra.mxu0 %v1763
    %2901 = vmatprep.subr.bf16.mxu0 0
    %2902 = vmatpush1.bf16.msra.mxu0 %v1770
    %2903 = vmatprep.subr.bf16.mxu0 0
    %2904 = vmatpush1.bf16.msra.mxu0 %v1777
    %2905 = vmatprep.subr.bf16.mxu0 0
    %2906 = vmatpush1.bf16.msra.mxu0 %v1784
    %2907 = vmatprep.subr.bf16.mxu0 0
    %2908 = vmatpush1.bf16.msra.mxu0 %v1791
    %2909 = vmatprep.subr.bf16.mxu0 0
    %2910 = vmatpush1.bf16.msra.mxu0 %v1798
    %2911 = vmatprep.subr.bf16.mxu0 0
    %2912 = vmatpush1.bf16.msra.mxu0 %v1805
    %2913 = vmatprep.subr.bf16.mxu0 0
    %2914 = vmatpush1.bf16.msra.mxu0 %v1812
    %2915 = vmatprep.mubr.bf16.mxu0 %v188
    %2916 = vmatmul.mubr.bf16.gmra.mrb[0].mxu0 %v187
    %v2917 = vpop.f32.mrb[0].mxu0
    %v2918 = vadd.f32 %v615, %v2917
    %v2919 = vpop.f32.mrb[0].mxu0
    %v2920 = vpop.f32.mrb[0].mxu0
    %v2921 = vpop.f32.mrb[0].mxu0
    %2922 = vdwg.mxu0
    %2923 = vmatprep.subr.bf16.mxu0 0
    %2924 = vmatpush1.bf16.msra.mxu0 %v1819
    %2925 = vmatprep.subr.bf16.mxu0 0
    %2926 = vmatpush1.bf16.msra.mxu0 %v1826
    %2927 = vmatprep.subr.bf16.mxu0 0
    %2928 = vmatpush1.bf16.msra.mxu0 %v1833
    %2929 = vmatprep.subr.bf16.mxu0 0
    %2930 = vmatpush1.bf16.msra.mxu0 %v1840
    %2931 = vmatprep.subr.bf16.mxu0 0
    %2932 = vmatpush1.bf16.msra.mxu0 %v1847
    %2933 = vmatprep.subr.bf16.mxu0 0
    %2934 = vmatpush1.bf16.msra.mxu0 %v1854
    %2935 = vmatprep.subr.bf16.mxu0 0
    %2936 = vmatpush1.bf16.msra.mxu0 %v1861
    %2937 = vmatprep.subr.bf16.mxu0 0
    %2938 = vmatpush1.bf16.msra.mxu0 %v1868
    %2939 = vmatprep.subr.bf16.mxu0 0
    %2940 = vmatpush1.bf16.msra.mxu0 %v1875
    %2941 = vmatprep.subr.bf16.mxu0 0
    %2942 = vmatpush1.bf16.msra.mxu0 %v1882
    %2943 = vmatprep.subr.bf16.mxu0 0
    %2944 = vmatpush1.bf16.msra.mxu0 %v1889
    %2945 = vmatprep.subr.bf16.mxu0 0
    %2946 = vmatpush1.bf16.msra.mxu0 %v1896
    %2947 = vmatprep.subr.bf16.mxu0 0
    %2948 = vmatpush1.bf16.msra.mxu0 %v1903
    %2949 = vmatprep.subr.bf16.mxu0 0
    %2950 = vmatpush1.bf16.msra.mxu0 %v1910
    %2951 = vmatprep.subr.bf16.mxu0 0
    %2952 = vmatpush1.bf16.msra.mxu0 %v1917
    %2953 = vmatprep.subr.bf16.mxu0 0
    %2954 = vmatpush1.bf16.msra.mxu0 %v1924
    %2955 = vmatprep.mubr.bf16.mxu0 %v190
    %2956 = vmatmul.mubr.bf16.gmra.mrb[0].mxu0 %v189
    %v2957 = vpop.f32.mrb[0].mxu0
    %v2958 = vadd.f32 %v2918, %v2957
    %v2959 = vpop.f32.mrb[0].mxu0
    %v2960 = vpop.f32.mrb[0].mxu0
    %v2961 = vpop.f32.mrb[0].mxu0
    %2962 = vdwg.mxu0
    %2963 = vmatprep.subr.bf16.mxu0 0
    %2964 = vmatpush1.bf16.msra.mxu0 %v1931
    %2965 = vmatprep.subr.bf16.mxu0 0
    %2966 = vmatpush1.bf16.msra.mxu0 %v1938
    %2967 = vmatprep.subr.bf16.mxu0 0
    %2968 = vmatpush1.bf16.msra.mxu0 %v1945
    %2969 = vmatprep.subr.bf16.mxu0 0
    %2970 = vmatpush1.bf16.msra.mxu0 %v1952
    %2971 = vmatprep.subr.bf16.mxu0 0
    %2972 = vmatpush1.bf16.msra.mxu0 %v1959
    %2973 = vmatprep.subr.bf16.mxu0 0
    %2974 = vmatpush1.bf16.msra.mxu0 %v1966
    %2975 = vmatprep.subr.bf16.mxu0 0
    %2976 = vmatpush1.bf16.msra.mxu0 %v1973
    %2977 = vmatprep.subr.bf16.mxu0 0
    %2978 = vmatpush1.bf16.msra.mxu0 %v1980
    %2979 = vmatprep.subr.bf16.mxu0 0
    %2980 = vmatpush1.bf16.msra.mxu0 %v1987
    %2981 = vmatprep.subr.bf16.mxu0 0
    %2982 = vmatpush1.bf16.msra.mxu0 %v1994
    %2983 = vmatprep.subr.bf16.mxu0 0
    %2984 = vmatpush1.bf16.msra.mxu0 %v2001
    %2985 = vmatprep.subr.bf16.mxu0 0
    %2986 = vmatpush1.bf16.msra.mxu0 %v2008
    %2987 = vmatprep.subr.bf16.mxu0 0
    %2988 = vmatpush1.bf16.msra.mxu0 %v2015
    %2989 = vmatprep.subr.bf16.mxu0 0
    %2990 = vmatpush1.bf16.msra.mxu0 %v2022
    %2991 = vmatprep.subr.bf16.mxu0 0
    %2992 = vmatpush1.bf16.msra.mxu0 %v2029
    %2993 = vmatprep.subr.bf16.mxu0 0
    %2994 = vmatpush1.bf16.msra.mxu0 %v2036
    %2995 = vmatprep.mubr.bf16.mxu0 %v192
    %2996 = vmatmul.mubr.bf16.gmra.mrb[0].mxu0 %v191
    %v2997 = vpop.f32.mrb[0].mxu0
    %v2998 = vadd.f32 %v2958, %v2997
    %v2999 = vpop.f32.mrb[0].mxu0
    %v3000 = vpop.f32.mrb[0].mxu0
    %v3001 = vpop.f32.mrb[0].mxu0
    %3002 = vdwg.mxu0
    %3003 = vmatprep.subr.bf16.mxu0 0
    %3004 = vmatpush1.bf16.msra.mxu0 %v2043
    %3005 = vmatprep.subr.bf16.mxu0 0
    %3006 = vmatpush1.bf16.msra.mxu0 0
    %3007 = vmatprep.subr.bf16.mxu0 0
    %3008 = vmatpush1.bf16.msra.mxu0 0
    %3009 = vmatprep.subr.bf16.mxu0 0
    %3010 = vmatpush1.bf16.msra.mxu0 0
    %3011 = vmatprep.subr.bf16.mxu0 0
    %3012 = vmatpush1.bf16.msra.mxu0 0
    %3013 = vmatprep.subr.bf16.mxu0 0
    %3014 = vmatpush1.bf16.msra.mxu0 0
    %3015 = vmatprep.subr.bf16.mxu0 0
    %3016 = vmatpush1.bf16.msra.mxu0 0
    %3017 = vmatprep.subr.bf16.mxu0 0
    %3018 = vmatpush1.bf16.msra.mxu0 0
    %3019 = vmatprep.subr.bf16.mxu0 0
    %3020 = vmatpush1.bf16.msra.mxu0 0
    %3021 = vmatprep.subr.bf16.mxu0 0
    %3022 = vmatpush1.bf16.msra.mxu0 0
    %3023 = vmatprep.subr.bf16.mxu0 0
    %3024 = vmatpush1.bf16.msra.mxu0 0
    %3025 = vmatprep.subr.bf16.mxu0 0
    %3026 = vmatpush1.bf16.msra.mxu0 0
    %3027 = vmatprep.subr.bf16.mxu0 0
    %3028 = vmatpush1.bf16.msra.mxu0 0
    %3029 = vmatprep.subr.bf16.mxu0 0
    %3030 = vmatpush1.bf16.msra.mxu0 0
    %3031 = vmatprep.subr.bf16.mxu0 0
    %3032 = vmatpush1.bf16.msra.mxu0 0
    %3033 = vmatprep.subr.bf16.mxu0 0
    %3034 = vmatpush1.bf16.msra.mxu0 0
    %3035 = vmatprep.mubr.bf16.mxu0 0
    %3036 = vmatmul.mubr.bf16.gmra.mrb[0].mxu0 %v2389
    %v3037 = vpop.f32.mrb[0].mxu0
    %v3038 = vadd.f32 %v2998, %v3037
    %v3039 = vpop.f32.mrb[0].mxu0
    %v3040 = vpop.f32.mrb[0].mxu0
    %v3041 = vpop.f32.mrb[0].mxu0
    %3042 = vdwg.mxu0
    %v3043 = vmax.f32 %v2549, 0.0
    %v3044 = vmax.f32 %v2551, 0.0
    %v3045 = vmax.f32 %v2713, 0.0
    %v3046 = vmax.f32 %v2715, 0.0
    %v3047 = vmax.f32 %v2877, 0.0
    %v3048 = vmax.f32 %v2879, 0.0
    %v3049 = vmax.f32 %v3038, 0.0
    %v3050 = vpack.c.bf16 %v3043, %v3043
    %v3051 = vpack.c.bf16 %v3044, %v3044
    %v3052 = vpack.c.bf16 %v3045, %v3045
    %v3053 = vpack.c.bf16 %v3046, %v3046
    %v3054 = vpack.c.bf16 %v3047, %v3047
    %v3055 = vpack.c.bf16 %v3048, %v3048
    %v3056 = vpack.c.bf16 %v3049, %v3049
    %v3057 = vld [vmem:[#allocation8] sm:$0xff]
    %v3058 = vld [vmem:[#allocation8 + $0x8] sm:$0xf]
    %v3059 = vld [vmem:[#allocation8 + $0xc] sm:$0xff]
    %v3060 = vld [vmem:[#allocation8 + $0x14] sm:$0xf]
    %v3061 = vld [vmem:[#allocation8 + $0x18] sm:$0xff]
    %v3062 = vld [vmem:[#allocation8 + $0x20] sm:$0xf]
    %v3063 = vld [vmem:[#allocation8 + $0x24] sm:$0xff]
    %v3064 = vld [vmem:[#allocation8 + $0x2c] sm:$0xf]
    %v3065 = vld [vmem:[#allocation8 + $0x30] sm:$0xff]
    %v3066 = vld [vmem:[#allocation8 + $0x38] sm:$0xf]
    %v3067 = vld [vmem:[#allocation8 + $0x3c] sm:$0xff]
    %v3068 = vld [vmem:[#allocation8 + $0x44] sm:$0xf]
    %v3069 = vld [vmem:[#allocation8 + $0x48] sm:$0xff]
    %v3070 = vld [vmem:[#allocation8 + $0x50] sm:$0xf]
    %v3071 = vld [vmem:[#allocation8 + $0x54] sm:$0xff]
    %v3072 = vld [vmem:[#allocation8 + $0x5c] sm:$0xf]
    %v3073 = vld [vmem:[#allocation8 + $0x60] sm:$0xff]
    %v3074 = vld [vmem:[#allocation8 + $0x68] sm:$0xf]
    %v3075 = vld [vmem:[#allocation8 + $0x6c] sm:$0xff]
    %v3076 = vld [vmem:[#allocation8 + $0x74] sm:$0xf]
    %v3077 = vld [vmem:[#allocation8 + $0x78] sm:$0xff]
    %v3078 = vld [vmem:[#allocation8 + $0x80] sm:$0xf]
    %v3079 = vld [vmem:[#allocation8 + $0x84] sm:$0xff]
    %v3080 = vld [vmem:[#allocation8 + $0x8c] sm:$0xf]
    %v3081 = vld [vmem:[#allocation8 + $0x90] sm:$0xff]
    %v3082 = vld [vmem:[#allocation8 + $0x98] sm:$0xf]
    %v3083 = vld [vmem:[#allocation8 + $0x9c] sm:$0xff]
    %v3084 = vld [vmem:[#allocation8 + $0xa4] sm:$0xf]
    %v3085 = vld [vmem:[#allocation8 + $0xa8] sm:$0xff]
    %v3086 = vld [vmem:[#allocation8 + $0xb0] sm:$0xf]
    %v3087 = vld [vmem:[#allocation8 + $0xb4] sm:$0xff]
    %v3088 = vld [vmem:[#allocation8 + $0xbc] sm:$0xf]
    %v3089 = vld [vmem:[#allocation8 + $0xc0] sm:$0xff]
    %v3090 = vld [vmem:[#allocation8 + $0xc8] sm:$0xf]
    %v3091 = vld [vmem:[#allocation8 + $0xcc] sm:$0xff]
    %v3092 = vld [vmem:[#allocation8 + $0xd4] sm:$0xf]
    %v3093 = vld [vmem:[#allocation8 + $0xd8] sm:$0xff]
    %v3094 = vld [vmem:[#allocation8 + $0xe0] sm:$0xf]
    %v3095 = vld [vmem:[#allocation8 + $0xe4] sm:$0xff]
    %v3096 = vld [vmem:[#allocation8 + $0xec] sm:$0xf]
    %v3097 = vld [vmem:[#allocation8 + $0xf0] sm:$0xff]
    %v3098 = vld [vmem:[#allocation8 + $0xf8] sm:$0xf]
    %v3099 = vld [vmem:[#allocation8 + $0xfc] sm:$0xff]
    %v3100 = vld [vmem:[#allocation8 + $0x104] sm:$0xf]
    %v3101 = vld [vmem:[#allocation8 + $0x108] sm:$0xff]
    %v3102 = vld [vmem:[#allocation8 + $0x110] sm:$0xf]
    %v3103 = vld [vmem:[#allocation8 + $0x114] sm:$0xff]
    %v3104 = vld [vmem:[#allocation8 + $0x11c] sm:$0xf]
    %v3105 = vld [vmem:[#allocation8 + $0x120] sm:$0xff]
    %v3106 = vld [vmem:[#allocation8 + $0x128] sm:$0xf]
    %v3107 = vld [vmem:[#allocation8 + $0x12c] sm:$0xff]
    %v3108 = vld [vmem:[#allocation8 + $0x134] sm:$0xf]
    %v3109 = vld [vmem:[#allocation8 + $0x138] sm:$0xff]
    %v3110 = vld [vmem:[#allocation8 + $0x140] sm:$0xf]
    %v3111 = vld [vmem:[#allocation8 + $0x144] sm:$0xff]
    %v3112 = vld [vmem:[#allocation8 + $0x14c] sm:$0xf]
    %v3113 = vld [vmem:[#allocation8 + $0x150] sm:$0xff]
    %v3114 = vld [vmem:[#allocation8 + $0x158] sm:$0xf]
    %v3115 = vld [vmem:[#allocation8 + $0x15c] sm:$0xff]
    %v3116 = vld [vmem:[#allocation8 + $0x164] sm:$0xf]
    %v3117 = vld [vmem:[#allocation8 + $0x168] sm:$0xff]
    %v3118 = vld [vmem:[#allocation8 + $0x170] sm:$0xf]
    %v3119 = vld [vmem:[#allocation8 + $0x174] sm:$0xff]
    %v3120 = vld [vmem:[#allocation8 + $0x17c] sm:$0xf]
    %v3121 = vld [vmem:[#allocation8 + $0x180] sm:$0xff]
    %v3122 = vld [vmem:[#allocation8 + $0x188] sm:$0xf]
    %v3123 = vld [vmem:[#allocation8 + $0x18c] sm:$0xff]
    %v3124 = vld [vmem:[#allocation8 + $0x194] sm:$0xf]
    %v3125 = vld [vmem:[#allocation8 + $0x198] sm:$0xff]
    %v3126 = vld [vmem:[#allocation8 + $0x1a0] sm:$0xf]
    %v3127 = vld [vmem:[#allocation8 + $0x1a4] sm:$0xff]
    %v3128 = vld [vmem:[#allocation8 + $0x1ac] sm:$0xf]
    %v3129 = vld [vmem:[#allocation8 + $0x1b0] sm:$0xff]
    %v3130 = vld [vmem:[#allocation8 + $0x1b8] sm:$0xf]
    %v3131 = vld [vmem:[#allocation8 + $0x1bc] sm:$0xff]
    %v3132 = vld [vmem:[#allocation8 + $0x1c4] sm:$0xf]
    %v3133 = vld [vmem:[#allocation8 + $0x1c8] sm:$0xff]
    %v3134 = vld [vmem:[#allocation8 + $0x1d0] sm:$0xf]
    %v3135 = vld [vmem:[#allocation8 + $0x1d4] sm:$0xff]
    %v3136 = vld [vmem:[#allocation8 + $0x1dc] sm:$0xf]
    %v3137 = vld [vmem:[#allocation8 + $0x1e0] sm:$0xff]
    %v3138 = vld [vmem:[#allocation8 + $0x1e8] sm:$0xf]
    %v3139 = vld [vmem:[#allocation8 + $0x1ec] sm:$0xff]
    %v3140 = vld [vmem:[#allocation8 + $0x1f4] sm:$0xf]
    %v3141 = vld [vmem:[#allocation8 + $0x1f8] sm:$0xff]
    %v3142 = vld [vmem:[#allocation8 + $0x200] sm:$0xf]
    %v3143 = vld [vmem:[#allocation8 + $0x204] sm:$0xff]
    %v3144 = vld [vmem:[#allocation8 + $0x20c] sm:$0xf]
    %v3145 = vld [vmem:[#allocation8 + $0x210] sm:$0xff]
    %v3146 = vld [vmem:[#allocation8 + $0x218] sm:$0xf]
    %v3147 = vld [vmem:[#allocation8 + $0x21c] sm:$0xff]
    %v3148 = vld [vmem:[#allocation8 + $0x224] sm:$0xf]
    %v3149 = vld [vmem:[#allocation8 + $0x228] sm:$0xff]
    %v3150 = vld [vmem:[#allocation8 + $0x230] sm:$0xf]
    %v3151 = vld [vmem:[#allocation8 + $0x234] sm:$0xff]
    %v3152 = vld [vmem:[#allocation8 + $0x23c] sm:$0xf]
    %v3153 = vld [vmem:[#allocation8 + $0x240] sm:$0xff]
    %v3154 = vld [vmem:[#allocation8 + $0x248] sm:$0xf]
    %v3155 = vld [vmem:[#allocation8 + $0x24c] sm:$0xff]
    %v3156 = vld [vmem:[#allocation8 + $0x254] sm:$0xf]
    %v3157 = vld [vmem:[#allocation8 + $0x258] sm:$0xff]
    %v3158 = vld [vmem:[#allocation8 + $0x260] sm:$0xf]
    %v3159 = vld [vmem:[#allocation8 + $0x264] sm:$0xff]
    %v3160 = vld [vmem:[#allocation8 + $0x26c] sm:$0xf]
    %v3161 = vld [vmem:[#allocation8 + $0x270] sm:$0xff]
    %v3162 = vld [vmem:[#allocation8 + $0x278] sm:$0xf]
    %v3163 = vld [vmem:[#allocation8 + $0x27c] sm:$0xff]
    %v3164 = vld [vmem:[#allocation8 + $0x284] sm:$0xf]
    %v3165 = vld [vmem:[#allocation8 + $0x288] sm:$0xff]
    %v3166 = vld [vmem:[#allocation8 + $0x290] sm:$0xf]
    %v3167 = vld [vmem:[#allocation8 + $0x294] sm:$0xff]
    %v3168 = vld [vmem:[#allocation8 + $0x29c] sm:$0xf]
    %v3169 = vld [vmem:[#allocation8 + $0x2a0] sm:$0xff]
    %v3170 = vld [vmem:[#allocation8 + $0x2a8] sm:$0xf]
    %v3171 = vld [vmem:[#allocation8 + $0x2ac] sm:$0xff]
    %v3172 = vld [vmem:[#allocation8 + $0x2b4] sm:$0xf]
    %v3173 = vld [vmem:[#allocation8 + $0x2b8] sm:$0xff]
    %v3174 = vld [vmem:[#allocation8 + $0x2c0] sm:$0xf]
    %v3175 = vld [vmem:[#allocation8 + $0x2c4] sm:$0xff]
    %v3176 = vld [vmem:[#allocation8 + $0x2cc] sm:$0xf]
    %v3177 = vld [vmem:[#allocation8 + $0x2d0] sm:$0xff]
    %v3178 = vld [vmem:[#allocation8 + $0x2d8] sm:$0xf]
    %v3179 = vld [vmem:[#allocation8 + $0x2dc] sm:$0xff]
    %v3180 = vld [vmem:[#allocation8 + $0x2e4] sm:$0xf]
    %v3181 = vld [vmem:[#allocation8 + $0x2e8] sm:$0xff]
    %v3182 = vld [vmem:[#allocation8 + $0x2f0] sm:$0xf]
    %v3183 = vld [vmem:[#allocation8 + $0x2f4] sm:$0xff]
    %v3184 = vld [vmem:[#allocation8 + $0x2fc] sm:$0xf]
    %v3185 = vld [vmem:[#allocation8 + $0x300] sm:$0xff]
    %v3186 = vld [vmem:[#allocation8 + $0x308] sm:$0xf]
    %v3187 = vld [vmem:[#allocation8 + $0x30c] sm:$0xff]
    %v3188 = vld [vmem:[#allocation8 + $0x314] sm:$0xf]
    %v3189 = vld [vmem:[#allocation8 + $0x318] sm:$0xff]
    %v3190 = vld [vmem:[#allocation8 + $0x320] sm:$0xf]
    %v3191 = vld [vmem:[#allocation8 + $0x324] sm:$0xff]
    %v3192 = vld [vmem:[#allocation8 + $0x32c] sm:$0xf]
    %v3193 = vld [vmem:[#allocation8 + $0x330] sm:$0xff]
    %v3194 = vld [vmem:[#allocation8 + $0x338] sm:$0xf]
    %v3195 = vld [vmem:[#allocation8 + $0x33c] sm:$0xff]
    %v3196 = vld [vmem:[#allocation8 + $0x344] sm:$0xf]
    %v3197 = vld [vmem:[#allocation8 + $0x348] sm:$0xff]
    %v3198 = vld [vmem:[#allocation8 + $0x350] sm:$0xf]
    %v3199 = vld [vmem:[#allocation8 + $0x354] sm:$0xff]
    %v3200 = vld [vmem:[#allocation8 + $0x35c] sm:$0xf]
    %v3201 = vld [vmem:[#allocation8 + $0x360] sm:$0xff]
    %v3202 = vld [vmem:[#allocation8 + $0x368] sm:$0xf]
    %v3203 = vld [vmem:[#allocation8 + $0x36c] sm:$0xff]
    %v3204 = vld [vmem:[#allocation8 + $0x374] sm:$0xf]
    %v3205 = vld [vmem:[#allocation8 + $0x378] sm:$0xff]
    %v3206 = vld [vmem:[#allocation8 + $0x380] sm:$0xf]
    %v3207 = vld [vmem:[#allocation8 + $0x384] sm:$0xff]
    %v3208 = vld [vmem:[#allocation8 + $0x38c] sm:$0xf]
    %v3209 = vld [vmem:[#allocation8 + $0x390] sm:$0xff]
    %v3210 = vld [vmem:[#allocation8 + $0x398] sm:$0xf]
    %v3211 = vld [vmem:[#allocation8 + $0x39c] sm:$0xff]
    %v3212 = vld [vmem:[#allocation8 + $0x3a4] sm:$0xf]
    %v3213 = vld [vmem:[#allocation8 + $0x3a8] sm:$0xff]
    %v3214 = vld [vmem:[#allocation8 + $0x3b0] sm:$0xf]
    %v3215 = vld [vmem:[#allocation8 + $0x3b4] sm:$0xff]
    %v3216 = vld [vmem:[#allocation8 + $0x3bc] sm:$0xf]
    %v3217 = vld [vmem:[#allocation8 + $0x3c0] sm:$0xff]
    %v3218 = vld [vmem:[#allocation8 + $0x3c8] sm:$0xf]
    %v3219 = vld [vmem:[#allocation8 + $0x3cc] sm:$0xff]
    %v3220 = vld [vmem:[#allocation8 + $0x3d4] sm:$0xf]
    %v3221 = vld [vmem:[#allocation8 + $0x3d8] sm:$0xff]
    %v3222 = vld [vmem:[#allocation8 + $0x3e0] sm:$0xf]
    %v3223 = vld [vmem:[#allocation8 + $0x3e4] sm:$0xff]
    %v3224 = vld [vmem:[#allocation8 + $0x3ec] sm:$0xf]
    %v3225 = vld [vmem:[#allocation8 + $0x3f0] sm:$0xff]
    %v3226 = vld [vmem:[#allocation8 + $0x3f8] sm:$0xf]
    %v3227 = vld [vmem:[#allocation8 + $0x3fc] sm:$0xff]
    %v3228 = vld [vmem:[#allocation8 + $0x404] sm:$0xf]
    %v3229 = vld [vmem:[#allocation8 + $0x408] sm:$0xff]
    %v3230 = vld [vmem:[#allocation8 + $0x410] sm:$0xf]
    %v3231 = vld [vmem:[#allocation8 + $0x414] sm:$0xff]
    %v3232 = vld [vmem:[#allocation8 + $0x41c] sm:$0xf]
    %v3233 = vld [vmem:[#allocation8 + $0x420] sm:$0xff]
    %v3234 = vld [vmem:[#allocation8 + $0x428] sm:$0xf]
    %v3235 = vld [vmem:[#allocation8 + $0x42c] sm:$0xff]
    %v3236 = vld [vmem:[#allocation8 + $0x434] sm:$0xf]
    %v3237 = vld [vmem:[#allocation8 + $0x438] sm:$0xff]
    %v3238 = vld [vmem:[#allocation8 + $0x440] sm:$0xf]
    %v3239 = vld [vmem:[#allocation8 + $0x444] sm:$0xff]
    %v3240 = vld [vmem:[#allocation8 + $0x44c] sm:$0xf]
    %v3241 = vld [vmem:[#allocation8 + $0x450] sm:$0xff]
    %v3242 = vld [vmem:[#allocation8 + $0x458] sm:$0xf]
    %v3243 = vld [vmem:[#allocation8 + $0x45c] sm:$0xff]
    %v3244 = vld [vmem:[#allocation8 + $0x464] sm:$0xf]
    %v3245 = vld [vmem:[#allocation8 + $0x468] sm:$0xff]
    %v3246 = vld [vmem:[#allocation8 + $0x470] sm:$0xf]
    %v3247 = vld [vmem:[#allocation8 + $0x474] sm:$0xff]
    %v3248 = vld [vmem:[#allocation8 + $0x47c] sm:$0xf]
    %v3249 = vld [vmem:[#allocation8 + $0x480] sm:$0xff]
    %v3250 = vld [vmem:[#allocation8 + $0x488] sm:$0xf]
    %v3251 = vld [vmem:[#allocation8 + $0x48c] sm:$0xff]
    %v3252 = vld [vmem:[#allocation8 + $0x494] sm:$0xf]
    %v3253 = vld [vmem:[#allocation8 + $0x498] sm:$0xff]
    %v3254 = vld [vmem:[#allocation8 + $0x4a0] sm:$0xf]
    %v3255 = vld [vmem:[#allocation8 + $0x4a4] sm:$0xff]
    %v3256 = vld [vmem:[#allocation8 + $0x4ac] sm:$0xf]
    %v3257 = vld [vmem:[#allocation8 + $0x4b0] sm:$0xff]
    %v3258 = vld [vmem:[#allocation8 + $0x4b8] sm:$0xf]
    %v3259 = vld [vmem:[#allocation8 + $0x4bc] sm:$0xff]
    %v3260 = vld [vmem:[#allocation8 + $0x4c4] sm:$0xf]
    %v3261 = vld [vmem:[#allocation8 + $0x4c8] sm:$0xff]
    %v3262 = vld [vmem:[#allocation8 + $0x4d0] sm:$0xf]
    %v3263 = vld [vmem:[#allocation8 + $0x4d4] sm:$0xff]
    %v3264 = vld [vmem:[#allocation8 + $0x4dc] sm:$0xf]
    %v3265 = vld [vmem:[#allocation8 + $0x4e0] sm:$0xff]
    %v3266 = vld [vmem:[#allocation8 + $0x4e8] sm:$0xf]
    %v3267 = vld [vmem:[#allocation8 + $0x4ec] sm:$0xff]
    %v3268 = vld [vmem:[#allocation8 + $0x4f4] sm:$0xf]
    %v3269 = vld [vmem:[#allocation8 + $0x4f8] sm:$0xff]
    %v3270 = vld [vmem:[#allocation8 + $0x500] sm:$0xf]
    %v3271 = vld [vmem:[#allocation8 + $0x504] sm:$0xff]
    %v3272 = vld [vmem:[#allocation8 + $0x50c] sm:$0xf]
    %v3273 = vld [vmem:[#allocation8 + $0x510] sm:$0xff]
    %v3274 = vld [vmem:[#allocation8 + $0x518] sm:$0xf]
    %v3275 = vld [vmem:[#allocation8 + $0x51c] sm:$0xff]
    %v3276 = vld [vmem:[#allocation8 + $0x524] sm:$0xf]
    %v3277 = vld [vmem:[#allocation8 + $0x528] sm:$0xff]
    %v3278 = vld [vmem:[#allocation8 + $0x530] sm:$0xf]
    %v3279 = vld [vmem:[#allocation8 + $0x534] sm:$0xff]
    %v3280 = vld [vmem:[#allocation8 + $0x53c] sm:$0xf]
    %v3281 = vld [vmem:[#allocation10] sm:$0x7]
    %v3283 = vlaneseq
    %v3284 = vshrl.u32 %v3283, 7
    %v3285 = vsub.s32 0, %v3284
    %v3286 = vrot.slane %v3281, %v3285
    %v3287 = vlaneseq
    %v3288 = vshrl.u32 %v3287, 7
    %v3289 = vsub.s32 1, %v3288
    %v3290 = vrot.slane %v3281, %v3289
    %v3291 = vlaneseq
    %v3292 = vshrl.u32 %v3291, 7
    %v3293 = vsub.s32 2, %v3292
    %v3294 = vrot.slane %v3281, %v3293
    %v3522 = vunpack.c.l.b16 %v3057
    %v3523 = vunpack.c.h.b16 %v3057
    %v3524 = vunpack.c.l.b16 %v3058
    %v3525 = vunpack.c.l.b16 %v3059
    %v3526 = vunpack.c.h.b16 %v3059
    %v3527 = vunpack.c.l.b16 %v3060
    %v3528 = vunpack.c.l.b16 %v3061
    %v3529 = vunpack.c.h.b16 %v3061
    %v3530 = vunpack.c.l.b16 %v3062
    %v3531 = vunpack.c.l.b16 %v3063
    %v3532 = vunpack.c.h.b16 %v3063
    %v3533 = vunpack.c.l.b16 %v3064
    %v3534 = vunpack.c.l.b16 %v3065
    %v3535 = vunpack.c.h.b16 %v3065
    %v3536 = vunpack.c.l.b16 %v3066
    %v3537 = vunpack.c.l.b16 %v3067
    %v3538 = vunpack.c.h.b16 %v3067
    %v3539 = vunpack.c.l.b16 %v3068
    %v3540 = vunpack.c.l.b16 %v3069
    %v3541 = vunpack.c.h.b16 %v3069
    %v3542 = vunpack.c.l.b16 %v3070
    %v3543 = vunpack.c.l.b16 %v3071
    %v3544 = vunpack.c.h.b16 %v3071
    %v3545 = vunpack.c.l.b16 %v3072
    %v3546 = vunpack.c.l.b16 %v3073
    %v3547 = vunpack.c.h.b16 %v3073
    %v3548 = vunpack.c.l.b16 %v3074
    %v3549 = vunpack.c.l.b16 %v3075
    %v3550 = vunpack.c.h.b16 %v3075
    %v3551 = vunpack.c.l.b16 %v3076
    %v3552 = vunpack.c.l.b16 %v3077
    %v3553 = vunpack.c.h.b16 %v3077
    %v3554 = vunpack.c.l.b16 %v3078
    %v3555 = vunpack.c.l.b16 %v3079
    %v3556 = vunpack.c.h.b16 %v3079
    %v3557 = vunpack.c.l.b16 %v3080
    %v3558 = vunpack.c.l.b16 %v3081
    %v3559 = vunpack.c.h.b16 %v3081
    %v3560 = vunpack.c.l.b16 %v3082
    %v3561 = vunpack.c.l.b16 %v3083
    %v3562 = vunpack.c.h.b16 %v3083
    %v3563 = vunpack.c.l.b16 %v3084
    %v3564 = vunpack.c.l.b16 %v3085
    %v3565 = vunpack.c.h.b16 %v3085
    %v3566 = vunpack.c.l.b16 %v3086
    %v3567 = vunpack.c.l.b16 %v3087
    %v3568 = vunpack.c.h.b16 %v3087
    %v3569 = vunpack.c.l.b16 %v3088
    %v3570 = vunpack.c.l.b16 %v3089
    %v3571 = vunpack.c.h.b16 %v3089
    %v3572 = vunpack.c.l.b16 %v3090
    %v3573 = vunpack.c.l.b16 %v3091
    %v3574 = vunpack.c.h.b16 %v3091
    %v3575 = vunpack.c.l.b16 %v3092
    %v3576 = vunpack.c.l.b16 %v3093
    %v3577 = vunpack.c.h.b16 %v3093
    %v3578 = vunpack.c.l.b16 %v3094
    %v3579 = vunpack.c.l.b16 %v3095
    %v3580 = vunpack.c.h.b16 %v3095
    %v3581 = vunpack.c.l.b16 %v3096
    %v3582 = vunpack.c.l.b16 %v3097
    %v3583 = vunpack.c.h.b16 %v3097
    %v3584 = vunpack.c.l.b16 %v3098
    %v3585 = vunpack.c.l.b16 %v3099
    %v3586 = vunpack.c.h.b16 %v3099
    %v3587 = vunpack.c.l.b16 %v3100
    %v3588 = vunpack.c.l.b16 %v3101
    %v3589 = vunpack.c.h.b16 %v3101
    %v3590 = vunpack.c.l.b16 %v3102
    %v3591 = vunpack.c.l.b16 %v3103
    %v3592 = vunpack.c.h.b16 %v3103
    %v3593 = vunpack.c.l.b16 %v3104
    %v3594 = vunpack.c.l.b16 %v3105
    %v3595 = vunpack.c.h.b16 %v3105
    %v3596 = vunpack.c.l.b16 %v3106
    %v3597 = vunpack.c.l.b16 %v3107
    %v3598 = vunpack.c.h.b16 %v3107
    %v3599 = vunpack.c.l.b16 %v3108
    %v3600 = vunpack.c.l.b16 %v3109
    %v3601 = vunpack.c.h.b16 %v3109
    %v3602 = vunpack.c.l.b16 %v3110
    %v3603 = vunpack.c.l.b16 %v3111
    %v3604 = vunpack.c.h.b16 %v3111
    %v3605 = vunpack.c.l.b16 %v3112
    %v3606 = vunpack.c.l.b16 %v3113
    %v3607 = vunpack.c.h.b16 %v3113
    %v3608 = vunpack.c.l.b16 %v3114
    %v3609 = vunpack.c.l.b16 %v3115
    %v3610 = vunpack.c.h.b16 %v3115
    %v3611 = vunpack.c.l.b16 %v3116
    %v3612 = vunpack.c.l.b16 %v3117
    %v3613 = vunpack.c.h.b16 %v3117
    %v3614 = vunpack.c.l.b16 %v3118
    %v3615 = vunpack.c.l.b16 %v3119
    %v3616 = vunpack.c.h.b16 %v3119
    %v3617 = vunpack.c.l.b16 %v3120
    %v3618 = vunpack.c.l.b16 %v3121
    %v3619 = vunpack.c.h.b16 %v3121
    %v3620 = vunpack.c.l.b16 %v3122
    %v3621 = vunpack.c.l.b16 %v3123
    %v3622 = vunpack.c.h.b16 %v3123
    %v3623 = vunpack.c.l.b16 %v3124
    %v3624 = vunpack.c.l.b16 %v3125
    %v3625 = vunpack.c.h.b16 %v3125
    %v3626 = vunpack.c.l.b16 %v3126
    %v3627 = vunpack.c.l.b16 %v3127
    %v3628 = vunpack.c.h.b16 %v3127
    %v3629 = vunpack.c.l.b16 %v3128
    %v3630 = vunpack.c.l.b16 %v3129
    %v3631 = vunpack.c.h.b16 %v3129
    %v3632 = vunpack.c.l.b16 %v3130
    %v3633 = vunpack.c.l.b16 %v3131
    %v3634 = vunpack.c.h.b16 %v3131
    %v3635 = vunpack.c.l.b16 %v3132
    %v3636 = vunpack.c.l.b16 %v3133
    %v3637 = vunpack.c.h.b16 %v3133
    %v3638 = vunpack.c.l.b16 %v3134
    %v3639 = vunpack.c.l.b16 %v3135
    %v3640 = vunpack.c.h.b16 %v3135
    %v3641 = vunpack.c.l.b16 %v3136
    %v3642 = vunpack.c.l.b16 %v3137
    %v3643 = vunpack.c.h.b16 %v3137
    %v3644 = vunpack.c.l.b16 %v3138
    %v3645 = vunpack.c.l.b16 %v3139
    %v3646 = vunpack.c.h.b16 %v3139
    %v3647 = vunpack.c.l.b16 %v3140
    %v3648 = vunpack.c.l.b16 %v3141
    %v3649 = vunpack.c.h.b16 %v3141
    %v3650 = vunpack.c.l.b16 %v3142
    %v3651 = vunpack.c.l.b16 %v3143
    %v3652 = vunpack.c.h.b16 %v3143
    %v3653 = vunpack.c.l.b16 %v3144
    %v3654 = vunpack.c.l.b16 %v3145
    %v3655 = vunpack.c.h.b16 %v3145
    %v3656 = vunpack.c.l.b16 %v3146
    %v3657 = vunpack.c.l.b16 %v3147
    %v3658 = vunpack.c.h.b16 %v3147
    %v3659 = vunpack.c.l.b16 %v3148
    %v3660 = vunpack.c.l.b16 %v3149
    %v3661 = vunpack.c.h.b16 %v3149
    %v3662 = vunpack.c.l.b16 %v3150
    %v3663 = vunpack.c.l.b16 %v3151
    %v3664 = vunpack.c.h.b16 %v3151
    %v3665 = vunpack.c.l.b16 %v3152
    %v3666 = vunpack.c.l.b16 %v3153
    %v3667 = vunpack.c.h.b16 %v3153
    %v3668 = vunpack.c.l.b16 %v3154
    %v3669 = vunpack.c.l.b16 %v3155
    %v3670 = vunpack.c.h.b16 %v3155
    %v3671 = vunpack.c.l.b16 %v3156
    %v3672 = vunpack.c.l.b16 %v3157
    %v3673 = vunpack.c.h.b16 %v3157
    %v3674 = vunpack.c.l.b16 %v3158
    %v3675 = vunpack.c.l.b16 %v3159
    %v3676 = vunpack.c.h.b16 %v3159
    %v3677 = vunpack.c.l.b16 %v3160
    %v3678 = vunpack.c.l.b16 %v3161
    %v3679 = vunpack.c.h.b16 %v3161
    %v3680 = vunpack.c.l.b16 %v3162
    %v3681 = vunpack.c.l.b16 %v3163
    %v3682 = vunpack.c.h.b16 %v3163
    %v3683 = vunpack.c.l.b16 %v3164
    %v3684 = vunpack.c.l.b16 %v3165
    %v3685 = vunpack.c.h.b16 %v3165
    %v3686 = vunpack.c.l.b16 %v3166
    %v3687 = vunpack.c.l.b16 %v3167
    %v3688 = vunpack.c.h.b16 %v3167
    %v3689 = vunpack.c.l.b16 %v3168
    %v3690 = vunpack.c.l.b16 %v3169
    %v3691 = vunpack.c.h.b16 %v3169
    %v3692 = vunpack.c.l.b16 %v3170
    %v3693 = vunpack.c.l.b16 %v3171
    %v3694 = vunpack.c.h.b16 %v3171
    %v3695 = vunpack.c.l.b16 %v3172
    %v3696 = vunpack.c.l.b16 %v3173
    %v3697 = vunpack.c.h.b16 %v3173
    %v3698 = vunpack.c.l.b16 %v3174
    %v3699 = vunpack.c.l.b16 %v3175
    %v3700 = vunpack.c.h.b16 %v3175
    %v3701 = vunpack.c.l.b16 %v3176
    %v3702 = vunpack.c.l.b16 %v3177
    %v3703 = vunpack.c.h.b16 %v3177
    %v3704 = vunpack.c.l.b16 %v3178
    %v3705 = vunpack.c.l.b16 %v3179
    %v3706 = vunpack.c.h.b16 %v3179
    %v3707 = vunpack.c.l.b16 %v3180
    %v3708 = vunpack.c.l.b16 %v3181
    %v3709 = vunpack.c.h.b16 %v3181
    %v3710 = vunpack.c.l.b16 %v3182
    %v3711 = vunpack.c.l.b16 %v3183
    %v3712 = vunpack.c.h.b16 %v3183
    %v3713 = vunpack.c.l.b16 %v3184
    %v3714 = vunpack.c.l.b16 %v3185
    %v3715 = vunpack.c.h.b16 %v3185
    %v3716 = vunpack.c.l.b16 %v3186
    %v3717 = vunpack.c.l.b16 %v3187
    %v3718 = vunpack.c.h.b16 %v3187
    %v3719 = vunpack.c.l.b16 %v3188
    %v3720 = vunpack.c.l.b16 %v3189
    %v3721 = vunpack.c.h.b16 %v3189
    %v3722 = vunpack.c.l.b16 %v3190
    %v3723 = vunpack.c.l.b16 %v3191
    %v3724 = vunpack.c.h.b16 %v3191
    %v3725 = vunpack.c.l.b16 %v3192
    %v3726 = vunpack.c.l.b16 %v3193
    %v3727 = vunpack.c.h.b16 %v3193
    %v3728 = vunpack.c.l.b16 %v3194
    %v3729 = vunpack.c.l.b16 %v3195
    %v3730 = vunpack.c.h.b16 %v3195
    %v3731 = vunpack.c.l.b16 %v3196
    %v3732 = vunpack.c.l.b16 %v3197
    %v3733 = vunpack.c.h.b16 %v3197
    %v3734 = vunpack.c.l.b16 %v3198
    %v3735 = vunpack.c.l.b16 %v3199
    %v3736 = vunpack.c.h.b16 %v3199
    %v3737 = vunpack.c.l.b16 %v3200
    %v3738 = vunpack.c.l.b16 %v3201
    %v3739 = vunpack.c.h.b16 %v3201
    %v3740 = vunpack.c.l.b16 %v3202
    %v3741 = vunpack.c.l.b16 %v3203
    %v3742 = vunpack.c.h.b16 %v3203
    %v3743 = vunpack.c.l.b16 %v3204
    %v3744 = vunpack.c.l.b16 %v3205
    %v3745 = vunpack.c.h.b16 %v3205
    %v3746 = vunpack.c.l.b16 %v3206
    %v3747 = vunpack.c.l.b16 %v3207
    %v3748 = vunpack.c.h.b16 %v3207
    %v3749 = vunpack.c.l.b16 %v3208
    %v3750 = vunpack.c.l.b16 %v3209
    %v3751 = vunpack.c.h.b16 %v3209
    %v3752 = vunpack.c.l.b16 %v3210
    %v3753 = vunpack.c.l.b16 %v3211
    %v3754 = vunpack.c.h.b16 %v3211
    %v3755 = vunpack.c.l.b16 %v3212
    %v3756 = vunpack.c.l.b16 %v3213
    %v3757 = vunpack.c.h.b16 %v3213
    %v3758 = vunpack.c.l.b16 %v3214
    %v3759 = vunpack.c.l.b16 %v3215
    %v3760 = vunpack.c.h.b16 %v3215
    %v3761 = vunpack.c.l.b16 %v3216
    %v3762 = vunpack.c.l.b16 %v3217
    %v3763 = vunpack.c.h.b16 %v3217
    %v3764 = vunpack.c.l.b16 %v3218
    %v3765 = vunpack.c.l.b16 %v3219
    %v3766 = vunpack.c.h.b16 %v3219
    %v3767 = vunpack.c.l.b16 %v3220
    %v3768 = vunpack.c.l.b16 %v3221
    %v3769 = vunpack.c.h.b16 %v3221
    %v3770 = vunpack.c.l.b16 %v3222
    %v3771 = vunpack.c.l.b16 %v3223
    %v3772 = vunpack.c.h.b16 %v3223
    %v3773 = vunpack.c.l.b16 %v3224
    %v3774 = vunpack.c.l.b16 %v3225
    %v3775 = vunpack.c.h.b16 %v3225
    %v3776 = vunpack.c.l.b16 %v3226
    %v3777 = vunpack.c.l.b16 %v3227
    %v3778 = vunpack.c.h.b16 %v3227
    %v3779 = vunpack.c.l.b16 %v3228
    %v3780 = vunpack.c.l.b16 %v3229
    %v3781 = vunpack.c.h.b16 %v3229
    %v3782 = vunpack.c.l.b16 %v3230
    %v3783 = vunpack.c.l.b16 %v3231
    %v3784 = vunpack.c.h.b16 %v3231
    %v3785 = vunpack.c.l.b16 %v3232
    %v3786 = vunpack.c.l.b16 %v3233
    %v3787 = vunpack.c.h.b16 %v3233
    %v3788 = vunpack.c.l.b16 %v3234
    %v3789 = vunpack.c.l.b16 %v3235
    %v3790 = vunpack.c.h.b16 %v3235
    %v3791 = vunpack.c.l.b16 %v3236
    %v3792 = vunpack.c.l.b16 %v3237
    %v3793 = vunpack.c.h.b16 %v3237
    %v3794 = vunpack.c.l.b16 %v3238
    %v3795 = vunpack.c.l.b16 %v3239
    %v3796 = vunpack.c.h.b16 %v3239
    %v3797 = vunpack.c.l.b16 %v3240
    %v3798 = vunpack.c.l.b16 %v3241
    %v3799 = vunpack.c.h.b16 %v3241
    %v3800 = vunpack.c.l.b16 %v3242
    %v3801 = vunpack.c.l.b16 %v3243
    %v3802 = vunpack.c.h.b16 %v3243
    %v3803 = vunpack.c.l.b16 %v3244
    %v3804 = vunpack.c.l.b16 %v3245
    %v3805 = vunpack.c.h.b16 %v3245
    %v3806 = vunpack.c.l.b16 %v3246
    %v3807 = vunpack.c.l.b16 %v3247
    %v3808 = vunpack.c.h.b16 %v3247
    %v3809 = vunpack.c.l.b16 %v3248
    %v3810 = vunpack.c.l.b16 %v3249
    %v3811 = vunpack.c.h.b16 %v3249
    %v3812 = vunpack.c.l.b16 %v3250
    %v3813 = vunpack.c.l.b16 %v3251
    %v3814 = vunpack.c.h.b16 %v3251
    %v3815 = vunpack.c.l.b16 %v3252
    %v3816 = vunpack.c.l.b16 %v3253
    %v3817 = vunpack.c.h.b16 %v3253
    %v3818 = vunpack.c.l.b16 %v3254
    %v3819 = vunpack.c.l.b16 %v3255
    %v3820 = vunpack.c.h.b16 %v3255
    %v3821 = vunpack.c.l.b16 %v3256
    %v3822 = vunpack.c.l.b16 %v3257
    %v3823 = vunpack.c.h.b16 %v3257
    %v3824 = vunpack.c.l.b16 %v3258
    %v3825 = vunpack.c.l.b16 %v3259
    %v3826 = vunpack.c.h.b16 %v3259
    %v3827 = vunpack.c.l.b16 %v3260
    %v3828 = vunpack.c.l.b16 %v3261
    %v3829 = vunpack.c.h.b16 %v3261
    %v3830 = vunpack.c.l.b16 %v3262
    %v3831 = vunpack.c.l.b16 %v3263
    %v3832 = vunpack.c.h.b16 %v3263
    %v3833 = vunpack.c.l.b16 %v3264
    %v3834 = vunpack.c.l.b16 %v3265
    %v3835 = vunpack.c.h.b16 %v3265
    %v3836 = vunpack.c.l.b16 %v3266
    %v3837 = vunpack.c.l.b16 %v3267
    %v3838 = vunpack.c.h.b16 %v3267
    %v3839 = vunpack.c.l.b16 %v3268
    %v3840 = vunpack.c.l.b16 %v3269
    %v3841 = vunpack.c.h.b16 %v3269
    %v3842 = vunpack.c.l.b16 %v3270
    %v3843 = vunpack.c.l.b16 %v3271
    %v3844 = vunpack.c.h.b16 %v3271
    %v3845 = vunpack.c.l.b16 %v3272
    %v3846 = vunpack.c.l.b16 %v3273
    %v3847 = vunpack.c.h.b16 %v3273
    %v3848 = vunpack.c.l.b16 %v3274
    %v3849 = vunpack.c.l.b16 %v3275
    %v3850 = vunpack.c.h.b16 %v3275
    %v3851 = vunpack.c.l.b16 %v3276
    %v3852 = vunpack.c.l.b16 %v3277
    %v3853 = vunpack.c.h.b16 %v3277
    %v3854 = vunpack.c.l.b16 %v3278
    %v3855 = vunpack.c.l.b16 %v3279
    %v3856 = vunpack.c.h.b16 %v3279
    %v3857 = vunpack.c.l.b16 %v3280
    %v3858 = vpack.c.b16 %v3525, %v3522
    %v3859 = vpack.c.b16 %v3526, %v3523
    %v3860 = vpack.c.b16 %v3527, %v3524
    %v3861 = vpack.c.b16 %v3531, %v3528
    %v3862 = vpack.c.b16 %v3532, %v3529
    %v3863 = vpack.c.b16 %v3533, %v3530
    %v3864 = vpack.c.b16 %v3537, %v3534
    %v3865 = vpack.c.b16 %v3538, %v3535
    %v3866 = vpack.c.b16 %v3539, %v3536
    %v3867 = vpack.c.b16 %v3543, %v3540
    %v3868 = vpack.c.b16 %v3544, %v3541
    %v3869 = vpack.c.b16 %v3545, %v3542
    %v3870 = vpack.c.b16 %v3549, %v3546
    %v3871 = vpack.c.b16 %v3550, %v3547
    %v3872 = vpack.c.b16 %v3551, %v3548
    %v3873 = vpack.c.b16 %v3555, %v3552
    %v3874 = vpack.c.b16 %v3556, %v3553
    %v3875 = vpack.c.b16 %v3557, %v3554
    %v3876 = vpack.c.b16 %v3561, %v3558
    %v3877 = vpack.c.b16 %v3562, %v3559
    %v3878 = vpack.c.b16 %v3563, %v3560
    %v3879 = vpack.c.b16 %v3567, %v3564
    %v3880 = vpack.c.b16 %v3568, %v3565
    %v3881 = vpack.c.b16 %v3569, %v3566
    %v3882 = vpack.c.b16 %v3573, %v3570
    %v3883 = vpack.c.b16 %v3574, %v3571
    %v3884 = vpack.c.b16 %v3575, %v3572
    %v3885 = vpack.c.b16 %v3579, %v3576
    %v3886 = vpack.c.b16 %v3580, %v3577
    %v3887 = vpack.c.b16 %v3581, %v3578
    %v3888 = vpack.c.b16 %v3585, %v3582
    %v3889 = vpack.c.b16 %v3586, %v3583
    %v3890 = vpack.c.b16 %v3587, %v3584
    %v3891 = vpack.c.b16 %v3591, %v3588
    %v3892 = vpack.c.b16 %v3592, %v3589
    %v3893 = vpack.c.b16 %v3593, %v3590
    %v3894 = vpack.c.b16 %v3597, %v3594
    %v3895 = vpack.c.b16 %v3598, %v3595
    %v3896 = vpack.c.b16 %v3599, %v3596
    %v3897 = vpack.c.b16 %v3603, %v3600
    %v3898 = vpack.c.b16 %v3604, %v3601
    %v3899 = vpack.c.b16 %v3605, %v3602
    %v3900 = vpack.c.b16 %v3609, %v3606
    %v3901 = vpack.c.b16 %v3610, %v3607
    %v3902 = vpack.c.b16 %v3611, %v3608
    %v3903 = vpack.c.b16 %v3615, %v3612
    %v3904 = vpack.c.b16 %v3616, %v3613
    %v3905 = vpack.c.b16 %v3617, %v3614
    %v3906 = vpack.c.b16 %v3621, %v3618
    %v3907 = vpack.c.b16 %v3622, %v3619
    %v3908 = vpack.c.b16 %v3623, %v3620
    %v3909 = vpack.c.b16 %v3627, %v3624
    %v3910 = vpack.c.b16 %v3628, %v3625
    %v3911 = vpack.c.b16 %v3629, %v3626
    %v3912 = vpack.c.b16 %v3633, %v3630
    %v3913 = vpack.c.b16 %v3634, %v3631
    %v3914 = vpack.c.b16 %v3635, %v3632
    %v3915 = vpack.c.b16 %v3639, %v3636
    %v3916 = vpack.c.b16 %v3640, %v3637
    %v3917 = vpack.c.b16 %v3641, %v3638
    %v3918 = vpack.c.b16 %v3645, %v3642
    %v3919 = vpack.c.b16 %v3646, %v3643
    %v3920 = vpack.c.b16 %v3647, %v3644
    %v3921 = vpack.c.b16 %v3651, %v3648
    %v3922 = vpack.c.b16 %v3652, %v3649
    %v3923 = vpack.c.b16 %v3653, %v3650
    %v3924 = vpack.c.b16 %v3657, %v3654
    %v3925 = vpack.c.b16 %v3658, %v3655
    %v3926 = vpack.c.b16 %v3659, %v3656
    %v3927 = vpack.c.b16 %v3663, %v3660
    %v3928 = vpack.c.b16 %v3664, %v3661
    %v3929 = vpack.c.b16 %v3665, %v3662
    %v3930 = vpack.c.b16 %v3669, %v3666
    %v3931 = vpack.c.b16 %v3670, %v3667
    %v3932 = vpack.c.b16 %v3671, %v3668
    %v3933 = vpack.c.b16 %v3675, %v3672
    %v3934 = vpack.c.b16 %v3676, %v3673
    %v3935 = vpack.c.b16 %v3677, %v3674
    %v3936 = vpack.c.b16 %v3681, %v3678
    %v3937 = vpack.c.b16 %v3682, %v3679
    %v3938 = vpack.c.b16 %v3683, %v3680
    %v3939 = vpack.c.b16 %v3687, %v3684
    %v3940 = vpack.c.b16 %v3688, %v3685
    %v3941 = vpack.c.b16 %v3689, %v3686
    %v3942 = vpack.c.b16 %v3693, %v3690
    %v3943 = vpack.c.b16 %v3694, %v3691
    %v3944 = vpack.c.b16 %v3695, %v3692
    %v3945 = vpack.c.b16 %v3699, %v3696
    %v3946 = vpack.c.b16 %v3700, %v3697
    %v3947 = vpack.c.b16 %v3701, %v3698
    %v3948 = vpack.c.b16 %v3705, %v3702
    %v3949 = vpack.c.b16 %v3706, %v3703
    %v3950 = vpack.c.b16 %v3707, %v3704
    %v3951 = vpack.c.b16 %v3711, %v3708
    %v3952 = vpack.c.b16 %v3712, %v3709
    %v3953 = vpack.c.b16 %v3713, %v3710
    %v3954 = vpack.c.b16 %v3717, %v3714
    %v3955 = vpack.c.b16 %v3718, %v3715
    %v3956 = vpack.c.b16 %v3719, %v3716
    %v3957 = vpack.c.b16 %v3723, %v3720
    %v3958 = vpack.c.b16 %v3724, %v3721
    %v3959 = vpack.c.b16 %v3725, %v3722
    %v3960 = vpack.c.b16 %v3729, %v3726
    %v3961 = vpack.c.b16 %v3730, %v3727
    %v3962 = vpack.c.b16 %v3731, %v3728
    %v3963 = vpack.c.b16 %v3735, %v3732
    %v3964 = vpack.c.b16 %v3736, %v3733
    %v3965 = vpack.c.b16 %v3737, %v3734
    %v3966 = vpack.c.b16 %v3741, %v3738
    %v3967 = vpack.c.b16 %v3742, %v3739
    %v3968 = vpack.c.b16 %v3743, %v3740
    %v3969 = vpack.c.b16 %v3747, %v3744
    %v3970 = vpack.c.b16 %v3748, %v3745
    %v3971 = vpack.c.b16 %v3749, %v3746
    %v3972 = vpack.c.b16 %v3753, %v3750
    %v3973 = vpack.c.b16 %v3754, %v3751
    %v3974 = vpack.c.b16 %v3755, %v3752
    %v3975 = vpack.c.b16 %v3759, %v3756
    %v3976 = vpack.c.b16 %v3760, %v3757
    %v3977 = vpack.c.b16 %v3761, %v3758
    %v3978 = vpack.c.b16 %v3765, %v3762
    %v3979 = vpack.c.b16 %v3766, %v3763
    %v3980 = vpack.c.b16 %v3767, %v3764
    %v3981 = vpack.c.b16 %v3771, %v3768
    %v3982 = vpack.c.b16 %v3772, %v3769
    %v3983 = vpack.c.b16 %v3773, %v3770
    %v3984 = vpack.c.b16 %v3777, %v3774
    %v3985 = vpack.c.b16 %v3778, %v3775
    %v3986 = vpack.c.b16 %v3779, %v3776
    %v3987 = vpack.c.b16 %v3783, %v3780
    %v3988 = vpack.c.b16 %v3784, %v3781
    %v3989 = vpack.c.b16 %v3785, %v3782
    %v3990 = vpack.c.b16 %v3789, %v3786
    %v3991 = vpack.c.b16 %v3790, %v3787
    %v3992 = vpack.c.b16 %v3791, %v3788
    %v3993 = vpack.c.b16 %v3795, %v3792
    %v3994 = vpack.c.b16 %v3796, %v3793
    %v3995 = vpack.c.b16 %v3797, %v3794
    %v3996 = vpack.c.b16 %v3801, %v3798
    %v3997 = vpack.c.b16 %v3802, %v3799
    %v3998 = vpack.c.b16 %v3803, %v3800
    %v3999 = vpack.c.b16 %v3807, %v3804
    %v4000 = vpack.c.b16 %v3808, %v3805
    %v4001 = vpack.c.b16 %v3809, %v3806
    %v4002 = vpack.c.b16 %v3813, %v3810
    %v4003 = vpack.c.b16 %v3814, %v3811
    %v4004 = vpack.c.b16 %v3815, %v3812
    %v4005 = vpack.c.b16 %v3819, %v3816
    %v4006 = vpack.c.b16 %v3820, %v3817
    %v4007 = vpack.c.b16 %v3821, %v3818
    %v4008 = vpack.c.b16 %v3825, %v3822
    %v4009 = vpack.c.b16 %v3826, %v3823
    %v4010 = vpack.c.b16 %v3827, %v3824
    %v4011 = vpack.c.b16 %v3831, %v3828
    %v4012 = vpack.c.b16 %v3832, %v3829
    %v4013 = vpack.c.b16 %v3833, %v3830
    %v4014 = vpack.c.b16 %v3837, %v3834
    %v4015 = vpack.c.b16 %v3838, %v3835
    %v4016 = vpack.c.b16 %v3839, %v3836
    %v4017 = vpack.c.b16 %v3843, %v3840
    %v4018 = vpack.c.b16 %v3844, %v3841
    %v4019 = vpack.c.b16 %v3845, %v3842
    %v4020 = vpack.c.b16 %v3849, %v3846
    %v4021 = vpack.c.b16 %v3850, %v3847
    %v4022 = vpack.c.b16 %v3851, %v3848
    %v4023 = vpack.c.b16 %v3855, %v3852
    %v4024 = vpack.c.b16 %v3856, %v3853
    %v4025 = vpack.c.b16 %v3857, %v3854
    %4194 = vmatprep.subr.bf16.mxu0 %v3859
    %4195 = vmatpush1.bf16.msra.mxu0 %v3858
    %4196 = vmatprep.subr.bf16.mxu0 %v3862
    %4197 = vmatpush1.bf16.msra.mxu0 %v3861
    %4198 = vmatprep.subr.bf16.mxu0 %v3865
    %4199 = vmatpush1.bf16.msra.mxu0 %v3864
    %4200 = vmatprep.subr.bf16.mxu0 %v3868
    %4201 = vmatpush1.bf16.msra.mxu0 %v3867
    %4202 = vmatprep.subr.bf16.mxu0 %v3871
    %4203 = vmatpush1.bf16.msra.mxu0 %v3870
    %4204 = vmatprep.subr.bf16.mxu0 %v3874
    %4205 = vmatpush1.bf16.msra.mxu0 %v3873
    %4206 = vmatprep.subr.bf16.mxu0 %v3877
    %4207 = vmatpush1.bf16.msra.mxu0 %v3876
    %4208 = vmatprep.subr.bf16.mxu0 %v3880
    %4209 = vmatpush1.bf16.msra.mxu0 %v3879
    %4210 = vmatprep.subr.bf16.mxu0 %v3883
    %4211 = vmatpush1.bf16.msra.mxu0 %v3882
    %4212 = vmatprep.subr.bf16.mxu0 %v3886
    %4213 = vmatpush1.bf16.msra.mxu0 %v3885
    %4214 = vmatprep.subr.bf16.mxu0 %v3889
    %4215 = vmatpush1.bf16.msra.mxu0 %v3888
    %4216 = vmatprep.subr.bf16.mxu0 %v3892
    %4217 = vmatpush1.bf16.msra.mxu0 %v3891
    %4218 = vmatprep.subr.bf16.mxu0 %v3895
    %4219 = vmatpush1.bf16.msra.mxu0 %v3894
    %4220 = vmatprep.subr.bf16.mxu0 %v3898
    %4221 = vmatpush1.bf16.msra.mxu0 %v3897
    %4222 = vmatprep.subr.bf16.mxu0 %v3901
    %4223 = vmatpush1.bf16.msra.mxu0 %v3900
    %4224 = vmatprep.subr.bf16.mxu0 %v3904
    %4225 = vmatpush1.bf16.msra.mxu0 %v3903
    %4226 = vmatprep.mubr.bf16.mxu0 %v3051
    %4227 = vmatmul.mubr.bf16.gmra.mrb[0].mxu0 %v3050
    %v4228 = vpop.f32.mrb[0].mxu0
    %v4229 = vadd.f32 %v3286, %v4228
    %v4230 = vpop.f32.mrb[0].mxu0
    %v4231 = vadd.f32 %v3290, %v4230
    %v4232 = vpop.f32.mrb[0].mxu0
    %v4233 = vpop.f32.mrb[0].mxu0
    %4234 = vdwg.mxu0
    %4235 = vmatprep.subr.bf16.mxu0 %v3907
    %4236 = vmatpush1.bf16.msra.mxu0 %v3906
    %4237 = vmatprep.subr.bf16.mxu0 %v3910
    %4238 = vmatpush1.bf16.msra.mxu0 %v3909
    %4239 = vmatprep.subr.bf16.mxu0 %v3913
    %4240 = vmatpush1.bf16.msra.mxu0 %v3912
    %4241 = vmatprep.subr.bf16.mxu0 %v3916
    %4242 = vmatpush1.bf16.msra.mxu0 %v3915
    %4243 = vmatprep.subr.bf16.mxu0 %v3919
    %4244 = vmatpush1.bf16.msra.mxu0 %v3918
    %4245 = vmatprep.subr.bf16.mxu0 %v3922
    %4246 = vmatpush1.bf16.msra.mxu0 %v3921
    %4247 = vmatprep.subr.bf16.mxu0 %v3925
    %4248 = vmatpush1.bf16.msra.mxu0 %v3924
    %4249 = vmatprep.subr.bf16.mxu0 %v3928
    %4250 = vmatpush1.bf16.msra.mxu0 %v3927
    %4251 = vmatprep.subr.bf16.mxu0 %v3931
    %4252 = vmatpush1.bf16.msra.mxu0 %v3930
    %4253 = vmatprep.subr.bf16.mxu0 %v3934
    %4254 = vmatpush1.bf16.msra.mxu0 %v3933
    %4255 = vmatprep.subr.bf16.mxu0 %v3937
    %4256 = vmatpush1.bf16.msra.mxu0 %v3936
    %4257 = vmatprep.subr.bf16.mxu0 %v3940
    %4258 = vmatpush1.bf16.msra.mxu0 %v3939
    %4259 = vmatprep.subr.bf16.mxu0 %v3943
    %4260 = vmatpush1.bf16.msra.mxu0 %v3942
    %4261 = vmatprep.subr.bf16.mxu0 %v3946
    %4262 = vmatpush1.bf16.msra.mxu0 %v3945
    %4263 = vmatprep.subr.bf16.mxu0 %v3949
    %4264 = vmatpush1.bf16.msra.mxu0 %v3948
    %4265 = vmatprep.subr.bf16.mxu0 %v3952
    %4266 = vmatpush1.bf16.msra.mxu0 %v3951
    %4267 = vmatprep.mubr.bf16.mxu0 %v3053
    %4268 = vmatmul.mubr.bf16.gmra.mrb[0].mxu0 %v3052
    %v4269 = vpop.f32.mrb[0].mxu0
    %v4270 = vadd.f32 %v4229, %v4269
    %v4271 = vpop.f32.mrb[0].mxu0
    %v4272 = vadd.f32 %v4231, %v4271
    %v4273 = vpop.f32.mrb[0].mxu0
    %v4274 = vpop.f32.mrb[0].mxu0
    %4275 = vdwg.mxu0
    %4276 = vmatprep.subr.bf16.mxu0 %v3955
    %4277 = vmatpush1.bf16.msra.mxu0 %v3954
    %4278 = vmatprep.subr.bf16.mxu0 %v3958
    %4279 = vmatpush1.bf16.msra.mxu0 %v3957
    %4280 = vmatprep.subr.bf16.mxu0 %v3961
    %4281 = vmatpush1.bf16.msra.mxu0 %v3960
    %4282 = vmatprep.subr.bf16.mxu0 %v3964
    %4283 = vmatpush1.bf16.msra.mxu0 %v3963
    %4284 = vmatprep.subr.bf16.mxu0 %v3967
    %4285 = vmatpush1.bf16.msra.mxu0 %v3966
    %4286 = vmatprep.subr.bf16.mxu0 %v3970
    %4287 = vmatpush1.bf16.msra.mxu0 %v3969
    %4288 = vmatprep.subr.bf16.mxu0 %v3973
    %4289 = vmatpush1.bf16.msra.mxu0 %v3972
    %4290 = vmatprep.subr.bf16.mxu0 %v3976
    %4291 = vmatpush1.bf16.msra.mxu0 %v3975
    %4292 = vmatprep.subr.bf16.mxu0 %v3979
    %4293 = vmatpush1.bf16.msra.mxu0 %v3978
    %4294 = vmatprep.subr.bf16.mxu0 %v3982
    %4295 = vmatpush1.bf16.msra.mxu0 %v3981
    %4296 = vmatprep.subr.bf16.mxu0 %v3985
    %4297 = vmatpush1.bf16.msra.mxu0 %v3984
    %4298 = vmatprep.subr.bf16.mxu0 %v3988
    %4299 = vmatpush1.bf16.msra.mxu0 %v3987
    %4300 = vmatprep.subr.bf16.mxu0 %v3991
    %4301 = vmatpush1.bf16.msra.mxu0 %v3990
    %4302 = vmatprep.subr.bf16.mxu0 %v3994
    %4303 = vmatpush1.bf16.msra.mxu0 %v3993
    %4304 = vmatprep.subr.bf16.mxu0 %v3997
    %4305 = vmatpush1.bf16.msra.mxu0 %v3996
    %4306 = vmatprep.subr.bf16.mxu0 %v4000
    %4307 = vmatpush1.bf16.msra.mxu0 %v3999
    %4308 = vmatprep.mubr.bf16.mxu0 %v3055
    %4309 = vmatmul.mubr.bf16.gmra.mrb[0].mxu0 %v3054
    %v4310 = vpop.f32.mrb[0].mxu0
    %v4311 = vadd.f32 %v4270, %v4310
    %v4312 = vpop.f32.mrb[0].mxu0
    %v4313 = vadd.f32 %v4272, %v4312
    %v4314 = vpop.f32.mrb[0].mxu0
    %v4315 = vpop.f32.mrb[0].mxu0
    %4316 = vdwg.mxu0
    %4317 = vmatprep.subr.bf16.mxu0 %v4003
    %4318 = vmatpush1.bf16.msra.mxu0 %v4002
    %4319 = vmatprep.subr.bf16.mxu0 %v4006
    %4320 = vmatpush1.bf16.msra.mxu0 %v4005
    %4321 = vmatprep.subr.bf16.mxu0 %v4009
    %4322 = vmatpush1.bf16.msra.mxu0 %v4008
    %4323 = vmatprep.subr.bf16.mxu0 %v4012
    %4324 = vmatpush1.bf16.msra.mxu0 %v4011
    %4325 = vmatprep.subr.bf16.mxu0 %v4015
    %4326 = vmatpush1.bf16.msra.mxu0 %v4014
    %4327 = vmatprep.subr.bf16.mxu0 %v4018
    %4328 = vmatpush1.bf16.msra.mxu0 %v4017
    %4329 = vmatprep.subr.bf16.mxu0 %v4021
    %4330 = vmatpush1.bf16.msra.mxu0 %v4020
    %4331 = vmatprep.subr.bf16.mxu0 %v4024
    %4332 = vmatpush1.bf16.msra.mxu0 %v4023
    %4333 = vmatprep.subr.bf16.mxu0 0
    %4334 = vmatpush1.bf16.msra.mxu0 0
    %4335 = vmatprep.subr.bf16.mxu0 0
    %4336 = vmatpush1.bf16.msra.mxu0 0
    %4337 = vmatprep.subr.bf16.mxu0 0
    %4338 = vmatpush1.bf16.msra.mxu0 0
    %4339 = vmatprep.subr.bf16.mxu0 0
    %4340 = vmatpush1.bf16.msra.mxu0 0
    %4341 = vmatprep.subr.bf16.mxu0 0
    %4342 = vmatpush1.bf16.msra.mxu0 0
    %4343 = vmatprep.subr.bf16.mxu0 0
    %4344 = vmatpush1.bf16.msra.mxu0 0
    %4345 = vmatprep.subr.bf16.mxu0 0
    %4346 = vmatpush1.bf16.msra.mxu0 0
    %4347 = vmatprep.subr.bf16.mxu0 0
    %4348 = vmatpush1.bf16.msra.mxu0 0
    %4349 = vmatprep.mubr.bf16.mxu0 0
    %4350 = vmatmul.mubr.bf16.gmra.mrb[0].mxu0 %v3056
    %v4351 = vpop.f32.mrb[0].mxu0
    %v4352 = vadd.f32 %v4311, %v4351
    %v4353 = vpop.f32.mrb[0].mxu0
    %v4354 = vadd.f32 %v4313, %v4353
    %v4355 = vpop.f32.mrb[0].mxu0
    %v4356 = vpop.f32.mrb[0].mxu0
    %4357 = vdwg.mxu0
    %4358 = vmatprep.subr.bf16.mxu0 0
    %4359 = vmatpush1.bf16.msra.mxu0 %v3860
    %4360 = vmatprep.subr.bf16.mxu0 0
    %4361 = vmatpush1.bf16.msra.mxu0 %v3863
    %4362 = vmatprep.subr.bf16.mxu0 0
    %4363 = vmatpush1.bf16.msra.mxu0 %v3866
    %4364 = vmatprep.subr.bf16.mxu0 0
    %4365 = vmatpush1.bf16.msra.mxu0 %v3869
    %4366 = vmatprep.subr.bf16.mxu0 0
    %4367 = vmatpush1.bf16.msra.mxu0 %v3872
    %4368 = vmatprep.subr.bf16.mxu0 0
    %4369 = vmatpush1.bf16.msra.mxu0 %v3875
    %4370 = vmatprep.subr.bf16.mxu0 0
    %4371 = vmatpush1.bf16.msra.mxu0 %v3878
    %4372 = vmatprep.subr.bf16.mxu0 0
    %4373 = vmatpush1.bf16.msra.mxu0 %v3881
    %4374 = vmatprep.subr.bf16.mxu0 0
    %4375 = vmatpush1.bf16.msra.mxu0 %v3884
    %4376 = vmatprep.subr.bf16.mxu0 0
    %4377 = vmatpush1.bf16.msra.mxu0 %v3887
    %4378 = vmatprep.subr.bf16.mxu0 0
    %4379 = vmatpush1.bf16.msra.mxu0 %v3890
    %4380 = vmatprep.subr.bf16.mxu0 0
    %4381 = vmatpush1.bf16.msra.mxu0 %v3893
    %4382 = vmatprep.subr.bf16.mxu0 0
    %4383 = vmatpush1.bf16.msra.mxu0 %v3896
    %4384 = vmatprep.subr.bf16.mxu0 0
    %4385 = vmatpush1.bf16.msra.mxu0 %v3899
    %4386 = vmatprep.subr.bf16.mxu0 0
    %4387 = vmatpush1.bf16.msra.mxu0 %v3902
    %4388 = vmatprep.subr.bf16.mxu0 0
    %4389 = vmatpush1.bf16.msra.mxu0 %v3905
    %4390 = vmatprep.mubr.bf16.mxu0 %v3051
    %4391 = vmatmul.mubr.bf16.gmra.mrb[0].mxu0 %v3050
    %v4392 = vpop.f32.mrb[0].mxu0
    %v4393 = vadd.f32 %v3294, %v4392
    %v4394 = vpop.f32.mrb[0].mxu0
    %v4395 = vpop.f32.mrb[0].mxu0
    %v4396 = vpop.f32.mrb[0].mxu0
    %4397 = vdwg.mxu0
    %4398 = vmatprep.subr.bf16.mxu0 0
    %4399 = vmatpush1.bf16.msra.mxu0 %v3908
    %4400 = vmatprep.subr.bf16.mxu0 0
    %4401 = vmatpush1.bf16.msra.mxu0 %v3911
    %4402 = vmatprep.subr.bf16.mxu0 0
    %4403 = vmatpush1.bf16.msra.mxu0 %v3914
    %4404 = vmatprep.subr.bf16.mxu0 0
    %4405 = vmatpush1.bf16.msra.mxu0 %v3917
    %4406 = vmatprep.subr.bf16.mxu0 0
    %4407 = vmatpush1.bf16.msra.mxu0 %v3920
    %4408 = vmatprep.subr.bf16.mxu0 0
    %4409 = vmatpush1.bf16.msra.mxu0 %v3923
    %4410 = vmatprep.subr.bf16.mxu0 0
    %4411 = vmatpush1.bf16.msra.mxu0 %v3926
    %4412 = vmatprep.subr.bf16.mxu0 0
    %4413 = vmatpush1.bf16.msra.mxu0 %v3929
    %4414 = vmatprep.subr.bf16.mxu0 0
    %4415 = vmatpush1.bf16.msra.mxu0 %v3932
    %4416 = vmatprep.subr.bf16.mxu0 0
    %4417 = vmatpush1.bf16.msra.mxu0 %v3935
    %4418 = vmatprep.subr.bf16.mxu0 0
    %4419 = vmatpush1.bf16.msra.mxu0 %v3938
    %4420 = vmatprep.subr.bf16.mxu0 0
    %4421 = vmatpush1.bf16.msra.mxu0 %v3941
    %4422 = vmatprep.subr.bf16.mxu0 0
    %4423 = vmatpush1.bf16.msra.mxu0 %v3944
    %4424 = vmatprep.subr.bf16.mxu0 0
    %4425 = vmatpush1.bf16.msra.mxu0 %v3947
    %4426 = vmatprep.subr.bf16.mxu0 0
    %4427 = vmatpush1.bf16.msra.mxu0 %v3950
    %4428 = vmatprep.subr.bf16.mxu0 0
    %4429 = vmatpush1.bf16.msra.mxu0 %v3953
    %4430 = vmatprep.mubr.bf16.mxu0 %v3053
    %4431 = vmatmul.mubr.bf16.gmra.mrb[0].mxu0 %v3052
    %v4432 = vpop.f32.mrb[0].mxu0
    %v4433 = vadd.f32 %v4393, %v4432
    %v4434 = vpop.f32.mrb[0].mxu0
    %v4435 = vpop.f32.mrb[0].mxu0
    %v4436 = vpop.f32.mrb[0].mxu0
    %4437 = vdwg.mxu0
    %4438 = vmatprep.subr.bf16.mxu0 0
    %4439 = vmatpush1.bf16.msra.mxu0 %v3956
    %4440 = vmatprep.subr.bf16.mxu0 0
    %4441 = vmatpush1.bf16.msra.mxu0 %v3959
    %4442 = vmatprep.subr.bf16.mxu0 0
    %4443 = vmatpush1.bf16.msra.mxu0 %v3962
    %4444 = vmatprep.subr.bf16.mxu0 0
    %4445 = vmatpush1.bf16.msra.mxu0 %v3965
    %4446 = vmatprep.subr.bf16.mxu0 0
    %4447 = vmatpush1.bf16.msra.mxu0 %v3968
    %4448 = vmatprep.subr.bf16.mxu0 0
    %4449 = vmatpush1.bf16.msra.mxu0 %v3971
    %4450 = vmatprep.subr.bf16.mxu0 0
    %4451 = vmatpush1.bf16.msra.mxu0 %v3974
    %4452 = vmatprep.subr.bf16.mxu0 0
    %4453 = vmatpush1.bf16.msra.mxu0 %v3977
    %4454 = vmatprep.subr.bf16.mxu0 0
    %4455 = vmatpush1.bf16.msra.mxu0 %v3980
    %4456 = vmatprep.subr.bf16.mxu0 0
    %4457 = vmatpush1.bf16.msra.mxu0 %v3983
    %4458 = vmatprep.subr.bf16.mxu0 0
    %4459 = vmatpush1.bf16.msra.mxu0 %v3986
    %4460 = vmatprep.subr.bf16.mxu0 0
    %4461 = vmatpush1.bf16.msra.mxu0 %v3989
    %4462 = vmatprep.subr.bf16.mxu0 0
    %4463 = vmatpush1.bf16.msra.mxu0 %v3992
    %4464 = vmatprep.subr.bf16.mxu0 0
    %4465 = vmatpush1.bf16.msra.mxu0 %v3995
    %4466 = vmatprep.subr.bf16.mxu0 0
    %4467 = vmatpush1.bf16.msra.mxu0 %v3998
    %4468 = vmatprep.subr.bf16.mxu0 0
    %4469 = vmatpush1.bf16.msra.mxu0 %v4001
    %4470 = vmatprep.mubr.bf16.mxu0 %v3055
    %4471 = vmatmul.mubr.bf16.gmra.mrb[0].mxu0 %v3054
    %v4472 = vpop.f32.mrb[0].mxu0
    %v4473 = vadd.f32 %v4433, %v4472
    %v4474 = vpop.f32.mrb[0].mxu0
    %v4475 = vpop.f32.mrb[0].mxu0
    %v4476 = vpop.f32.mrb[0].mxu0
    %4477 = vdwg.mxu0
    %4478 = vmatprep.subr.bf16.mxu0 0
    %4479 = vmatpush1.bf16.msra.mxu0 %v4004
    %4480 = vmatprep.subr.bf16.mxu0 0
    %4481 = vmatpush1.bf16.msra.mxu0 %v4007
    %4482 = vmatprep.subr.bf16.mxu0 0
    %4483 = vmatpush1.bf16.msra.mxu0 %v4010
    %4484 = vmatprep.subr.bf16.mxu0 0
    %4485 = vmatpush1.bf16.msra.mxu0 %v4013
    %4486 = vmatprep.subr.bf16.mxu0 0
    %4487 = vmatpush1.bf16.msra.mxu0 %v4016
    %4488 = vmatprep.subr.bf16.mxu0 0
    %4489 = vmatpush1.bf16.msra.mxu0 %v4019
    %4490 = vmatprep.subr.bf16.mxu0 0
    %4491 = vmatpush1.bf16.msra.mxu0 %v4022
    %4492 = vmatprep.subr.bf16.mxu0 0
    %4493 = vmatpush1.bf16.msra.mxu0 %v4025
    %4494 = vmatprep.subr.bf16.mxu0 0
    %4495 = vmatpush1.bf16.msra.mxu0 0
    %4496 = vmatprep.subr.bf16.mxu0 0
    %4497 = vmatpush1.bf16.msra.mxu0 0
    %4498 = vmatprep.subr.bf16.mxu0 0
    %4499 = vmatpush1.bf16.msra.mxu0 0
    %4500 = vmatprep.subr.bf16.mxu0 0
    %4501 = vmatpush1.bf16.msra.mxu0 0
    %4502 = vmatprep.subr.bf16.mxu0 0
    %4503 = vmatpush1.bf16.msra.mxu0 0
    %4504 = vmatprep.subr.bf16.mxu0 0
    %4505 = vmatpush1.bf16.msra.mxu0 0
    %4506 = vmatprep.subr.bf16.mxu0 0
    %4507 = vmatpush1.bf16.msra.mxu0 0
    %4508 = vmatprep.subr.bf16.mxu0 0
    %4509 = vmatpush1.bf16.msra.mxu0 0
    %4510 = vmatprep.mubr.bf16.mxu0 0
    %4511 = vmatmul.mubr.bf16.gmra.mrb[0].mxu0 %v3056
    %v4512 = vpop.f32.mrb[0].mxu0
    %v4513 = vadd.f32 %v4473, %v4512
    %v4514 = vpop.f32.mrb[0].mxu0
    %v4515 = vpop.f32.mrb[0].mxu0
    %v4516 = vpop.f32.mrb[0].mxu0
    %4517 = vdwg.mxu0
    %v4518 = vmax.f32 %v4352, 0.0
    %v4519 = vmax.f32 %v4354, 0.0
    %v4520 = vmax.f32 %v4513, 0.0
    %v4521 = vpack.c.bf16 %v4518, %v4518
    %v4522 = vpack.c.bf16 %v4519, %v4519
    %v4523 = vpack.c.bf16 %v4520, %v4520
    %v4524 = vld [vmem:[#allocation11] sm:$0xff]
    %v4525 = vld [vmem:[#allocation11 + $0x8] sm:$0xf]
    %v4526 = vld [vmem:[#allocation11 + $0xc] sm:$0xff]
    %v4527 = vld [vmem:[#allocation11 + $0x14] sm:$0xf]
    %v4528 = vld [vmem:[#allocation11 + $0x18] sm:$0xff]
    %v4529 = vld [vmem:[#allocation11 + $0x20] sm:$0xf]
    %v4530 = vld [vmem:[#allocation11 + $0x24] sm:$0xff]
    %v4531 = vld [vmem:[#allocation11 + $0x2c] sm:$0xf]
    %v4532 = vld [vmem:[#allocation11 + $0x30] sm:$0xff]
    %v4533 = vld [vmem:[#allocation11 + $0x38] sm:$0xf]
    %v4534 = vld [vmem:[#allocation11 + $0x3c] sm:$0xff]
    %v4535 = vld [vmem:[#allocation11 + $0x44] sm:$0xf]
    %v4536 = vld [vmem:[#allocation11 + $0x48] sm:$0xff]
    %v4537 = vld [vmem:[#allocation11 + $0x50] sm:$0xf]
    %v4538 = vld [vmem:[#allocation11 + $0x54] sm:$0xff]
    %v4539 = vld [vmem:[#allocation11 + $0x5c] sm:$0xf]
    %v4540 = vld [vmem:[#allocation11 + $0x60] sm:$0xff]
    %v4541 = vld [vmem:[#allocation11 + $0x68] sm:$0xf]
    %v4542 = vld [vmem:[#allocation11 + $0x6c] sm:$0xff]
    %v4543 = vld [vmem:[#allocation11 + $0x74] sm:$0xf]
    %v4544 = vld [vmem:[#allocation11 + $0x78] sm:$0xff]
    %v4545 = vld [vmem:[#allocation11 + $0x80] sm:$0xf]
    %v4546 = vld [vmem:[#allocation11 + $0x84] sm:$0xff]
    %v4547 = vld [vmem:[#allocation11 + $0x8c] sm:$0xf]
    %v4548 = vld [vmem:[#allocation11 + $0x90] sm:$0xff]
    %v4549 = vld [vmem:[#allocation11 + $0x98] sm:$0xf]
    %v4550 = vld [vmem:[#allocation11 + $0x9c] sm:$0xff]
    %v4551 = vld [vmem:[#allocation11 + $0xa4] sm:$0xf]
    %v4552 = vld [vmem:[#allocation11 + $0xa8] sm:$0xff]
    %v4553 = vld [vmem:[#allocation11 + $0xb0] sm:$0xf]
    %v4554 = vld [vmem:[#allocation11 + $0xb4] sm:$0xff]
    %v4555 = vld [vmem:[#allocation11 + $0xbc] sm:$0xf]
    %v4556 = vld [vmem:[#allocation11 + $0xc0] sm:$0xff]
    %v4557 = vld [vmem:[#allocation11 + $0xc8] sm:$0xf]
    %v4558 = vld [vmem:[#allocation11 + $0xcc] sm:$0xff]
    %v4559 = vld [vmem:[#allocation11 + $0xd4] sm:$0xf]
    %v4560 = vld [vmem:[#allocation11 + $0xd8] sm:$0xff]
    %v4561 = vld [vmem:[#allocation11 + $0xe0] sm:$0xf]
    %v4562 = vld [vmem:[#allocation11 + $0xe4] sm:$0xff]
    %v4563 = vld [vmem:[#allocation11 + $0xec] sm:$0xf]
    %v4564 = vld [vmem:[#allocation11 + $0xf0] sm:$0xff]
    %v4565 = vld [vmem:[#allocation11 + $0xf8] sm:$0xf]
    %v4566 = vld [vmem:[#allocation11 + $0xfc] sm:$0xff]
    %v4567 = vld [vmem:[#allocation11 + $0x104] sm:$0xf]
    %v4568 = vld [vmem:[#allocation11 + $0x108] sm:$0xff]
    %v4569 = vld [vmem:[#allocation11 + $0x110] sm:$0xf]
    %v4570 = vld [vmem:[#allocation11 + $0x114] sm:$0xff]
    %v4571 = vld [vmem:[#allocation11 + $0x11c] sm:$0xf]
    %v4572 = vld [vmem:[#allocation11 + $0x120] sm:$0xff]
    %v4573 = vld [vmem:[#allocation11 + $0x128] sm:$0xf]
    %v4574 = vld [vmem:[#allocation11 + $0x12c] sm:$0xff]
    %v4575 = vld [vmem:[#allocation11 + $0x134] sm:$0xf]
    %v4576 = vld [vmem:[#allocation11 + $0x138] sm:$0xff]
    %v4577 = vld [vmem:[#allocation11 + $0x140] sm:$0xf]
    %v4578 = vld [vmem:[#allocation11 + $0x144] sm:$0xff]
    %v4579 = vld [vmem:[#allocation11 + $0x14c] sm:$0xf]
    %v4580 = vld [vmem:[#allocation11 + $0x150] sm:$0xff]
    %v4581 = vld [vmem:[#allocation11 + $0x158] sm:$0xf]
    %v4582 = vld [vmem:[#allocation11 + $0x15c] sm:$0xff]
    %v4583 = vld [vmem:[#allocation11 + $0x164] sm:$0xf]
    %v4584 = vld [vmem:[#allocation11 + $0x168] sm:$0xff]
    %v4585 = vld [vmem:[#allocation11 + $0x170] sm:$0xf]
    %v4586 = vld [vmem:[#allocation11 + $0x174] sm:$0xff]
    %v4587 = vld [vmem:[#allocation11 + $0x17c] sm:$0xf]
    %v4588 = vld [vmem:[#allocation11 + $0x180] sm:$0xff]
    %v4589 = vld [vmem:[#allocation11 + $0x188] sm:$0xf]
    %v4590 = vld [vmem:[#allocation11 + $0x18c] sm:$0xff]
    %v4591 = vld [vmem:[#allocation11 + $0x194] sm:$0xf]
    %v4592 = vld [vmem:[#allocation11 + $0x198] sm:$0xff]
    %v4593 = vld [vmem:[#allocation11 + $0x1a0] sm:$0xf]
    %v4594 = vld [vmem:[#allocation11 + $0x1a4] sm:$0xff]
    %v4595 = vld [vmem:[#allocation11 + $0x1ac] sm:$0xf]
    %v4596 = vld [vmem:[#allocation11 + $0x1b0] sm:$0xff]
    %v4597 = vld [vmem:[#allocation11 + $0x1b8] sm:$0xf]
    %v4598 = vld [vmem:[#allocation11 + $0x1bc] sm:$0xff]
    %v4599 = vld [vmem:[#allocation11 + $0x1c4] sm:$0xf]
    %v4600 = vld [vmem:[#allocation11 + $0x1c8] sm:$0xff]
    %v4601 = vld [vmem:[#allocation11 + $0x1d0] sm:$0xf]
    %v4602 = vld [vmem:[#allocation11 + $0x1d4] sm:$0xff]
    %v4603 = vld [vmem:[#allocation11 + $0x1dc] sm:$0xf]
    %v4604 = vld [vmem:[#allocation11 + $0x1e0] sm:$0xff]
    %v4605 = vld [vmem:[#allocation11 + $0x1e8] sm:$0xf]
    %v4606 = vld [vmem:[#allocation11 + $0x1ec] sm:$0xff]
    %v4607 = vld [vmem:[#allocation11 + $0x1f4] sm:$0xf]
    %v4608 = vld [vmem:[#allocation11 + $0x1f8] sm:$0xff]
    %v4609 = vld [vmem:[#allocation11 + $0x200] sm:$0xf]
    %v4610 = vld [vmem:[#allocation11 + $0x204] sm:$0xff]
    %v4611 = vld [vmem:[#allocation11 + $0x20c] sm:$0xf]
    %v4612 = vld [vmem:[#allocation11 + $0x210] sm:$0xff]
    %v4613 = vld [vmem:[#allocation11 + $0x218] sm:$0xf]
    %v4614 = vld [vmem:[#allocation11 + $0x21c] sm:$0xff]
    %v4615 = vld [vmem:[#allocation11 + $0x224] sm:$0xf]
    %v4616 = vld [vmem:[#allocation11 + $0x228] sm:$0xff]
    %v4617 = vld [vmem:[#allocation11 + $0x230] sm:$0xf]
    %v4618 = vld [vmem:[#allocation11 + $0x234] sm:$0xff]
    %v4619 = vld [vmem:[#allocation11 + $0x23c] sm:$0xf]
    %v4620 = vld [vmem:[#allocation13] sm:$0x7]
    %v4622 = vlaneseq
    %v4623 = vshrl.u32 %v4622, 7
    %v4624 = vsub.s32 0, %v4623
    %v4625 = vrot.slane %v4620, %v4624
    %v4626 = vlaneseq
    %v4627 = vshrl.u32 %v4626, 7
    %v4628 = vsub.s32 1, %v4627
    %v4629 = vrot.slane %v4620, %v4628
    %v4630 = vlaneseq
    %v4631 = vshrl.u32 %v4630, 7
    %v4632 = vsub.s32 2, %v4631
    %v4633 = vrot.slane %v4620, %v4632
    %v4733 = vunpack.c.l.b16 %v4524
    %v4734 = vunpack.c.h.b16 %v4524
    %v4735 = vunpack.c.l.b16 %v4525
    %v4736 = vunpack.c.l.b16 %v4526
    %v4737 = vunpack.c.h.b16 %v4526
    %v4738 = vunpack.c.l.b16 %v4527
    %v4739 = vunpack.c.l.b16 %v4528
    %v4740 = vunpack.c.h.b16 %v4528
    %v4741 = vunpack.c.l.b16 %v4529
    %v4742 = vunpack.c.l.b16 %v4530
    %v4743 = vunpack.c.h.b16 %v4530
    %v4744 = vunpack.c.l.b16 %v4531
    %v4745 = vunpack.c.l.b16 %v4532
    %v4746 = vunpack.c.h.b16 %v4532
    %v4747 = vunpack.c.l.b16 %v4533
    %v4748 = vunpack.c.l.b16 %v4534
    %v4749 = vunpack.c.h.b16 %v4534
    %v4750 = vunpack.c.l.b16 %v4535
    %v4751 = vunpack.c.l.b16 %v4536
    %v4752 = vunpack.c.h.b16 %v4536
    %v4753 = vunpack.c.l.b16 %v4537
    %v4754 = vunpack.c.l.b16 %v4538
    %v4755 = vunpack.c.h.b16 %v4538
    %v4756 = vunpack.c.l.b16 %v4539
    %v4757 = vunpack.c.l.b16 %v4540
    %v4758 = vunpack.c.h.b16 %v4540
    %v4759 = vunpack.c.l.b16 %v4541
    %v4760 = vunpack.c.l.b16 %v4542
    %v4761 = vunpack.c.h.b16 %v4542
    %v4762 = vunpack.c.l.b16 %v4543
    %v4763 = vunpack.c.l.b16 %v4544
    %v4764 = vunpack.c.h.b16 %v4544
    %v4765 = vunpack.c.l.b16 %v4545
    %v4766 = vunpack.c.l.b16 %v4546
    %v4767 = vunpack.c.h.b16 %v4546
    %v4768 = vunpack.c.l.b16 %v4547
    %v4769 = vunpack.c.l.b16 %v4548
    %v4770 = vunpack.c.h.b16 %v4548
    %v4771 = vunpack.c.l.b16 %v4549
    %v4772 = vunpack.c.l.b16 %v4550
    %v4773 = vunpack.c.h.b16 %v4550
    %v4774 = vunpack.c.l.b16 %v4551
    %v4775 = vunpack.c.l.b16 %v4552
    %v4776 = vunpack.c.h.b16 %v4552
    %v4777 = vunpack.c.l.b16 %v4553
    %v4778 = vunpack.c.l.b16 %v4554
    %v4779 = vunpack.c.h.b16 %v4554
    %v4780 = vunpack.c.l.b16 %v4555
    %v4781 = vunpack.c.l.b16 %v4556
    %v4782 = vunpack.c.h.b16 %v4556
    %v4783 = vunpack.c.l.b16 %v4557
    %v4784 = vunpack.c.l.b16 %v4558
    %v4785 = vunpack.c.h.b16 %v4558
    %v4786 = vunpack.c.l.b16 %v4559
    %v4787 = vunpack.c.l.b16 %v4560
    %v4788 = vunpack.c.h.b16 %v4560
    %v4789 = vunpack.c.l.b16 %v4561
    %v4790 = vunpack.c.l.b16 %v4562
    %v4791 = vunpack.c.h.b16 %v4562
    %v4792 = vunpack.c.l.b16 %v4563
    %v4793 = vunpack.c.l.b16 %v4564
    %v4794 = vunpack.c.h.b16 %v4564
    %v4795 = vunpack.c.l.b16 %v4565
    %v4796 = vunpack.c.l.b16 %v4566
    %v4797 = vunpack.c.h.b16 %v4566
    %v4798 = vunpack.c.l.b16 %v4567
    %v4799 = vunpack.c.l.b16 %v4568
    %v4800 = vunpack.c.h.b16 %v4568
    %v4801 = vunpack.c.l.b16 %v4569
    %v4802 = vunpack.c.l.b16 %v4570
    %v4803 = vunpack.c.h.b16 %v4570
    %v4804 = vunpack.c.l.b16 %v4571
    %v4805 = vunpack.c.l.b16 %v4572
    %v4806 = vunpack.c.h.b16 %v4572
    %v4807 = vunpack.c.l.b16 %v4573
    %v4808 = vunpack.c.l.b16 %v4574
    %v4809 = vunpack.c.h.b16 %v4574
    %v4810 = vunpack.c.l.b16 %v4575
    %v4811 = vunpack.c.l.b16 %v4576
    %v4812 = vunpack.c.h.b16 %v4576
    %v4813 = vunpack.c.l.b16 %v4577
    %v4814 = vunpack.c.l.b16 %v4578
    %v4815 = vunpack.c.h.b16 %v4578
    %v4816 = vunpack.c.l.b16 %v4579
    %v4817 = vunpack.c.l.b16 %v4580
    %v4818 = vunpack.c.h.b16 %v4580
    %v4819 = vunpack.c.l.b16 %v4581
    %v4820 = vunpack.c.l.b16 %v4582
    %v4821 = vunpack.c.h.b16 %v4582
    %v4822 = vunpack.c.l.b16 %v4583
    %v4823 = vunpack.c.l.b16 %v4584
    %v4824 = vunpack.c.h.b16 %v4584
    %v4825 = vunpack.c.l.b16 %v4585
    %v4826 = vunpack.c.l.b16 %v4586
    %v4827 = vunpack.c.h.b16 %v4586
    %v4828 = vunpack.c.l.b16 %v4587
    %v4829 = vunpack.c.l.b16 %v4588
    %v4830 = vunpack.c.h.b16 %v4588
    %v4831 = vunpack.c.l.b16 %v4589
    %v4832 = vunpack.c.l.b16 %v4590
    %v4833 = vunpack.c.h.b16 %v4590
    %v4834 = vunpack.c.l.b16 %v4591
    %v4835 = vunpack.c.l.b16 %v4592
    %v4836 = vunpack.c.h.b16 %v4592
    %v4837 = vunpack.c.l.b16 %v4593
    %v4838 = vunpack.c.l.b16 %v4594
    %v4839 = vunpack.c.h.b16 %v4594
    %v4840 = vunpack.c.l.b16 %v4595
    %v4841 = vunpack.c.l.b16 %v4596
    %v4842 = vunpack.c.h.b16 %v4596
    %v4843 = vunpack.c.l.b16 %v4597
    %v4844 = vunpack.c.l.b16 %v4598
    %v4845 = vunpack.c.h.b16 %v4598
    %v4846 = vunpack.c.l.b16 %v4599
    %v4847 = vunpack.c.l.b16 %v4600
    %v4848 = vunpack.c.h.b16 %v4600
    %v4849 = vunpack.c.l.b16 %v4601
    %v4850 = vunpack.c.l.b16 %v4602
    %v4851 = vunpack.c.h.b16 %v4602
    %v4852 = vunpack.c.l.b16 %v4603
    %v4853 = vunpack.c.l.b16 %v4604
    %v4854 = vunpack.c.h.b16 %v4604
    %v4855 = vunpack.c.l.b16 %v4605
    %v4856 = vunpack.c.l.b16 %v4606
    %v4857 = vunpack.c.h.b16 %v4606
    %v4858 = vunpack.c.l.b16 %v4607
    %v4859 = vunpack.c.l.b16 %v4608
    %v4860 = vunpack.c.h.b16 %v4608
    %v4861 = vunpack.c.l.b16 %v4609
    %v4862 = vunpack.c.l.b16 %v4610
    %v4863 = vunpack.c.h.b16 %v4610
    %v4864 = vunpack.c.l.b16 %v4611
    %v4865 = vunpack.c.l.b16 %v4612
    %v4866 = vunpack.c.h.b16 %v4612
    %v4867 = vunpack.c.l.b16 %v4613
    %v4868 = vunpack.c.l.b16 %v4614
    %v4869 = vunpack.c.h.b16 %v4614
    %v4870 = vunpack.c.l.b16 %v4615
    %v4871 = vunpack.c.l.b16 %v4616
    %v4872 = vunpack.c.h.b16 %v4616
    %v4873 = vunpack.c.l.b16 %v4617
    %v4874 = vunpack.c.l.b16 %v4618
    %v4875 = vunpack.c.h.b16 %v4618
    %v4876 = vunpack.c.l.b16 %v4619
    %v4877 = vpack.c.b16 %v4736, %v4733
    %v4878 = vpack.c.b16 %v4737, %v4734
    %v4879 = vpack.c.b16 %v4738, %v4735
    %v4880 = vpack.c.b16 %v4742, %v4739
    %v4881 = vpack.c.b16 %v4743, %v4740
    %v4882 = vpack.c.b16 %v4744, %v4741
    %v4883 = vpack.c.b16 %v4748, %v4745
    %v4884 = vpack.c.b16 %v4749, %v4746
    %v4885 = vpack.c.b16 %v4750, %v4747
    %v4886 = vpack.c.b16 %v4754, %v4751
    %v4887 = vpack.c.b16 %v4755, %v4752
    %v4888 = vpack.c.b16 %v4756, %v4753
    %v4889 = vpack.c.b16 %v4760, %v4757
    %v4890 = vpack.c.b16 %v4761, %v4758
    %v4891 = vpack.c.b16 %v4762, %v4759
    %v4892 = vpack.c.b16 %v4766, %v4763
    %v4893 = vpack.c.b16 %v4767, %v4764
    %v4894 = vpack.c.b16 %v4768, %v4765
    %v4895 = vpack.c.b16 %v4772, %v4769
    %v4896 = vpack.c.b16 %v4773, %v4770
    %v4897 = vpack.c.b16 %v4774, %v4771
    %v4898 = vpack.c.b16 %v4778, %v4775
    %v4899 = vpack.c.b16 %v4779, %v4776
    %v4900 = vpack.c.b16 %v4780, %v4777
    %v4901 = vpack.c.b16 %v4784, %v4781
    %v4902 = vpack.c.b16 %v4785, %v4782
    %v4903 = vpack.c.b16 %v4786, %v4783
    %v4904 = vpack.c.b16 %v4790, %v4787
    %v4905 = vpack.c.b16 %v4791, %v4788
    %v4906 = vpack.c.b16 %v4792, %v4789
    %v4907 = vpack.c.b16 %v4796, %v4793
    %v4908 = vpack.c.b16 %v4797, %v4794
    %v4909 = vpack.c.b16 %v4798, %v4795
    %v4910 = vpack.c.b16 %v4802, %v4799
    %v4911 = vpack.c.b16 %v4803, %v4800
    %v4912 = vpack.c.b16 %v4804, %v4801
    %v4913 = vpack.c.b16 %v4808, %v4805
    %v4914 = vpack.c.b16 %v4809, %v4806
    %v4915 = vpack.c.b16 %v4810, %v4807
    %v4916 = vpack.c.b16 %v4814, %v4811
    %v4917 = vpack.c.b16 %v4815, %v4812
    %v4918 = vpack.c.b16 %v4816, %v4813
    %v4919 = vpack.c.b16 %v4820, %v4817
    %v4920 = vpack.c.b16 %v4821, %v4818
    %v4921 = vpack.c.b16 %v4822, %v4819
    %v4922 = vpack.c.b16 %v4826, %v4823
    %v4923 = vpack.c.b16 %v4827, %v4824
    %v4924 = vpack.c.b16 %v4828, %v4825
    %v4925 = vpack.c.b16 %v4832, %v4829
    %v4926 = vpack.c.b16 %v4833, %v4830
    %v4927 = vpack.c.b16 %v4834, %v4831
    %v4928 = vpack.c.b16 %v4838, %v4835
    %v4929 = vpack.c.b16 %v4839, %v4836
    %v4930 = vpack.c.b16 %v4840, %v4837
    %v4931 = vpack.c.b16 %v4844, %v4841
    %v4932 = vpack.c.b16 %v4845, %v4842
    %v4933 = vpack.c.b16 %v4846, %v4843
    %v4934 = vpack.c.b16 %v4850, %v4847
    %v4935 = vpack.c.b16 %v4851, %v4848
    %v4936 = vpack.c.b16 %v4852, %v4849
    %v4937 = vpack.c.b16 %v4856, %v4853
    %v4938 = vpack.c.b16 %v4857, %v4854
    %v4939 = vpack.c.b16 %v4858, %v4855
    %v4940 = vpack.c.b16 %v4862, %v4859
    %v4941 = vpack.c.b16 %v4863, %v4860
    %v4942 = vpack.c.b16 %v4864, %v4861
    %v4943 = vpack.c.b16 %v4868, %v4865
    %v4944 = vpack.c.b16 %v4869, %v4866
    %v4945 = vpack.c.b16 %v4870, %v4867
    %v4946 = vpack.c.b16 %v4874, %v4871
    %v4947 = vpack.c.b16 %v4875, %v4872
    %v4948 = vpack.c.b16 %v4876, %v4873
    %5021 = vmatprep.subr.bf16.mxu0 %v4878
    %5022 = vmatpush1.bf16.msra.mxu0 %v4877
    %5023 = vmatprep.subr.bf16.mxu0 %v4881
    %5024 = vmatpush1.bf16.msra.mxu0 %v4880
    %5025 = vmatprep.subr.bf16.mxu0 %v4884
    %5026 = vmatpush1.bf16.msra.mxu0 %v4883
    %5027 = vmatprep.subr.bf16.mxu0 %v4887
    %5028 = vmatpush1.bf16.msra.mxu0 %v4886
    %5029 = vmatprep.subr.bf16.mxu0 %v4890
    %5030 = vmatpush1.bf16.msra.mxu0 %v4889
    %5031 = vmatprep.subr.bf16.mxu0 %v4893
    %5032 = vmatpush1.bf16.msra.mxu0 %v4892
    %5033 = vmatprep.subr.bf16.mxu0 %v4896
    %5034 = vmatpush1.bf16.msra.mxu0 %v4895
    %5035 = vmatprep.subr.bf16.mxu0 %v4899
    %5036 = vmatpush1.bf16.msra.mxu0 %v4898
    %5037 = vmatprep.subr.bf16.mxu0 %v4902
    %5038 = vmatpush1.bf16.msra.mxu0 %v4901
    %5039 = vmatprep.subr.bf16.mxu0 %v4905
    %5040 = vmatpush1.bf16.msra.mxu0 %v4904
    %5041 = vmatprep.subr.bf16.mxu0 %v4908
    %5042 = vmatpush1.bf16.msra.mxu0 %v4907
    %5043 = vmatprep.subr.bf16.mxu0 %v4911
    %5044 = vmatpush1.bf16.msra.mxu0 %v4910
    %5045 = vmatprep.subr.bf16.mxu0 %v4914
    %5046 = vmatpush1.bf16.msra.mxu0 %v4913
    %5047 = vmatprep.subr.bf16.mxu0 %v4917
    %5048 = vmatpush1.bf16.msra.mxu0 %v4916
    %5049 = vmatprep.subr.bf16.mxu0 %v4920
    %5050 = vmatpush1.bf16.msra.mxu0 %v4919
    %5051 = vmatprep.subr.bf16.mxu0 %v4923
    %5052 = vmatpush1.bf16.msra.mxu0 %v4922
    %5053 = vmatprep.mubr.bf16.mxu0 %v4522
    %5054 = vmatmul.mubr.bf16.gmra.mrb[0].mxu0 %v4521
    %v5055 = vpop.f32.mrb[0].mxu0
    %v5056 = vadd.f32 %v4625, %v5055
    %v5057 = vpop.f32.mrb[0].mxu0
    %v5058 = vadd.f32 %v4629, %v5057
    %v5059 = vpop.f32.mrb[0].mxu0
    %v5060 = vpop.f32.mrb[0].mxu0
    %5061 = vdwg.mxu0
    %5062 = vmatprep.subr.bf16.mxu0 %v4926
    %5063 = vmatpush1.bf16.msra.mxu0 %v4925
    %5064 = vmatprep.subr.bf16.mxu0 %v4929
    %5065 = vmatpush1.bf16.msra.mxu0 %v4928
    %5066 = vmatprep.subr.bf16.mxu0 %v4932
    %5067 = vmatpush1.bf16.msra.mxu0 %v4931
    %5068 = vmatprep.subr.bf16.mxu0 %v4935
    %5069 = vmatpush1.bf16.msra.mxu0 %v4934
    %5070 = vmatprep.subr.bf16.mxu0 %v4938
    %5071 = vmatpush1.bf16.msra.mxu0 %v4937
    %5072 = vmatprep.subr.bf16.mxu0 %v4941
    %5073 = vmatpush1.bf16.msra.mxu0 %v4940
    %5074 = vmatprep.subr.bf16.mxu0 %v4944
    %5075 = vmatpush1.bf16.msra.mxu0 %v4943
    %5076 = vmatprep.subr.bf16.mxu0 %v4947
    %5077 = vmatpush1.bf16.msra.mxu0 %v4946
    %5078 = vmatprep.subr.bf16.mxu0 0
    %5079 = vmatpush1.bf16.msra.mxu0 0
    %5080 = vmatprep.subr.bf16.mxu0 0
    %5081 = vmatpush1.bf16.msra.mxu0 0
    %5082 = vmatprep.subr.bf16.mxu0 0
    %5083 = vmatpush1.bf16.msra.mxu0 0
    %5084 = vmatprep.subr.bf16.mxu0 0
    %5085 = vmatpush1.bf16.msra.mxu0 0
    %5086 = vmatprep.subr.bf16.mxu0 0
    %5087 = vmatpush1.bf16.msra.mxu0 0
    %5088 = vmatprep.subr.bf16.mxu0 0
    %5089 = vmatpush1.bf16.msra.mxu0 0
    %5090 = vmatprep.subr.bf16.mxu0 0
    %5091 = vmatpush1.bf16.msra.mxu0 0
    %5092 = vmatprep.subr.bf16.mxu0 0
    %5093 = vmatpush1.bf16.msra.mxu0 0
    %5094 = vmatprep.mubr.bf16.mxu0 0
    %5095 = vmatmul.mubr.bf16.gmra.mrb[0].mxu0 %v4523
    %v5096 = vpop.f32.mrb[0].mxu0
    %v5097 = vadd.f32 %v5056, %v5096
    %v5098 = vpop.f32.mrb[0].mxu0
    %v5099 = vadd.f32 %v5058, %v5098
    %v5100 = vpop.f32.mrb[0].mxu0
    %v5101 = vpop.f32.mrb[0].mxu0
    %5102 = vdwg.mxu0
    %5103 = vmatprep.subr.bf16.mxu0 0
    %5104 = vmatpush1.bf16.msra.mxu0 %v4879
    %5105 = vmatprep.subr.bf16.mxu0 0
    %5106 = vmatpush1.bf16.msra.mxu0 %v4882
    %5107 = vmatprep.subr.bf16.mxu0 0
    %5108 = vmatpush1.bf16.msra.mxu0 %v4885
    %5109 = vmatprep.subr.bf16.mxu0 0
    %5110 = vmatpush1.bf16.msra.mxu0 %v4888
    %5111 = vmatprep.subr.bf16.mxu0 0
    %5112 = vmatpush1.bf16.msra.mxu0 %v4891
    %5113 = vmatprep.subr.bf16.mxu0 0
    %5114 = vmatpush1.bf16.msra.mxu0 %v4894
    %5115 = vmatprep.subr.bf16.mxu0 0
    %5116 = vmatpush1.bf16.msra.mxu0 %v4897
    %5117 = vmatprep.subr.bf16.mxu0 0
    %5118 = vmatpush1.bf16.msra.mxu0 %v4900
    %5119 = vmatprep.subr.bf16.mxu0 0
    %5120 = vmatpush1.bf16.msra.mxu0 %v4903
    %5121 = vmatprep.subr.bf16.mxu0 0
    %5122 = vmatpush1.bf16.msra.mxu0 %v4906
    %5123 = vmatprep.subr.bf16.mxu0 0
    %5124 = vmatpush1.bf16.msra.mxu0 %v4909
    %5125 = vmatprep.subr.bf16.mxu0 0
    %5126 = vmatpush1.bf16.msra.mxu0 %v4912
    %5127 = vmatprep.subr.bf16.mxu0 0
    %5128 = vmatpush1.bf16.msra.mxu0 %v4915
    %5129 = vmatprep.subr.bf16.mxu0 0
    %5130 = vmatpush1.bf16.msra.mxu0 %v4918
    %5131 = vmatprep.subr.bf16.mxu0 0
    %5132 = vmatpush1.bf16.msra.mxu0 %v4921
    %5133 = vmatprep.subr.bf16.mxu0 0
    %5134 = vmatpush1.bf16.msra.mxu0 %v4924
    %5135 = vmatprep.mubr.bf16.mxu0 %v4522
    %5136 = vmatmul.mubr.bf16.gmra.mrb[0].mxu0 %v4521
    %v5137 = vpop.f32.mrb[0].mxu0
    %v5138 = vadd.f32 %v4633, %v5137
    %v5139 = vpop.f32.mrb[0].mxu0
    %v5140 = vpop.f32.mrb[0].mxu0
    %v5141 = vpop.f32.mrb[0].mxu0
    %5142 = vdwg.mxu0
    %5143 = vmatprep.subr.bf16.mxu0 0
    %5144 = vmatpush1.bf16.msra.mxu0 %v4927
    %5145 = vmatprep.subr.bf16.mxu0 0
    %5146 = vmatpush1.bf16.msra.mxu0 %v4930
    %5147 = vmatprep.subr.bf16.mxu0 0
    %5148 = vmatpush1.bf16.msra.mxu0 %v4933
    %5149 = vmatprep.subr.bf16.mxu0 0
    %5150 = vmatpush1.bf16.msra.mxu0 %v4936
    %5151 = vmatprep.subr.bf16.mxu0 0
    %5152 = vmatpush1.bf16.msra.mxu0 %v4939
    %5153 = vmatprep.subr.bf16.mxu0 0
    %5154 = vmatpush1.bf16.msra.mxu0 %v4942
    %5155 = vmatprep.subr.bf16.mxu0 0
    %5156 = vmatpush1.bf16.msra.mxu0 %v4945
    %5157 = vmatprep.subr.bf16.mxu0 0
    %5158 = vmatpush1.bf16.msra.mxu0 %v4948
    %5159 = vmatprep.subr.bf16.mxu0 0
    %5160 = vmatpush1.bf16.msra.mxu0 0
    %5161 = vmatprep.subr.bf16.mxu0 0
    %5162 = vmatpush1.bf16.msra.mxu0 0
    %5163 = vmatprep.subr.bf16.mxu0 0
    %5164 = vmatpush1.bf16.msra.mxu0 0
    %5165 = vmatprep.subr.bf16.mxu0 0
    %5166 = vmatpush1.bf16.msra.mxu0 0
    %5167 = vmatprep.subr.bf16.mxu0 0
    %5168 = vmatpush1.bf16.msra.mxu0 0
    %5169 = vmatprep.subr.bf16.mxu0 0
    %5170 = vmatpush1.bf16.msra.mxu0 0
    %5171 = vmatprep.subr.bf16.mxu0 0
    %5172 = vmatpush1.bf16.msra.mxu0 0
    %5173 = vmatprep.subr.bf16.mxu0 0
    %5174 = vmatpush1.bf16.msra.mxu0 0
    %5175 = vmatprep.mubr.bf16.mxu0 0
    %5176 = vmatmul.mubr.bf16.gmra.mrb[0].mxu0 %v4523
    %v5177 = vpop.f32.mrb[0].mxu0
    %v5178 = vadd.f32 %v5138, %v5177
    %v5179 = vpop.f32.mrb[0].mxu0
    %v5180 = vpop.f32.mrb[0].mxu0
    %v5181 = vpop.f32.mrb[0].mxu0
    %5182 = vdwg.mxu0
    %v5183 = vmax.f32 %v5097, 0.0
    %v5184 = vmax.f32 %v5099, 0.0
    %v5185 = vmax.f32 %v5178, 0.0
    %v5186 = vpack.c.bf16 %v5183, %v5183
    %v5187 = vpack.c.bf16 %v5184, %v5184
    %v5188 = vpack.c.bf16 %v5185, %v5185
    %v5189 = vld [vmem:[#allocation14] sm:$0xff]
    %v5190 = vld [vmem:[#allocation14 + $0x8] sm:$0xff]
    %v5191 = vld [vmem:[#allocation14 + $0x10] sm:$0xff]
    %v5192 = vld [vmem:[#allocation14 + $0x18] sm:$0xff]
    %v5193 = vld [vmem:[#allocation14 + $0x20] sm:$0xff]
    %v5194 = vld [vmem:[#allocation14 + $0x28] sm:$0xff]
    %v5195 = vld [vmem:[#allocation14 + $0x30] sm:$0xff]
    %v5196 = vld [vmem:[#allocation14 + $0x38] sm:$0xff]
    %v5197 = vld [vmem:[#allocation14 + $0x40] sm:$0xff]
    %v5198 = vld [vmem:[#allocation14 + $0x48] sm:$0xff]
    %v5199 = vld [vmem:[#allocation14 + $0x50] sm:$0xff]
    %v5200 = vld [vmem:[#allocation14 + $0x58] sm:$0xff]
    %v5201 = vld [vmem:[#allocation14 + $0x60] sm:$0xff]
    %v5202 = vld [vmem:[#allocation14 + $0x68] sm:$0xff]
    %v5203 = vld [vmem:[#allocation14 + $0x70] sm:$0xff]
    %v5204 = vld [vmem:[#allocation14 + $0x78] sm:$0xff]
    %v5205 = vld [vmem:[#allocation14 + $0x80] sm:$0xff]
    %v5206 = vld [vmem:[#allocation14 + $0x88] sm:$0xff]
    %v5207 = vld [vmem:[#allocation14 + $0x90] sm:$0xff]
    %v5208 = vld [vmem:[#allocation14 + $0x98] sm:$0xff]
    %v5209 = vld [vmem:[#allocation14 + $0xa0] sm:$0xff]
    %v5210 = vld [vmem:[#allocation14 + $0xa8] sm:$0xff]
    %v5211 = vld [vmem:[#allocation14 + $0xb0] sm:$0xff]
    %v5212 = vld [vmem:[#allocation14 + $0xb8] sm:$0xff]
    %v5213 = vld [vmem:[#allocation14 + $0xc0] sm:$0xff]
    %v5214 = vld [vmem:[#allocation14 + $0xc8] sm:$0xff]
    %v5215 = vld [vmem:[#allocation14 + $0xd0] sm:$0xff]
    %v5216 = vld [vmem:[#allocation14 + $0xd8] sm:$0xff]
    %v5217 = vld [vmem:[#allocation14 + $0xe0] sm:$0xff]
    %v5218 = vld [vmem:[#allocation14 + $0xe8] sm:$0xff]
    %v5219 = vld [vmem:[#allocation14 + $0xf0] sm:$0xff]
    %v5220 = vld [vmem:[#allocation14 + $0xf8] sm:$0xff]
    %v5221 = vld [vmem:[#allocation14 + $0x100] sm:$0xff]
    %v5222 = vld [vmem:[#allocation14 + $0x108] sm:$0xff]
    %v5223 = vld [vmem:[#allocation14 + $0x110] sm:$0xff]
    %v5224 = vld [vmem:[#allocation14 + $0x118] sm:$0xff]
    %v5225 = vld [vmem:[#allocation14 + $0x120] sm:$0xff]
    %v5226 = vld [vmem:[#allocation14 + $0x128] sm:$0xff]
    %v5227 = vld [vmem:[#allocation14 + $0x130] sm:$0xff]
    %v5228 = vld [vmem:[#allocation14 + $0x138] sm:$0xff]
    %v5229 = vld [vmem:[#allocation14 + $0x140] sm:$0xff]
    %v5230 = vld [vmem:[#allocation14 + $0x148] sm:$0xff]
    %v5231 = vld [vmem:[#allocation14 + $0x150] sm:$0xff]
    %v5232 = vld [vmem:[#allocation14 + $0x158] sm:$0xff]
    %v5233 = vld [vmem:[#allocation14 + $0x160] sm:$0xff]
    %v5234 = vld [vmem:[#allocation14 + $0x168] sm:$0xff]
    %v5235 = vld [vmem:[#allocation14 + $0x170] sm:$0xff]
    %v5236 = vld [vmem:[#allocation14 + $0x178] sm:$0xff]
    %v5237 = vld [vmem:[#allocation16] sm:$0x3]
    %v5239 = vlaneseq
    %v5240 = vshrl.u32 %v5239, 7
    %v5241 = vsub.s32 0, %v5240
    %v5242 = vrot.slane %v5237, %v5241
    %v5243 = vlaneseq
    %v5244 = vshrl.u32 %v5243, 7
    %v5245 = vsub.s32 1, %v5244
    %v5246 = vrot.slane %v5237, %v5245
    %v5297 = vunpack.c.l.b16 %v5189
    %v5298 = vunpack.c.h.b16 %v5189
    %v5299 = vunpack.c.l.b16 %v5190
    %v5300 = vunpack.c.h.b16 %v5190
    %v5301 = vunpack.c.l.b16 %v5191
    %v5302 = vunpack.c.h.b16 %v5191
    %v5303 = vunpack.c.l.b16 %v5192
    %v5304 = vunpack.c.h.b16 %v5192
    %v5305 = vunpack.c.l.b16 %v5193
    %v5306 = vunpack.c.h.b16 %v5193
    %v5307 = vunpack.c.l.b16 %v5194
    %v5308 = vunpack.c.h.b16 %v5194
    %v5309 = vunpack.c.l.b16 %v5195
    %v5310 = vunpack.c.h.b16 %v5195
    %v5311 = vunpack.c.l.b16 %v5196
    %v5312 = vunpack.c.h.b16 %v5196
    %v5313 = vunpack.c.l.b16 %v5197
    %v5314 = vunpack.c.h.b16 %v5197
    %v5315 = vunpack.c.l.b16 %v5198
    %v5316 = vunpack.c.h.b16 %v5198
    %v5317 = vunpack.c.l.b16 %v5199
    %v5318 = vunpack.c.h.b16 %v5199
    %v5319 = vunpack.c.l.b16 %v5200
    %v5320 = vunpack.c.h.b16 %v5200
    %v5321 = vunpack.c.l.b16 %v5201
    %v5322 = vunpack.c.h.b16 %v5201
    %v5323 = vunpack.c.l.b16 %v5202
    %v5324 = vunpack.c.h.b16 %v5202
    %v5325 = vunpack.c.l.b16 %v5203
    %v5326 = vunpack.c.h.b16 %v5203
    %v5327 = vunpack.c.l.b16 %v5204
    %v5328 = vunpack.c.h.b16 %v5204
    %v5329 = vunpack.c.l.b16 %v5205
    %v5330 = vunpack.c.h.b16 %v5205
    %v5331 = vunpack.c.l.b16 %v5206
    %v5332 = vunpack.c.h.b16 %v5206
    %v5333 = vunpack.c.l.b16 %v5207
    %v5334 = vunpack.c.h.b16 %v5207
    %v5335 = vunpack.c.l.b16 %v5208
    %v5336 = vunpack.c.h.b16 %v5208
    %v5337 = vunpack.c.l.b16 %v5209
    %v5338 = vunpack.c.h.b16 %v5209
    %v5339 = vunpack.c.l.b16 %v5210
    %v5340 = vunpack.c.h.b16 %v5210
    %v5341 = vunpack.c.l.b16 %v5211
    %v5342 = vunpack.c.h.b16 %v5211
    %v5343 = vunpack.c.l.b16 %v5212
    %v5344 = vunpack.c.h.b16 %v5212
    %v5345 = vunpack.c.l.b16 %v5213
    %v5346 = vunpack.c.h.b16 %v5213
    %v5347 = vunpack.c.l.b16 %v5214
    %v5348 = vunpack.c.h.b16 %v5214
    %v5349 = vunpack.c.l.b16 %v5215
    %v5350 = vunpack.c.h.b16 %v5215
    %v5351 = vunpack.c.l.b16 %v5216
    %v5352 = vunpack.c.h.b16 %v5216
    %v5353 = vunpack.c.l.b16 %v5217
    %v5354 = vunpack.c.h.b16 %v5217
    %v5355 = vunpack.c.l.b16 %v5218
    %v5356 = vunpack.c.h.b16 %v5218
    %v5357 = vunpack.c.l.b16 %v5219
    %v5358 = vunpack.c.h.b16 %v5219
    %v5359 = vunpack.c.l.b16 %v5220
    %v5360 = vunpack.c.h.b16 %v5220
    %v5361 = vunpack.c.l.b16 %v5221
    %v5362 = vunpack.c.h.b16 %v5221
    %v5363 = vunpack.c.l.b16 %v5222
    %v5364 = vunpack.c.h.b16 %v5222
    %v5365 = vunpack.c.l.b16 %v5223
    %v5366 = vunpack.c.h.b16 %v5223
    %v5367 = vunpack.c.l.b16 %v5224
    %v5368 = vunpack.c.h.b16 %v5224
    %v5369 = vunpack.c.l.b16 %v5225
    %v5370 = vunpack.c.h.b16 %v5225
    %v5371 = vunpack.c.l.b16 %v5226
    %v5372 = vunpack.c.h.b16 %v5226
    %v5373 = vunpack.c.l.b16 %v5227
    %v5374 = vunpack.c.h.b16 %v5227
    %v5375 = vunpack.c.l.b16 %v5228
    %v5376 = vunpack.c.h.b16 %v5228
    %v5377 = vunpack.c.l.b16 %v5229
    %v5378 = vunpack.c.h.b16 %v5229
    %v5379 = vunpack.c.l.b16 %v5230
    %v5380 = vunpack.c.h.b16 %v5230
    %v5381 = vunpack.c.l.b16 %v5231
    %v5382 = vunpack.c.h.b16 %v5231
    %v5383 = vunpack.c.l.b16 %v5232
    %v5384 = vunpack.c.h.b16 %v5232
    %v5385 = vunpack.c.l.b16 %v5233
    %v5386 = vunpack.c.h.b16 %v5233
    %v5387 = vunpack.c.l.b16 %v5234
    %v5388 = vunpack.c.h.b16 %v5234
    %v5389 = vunpack.c.l.b16 %v5235
    %v5390 = vunpack.c.h.b16 %v5235
    %v5391 = vunpack.c.l.b16 %v5236
    %v5392 = vunpack.c.h.b16 %v5236
    %v5393 = vpack.c.b16 %v5299, %v5297
    %v5394 = vpack.c.b16 %v5300, %v5298
    %v5395 = vpack.c.b16 %v5303, %v5301
    %v5396 = vpack.c.b16 %v5304, %v5302
    %v5397 = vpack.c.b16 %v5307, %v5305
    %v5398 = vpack.c.b16 %v5308, %v5306
    %v5399 = vpack.c.b16 %v5311, %v5309
    %v5400 = vpack.c.b16 %v5312, %v5310
    %v5401 = vpack.c.b16 %v5315, %v5313
    %v5402 = vpack.c.b16 %v5316, %v5314
    %v5403 = vpack.c.b16 %v5319, %v5317
    %v5404 = vpack.c.b16 %v5320, %v5318
    %v5405 = vpack.c.b16 %v5323, %v5321
    %v5406 = vpack.c.b16 %v5324, %v5322
    %v5407 = vpack.c.b16 %v5327, %v5325
    %v5408 = vpack.c.b16 %v5328, %v5326
    %v5409 = vpack.c.b16 %v5331, %v5329
    %v5410 = vpack.c.b16 %v5332, %v5330
    %v5411 = vpack.c.b16 %v5335, %v5333
    %v5412 = vpack.c.b16 %v5336, %v5334
    %v5413 = vpack.c.b16 %v5339, %v5337
    %v5414 = vpack.c.b16 %v5340, %v5338
    %v5415 = vpack.c.b16 %v5343, %v5341
    %v5416 = vpack.c.b16 %v5344, %v5342
    %v5417 = vpack.c.b16 %v5347, %v5345
    %v5418 = vpack.c.b16 %v5348, %v5346
    %v5419 = vpack.c.b16 %v5351, %v5349
    %v5420 = vpack.c.b16 %v5352, %v5350
    %v5421 = vpack.c.b16 %v5355, %v5353
    %v5422 = vpack.c.b16 %v5356, %v5354
    %v5423 = vpack.c.b16 %v5359, %v5357
    %v5424 = vpack.c.b16 %v5360, %v5358
    %v5425 = vpack.c.b16 %v5363, %v5361
    %v5426 = vpack.c.b16 %v5364, %v5362
    %v5427 = vpack.c.b16 %v5367, %v5365
    %v5428 = vpack.c.b16 %v5368, %v5366
    %v5429 = vpack.c.b16 %v5371, %v5369
    %v5430 = vpack.c.b16 %v5372, %v5370
    %v5431 = vpack.c.b16 %v5375, %v5373
    %v5432 = vpack.c.b16 %v5376, %v5374
    %v5433 = vpack.c.b16 %v5379, %v5377
    %v5434 = vpack.c.b16 %v5380, %v5378
    %v5435 = vpack.c.b16 %v5383, %v5381
    %v5436 = vpack.c.b16 %v5384, %v5382
    %v5437 = vpack.c.b16 %v5387, %v5385
    %v5438 = vpack.c.b16 %v5388, %v5386
    %v5439 = vpack.c.b16 %v5391, %v5389
    %v5440 = vpack.c.b16 %v5392, %v5390
    %5489 = vmatprep.subr.bf16.mxu0 %v5394
    %5490 = vmatpush1.bf16.msra.mxu0 %v5393
    %5491 = vmatprep.subr.bf16.mxu0 %v5396
    %5492 = vmatpush1.bf16.msra.mxu0 %v5395
    %5493 = vmatprep.subr.bf16.mxu0 %v5398
    %5494 = vmatpush1.bf16.msra.mxu0 %v5397
    %5495 = vmatprep.subr.bf16.mxu0 %v5400
    %5496 = vmatpush1.bf16.msra.mxu0 %v5399
    %5497 = vmatprep.subr.bf16.mxu0 %v5402
    %5498 = vmatpush1.bf16.msra.mxu0 %v5401
    %5499 = vmatprep.subr.bf16.mxu0 %v5404
    %5500 = vmatpush1.bf16.msra.mxu0 %v5403
    %5501 = vmatprep.subr.bf16.mxu0 %v5406
    %5502 = vmatpush1.bf16.msra.mxu0 %v5405
    %5503 = vmatprep.subr.bf16.mxu0 %v5408
    %5504 = vmatpush1.bf16.msra.mxu0 %v5407
    %5505 = vmatprep.subr.bf16.mxu0 %v5410
    %5506 = vmatpush1.bf16.msra.mxu0 %v5409
    %5507 = vmatprep.subr.bf16.mxu0 %v5412
    %5508 = vmatpush1.bf16.msra.mxu0 %v5411
    %5509 = vmatprep.subr.bf16.mxu0 %v5414
    %5510 = vmatpush1.bf16.msra.mxu0 %v5413
    %5511 = vmatprep.subr.bf16.mxu0 %v5416
    %5512 = vmatpush1.bf16.msra.mxu0 %v5415
    %5513 = vmatprep.subr.bf16.mxu0 %v5418
    %5514 = vmatpush1.bf16.msra.mxu0 %v5417
    %5515 = vmatprep.subr.bf16.mxu0 %v5420
    %5516 = vmatpush1.bf16.msra.mxu0 %v5419
    %5517 = vmatprep.subr.bf16.mxu0 %v5422
    %5518 = vmatpush1.bf16.msra.mxu0 %v5421
    %5519 = vmatprep.subr.bf16.mxu0 %v5424
    %5520 = vmatpush1.bf16.msra.mxu0 %v5423
    %5521 = vmatprep.mubr.bf16.mxu0 %v5187
    %5522 = vmatmul.mubr.bf16.gmra.mrb[0].mxu0 %v5186
    %v5523 = vpop.f32.mrb[0].mxu0
    %v5524 = vadd.f32 %v5242, %v5523
    %v5525 = vpop.f32.mrb[0].mxu0
    %v5526 = vadd.f32 %v5246, %v5525
    %v5527 = vpop.f32.mrb[0].mxu0
    %v5528 = vpop.f32.mrb[0].mxu0
    %5529 = vdwg.mxu0
    %5530 = vmatprep.subr.bf16.mxu0 %v5426
    %5531 = vmatpush1.bf16.msra.mxu0 %v5425
    %5532 = vmatprep.subr.bf16.mxu0 %v5428
    %5533 = vmatpush1.bf16.msra.mxu0 %v5427
    %5534 = vmatprep.subr.bf16.mxu0 %v5430
    %5535 = vmatpush1.bf16.msra.mxu0 %v5429
    %5536 = vmatprep.subr.bf16.mxu0 %v5432
    %5537 = vmatpush1.bf16.msra.mxu0 %v5431
    %5538 = vmatprep.subr.bf16.mxu0 %v5434
    %5539 = vmatpush1.bf16.msra.mxu0 %v5433
    %5540 = vmatprep.subr.bf16.mxu0 %v5436
    %5541 = vmatpush1.bf16.msra.mxu0 %v5435
    %5542 = vmatprep.subr.bf16.mxu0 %v5438
    %5543 = vmatpush1.bf16.msra.mxu0 %v5437
    %5544 = vmatprep.subr.bf16.mxu0 %v5440
    %5545 = vmatpush1.bf16.msra.mxu0 %v5439
    %5546 = vmatprep.subr.bf16.mxu0 0
    %5547 = vmatpush1.bf16.msra.mxu0 0
    %5548 = vmatprep.subr.bf16.mxu0 0
    %5549 = vmatpush1.bf16.msra.mxu0 0
    %5550 = vmatprep.subr.bf16.mxu0 0
    %5551 = vmatpush1.bf16.msra.mxu0 0
    %5552 = vmatprep.subr.bf16.mxu0 0
    %5553 = vmatpush1.bf16.msra.mxu0 0
    %5554 = vmatprep.subr.bf16.mxu0 0
    %5555 = vmatpush1.bf16.msra.mxu0 0
    %5556 = vmatprep.subr.bf16.mxu0 0
    %5557 = vmatpush1.bf16.msra.mxu0 0
    %5558 = vmatprep.subr.bf16.mxu0 0
    %5559 = vmatpush1.bf16.msra.mxu0 0
    %5560 = vmatprep.subr.bf16.mxu0 0
    %5561 = vmatpush1.bf16.msra.mxu0 0
    %5562 = vmatprep.mubr.bf16.mxu0 0
    %5563 = vmatmul.mubr.bf16.gmra.mrb[0].mxu0 %v5188
    %v5564 = vpop.f32.mrb[0].mxu0
    %v5565 = vadd.f32 %v5524, %v5564
    %v5566 = vpop.f32.mrb[0].mxu0
    %v5567 = vadd.f32 %v5526, %v5566
    %v5568 = vpop.f32.mrb[0].mxu0
    %v5569 = vpop.f32.mrb[0].mxu0
    %5570 = vdwg.mxu0
    %v5571 = vmax.f32 %v5565, 0.0
    %v5572 = vmax.f32 %v5567, 0.0
    %v5573 = vpack.c.bf16 %v5571, %v5571
    %v5574 = vpack.c.bf16 %v5572, %v5572
    %v5575 = vld [vmem:[#allocation17] sm:$0xf]
    %v5576 = vld [vmem:[#allocation17 + $0x4] sm:$0xf]
    %v5577 = vld [vmem:[#allocation17 + $0x8] sm:$0xf]
    %v5578 = vld [vmem:[#allocation17 + $0xc] sm:$0xf]
    %v5579 = vld [vmem:[#allocation17 + $0x10] sm:$0xf]
    %v5580 = vld [vmem:[#allocation17 + $0x14] sm:$0xf]
    %v5581 = vld [vmem:[#allocation17 + $0x18] sm:$0xf]
    %v5582 = vld [vmem:[#allocation17 + $0x1c] sm:$0xf]
    %v5583 = vld [vmem:[#allocation17 + $0x20] sm:$0xf]
    %v5584 = vld [vmem:[#allocation17 + $0x24] sm:$0xf]
    %v5585 = vld [vmem:[#allocation17 + $0x28] sm:$0xf]
    %v5586 = vld [vmem:[#allocation17 + $0x2c] sm:$0xf]
    %v5587 = vld [vmem:[#allocation17 + $0x30] sm:$0xf]
    %v5588 = vld [vmem:[#allocation17 + $0x34] sm:$0xf]
    %v5589 = vld [vmem:[#allocation17 + $0x38] sm:$0xf]
    %v5590 = vld [vmem:[#allocation17 + $0x3c] sm:$0xf]
    %v5591 = vld [vmem:[#allocation17 + $0x40] sm:$0xf]
    %v5592 = vld [vmem:[#allocation17 + $0x44] sm:$0xf]
    %v5593 = vld [vmem:[#allocation17 + $0x48] sm:$0xf]
    %v5594 = vld [vmem:[#allocation17 + $0x4c] sm:$0xf]
    %v5595 = vld [vmem:[#allocation17 + $0x50] sm:$0xf]
    %v5596 = vld [vmem:[#allocation17 + $0x54] sm:$0xf]
    %v5597 = vld [vmem:[#allocation17 + $0x58] sm:$0xf]
    %v5598 = vld [vmem:[#allocation17 + $0x5c] sm:$0xf]
    %v5599 = vld [vmem:[#allocation17 + $0x60] sm:$0xf]
    %v5600 = vld [vmem:[#allocation17 + $0x64] sm:$0xf]
    %v5601 = vld [vmem:[#allocation17 + $0x68] sm:$0xf]
    %v5602 = vld [vmem:[#allocation17 + $0x6c] sm:$0xf]
    %v5603 = vld [vmem:[#allocation17 + $0x70] sm:$0xf]
    %v5604 = vld [vmem:[#allocation17 + $0x74] sm:$0xf]
    %v5605 = vld [vmem:[#allocation17 + $0x78] sm:$0xf]
    %v5606 = vld [vmem:[#allocation17 + $0x7c] sm:$0xf]
    %v5607 = vld [vmem:[#allocation19] sm:$0x1]
    %v5609 = vlaneseq
    %v5610 = vshrl.u32 %v5609, 7
    %v5611 = vsub.s32 0, %v5610
    %v5612 = vrot.slane %v5607, %v5611
    %v5646 = vunpack.c.l.b16 %v5575
    %v5647 = vunpack.c.l.b16 %v5576
    %v5648 = vunpack.c.l.b16 %v5577
    %v5649 = vunpack.c.l.b16 %v5578
    %v5650 = vunpack.c.l.b16 %v5579
    %v5651 = vunpack.c.l.b16 %v5580
    %v5652 = vunpack.c.l.b16 %v5581
    %v5653 = vunpack.c.l.b16 %v5582
    %v5654 = vunpack.c.l.b16 %v5583
    %v5655 = vunpack.c.l.b16 %v5584
    %v5656 = vunpack.c.l.b16 %v5585
    %v5657 = vunpack.c.l.b16 %v5586
    %v5658 = vunpack.c.l.b16 %v5587
    %v5659 = vunpack.c.l.b16 %v5588
    %v5660 = vunpack.c.l.b16 %v5589
    %v5661 = vunpack.c.l.b16 %v5590
    %v5662 = vunpack.c.l.b16 %v5591
    %v5663 = vunpack.c.l.b16 %v5592
    %v5664 = vunpack.c.l.b16 %v5593
    %v5665 = vunpack.c.l.b16 %v5594
    %v5666 = vunpack.c.l.b16 %v5595
    %v5667 = vunpack.c.l.b16 %v5596
    %v5668 = vunpack.c.l.b16 %v5597
    %v5669 = vunpack.c.l.b16 %v5598
    %v5670 = vunpack.c.l.b16 %v5599
    %v5671 = vunpack.c.l.b16 %v5600
    %v5672 = vunpack.c.l.b16 %v5601
    %v5673 = vunpack.c.l.b16 %v5602
    %v5674 = vunpack.c.l.b16 %v5603
    %v5675 = vunpack.c.l.b16 %v5604
    %v5676 = vunpack.c.l.b16 %v5605
    %v5677 = vunpack.c.l.b16 %v5606
    %v5678 = vpack.c.b16 %v5647, %v5646
    %v5679 = vpack.c.b16 %v5649, %v5648
    %v5680 = vpack.c.b16 %v5651, %v5650
    %v5681 = vpack.c.b16 %v5653, %v5652
    %v5682 = vpack.c.b16 %v5655, %v5654
    %v5683 = vpack.c.b16 %v5657, %v5656
    %v5684 = vpack.c.b16 %v5659, %v5658
    %v5685 = vpack.c.b16 %v5661, %v5660
    %v5686 = vpack.c.b16 %v5663, %v5662
    %v5687 = vpack.c.b16 %v5665, %v5664
    %v5688 = vpack.c.b16 %v5667, %v5666
    %v5689 = vpack.c.b16 %v5669, %v5668
    %v5690 = vpack.c.b16 %v5671, %v5670
    %v5691 = vpack.c.b16 %v5673, %v5672
    %v5692 = vpack.c.b16 %v5675, %v5674
    %v5693 = vpack.c.b16 %v5677, %v5676
    %5710 = vmatprep.subr.bf16.mxu0 0
    %5711 = vmatpush1.bf16.msra.mxu0 %v5678
    %5712 = vmatprep.subr.bf16.mxu0 0
    %5713 = vmatpush1.bf16.msra.mxu0 %v5679
    %5714 = vmatprep.subr.bf16.mxu0 0
    %5715 = vmatpush1.bf16.msra.mxu0 %v5680
    %5716 = vmatprep.subr.bf16.mxu0 0
    %5717 = vmatpush1.bf16.msra.mxu0 %v5681
    %5718 = vmatprep.subr.bf16.mxu0 0
    %5719 = vmatpush1.bf16.msra.mxu0 %v5682
    %5720 = vmatprep.subr.bf16.mxu0 0
    %5721 = vmatpush1.bf16.msra.mxu0 %v5683
    %5722 = vmatprep.subr.bf16.mxu0 0
    %5723 = vmatpush1.bf16.msra.mxu0 %v5684
    %5724 = vmatprep.subr.bf16.mxu0 0
    %5725 = vmatpush1.bf16.msra.mxu0 %v5685
    %5726 = vmatprep.subr.bf16.mxu0 0
    %5727 = vmatpush1.bf16.msra.mxu0 %v5686
    %5728 = vmatprep.subr.bf16.mxu0 0
    %5729 = vmatpush1.bf16.msra.mxu0 %v5687
    %5730 = vmatprep.subr.bf16.mxu0 0
    %5731 = vmatpush1.bf16.msra.mxu0 %v5688
    %5732 = vmatprep.subr.bf16.mxu0 0
    %5733 = vmatpush1.bf16.msra.mxu0 %v5689
    %5734 = vmatprep.subr.bf16.mxu0 0
    %5735 = vmatpush1.bf16.msra.mxu0 %v5690
    %5736 = vmatprep.subr.bf16.mxu0 0
    %5737 = vmatpush1.bf16.msra.mxu0 %v5691
    %5738 = vmatprep.subr.bf16.mxu0 0
    %5739 = vmatpush1.bf16.msra.mxu0 %v5692
    %5740 = vmatprep.subr.bf16.mxu0 0
    %5741 = vmatpush1.bf16.msra.mxu0 %v5693
    %5742 = vmatprep.mubr.bf16.mxu0 %v5574
    %5743 = vmatmul.mubr.bf16.gmra.mrb[0].mxu0 %v5573
    %v5744 = vpop.f32.mrb[0].mxu0
    %v5745 = vadd.f32 %v5612, %v5744
    %v5746 = vpop.f32.mrb[0].mxu0
    %v5747 = vpop.f32.mrb[0].mxu0
    %v5748 = vpop.f32.mrb[0].mxu0
    %5749 = vdwg.mxu0
    %v5750 = vmax.f32 %v5745, 0.0
    %5751 = vst [vmem:[#allocation20] sm:$0xff] %v5750
    %v5752 = vlaneseq
    %v5753 = vand.u32 %v5752, 127
    %vm5754 = vcmp.lt.s32.totalorder %v5753, 10
    %v5755 = vsel %vm5754, %v5750, -1e+30
    %5756 = vmax.xlane.f32.xlu0 %v5755
    %v5757 = vpop.xlane.xlu0 %5756
    %v5758 = vsub.f32 %v5755, %v5757
    %v5759 = vmul.f32 %v5758, 1.442695
    %v5760 = vpow.pop %v5759
    %5761 = vadd.xlane.f32.xlu0 %v5760
    %v5762 = vpop.xlane.xlu0 %5761
    %v5763 = vrcp.pop %v5762
    %v5764 = vmul.f32 %v5760, %v5763
    %5765 = vst [vmem:[#allocation21] sm:$0xff] %v5764
    // Predicated region
    $region90: #{tpu_custom_call.1} parent=1 // pred_check
      _
    $region91: #{tpu_custom_call.1} parent=1 // pred_check_branch
      %5767 = sbr.rel (0) target = $region93
    $region92: #{tpu_custom_call.1} parent=1 // pred_region
      %s5769 = ssub.s32 128, 128
      %5770 = vsyncadd [#allocation4], %s5769
      %s5772 = sshll.u32 [#allocation20], 4
      %s5773 = int_to_ptr.vmem [resolvable:$true] %s5772
      %5775 = dma.vmem_to_hbm [thread:$0]  %s5773, 128, %s11, [#allocation4]
    $region93: #{tpu_custom_call.1} parent=1 // pred_fallthru
      _
    // Predicated region
    $region94: #{tpu_custom_call.1} parent=1 // pred_check
      _
    $region95: #{tpu_custom_call.1} parent=1 // pred_check_branch
      %5777 = sbr.rel (0) target = $region97
    $region96: #{tpu_custom_call.1} parent=1 // pred_region
      %s5779 = ssub.s32 128, 128
      %5780 = vsyncadd [#allocation22], %s5779
      %s5782 = sshll.u32 [#allocation21], 4
      %s5783 = int_to_ptr.vmem [resolvable:$true] %s5782
      %5785 = dma.vmem_to_hbm [thread:$0]  %s5783, 128, %s12, [#allocation22]
    $region97: #{tpu_custom_call.1} parent=1 // pred_fallthru
      _
    // Predicated region
    $region98: #{tpu_custom_call.1} parent=1 // pred_check
      _
    $region99: #{tpu_custom_call.1} parent=1 // pred_check_branch
      %5787 = sbr.rel (0) target = $region101
    $region100: #{tpu_custom_call.1} parent=1 // pred_region
      %5788 = dma.done [#allocation4], 128
    $region101: #{tpu_custom_call.1} parent=1 // pred_fallthru
      _
    // Predicated region
    $region102: #{tpu_custom_call.1} parent=1 // pred_check
      _
    $region103: #{tpu_custom_call.1} parent=1 // pred_check_branch
      %5790 = sbr.rel (0) target = $region105
    $region104: #{tpu_custom_call.1} parent=1 // pred_region
      %5791 = dma.done [#allocation22], 128
    $region105: #{tpu_custom_call.1} parent=1 // pred_fallthru
      _
    %5792 = vsyncpa [#allocation3], 1
    %5793 = vsyncpa [#allocation6], 1
    %5794 = vsyncpa [#allocation9], 1
    %5795 = vsyncpa [#allocation12], 1
    %5796 = vsyncpa [#allocation15], 1
    %5797 = vsyncpa [#allocation18], 1
    %5798 = vsyncpa [#allocation4], 1
    %5799 = vsyncpa [#allocation22], 1

</llo_original>
